<compile_context>
chip_gen: v6e
topology: v6e:2x2x1
jax: 0.10.0
libtpu: 0.0.40
codegen_flags: <defaults>
</compile_context>

<pallas_src>
import math

import jax
import jax.numpy as jnp
from jax.experimental import pallas as pl
from jax.experimental.pallas import tpu as pltpu

# 48 MiB: < 64 MiB physical VMEM on v7x, < 128 MiB on v5e/v6e; enough to hold the
# double-buffered 12 MB FC weight stack.
_VMEM_LIMIT = 48 << 20


def _round_up(x, m):
    return ((x + m - 1) // m) * m


def _pick_tiling(M, target=1024):
    """Return (M_pad, tile_m) with tile_m | M_pad and tile_m a multiple of 8
    (or equal to the full dim).  Prefers tilings that need NO padding."""
    if M <= target:
        m_pad = M if M % 8 == 0 else _round_up(M, 8)
        return m_pad, m_pad
    if M % 8 == 0:
        t = target - (target % 8)
        while t >= 8:
            if M % t == 0:          # exact divisor -> no pad, >=2 parallel blocks
                return M, t
            t -= 8
    t = target - (target % 8)
    return _round_up(M, t), t       # fallback (not hit for this net's shapes)


# ----------------------------------------------------------------------------
# Kernel 1: (tile_m, K) @ (K, N) + bias + relu    (conv1 / conv2 via im2col)
# ----------------------------------------------------------------------------
def _mm_bias_relu_kernel(a_ref, w_ref, b_ref, o_ref):
    h = jnp.dot(a_ref[...], w_ref[...], preferred_element_type=jnp.float32)
    o_ref[...] = jnp.maximum(h + b_ref[...], 0.0).astype(o_ref.dtype)


def matmul_bias_relu(a, w, bias, *, tile_target=1024):
    M, K = a.shape
    Kw, N = w.shape
    assert K == Kw, (K, Kw)
    M_pad, tile_m = _pick_tiling(M, tile_target)
    if M_pad != M:
        a = jnp.pad(a, ((0, M_pad - M), (0, 0)))
    out = pl.pallas_call(
        _mm_bias_relu_kernel,
        out_shape=jax.ShapeDtypeStruct((M_pad, N), jnp.float32),
        grid_spec=pltpu.PrefetchScalarGridSpec(
            num_scalar_prefetch=0,
            grid=(M_pad // tile_m,),
            in_specs=[
                pl.BlockSpec((tile_m, K), lambda i: (i, 0)),
                pl.BlockSpec((K, N), lambda i: (0, 0)),
                pl.BlockSpec((1, N), lambda i: (0, 0)),
            ],
            out_specs=pl.BlockSpec((tile_m, N), lambda i: (i, 0)),
        ),
        compiler_params=pltpu.CompilerParams(
            dimension_semantics=("parallel",),
            vmem_limit_bytes=_VMEM_LIMIT,
        ),
    )(a, w, bias.reshape(1, N))
    return out if M_pad == M else out[:M]


# ----------------------------------------------------------------------------
# Kernel 2: fused 1x1 convs  relu(relu(x@W3+b3)@W4+b4)   (conv3 + conv4)
# ----------------------------------------------------------------------------
def _double_mm_relu_kernel(x_ref, w3_ref, b3_ref, w4_ref, b4_ref, o_ref):
    h = jnp.dot(x_ref[...], w3_ref[...], preferred_element_type=jnp.float32)
    h = jnp.maximum(h + b3_ref[...], 0.0)
    h = jnp.dot(h, w4_ref[...], preferred_element_type=jnp.float32)
    o_ref[...] = jnp.maximum(h + b4_ref[...], 0.0).astype(o_ref.dtype)


def fused_1x1_convs(x2d, w3, b3, w4, b4, *, tile_target=1024):
    M, C3 = x2d.shape
    C3w, C4 = w3.shape
    C4w, Cout = w4.shape
    assert C3 == C3w and C4 == C4w
    M_pad, tile_m = _pick_tiling(M, tile_target)
    if M_pad != M:
        x2d = jnp.pad(x2d, ((0, M_pad - M), (0, 0)))
    out = pl.pallas_call(
        _double_mm_relu_kernel,
        out_shape=jax.ShapeDtypeStruct((M_pad, Cout), jnp.float32),
        grid_spec=pltpu.PrefetchScalarGridSpec(
            num_scalar_prefetch=0,
            grid=(M_pad // tile_m,),
            in_specs=[
                pl.BlockSpec((tile_m, C3), lambda i: (i, 0)),
                pl.BlockSpec((C3, C4), lambda i: (0, 0)),
                pl.BlockSpec((1, C4), lambda i: (0, 0)),
                pl.BlockSpec((C4, Cout), lambda i: (0, 0)),
                pl.BlockSpec((1, Cout), lambda i: (0, 0)),
            ],
            out_specs=pl.BlockSpec((tile_m, Cout), lambda i: (i, 0)),
        ),
        compiler_params=pltpu.CompilerParams(
            dimension_semantics=("parallel",),
            vmem_limit_bytes=_VMEM_LIMIT,
        ),
    )(x2d, w3, b3.reshape(1, -1), w4, b4.reshape(1, -1))
    return out if M_pad == M else out[:M]


# ----------------------------------------------------------------------------
# Kernel 3: fused FC stack  logsoftmax(relu(relu(x@W1+b1)@W2+b2)@W3+b3)
# All weights live in VMEM for the whole call; intermediates never hit HBM.
# ----------------------------------------------------------------------------
def _fc_stack_kernel(x_ref, w1_ref, b1_ref, w2_ref, b2_ref, w3_ref, b3_ref, o_ref):
    h = jnp.dot(x_ref[...], w1_ref[...], preferred_element_type=jnp.float32)
    h = jnp.maximum(h + b1_ref[...], 0.0)
    h = jnp.dot(h, w2_ref[...], preferred_element_type=jnp.float32)
    h = jnp.maximum(h + b2_ref[...], 0.0)
    h = jnp.dot(h, w3_ref[...], preferred_element_type=jnp.float32) + b3_ref[...]
    m = jnp.max(h, axis=-1, keepdims=True)
    s = h - m
    o_ref[...] = (s - jnp.log(jnp.sum(jnp.exp(s), axis=-1, keepdims=True))
                  ).astype(o_ref.dtype)


def fc_stack_logsoftmax(x, w1, b1, w2, b2, w3, b3):
    M, K1 = x.shape
    N1 = w1.shape[1]
    N2 = w2.shape[1]
    N3 = w3.shape[1]
    M_pad = max(8, _round_up(M, 8))           # tiny pad; padded rows are sliced off
    if M_pad != M:
        x = jnp.pad(x, ((0, M_pad - M), (0, 0)))
    out = pl.pallas_call(
        _fc_stack_kernel,
        out_shape=jax.ShapeDtypeStruct((M_pad, N3), jnp.float32),
        grid_spec=pltpu.PrefetchScalarGridSpec(
            num_scalar_prefetch=0,
            grid=(1,),
            in_specs=[
                pl.BlockSpec((M_pad, K1), lambda i: (0, 0)),
                pl.BlockSpec((K1, N1), lambda i: (0, 0)),
                pl.BlockSpec((1, N1), lambda i: (0, 0)),
                pl.BlockSpec((N1, N2), lambda i: (0, 0)),
                pl.BlockSpec((1, N2), lambda i: (0, 0)),
                pl.BlockSpec((N2, N3), lambda i: (0, 0)),
                pl.BlockSpec((1, N3), lambda i: (0, 0)),
            ],
            out_specs=pl.BlockSpec((M_pad, N3), lambda i: (0, 0)),
        ),
        compiler_params=pltpu.CompilerParams(
            dimension_semantics=("arbitrary",),
            vmem_limit_bytes=_VMEM_LIMIT,
        ),
    )(x, w1, b1.reshape(1, -1), w2, b2.reshape(1, -1), w3, b3.reshape(1, -1))
    return out[:M]


# ----------------------------------------------------------------------------
# Glue: im2col patch extraction (static strided slices) and conv wrapper.
# TODO(synk): fold the 3x3 patch gather into the kernel (grid over taps with a
# VMEM accumulator) to avoid the ~9x input duplication in HBM at large batch.
# ----------------------------------------------------------------------------
def _im2col_nhwc(x, kh, kw, stride):
    B, H, W, C = x.shape
    Ho = (H - kh) // stride + 1
    Wo = (W - kw) // stride + 1
    cols = []
    for i in range(kh):
        for j in range(kw):
            cols.append(
                x[:, i:i + stride * (Ho - 1) + 1:stride,
                     j:j + stride * (Wo - 1) + 1:stride, :])
    patches = jnp.stack(cols, axis=3)                 # (B, Ho, Wo, kh*kw, C)
    return patches.reshape(B * Ho * Wo, kh * kw * C), (B, Ho, Wo)


def conv2d_relu(x_nhwc, w_mat, bias, kh, kw, stride):
    patches, (B, Ho, Wo) = _im2col_nhwc(x_nhwc, kh, kw, stride)
    out = matmul_bias_relu(patches, w_mat, bias)
    return out.reshape(B, Ho, Wo, -1)


# ----------------------------------------------------------------------------
# Parameters: PyTorch-default uniform(-1/sqrt(fan_in), +), pre-laid-out for the
# kernels (conv weights as (kh*kw*Cin, Cout), fc weights as (in, out)).
# ----------------------------------------------------------------------------
def _uniform(key, shape, fan_in):
    bound = 1.0 / math.sqrt(fan_in)
    return jax.random.uniform(key, shape, jnp.float32, -bound, bound)


def _conv_w_to_mat(w_oihw):
    Cout, Cin, kh, kw = w_oihw.shape
    # (Cout, Cin, kh, kw) -> (kh, kw, Cin, Cout) -> (kh*kw*Cin, Cout)
    return jnp.transpose(w_oihw, (2, 3, 1, 0)).reshape(kh * kw * Cin, Cout)


def init_params(key):
    ks = jax.random.split(key, 14)
    p = {}
    p["conv1_w"] = _conv_w_to_mat(_uniform(ks[0], (96, 3, 3, 3), 27))
    p["conv1_b"] = _uniform(ks[1], (96,), 27)
    p["conv2_w"] = _conv_w_to_mat(_uniform(ks[2], (96, 96, 3, 3), 864))
    p["conv2_b"] = _uniform(ks[3], (96,), 864)
    p["conv3_w"] = _conv_w_to_mat(_uniform(ks[4], (192, 96, 1, 1), 96))
    p["conv3_b"] = _uniform(ks[5], (192,), 96)
    p["conv4_w"] = _conv_w_to_mat(_uniform(ks[6], (10, 192, 1, 1), 192))
    p["conv4_b"] = _uniform(ks[7], (10,), 192)
    # PyTorch Linear stores (out, in); pre-transpose ONCE here to (in, out).
    p["fc1_w"] = _uniform(ks[8], (1000, 1960), 1960).T
    p["fc1_b"] = _uniform(ks[9], (1000,), 1960)
    p["fc2_w"] = _uniform(ks[10], (1000, 1000), 1000).T
    p["fc2_b"] = _uniform(ks[11], (1000,), 1000)
    p["fc3_w"] = _uniform(ks[12], (2, 1000), 1000).T
    p["fc3_b"] = _uniform(ks[13], (2,), 1000)
    return p


# ----------------------------------------------------------------------------
# Forward pass (semantics identical to NetworkPhi.forward).
# ----------------------------------------------------------------------------
def network_phi_forward(params, x_nchw):
    x = jnp.transpose(x_nchw, (0, 2, 3, 1))                               # NCHW -> NHWC
    h = conv2d_relu(x, params["conv1_w"], params["conv1_b"], 3, 3, 1)     # (B,30,30,96)
    h = conv2d_relu(h, params["conv2_w"], params["conv2_b"], 3, 3, 2)     # (B,14,14,96)

    B, Ho, Wo, C = h.shape
    h2 = fused_1x1_convs(h.reshape(B * Ho * Wo, C),
                         params["conv3_w"], params["conv3_b"],
                         params["conv4_w"], params["conv4_b"])            # (B*196, 10)
    h2 = h2.reshape(B, Ho, Wo, 10)

    # PyTorch flattens NCHW: view(-1, 1960) -> transpose back before reshaping.
    flat = jnp.transpose(h2, (0, 3, 1, 2)).reshape(B, 10 * Ho * Wo)       # (B, 1960)

    return fc_stack_logsoftmax(flat,
                               params["fc1_w"], params["fc1_b"],
                               params["fc2_w"], params["fc2_b"],
                               params["fc3_w"], params["fc3_b"])          # (B, 2)


if __name__ == "__main__":
    key = jax.random.PRNGKey(0)
    pkey, xkey = jax.random.split(key)
    params = init_params(pkey)
    # Input shape forced to (B, 3, 32, 32) by the `view(-1, 1960)` in the module.
    x = jax.random.normal(xkey, (2, 3, 32, 32), jnp.float32)

    out = jax.jit(network_phi_forward)(params, x)
    out = jax.block_until_ready(out)

    assert out.shape == (2, 2), out.shape
    assert out.dtype == jnp.float32
    # log-softmax rows must exponentiate-sum to 1
    assert bool(jnp.all(jnp.abs(jnp.sum(jnp.exp(out), axis=1) - 1.0) < 1e-4))
    print("KERNEL_OK")
</pallas_src>

<mosaic_0001>
module attributes {stable_mosaic.version = 11 : i64} {
  func.func @_mm_bias_relu_kernel(%arg0: i32, %arg1: memref<600x27xf32, #tpu.memory_space<vmem>>, %arg2: memref<27x96xf32, #tpu.memory_space<vmem>>, %arg3: memref<1x96xf32, #tpu.memory_space<vmem>>, %arg4: memref<600x96xf32, #tpu.memory_space<vmem>>) attributes {dimension_semantics = [#tpu.dimension_semantics<parallel>], iteration_bounds = array<i64: 3>, scalar_prefetch = 0 : i64, scratch_operands = 0 : i64, tpu.core_type = #tpu.core_type<tc>, window_params = [{transform_indices = @transform_0, window_bounds = array<i64: 600, 27>}, {pipeline_mode = #tpu.pipeline_mode<synchronous>, transform_indices = @transform_1, window_bounds = array<i64: 27, 96>}, {pipeline_mode = #tpu.pipeline_mode<synchronous>, transform_indices = @transform_2, window_bounds = array<i64: 1, 96>}, {transform_indices = @transform_3, window_bounds = array<i64: 600, 96>}]} {
    %c0 = arith.constant 0 : index
    %c0_0 = arith.constant 0 : index
    %0 = vector.load %arg1[%c0, %c0_0] : memref<600x27xf32, #tpu.memory_space<vmem>>, vector<600x27xf32>
    %c0_1 = arith.constant 0 : index
    %c0_2 = arith.constant 0 : index
    %1 = vector.load %arg2[%c0_1, %c0_2] : memref<27x96xf32, #tpu.memory_space<vmem>>, vector<27x96xf32>
    %cst = arith.constant dense<0.000000e+00> : vector<600x96xf32>
    %2 = tpu.matmul %0, %1, %cst {dimension_numbers = #tpu.dot_dimension_numbers<[1], [0], [0], [1], [0, 0, 1, 1], [], []>} : vector<600x27xf32>, vector<27x96xf32>, vector<600x96xf32> -> vector<600x96xf32>
    %c0_3 = arith.constant 0 : index
    %c0_4 = arith.constant 0 : index
    %3 = vector.load %arg3[%c0_3, %c0_4] : memref<1x96xf32, #tpu.memory_space<vmem>>, vector<1x96xf32>
    %4 = vector.broadcast %3 : vector<1x96xf32> to vector<600x96xf32>
    %5 = arith.addf %2, %4 : vector<600x96xf32>
    %cst_5 = arith.constant 0.000000e+00 : f32
    %6 = vector.broadcast %cst_5 : f32 to vector<600x96xf32>
    %7 = arith.maximumf %5, %6 : vector<600x96xf32>
    %c0_6 = arith.constant 0 : index
    %c0_7 = arith.constant 0 : index
    %8 = vector.load %arg4[%c0_6, %c0_7] : memref<600x96xf32, #tpu.memory_space<vmem>>, vector<600x96xf32>
    tpu.vector_store %arg4[%c0_6, %c0_7], %7 {strides = array<i32>} : memref<600x96xf32, #tpu.memory_space<vmem>>, vector<600x96xf32>,
    return
  }
  func.func @transform_0(%arg0: i32) -> (i32, i32) {
    %c0_i32 = arith.constant 0 : i32
    %c0_i32_0 = arith.constant 0 : i32
    return %arg0, %c0_i32 : i32, i32
  }
  func.func @transform_1(%arg0: i32) -> (i32, i32) {
    %c0_i32 = arith.constant 0 : i32
    %c0_i32_0 = arith.constant 0 : i32
    %c0_i32_1 = arith.constant 0 : i32
    return %c0_i32, %c0_i32_0 : i32, i32
  }
  func.func @transform_2(%arg0: i32) -> (i32, i32) {
    %c0_i32 = arith.constant 0 : i32
    %c0_i32_0 = arith.constant 0 : i32
    %c0_i32_1 = arith.constant 0 : i32
    return %c0_i32, %c0_i32_0 : i32, i32
  }
  func.func @transform_3(%arg0: i32) -> (i32, i32) {
    %c0_i32 = arith.constant 0 : i32
    %c0_i32_0 = arith.constant 0 : i32
    return %arg0, %c0_i32 : i32, i32
  }
}

module attributes {stable_mosaic.version = 11 : i64} {
  func.func @_mm_bias_relu_kernel(%arg0: i32, %arg1: memref<392x864xf32, #tpu.memory_space<vmem>>, %arg2: memref<864x96xf32, #tpu.memory_space<vmem>>, %arg3: memref<1x96xf32, #tpu.memory_space<vmem>>, %arg4: memref<392x96xf32, #tpu.memory_space<vmem>>) attributes {dimension_semantics = [#tpu.dimension_semantics<parallel>], iteration_bounds = array<i64: 1>, scalar_prefetch = 0 : i64, scratch_operands = 0 : i64, tpu.core_type = #tpu.core_type<tc>, window_params = [{transform_indices = @transform_0, window_bounds = array<i64: 392, 864>}, {pipeline_mode = #tpu.pipeline_mode<synchronous>, transform_indices = @transform_1, window_bounds = array<i64: 864, 96>}, {pipeline_mode = #tpu.pipeline_mode<synchronous>, transform_indices = @transform_2, window_bounds = array<i64: 1, 96>}, {transform_indices = @transform_3, window_bounds = array<i64: 392, 96>}]} {
    %c0 = arith.constant 0 : index
    %c0_0 = arith.constant 0 : index
    %0 = vector.load %arg1[%c0, %c0_0] : memref<392x864xf32, #tpu.memory_space<vmem>>, vector<392x864xf32>
    %c0_1 = arith.constant 0 : index
    %c0_2 = arith.constant 0 : index
    %1 = vector.load %arg2[%c0_1, %c0_2] : memref<864x96xf32, #tpu.memory_space<vmem>>, vector<864x96xf32>
    %cst = arith.constant dense<0.000000e+00> : vector<392x96xf32>
    %2 = tpu.matmul %0, %1, %cst {dimension_numbers = #tpu.dot_dimension_numbers<[1], [0], [0], [1], [0, 0, 1, 1], [], []>} : vector<392x864xf32>, vector<864x96xf32>, vector<392x96xf32> -> vector<392x96xf32>
    %c0_3 = arith.constant 0 : index
    %c0_4 = arith.constant 0 : index
    %3 = vector.load %arg3[%c0_3, %c0_4] : memref<1x96xf32, #tpu.memory_space<vmem>>, vector<1x96xf32>
    %4 = vector.broadcast %3 : vector<1x96xf32> to vector<392x96xf32>
    %5 = arith.addf %2, %4 : vector<392x96xf32>
    %cst_5 = arith.constant 0.000000e+00 : f32
    %6 = vector.broadcast %cst_5 : f32 to vector<392x96xf32>
    %7 = arith.maximumf %5, %6 : vector<392x96xf32>
    %c0_6 = arith.constant 0 : index
    %c0_7 = arith.constant 0 : index
    %8 = vector.load %arg4[%c0_6, %c0_7] : memref<392x96xf32, #tpu.memory_space<vmem>>, vector<392x96xf32>
    tpu.vector_store %arg4[%c0_6, %c0_7], %7 {strides = array<i32>} : memref<392x96xf32, #tpu.memory_space<vmem>>, vector<392x96xf32>,
    return
  }
  func.func @transform_0(%arg0: i32) -> (i32, i32) {
    %c0_i32 = arith.constant 0 : i32
    %c0_i32_0 = arith.constant 0 : i32
    return %arg0, %c0_i32 : i32, i32
  }
  func.func @transform_1(%arg0: i32) -> (i32, i32) {
    %c0_i32 = arith.constant 0 : i32
    %c0_i32_0 = arith.constant 0 : i32
    %c0_i32_1 = arith.constant 0 : i32
    return %c0_i32, %c0_i32_0 : i32, i32
  }
  func.func @transform_2(%arg0: i32) -> (i32, i32) {
    %c0_i32 = arith.constant 0 : i32
    %c0_i32_0 = arith.constant 0 : i32
    %c0_i32_1 = arith.constant 0 : i32
    return %c0_i32, %c0_i32_0 : i32, i32
  }
  func.func @transform_3(%arg0: i32) -> (i32, i32) {
    %c0_i32 = arith.constant 0 : i32
    %c0_i32_0 = arith.constant 0 : i32
    return %arg0, %c0_i32 : i32, i32
  }
}

module attributes {stable_mosaic.version = 11 : i64} {
  func.func @_double_mm_relu_kernel(%arg0: i32, %arg1: memref<392x96xf32, #tpu.memory_space<vmem>>, %arg2: memref<96x192xf32, #tpu.memory_space<vmem>>, %arg3: memref<1x192xf32, #tpu.memory_space<vmem>>, %arg4: memref<192x10xf32, #tpu.memory_space<vmem>>, %arg5: memref<1x10xf32, #tpu.memory_space<vmem>>, %arg6: memref<392x10xf32, #tpu.memory_space<vmem>>) attributes {dimension_semantics = [#tpu.dimension_semantics<parallel>], iteration_bounds = array<i64: 1>, scalar_prefetch = 0 : i64, scratch_operands = 0 : i64, tpu.core_type = #tpu.core_type<tc>, window_params = [{transform_indices = @transform_0, window_bounds = array<i64: 392, 96>}, {pipeline_mode = #tpu.pipeline_mode<synchronous>, transform_indices = @transform_1, window_bounds = array<i64: 96, 192>}, {pipeline_mode = #tpu.pipeline_mode<synchronous>, transform_indices = @transform_2, window_bounds = array<i64: 1, 192>}, {pipeline_mode = #tpu.pipeline_mode<synchronous>, transform_indices = @transform_3, window_bounds = array<i64: 192, 10>}, {pipeline_mode = #tpu.pipeline_mode<synchronous>, transform_indices = @transform_4, window_bounds = array<i64: 1, 10>}, {transform_indices = @transform_5, window_bounds = array<i64: 392, 10>}]} {
    %c0 = arith.constant 0 : index
    %c0_0 = arith.constant 0 : index
    %0 = vector.load %arg1[%c0, %c0_0] : memref<392x96xf32, #tpu.memory_space<vmem>>, vector<392x96xf32>
    %c0_1 = arith.constant 0 : index
    %c0_2 = arith.constant 0 : index
    %1 = vector.load %arg2[%c0_1, %c0_2] : memref<96x192xf32, #tpu.memory_space<vmem>>, vector<96x192xf32>
    %cst = arith.constant dense<0.000000e+00> : vector<392x192xf32>
    %2 = tpu.matmul %0, %1, %cst {dimension_numbers = #tpu.dot_dimension_numbers<[1], [0], [0], [1], [0, 0, 1, 1], [], []>} : vector<392x96xf32>, vector<96x192xf32>, vector<392x192xf32> -> vector<392x192xf32>
    %c0_3 = arith.constant 0 : index
    %c0_4 = arith.constant 0 : index
    %3 = vector.load %arg3[%c0_3, %c0_4] : memref<1x192xf32, #tpu.memory_space<vmem>>, vector<1x192xf32>
    %4 = vector.broadcast %3 : vector<1x192xf32> to vector<392x192xf32>
    %5 = arith.addf %2, %4 : vector<392x192xf32>
    %cst_5 = arith.constant 0.000000e+00 : f32
    %6 = vector.broadcast %cst_5 : f32 to vector<392x192xf32>
    %7 = arith.maximumf %5, %6 : vector<392x192xf32>
    %c0_6 = arith.constant 0 : index
    %c0_7 = arith.constant 0 : index
    %8 = vector.load %arg4[%c0_6, %c0_7] : memref<192x10xf32, #tpu.memory_space<vmem>>, vector<192x10xf32>
    %cst_8 = arith.constant dense<0.000000e+00> : vector<392x10xf32>
    %9 = tpu.matmul %7, %8, %cst_8 {dimension_numbers = #tpu.dot_dimension_numbers<[1], [0], [0], [1], [0, 0, 1, 1], [], []>} : vector<392x192xf32>, vector<192x10xf32>, vector<392x10xf32> -> vector<392x10xf32>
    %c0_9 = arith.constant 0 : index
    %c0_10 = arith.constant 0 : index
    %10 = vector.load %arg5[%c0_9, %c0_10] : memref<1x10xf32, #tpu.memory_space<vmem>>, vector<1x10xf32>
    %11 = vector.broadcast %10 : vector<1x10xf32> to vector<392x10xf32>
    %12 = arith.addf %9, %11 : vector<392x10xf32>
    %cst_11 = arith.constant 0.000000e+00 : f32
    %13 = vector.broadcast %cst_11 : f32 to vector<392x10xf32>
    %14 = arith.maximumf %12, %13 : vector<392x10xf32>
    %c0_12 = arith.constant 0 : index
    %c0_13 = arith.constant 0 : index
    %15 = vector.load %arg6[%c0_12, %c0_13] : memref<392x10xf32, #tpu.memory_space<vmem>>, vector<392x10xf32>
    tpu.vector_store %arg6[%c0_12, %c0_13], %14 {strides = array<i32>} : memref<392x10xf32, #tpu.memory_space<vmem>>, vector<392x10xf32>,
    return
  }
  func.func @transform_0(%arg0: i32) -> (i32, i32) {
    %c0_i32 = arith.constant 0 : i32
    %c0_i32_0 = arith.constant 0 : i32
    return %arg0, %c0_i32 : i32, i32
  }
  func.func @transform_1(%arg0: i32) -> (i32, i32) {
    %c0_i32 = arith.constant 0 : i32
    %c0_i32_0 = arith.constant 0 : i32
    %c0_i32_1 = arith.constant 0 : i32
    return %c0_i32, %c0_i32_0 : i32, i32
  }
  func.func @transform_2(%arg0: i32) -> (i32, i32) {
    %c0_i32 = arith.constant 0 : i32
    %c0_i32_0 = arith.constant 0 : i32
    %c0_i32_1 = arith.constant 0 : i32
    return %c0_i32, %c0_i32_0 : i32, i32
  }
  func.func @transform_3(%arg0: i32) -> (i32, i32) {
    %c0_i32 = arith.constant 0 : i32
    %c0_i32_0 = arith.constant 0 : i32
    %c0_i32_1 = arith.constant 0 : i32
    return %c0_i32, %c0_i32_0 : i32, i32
  }
  func.func @transform_4(%arg0: i32) -> (i32, i32) {
    %c0_i32 = arith.constant 0 : i32
    %c0_i32_0 = arith.constant 0 : i32
    %c0_i32_1 = arith.constant 0 : i32
    return %c0_i32, %c0_i32_0 : i32, i32
  }
  func.func @transform_5(%arg0: i32) -> (i32, i32) {
    %c0_i32 = arith.constant 0 : i32
    %c0_i32_0 = arith.constant 0 : i32
    return %arg0, %c0_i32 : i32, i32
  }
}

module attributes {stable_mosaic.version = 11 : i64} {
  func.func @_fc_stack_kernel(%arg0: i32, %arg1: memref<8x1960xf32, #tpu.memory_space<vmem>>, %arg2: memref<1960x1000xf32, #tpu.memory_space<vmem>>, %arg3: memref<1x1000xf32, #tpu.memory_space<vmem>>, %arg4: memref<1000x1000xf32, #tpu.memory_space<vmem>>, %arg5: memref<1x1000xf32, #tpu.memory_space<vmem>>, %arg6: memref<1000x2xf32, #tpu.memory_space<vmem>>, %arg7: memref<1x2xf32, #tpu.memory_space<vmem>>, %arg8: memref<8x2xf32, #tpu.memory_space<vmem>>) attributes {dimension_semantics = [#tpu.dimension_semantics<arbitrary>], iteration_bounds = array<i64: 1>, scalar_prefetch = 0 : i64, scratch_operands = 0 : i64, tpu.core_type = #tpu.core_type<tc>, window_params = [{pipeline_mode = #tpu.pipeline_mode<synchronous>, transform_indices = @transform_0, window_bounds = array<i64: 8, 1960>}, {pipeline_mode = #tpu.pipeline_mode<synchronous>, transform_indices = @transform_1, window_bounds = array<i64: 1960, 1000>}, {pipeline_mode = #tpu.pipeline_mode<synchronous>, transform_indices = @transform_2, window_bounds = array<i64: 1, 1000>}, {pipeline_mode = #tpu.pipeline_mode<synchronous>, transform_indices = @transform_3, window_bounds = array<i64: 1000, 1000>}, {pipeline_mode = #tpu.pipeline_mode<synchronous>, transform_indices = @transform_4, window_bounds = array<i64: 1, 1000>}, {pipeline_mode = #tpu.pipeline_mode<synchronous>, transform_indices = @transform_5, window_bounds = array<i64: 1000, 2>}, {pipeline_mode = #tpu.pipeline_mode<synchronous>, transform_indices = @transform_6, window_bounds = array<i64: 1, 2>}, {pipeline_mode = #tpu.pipeline_mode<synchronous>, transform_indices = @transform_7, window_bounds = array<i64: 8, 2>}]} {
    %c0 = arith.constant 0 : index
    %c0_0 = arith.constant 0 : index
    %0 = vector.load %arg1[%c0, %c0_0] : memref<8x1960xf32, #tpu.memory_space<vmem>>, vector<8x1960xf32>
    %c0_1 = arith.constant 0 : index
    %c0_2 = arith.constant 0 : index
    %1 = vector.load %arg2[%c0_1, %c0_2] : memref<1960x1000xf32, #tpu.memory_space<vmem>>, vector<1960x1000xf32>
    %cst = arith.constant dense<0.000000e+00> : vector<8x1000xf32>
    %2 = tpu.matmul %0, %1, %cst {dimension_numbers = #tpu.dot_dimension_numbers<[1], [0], [0], [1], [0, 0, 1, 1], [], []>} : vector<8x1960xf32>, vector<1960x1000xf32>, vector<8x1000xf32> -> vector<8x1000xf32>
    %c0_3 = arith.constant 0 : index
    %c0_4 = arith.constant 0 : index
    %3 = vector.load %arg3[%c0_3, %c0_4] : memref<1x1000xf32, #tpu.memory_space<vmem>>, vector<1x1000xf32>
    %4 = vector.broadcast %3 : vector<1x1000xf32> to vector<8x1000xf32>
    %5 = arith.addf %2, %4 : vector<8x1000xf32>
    %cst_5 = arith.constant 0.000000e+00 : f32
    %6 = vector.broadcast %cst_5 : f32 to vector<8x1000xf32>
    %7 = arith.maximumf %5, %6 : vector<8x1000xf32>
    %c0_6 = arith.constant 0 : index
    %c0_7 = arith.constant 0 : index
    %8 = vector.load %arg4[%c0_6, %c0_7] : memref<1000x1000xf32, #tpu.memory_space<vmem>>, vector<1000x1000xf32>
    %cst_8 = arith.constant dense<0.000000e+00> : vector<8x1000xf32>
    %9 = tpu.matmul %7, %8, %cst_8 {dimension_numbers = #tpu.dot_dimension_numbers<[1], [0], [0], [1], [0, 0, 1, 1], [], []>} : vector<8x1000xf32>, vector<1000x1000xf32>, vector<8x1000xf32> -> vector<8x1000xf32>
    %c0_9 = arith.constant 0 : index
    %c0_10 = arith.constant 0 : index
    %10 = vector.load %arg5[%c0_9, %c0_10] : memref<1x1000xf32, #tpu.memory_space<vmem>>, vector<1x1000xf32>
    %11 = vector.broadcast %10 : vector<1x1000xf32> to vector<8x1000xf32>
    %12 = arith.addf %9, %11 : vector<8x1000xf32>
    %cst_11 = arith.constant 0.000000e+00 : f32
    %13 = vector.broadcast %cst_11 : f32 to vector<8x1000xf32>
    %14 = arith.maximumf %12, %13 : vector<8x1000xf32>
    %c0_12 = arith.constant 0 : index
    %c0_13 = arith.constant 0 : index
    %15 = vector.load %arg6[%c0_12, %c0_13] : memref<1000x2xf32, #tpu.memory_space<vmem>>, vector<1000x2xf32>
    %cst_14 = arith.constant dense<0.000000e+00> : vector<8x2xf32>
    %16 = tpu.matmul %14, %15, %cst_14 {dimension_numbers = #tpu.dot_dimension_numbers<[1], [0], [0], [1], [0, 0, 1, 1], [], []>} : vector<8x1000xf32>, vector<1000x2xf32>, vector<8x2xf32> -> vector<8x2xf32>
    %c0_15 = arith.constant 0 : index
    %c0_16 = arith.constant 0 : index
    %17 = vector.load %arg7[%c0_15, %c0_16] : memref<1x2xf32, #tpu.memory_space<vmem>>, vector<1x2xf32>
    %18 = vector.broadcast %17 : vector<1x2xf32> to vector<8x2xf32>
    %19 = arith.addf %16, %18 : vector<8x2xf32>
    %cst_17 = arith.constant dense<0xFF800000> : vector<8xf32>
    %20 = vector.multi_reduction <maximumf>, %19, %cst_17 [1] : vector<8x2xf32> to vector<8xf32>
    %21 = vector.shape_cast %20 : vector<8xf32> to vector<8x1xf32>
    %22 = vector.broadcast %21 : vector<8x1xf32> to vector<8x2xf32>
    %23 = arith.subf %19, %22 : vector<8x2xf32>
    %24 = math.exp %23 : vector<8x2xf32>
    %cst_18 = arith.constant dense<0.000000e+00> : vector<8xf32>
    %25 = vector.multi_reduction <add>, %24, %cst_18 [1] : vector<8x2xf32> to vector<8xf32>
    %26 = vector.shape_cast %25 : vector<8xf32> to vector<8x1xf32>
    %27 = math.log %26 : vector<8x1xf32>
    %28 = vector.broadcast %27 : vector<8x1xf32> to vector<8x2xf32>
    %29 = arith.subf %23, %28 : vector<8x2xf32>
    %c0_19 = arith.constant 0 : index
    %c0_20 = arith.constant 0 : index
    %30 = vector.load %arg8[%c0_19, %c0_20] : memref<8x2xf32, #tpu.memory_space<vmem>>, vector<8x2xf32>
    tpu.vector_store %arg8[%c0_19, %c0_20], %29 {strides = array<i32>} : memref<8x2xf32, #tpu.memory_space<vmem>>, vector<8x2xf32>,
    return
  }
  func.func @transform_0(%arg0: i32) -> (i32, i32) {
    %c0_i32 = arith.constant 0 : i32
    %c0_i32_0 = arith.constant 0 : i32
    %c0_i32_1 = arith.constant 0 : i32
    return %c0_i32, %c0_i32_0 : i32, i32
  }
  func.func @transform_1(%arg0: i32) -> (i32, i32) {
    %c0_i32 = arith.constant 0 : i32
    %c0_i32_0 = arith.constant 0 : i32
    %c0_i32_1 = arith.constant 0 : i32
    return %c0_i32, %c0_i32_0 : i32, i32
  }
  func.func @transform_2(%arg0: i32) -> (i32, i32) {
    %c0_i32 = arith.constant 0 : i32
    %c0_i32_0 = arith.constant 0 : i32
    %c0_i32_1 = arith.constant 0 : i32
    return %c0_i32, %c0_i32_0 : i32, i32
  }
  func.func @transform_3(%arg0: i32) -> (i32, i32) {
    %c0_i32 = arith.constant 0 : i32
    %c0_i32_0 = arith.constant 0 : i32
    %c0_i32_1 = arith.constant 0 : i32
    return %c0_i32, %c0_i32_0 : i32, i32
  }
  func.func @transform_4(%arg0: i32) -> (i32, i32) {
    %c0_i32 = arith.constant 0 : i32
    %c0_i32_0 = arith.constant 0 : i32
    %c0_i32_1 = arith.constant 0 : i32
    return %c0_i32, %c0_i32_0 : i32, i32
  }
  func.func @transform_5(%arg0: i32) -> (i32, i32) {
    %c0_i32 = arith.constant 0 : i32
    %c0_i32_0 = arith.constant 0 : i32
    %c0_i32_1 = arith.constant 0 : i32
    return %c0_i32, %c0_i32_0 : i32, i32
  }
  func.func @transform_6(%arg0: i32) -> (i32, i32) {
    %c0_i32 = arith.constant 0 : i32
    %c0_i32_0 = arith.constant 0 : i32
    %c0_i32_1 = arith.constant 0 : i32
    return %c0_i32, %c0_i32_0 : i32, i32
  }
  func.func @transform_7(%arg0: i32) -> (i32, i32) {
    %c0_i32 = arith.constant 0 : i32
    %c0_i32_0 = arith.constant 0 : i32
    %c0_i32_1 = arith.constant 0 : i32
    return %c0_i32, %c0_i32_0 : i32, i32
  }
}

</mosaic_0001>

<llo_original>
// kernel: network_phi_forward.4
$region0: #{network_phi_forward.4}
  #allocation0 [shape = 'u32[]', space=smem, size = 0x4, offset = 0x4, fixed_abs, tag = 'smem constant byte address 0x4 - core index']
  #allocation1 [shape = 'u32[144,128]{1,0:T(1,128)}', space=vmem, size = 0x12000, scoped, tag = 'internal scratch']
  %s0 = inlined_call_operand.vmem [shape: f32[1800,27], index: 0, kind: input, shape index: {}]
  %s1 = inlined_call_operand.vmem [shape: f32[27,96], index: 1, kind: input, shape index: {}]
  %s2 = inlined_call_operand.vmem [shape: f32[1,96], index: 2, kind: input, shape index: {}]
  %s3 = inlined_call_operand.vmem [shape: f32[1800,96], index: 3, kind: output, shape index: {}]
  %s4 = sld [smem:[#allocation0]]
  $region45: #{network_phi_forward.4} parent=0
    _
  %s6 = ssub.s32 1, %s4
  %s7 = scalar_select 0, %s6, %s4
  loop: start=0, step=1, limit=5
  $region2: #{network_phi_forward.4} parent=0 // loop_pre_header
    _
  $region3: #{network_phi_forward.4} parent=0 // loop_header
    %s9 = sphi 0, %s13
    %p10 = scmp.ge.s32.totalorder %s9, 5
    %s19 = sphi 0, %s21
    %s22 = sphi 0, %s19
    %s23 = sphi 0, %s22
    %s39 = sphi 0, %s23
    %s43 = sphi 0, %s43
    %s45 = sphi 0, %s43
    %s46 = sphi 0, %s45
    %s60 = sphi 0, %s46
    %s64 = sphi 0, %s64
    %s66 = sphi 0, %s64
    %s67 = sphi 0, %s66
    %s81 = sphi 0, %s67
    %s87 = sphi 0, %s89
    %s90 = sphi 0, %s87
    %s91 = sphi 0, %s90
    %s107 = sphi 0, %s91
  $region4: #{network_phi_forward.4} parent=0 // loop_header_branch
    %12 = sbr.rel (%p10) target = $region8
  $region5: #{network_phi_forward.4} parent=0 // loop_body
    %s14 = ssub.s32 %s9, 1
    %s15 = ssub.s32 %s9, 2
    %s16 = sadd.s32 %s9, 1
    %s17 = ssub.s32 %s9, %s16
    %p18 = scmp.eq.s32.totalorder %s17, 0
    %s20 = sadd.s32 %s19, 1
    %s21 = scalar_select %p18, %s19, %s20
    %p24 = pneg %p18
    %p25 = scmp.eq.s32.totalorder %s9, 2
    %p26 = por %p24, %p25
    %p27 = scmp.ne.s32.totalorder %s19, %s22
    %p28 = scmp.eq.s32.totalorder %s9, 0
    %p29 = por %p27, %p28
    %p30 = scmp.ne.s32.totalorder %s19, %s22
    %p31 = scmp.eq.s32.totalorder %s14, 2
    %p32 = por %p30, %p31
    %p33 = scmp.ne.s32.totalorder %s22, %s23
    %p34 = scmp.eq.s32.totalorder %s14, 0
    %p35 = por %p33, %p34
    %p36 = scmp.ne.s32.totalorder %s22, %s23
    %p37 = scmp.eq.s32.totalorder %s15, 2
    %p38 = por %p36, %p37
    %p40 = scmp.ne.s32.totalorder %s23, %s39
    %p41 = scmp.eq.s32.totalorder %s15, 0
    %p42 = por %p40, %p41
    %s44 = sadd.s32 %s43, 1
    %p47 = scmp.eq.s32.totalorder %s9, 2
    %p48 = scmp.ne.s32.totalorder %s43, %s45
    %p49 = scmp.eq.s32.totalorder %s9, 0
    %p50 = por %p48, %p49
    %p51 = scmp.ne.s32.totalorder %s43, %s45
    %p52 = scmp.eq.s32.totalorder %s14, 2
    %p53 = por %p51, %p52
    %p54 = scmp.ne.s32.totalorder %s45, %s46
    %p55 = scmp.eq.s32.totalorder %s14, 0
    %p56 = por %p54, %p55
    %p57 = scmp.ne.s32.totalorder %s45, %s46
    %p58 = scmp.eq.s32.totalorder %s15, 2
    %p59 = por %p57, %p58
    %p61 = scmp.ne.s32.totalorder %s46, %s60
    %p62 = scmp.eq.s32.totalorder %s15, 0
    %p63 = por %p61, %p62
    %s65 = sadd.s32 %s64, 1
    %p68 = scmp.eq.s32.totalorder %s9, 2
    %p69 = scmp.ne.s32.totalorder %s64, %s66
    %p70 = scmp.eq.s32.totalorder %s9, 0
    %p71 = por %p69, %p70
    %p72 = scmp.ne.s32.totalorder %s64, %s66
    %p73 = scmp.eq.s32.totalorder %s14, 2
    %p74 = por %p72, %p73
    %p75 = scmp.ne.s32.totalorder %s66, %s67
    %p76 = scmp.eq.s32.totalorder %s14, 0
    %p77 = por %p75, %p76
    %p78 = scmp.ne.s32.totalorder %s66, %s67
    %p79 = scmp.eq.s32.totalorder %s15, 2
    %p80 = por %p78, %p79
    %p82 = scmp.ne.s32.totalorder %s67, %s81
    %p83 = scmp.eq.s32.totalorder %s15, 0
    %p84 = por %p82, %p83
    %s85 = ssub.s32 %s9, %s16
    %p86 = scmp.eq.s32.totalorder %s85, 0
    %s88 = sadd.s32 %s87, 1
    %s89 = scalar_select %p86, %s87, %s88
    %p92 = pneg %p86
    %p93 = scmp.eq.s32.totalorder %s9, 2
    %p94 = por %p92, %p93
    %p95 = scmp.ne.s32.totalorder %s87, %s90
    %p96 = scmp.eq.s32.totalorder %s9, 0
    %p97 = por %p95, %p96
    %p98 = scmp.ne.s32.totalorder %s87, %s90
    %p99 = scmp.eq.s32.totalorder %s14, 2
    %p100 = por %p98, %p99
    %p101 = scmp.ne.s32.totalorder %s90, %s91
    %p102 = scmp.eq.s32.totalorder %s14, 0
    %p103 = por %p101, %p102
    %p104 = scmp.ne.s32.totalorder %s90, %s91
    %p105 = scmp.eq.s32.totalorder %s15, 2
    %p106 = por %p104, %p105
    %p108 = scmp.ne.s32.totalorder %s91, %s107
    %p109 = scmp.eq.s32.totalorder %s15, 0
    %p110 = por %p108, %p109
    %p111 = scmp.le.s32.totalorder 1, %s9
    %p112 = scmp.lt.s32.totalorder %s9, 4
    %p113 = pnand %p111, %p112
    %p114 = pneg %p113
    // Predicated region
    $region9: #{network_phi_forward.4} parent=5 // pred_check
      _
    $region10: #{network_phi_forward.4} parent=5 // pred_check_branch
      %116 = sbr.rel (%p113) target = $region12
    $region11: #{network_phi_forward.4} parent=5 // pred_region
      %s117 = ssub.s32 %s9, 1
      // Predicated region
      $region13: #{network_phi_forward.4} parent=11 // pred_check
        %p118 = pneg %p56
      $region14: #{network_phi_forward.4} parent=11 // pred_check_branch
        %120 = sbr.rel (%p118) target = $region16
      $region15: #{network_phi_forward.4} parent=11 // pred_region
        _
      $region16: #{network_phi_forward.4} parent=11 // pred_fallthru
        _
      // Predicated region
      $region17: #{network_phi_forward.4} parent=11 // pred_check
        %p121 = pneg %p77
      $region18: #{network_phi_forward.4} parent=11 // pred_check_branch
        %123 = sbr.rel (%p121) target = $region20
      $region19: #{network_phi_forward.4} parent=11 // pred_region
        _
      $region20: #{network_phi_forward.4} parent=11 // pred_fallthru
        _
    $region12: #{network_phi_forward.4} parent=5 // pred_fallthru
      _
    %p124 = scmp.lt.s32.totalorder %s9, 3
    // Predicated region
    $region21: #{network_phi_forward.4} parent=5 // pred_check
      %p125 = pneg %p124
    $region22: #{network_phi_forward.4} parent=5 // pred_check_branch
      %127 = sbr.rel (%p125) target = $region24
    $region23: #{network_phi_forward.4} parent=5 // pred_region
      // Predicated region
      $region25: #{network_phi_forward.4} parent=23 // pred_check
        %p128 = pneg %p29
      $region26: #{network_phi_forward.4} parent=23 // pred_check_branch
        %130 = sbr.rel (%p128) target = $region28
      $region27: #{network_phi_forward.4} parent=23 // pred_region
        %s131 = smul.u32 75, %s9
        %p132 = scmp.lt.s32.totalorder %s131, 224
        %s133 = scalar_select %p132, %s131, 224
        %s134 = smul.addr %s133, 8
        %s135 = scalar_lea.vmem %s0, %s134
        %s136 = smul.u32 75, %s9
      $region28: #{network_phi_forward.4} parent=23 // pred_fallthru
        _
    $region24: #{network_phi_forward.4} parent=5 // pred_fallthru
      _
    %p137 = scmp.le.s32.totalorder 1, %s9
    %p138 = scmp.lt.s32.totalorder %s9, 4
    %p139 = pnand %p137, %p138
    %p140 = pneg %p139
    // Predicated region
    $region29: #{network_phi_forward.4} parent=5 // pred_check
      _
    $region30: #{network_phi_forward.4} parent=5 // pred_check_branch
      %142 = sbr.rel (%p139) target = $region32
    $region31: #{network_phi_forward.4} parent=5 // pred_region
      %s143 = ssub.s32 %s9, 1
      %s144 = smul.u32 75, %s14
      %p145 = scmp.lt.s32.totalorder %s144, 224
      %s146 = scalar_select %p145, %s144, 224
      %s147 = smul.addr %s146, 8
      %s148 = scalar_lea.vmem %s0, %s147
      %p149 = pneg %p35
      %p150 = pneg %p32
      %p151 = pneg %p56
      %p152 = pneg %p53
      %p153 = pneg %p77
      %p154 = pneg %p74
      %p155 = pneg %p103
      %p156 = pneg %p100
      %s157 = smul.u32 75, %s14
      %p158 = scmp.lt.s32.totalorder %s157, 224
      %s159 = scalar_select %p158, %s157, 224
      %s160 = smul.addr %s159, 8
      %s161 = scalar_lea.vmem %s3, %s160
      %s162 = smul.u32 75, %s14
      %p163 = scmp.lt.s32.totalorder %s162, 224
      %s164 = scalar_select %p163, %s162, 224
      %s165 = smul.addr %s164, 8
      %s166 = scalar_lea.vmem %s0, %s165
      %s167 = smul.u32 75, %s14
      %s168 = smul.u32 75, %s14
      %p169 = scmp.lt.s32.totalorder %s168, 224
      %s170 = scalar_select %p169, %s168, 224
      %s171 = smul.addr %s170, 8
      %s172 = scalar_lea.vmem %s3, %s171
      %s173 = smul.u32 75, %s14
      %v174 = vld [vmem:[%s166] sm:$0xff]
      %v175 = vld [vmem:[%s166 + $0x8] sm:$0xff]
      %v176 = vld [vmem:[%s166 + $0x10] sm:$0xff]
      %v177 = vld [vmem:[%s166 + $0x18] sm:$0xff]
      %v178 = vld [vmem:[%s166 + $0x20] sm:$0xff]
      %v179 = vld [vmem:[%s166 + $0x28] sm:$0xff]
      %v180 = vld [vmem:[%s166 + $0x30] sm:$0xff]
      %v181 = vld [vmem:[%s166 + $0x38] sm:$0xff]
      %v182 = vld [vmem:[%s166 + $0x40] sm:$0xff]
      %v183 = vld [vmem:[%s166 + $0x48] sm:$0xff]
      %v184 = vld [vmem:[%s166 + $0x50] sm:$0xff]
      %v185 = vld [vmem:[%s166 + $0x58] sm:$0xff]
      %v186 = vld [vmem:[%s166 + $0x60] sm:$0xff]
      %v187 = vld [vmem:[%s166 + $0x68] sm:$0xff]
      %v188 = vld [vmem:[%s166 + $0x70] sm:$0xff]
      %v189 = vld [vmem:[%s166 + $0x78] sm:$0xff]
      %v190 = vld [vmem:[%s166 + $0x80] sm:$0xff]
      %v191 = vld [vmem:[%s166 + $0x88] sm:$0xff]
      %v192 = vld [vmem:[%s166 + $0x90] sm:$0xff]
      %v193 = vld [vmem:[%s166 + $0x98] sm:$0xff]
      %v194 = vld [vmem:[%s166 + $0xa0] sm:$0xff]
      %v195 = vld [vmem:[%s166 + $0xa8] sm:$0xff]
      %v196 = vld [vmem:[%s166 + $0xb0] sm:$0xff]
      %v197 = vld [vmem:[%s166 + $0xb8] sm:$0xff]
      %v198 = vld [vmem:[%s166 + $0xc0] sm:$0xff]
      %v199 = vld [vmem:[%s166 + $0xc8] sm:$0xff]
      %v200 = vld [vmem:[%s166 + $0xd0] sm:$0xff]
      %v201 = vld [vmem:[%s166 + $0xd8] sm:$0xff]
      %v202 = vld [vmem:[%s166 + $0xe0] sm:$0xff]
      %v203 = vld [vmem:[%s166 + $0xe8] sm:$0xff]
      %v204 = vld [vmem:[%s166 + $0xf0] sm:$0xff]
      %v205 = vld [vmem:[%s166 + $0xf8] sm:$0xff]
      %v206 = vld [vmem:[%s166 + $0x100] sm:$0xff]
      %v207 = vld [vmem:[%s166 + $0x108] sm:$0xff]
      %v208 = vld [vmem:[%s166 + $0x110] sm:$0xff]
      %v209 = vld [vmem:[%s166 + $0x118] sm:$0xff]
      %v210 = vld [vmem:[%s166 + $0x120] sm:$0xff]
      %v211 = vld [vmem:[%s166 + $0x128] sm:$0xff]
      %v212 = vld [vmem:[%s166 + $0x130] sm:$0xff]
      %v213 = vld [vmem:[%s166 + $0x138] sm:$0xff]
      %v214 = vld [vmem:[%s166 + $0x140] sm:$0xff]
      %v215 = vld [vmem:[%s166 + $0x148] sm:$0xff]
      %v216 = vld [vmem:[%s166 + $0x150] sm:$0xff]
      %v217 = vld [vmem:[%s166 + $0x158] sm:$0xff]
      %v218 = vld [vmem:[%s166 + $0x160] sm:$0xff]
      %v219 = vld [vmem:[%s166 + $0x168] sm:$0xff]
      %v220 = vld [vmem:[%s166 + $0x170] sm:$0xff]
      %v221 = vld [vmem:[%s166 + $0x178] sm:$0xff]
      %v222 = vld [vmem:[%s166 + $0x180] sm:$0xff]
      %v223 = vld [vmem:[%s166 + $0x188] sm:$0xff]
      %v224 = vld [vmem:[%s166 + $0x190] sm:$0xff]
      %v225 = vld [vmem:[%s166 + $0x198] sm:$0xff]
      %v226 = vld [vmem:[%s166 + $0x1a0] sm:$0xff]
      %v227 = vld [vmem:[%s166 + $0x1a8] sm:$0xff]
      %v228 = vld [vmem:[%s166 + $0x1b0] sm:$0xff]
      %v229 = vld [vmem:[%s166 + $0x1b8] sm:$0xff]
      %v230 = vld [vmem:[%s166 + $0x1c0] sm:$0xff]
      %v231 = vld [vmem:[%s166 + $0x1c8] sm:$0xff]
      %v232 = vld [vmem:[%s166 + $0x1d0] sm:$0xff]
      %v233 = vld [vmem:[%s166 + $0x1d8] sm:$0xff]
      %v234 = vld [vmem:[%s166 + $0x1e0] sm:$0xff]
      %v235 = vld [vmem:[%s166 + $0x1e8] sm:$0xff]
      %v236 = vld [vmem:[%s166 + $0x1f0] sm:$0xff]
      %v237 = vld [vmem:[%s166 + $0x1f8] sm:$0xff]
      %v238 = vld [vmem:[%s166 + $0x200] sm:$0xff]
      %v239 = vld [vmem:[%s166 + $0x208] sm:$0xff]
      %v240 = vld [vmem:[%s166 + $0x210] sm:$0xff]
      %v241 = vld [vmem:[%s166 + $0x218] sm:$0xff]
      %v242 = vld [vmem:[%s166 + $0x220] sm:$0xff]
      %v243 = vld [vmem:[%s166 + $0x228] sm:$0xff]
      %v244 = vld [vmem:[%s166 + $0x230] sm:$0xff]
      %v245 = vld [vmem:[%s166 + $0x238] sm:$0xff]
      %v246 = vld [vmem:[%s166 + $0x240] sm:$0xff]
      %v247 = vld [vmem:[%s166 + $0x248] sm:$0xff]
      %v248 = vld [vmem:[%s166 + $0x250] sm:$0xff]
      %v249 = vld [vmem:[%s1] sm:$0xff]
      %v250 = vld [vmem:[%s1 + $0x8] sm:$0xff]
      %v251 = vld [vmem:[%s1 + $0x10] sm:$0xff]
      %v252 = vld [vmem:[%s1 + $0x18] sm:$0x7]
      %v253 = vld [vmem:[%s2] sm:$0x1]
      %v255 = vlaneseq
      %v256 = vshrl.u32 %v255, 7
      %v257 = vsub.s32 0, %v256
      %v258 = vrot.slane %v253, %v257
      %vm260 = vcmask 220160
      %v262 = vsel %vm260, %v174, 0
      %v265 = vsel %vm260, %v175, 0
      %v268 = vsel %vm260, %v176, 0
      %v271 = vsel %vm260, %v177, 0
      %v274 = vsel %vm260, %v178, 0
      %v277 = vsel %vm260, %v179, 0
      %v280 = vsel %vm260, %v180, 0
      %v283 = vsel %vm260, %v181, 0
      %v286 = vsel %vm260, %v182, 0
      %v289 = vsel %vm260, %v183, 0
      %v292 = vsel %vm260, %v184, 0
      %v295 = vsel %vm260, %v185, 0
      %v298 = vsel %vm260, %v186, 0
      %v301 = vsel %vm260, %v187, 0
      %v304 = vsel %vm260, %v188, 0
      %v307 = vsel %vm260, %v189, 0
      %v310 = vsel %vm260, %v190, 0
      %v313 = vsel %vm260, %v191, 0
      %v316 = vsel %vm260, %v192, 0
      %v319 = vsel %vm260, %v193, 0
      %v322 = vsel %vm260, %v194, 0
      %v325 = vsel %vm260, %v195, 0
      %v328 = vsel %vm260, %v196, 0
      %v331 = vsel %vm260, %v197, 0
      %v334 = vsel %vm260, %v198, 0
      %v337 = vsel %vm260, %v199, 0
      %v340 = vsel %vm260, %v200, 0
      %v343 = vsel %vm260, %v201, 0
      %v346 = vsel %vm260, %v202, 0
      %v349 = vsel %vm260, %v203, 0
      %v352 = vsel %vm260, %v204, 0
      %v355 = vsel %vm260, %v205, 0
      %v358 = vsel %vm260, %v206, 0
      %v361 = vsel %vm260, %v207, 0
      %v364 = vsel %vm260, %v208, 0
      %v367 = vsel %vm260, %v209, 0
      %v370 = vsel %vm260, %v210, 0
      %v373 = vsel %vm260, %v211, 0
      %v376 = vsel %vm260, %v212, 0
      %v379 = vsel %vm260, %v213, 0
      %v382 = vsel %vm260, %v214, 0
      %v385 = vsel %vm260, %v215, 0
      %v388 = vsel %vm260, %v216, 0
      %v391 = vsel %vm260, %v217, 0
      %v394 = vsel %vm260, %v218, 0
      %v397 = vsel %vm260, %v219, 0
      %v400 = vsel %vm260, %v220, 0
      %v403 = vsel %vm260, %v221, 0
      %v406 = vsel %vm260, %v222, 0
      %v409 = vsel %vm260, %v223, 0
      %v412 = vsel %vm260, %v224, 0
      %v415 = vsel %vm260, %v225, 0
      %v418 = vsel %vm260, %v226, 0
      %v421 = vsel %vm260, %v227, 0
      %v424 = vsel %vm260, %v228, 0
      %v427 = vsel %vm260, %v229, 0
      %v430 = vsel %vm260, %v230, 0
      %v433 = vsel %vm260, %v231, 0
      %v436 = vsel %vm260, %v232, 0
      %v439 = vsel %vm260, %v233, 0
      %v442 = vsel %vm260, %v234, 0
      %v445 = vsel %vm260, %v235, 0
      %v448 = vsel %vm260, %v236, 0
      %v451 = vsel %vm260, %v237, 0
      %v454 = vsel %vm260, %v238, 0
      %v457 = vsel %vm260, %v239, 0
      %v460 = vsel %vm260, %v240, 0
      %v463 = vsel %vm260, %v241, 0
      %v466 = vsel %vm260, %v242, 0
      %v469 = vsel %vm260, %v243, 0
      %v472 = vsel %vm260, %v244, 0
      %v475 = vsel %vm260, %v245, 0
      %v478 = vsel %vm260, %v246, 0
      %v481 = vsel %vm260, %v247, 0
      %v484 = vsel %vm260, %v248, 0
      %vm486 = vcmask 1042432
      %v488 = vsel %vm486, %v252, 0
      %490 = vmatprep.subr.mxu0 0.0
      %491 = vmatpush1.msra.mxu0 0.0
      %492 = vmatprep.subr.mxu0 0.0
      %493 = vmatpush1.msra.mxu0 0.0
      %494 = vmatprep.subr.mxu0 0.0
      %495 = vmatpush1.msra.mxu0 0.0
      %496 = vmatprep.subr.mxu0 0.0
      %497 = vmatpush1.msra.mxu0 0.0
      %498 = vmatprep.subr.mxu0 0.0
      %499 = vmatpush1.msra.mxu0 0.0
      %500 = vmatprep.subr.mxu0 0.0
      %501 = vmatpush1.msra.mxu0 0.0
      %502 = vmatprep.subr.mxu0 0.0
      %503 = vmatpush1.msra.mxu0 0.0
      %504 = vmatprep.subr.mxu0 0.0
      %505 = vmatpush1.msra.mxu0 0.0
      %506 = vmatprep.subr.mxu0 0.0
      %507 = vmatpush1.msra.mxu0 0.0
      %508 = vmatprep.subr.mxu0 0.0
      %509 = vmatpush1.msra.mxu0 0.0
      %510 = vmatprep.subr.mxu0 0.0
      %511 = vmatpush1.msra.mxu0 0.0
      %512 = vmatprep.subr.mxu0 0.0
      %513 = vmatpush1.msra.mxu0 0.0
      %514 = vmatprep.subr.mxu0 0.0
      %515 = vmatpush1.msra.mxu0 %v488
      %516 = vmatprep.subr.mxu0 0.0
      %517 = vmatpush1.msra.mxu0 %v251
      %518 = vmatprep.subr.mxu0 0.0
      %519 = vmatpush1.msra.mxu0 %v250
      %520 = vmatprep.subr.mxu0 0.0
      %521 = vmatpush1.msra.mxu0 %v249
      %522 = vmatprep.subr.mxu0 0.0
      %523 = vmatpush2.msra.mxu0 0.0
      %524 = vmatprep.subr.mxu0 0.0
      %525 = vmatpush2.msra.mxu0 0.0
      %526 = vmatprep.subr.mxu0 0.0
      %527 = vmatpush2.msra.mxu0 0.0
      %528 = vmatprep.subr.mxu0 0.0
      %529 = vmatpush2.msra.mxu0 0.0
      %530 = vmatprep.subr.mxu0 0.0
      %531 = vmatpush2.msra.mxu0 0.0
      %532 = vmatprep.subr.mxu0 0.0
      %533 = vmatpush2.msra.mxu0 0.0
      %534 = vmatprep.subr.mxu0 0.0
      %535 = vmatpush2.msra.mxu0 0.0
      %536 = vmatprep.subr.mxu0 0.0
      %537 = vmatpush2.msra.mxu0 0.0
      %538 = vmatprep.subr.mxu0 0.0
      %539 = vmatpush2.msra.mxu0 0.0
      %540 = vmatprep.subr.mxu0 0.0
      %541 = vmatpush2.msra.mxu0 0.0
      %542 = vmatprep.subr.mxu0 0.0
      %543 = vmatpush2.msra.mxu0 0.0
      %544 = vmatprep.subr.mxu0 0.0
      %545 = vmatpush2.msra.mxu0 0.0
      %546 = vmatprep.subr.mxu0 0.0
      %547 = vmatpush2.msra.mxu0 0.0
      %548 = vmatprep.subr.mxu0 0.0
      %549 = vmatpush2.msra.mxu0 0.0
      %550 = vmatprep.subr.mxu0 0.0
      %551 = vmatpush2.msra.mxu0 0.0
      %552 = vmatprep.subr.mxu0 0.0
      %553 = vmatpush2.msra.mxu0 0.0
      %554 = vmatprep.mubr.f32.mxu0 0.0
      %555 = vmatmul.mubr.f32.gmra.mxu0 %v262
      %v556 = vpop.f32.mrf.mxu0
      %v557 = vadd.f32 %v258, %v556
      %v558 = vpop.f32.mrf.mxu0
      %559 = vmatprep.mubr.f32.mxu0 0.0
      %560 = vmatmul.mubr.f32.gmra.mxu0 %v265
      %v561 = vpop.f32.mrf.mxu0
      %v562 = vadd.f32 %v258, %v561
      %v563 = vpop.f32.mrf.mxu0
      %564 = vmatprep.mubr.f32.mxu0 0.0
      %565 = vmatmul.mubr.f32.gmra.mxu0 %v268
      %v566 = vpop.f32.mrf.mxu0
      %v567 = vadd.f32 %v258, %v566
      %v568 = vpop.f32.mrf.mxu0
      %569 = vmatprep.mubr.f32.mxu0 0.0
      %570 = vmatmul.mubr.f32.gmra.mxu0 %v271
      %v571 = vpop.f32.mrf.mxu0
      %v572 = vadd.f32 %v258, %v571
      %v573 = vpop.f32.mrf.mxu0
      %574 = vmatprep.mubr.f32.mxu0 0.0
      %575 = vmatmul.mubr.f32.gmra.mxu0 %v274
      %v576 = vpop.f32.mrf.mxu0
      %v577 = vadd.f32 %v258, %v576
      %v578 = vpop.f32.mrf.mxu0
      %579 = vmatprep.mubr.f32.mxu0 0.0
      %580 = vmatmul.mubr.f32.gmra.mxu0 %v277
      %v581 = vpop.f32.mrf.mxu0
      %v582 = vadd.f32 %v258, %v581
      %v583 = vpop.f32.mrf.mxu0
      %584 = vmatprep.mubr.f32.mxu0 0.0
      %585 = vmatmul.mubr.f32.gmra.mxu0 %v280
      %v586 = vpop.f32.mrf.mxu0
      %v587 = vadd.f32 %v258, %v586
      %v588 = vpop.f32.mrf.mxu0
      %589 = vmatprep.mubr.f32.mxu0 0.0
      %590 = vmatmul.mubr.f32.gmra.mxu0 %v283
      %v591 = vpop.f32.mrf.mxu0
      %v592 = vadd.f32 %v258, %v591
      %v593 = vpop.f32.mrf.mxu0
      %594 = vmatprep.mubr.f32.mxu0 0.0
      %595 = vmatmul.mubr.f32.gmra.mxu0 %v286
      %v596 = vpop.f32.mrf.mxu0
      %v597 = vadd.f32 %v258, %v596
      %v598 = vpop.f32.mrf.mxu0
      %599 = vmatprep.mubr.f32.mxu0 0.0
      %600 = vmatmul.mubr.f32.gmra.mxu0 %v289
      %v601 = vpop.f32.mrf.mxu0
      %v602 = vadd.f32 %v258, %v601
      %v603 = vpop.f32.mrf.mxu0
      %604 = vmatprep.mubr.f32.mxu0 0.0
      %605 = vmatmul.mubr.f32.gmra.mxu0 %v292
      %v606 = vpop.f32.mrf.mxu0
      %v607 = vadd.f32 %v258, %v606
      %v608 = vpop.f32.mrf.mxu0
      %609 = vmatprep.mubr.f32.mxu0 0.0
      %610 = vmatmul.mubr.f32.gmra.mxu0 %v295
      %v611 = vpop.f32.mrf.mxu0
      %v612 = vadd.f32 %v258, %v611
      %v613 = vpop.f32.mrf.mxu0
      %614 = vmatprep.mubr.f32.mxu0 0.0
      %615 = vmatmul.mubr.f32.gmra.mxu0 %v298
      %v616 = vpop.f32.mrf.mxu0
      %v617 = vadd.f32 %v258, %v616
      %v618 = vpop.f32.mrf.mxu0
      %619 = vmatprep.mubr.f32.mxu0 0.0
      %620 = vmatmul.mubr.f32.gmra.mxu0 %v301
      %v621 = vpop.f32.mrf.mxu0
      %v622 = vadd.f32 %v258, %v621
      %v623 = vpop.f32.mrf.mxu0
      %624 = vmatprep.mubr.f32.mxu0 0.0
      %625 = vmatmul.mubr.f32.gmra.mxu0 %v304
      %v626 = vpop.f32.mrf.mxu0
      %v627 = vadd.f32 %v258, %v626
      %v628 = vpop.f32.mrf.mxu0
      %629 = vmatprep.mubr.f32.mxu0 0.0
      %630 = vmatmul.mubr.f32.gmra.mxu0 %v307
      %v631 = vpop.f32.mrf.mxu0
      %v632 = vadd.f32 %v258, %v631
      %v633 = vpop.f32.mrf.mxu0
      %634 = vmatprep.mubr.f32.mxu0 0.0
      %635 = vmatmul.mubr.f32.gmra.mxu0 %v310
      %v636 = vpop.f32.mrf.mxu0
      %v637 = vadd.f32 %v258, %v636
      %v638 = vpop.f32.mrf.mxu0
      %639 = vmatprep.mubr.f32.mxu0 0.0
      %640 = vmatmul.mubr.f32.gmra.mxu0 %v313
      %v641 = vpop.f32.mrf.mxu0
      %v642 = vadd.f32 %v258, %v641
      %v643 = vpop.f32.mrf.mxu0
      %644 = vmatprep.mubr.f32.mxu0 0.0
      %645 = vmatmul.mubr.f32.gmra.mxu0 %v316
      %v646 = vpop.f32.mrf.mxu0
      %v647 = vadd.f32 %v258, %v646
      %v648 = vpop.f32.mrf.mxu0
      %649 = vmatprep.mubr.f32.mxu0 0.0
      %650 = vmatmul.mubr.f32.gmra.mxu0 %v319
      %v651 = vpop.f32.mrf.mxu0
      %v652 = vadd.f32 %v258, %v651
      %v653 = vpop.f32.mrf.mxu0
      %654 = vmatprep.mubr.f32.mxu0 0.0
      %655 = vmatmul.mubr.f32.gmra.mxu0 %v322
      %v656 = vpop.f32.mrf.mxu0
      %v657 = vadd.f32 %v258, %v656
      %v658 = vpop.f32.mrf.mxu0
      %659 = vmatprep.mubr.f32.mxu0 0.0
      %660 = vmatmul.mubr.f32.gmra.mxu0 %v325
      %v661 = vpop.f32.mrf.mxu0
      %v662 = vadd.f32 %v258, %v661
      %v663 = vpop.f32.mrf.mxu0
      %664 = vmatprep.mubr.f32.mxu0 0.0
      %665 = vmatmul.mubr.f32.gmra.mxu0 %v328
      %v666 = vpop.f32.mrf.mxu0
      %v667 = vadd.f32 %v258, %v666
      %v668 = vpop.f32.mrf.mxu0
      %669 = vmatprep.mubr.f32.mxu0 0.0
      %670 = vmatmul.mubr.f32.gmra.mxu0 %v331
      %v671 = vpop.f32.mrf.mxu0
      %v672 = vadd.f32 %v258, %v671
      %v673 = vpop.f32.mrf.mxu0
      %674 = vmatprep.mubr.f32.mxu0 0.0
      %675 = vmatmul.mubr.f32.gmra.mxu0 %v334
      %v676 = vpop.f32.mrf.mxu0
      %v677 = vadd.f32 %v258, %v676
      %v678 = vpop.f32.mrf.mxu0
      %679 = vmatprep.mubr.f32.mxu0 0.0
      %680 = vmatmul.mubr.f32.gmra.mxu0 %v337
      %v681 = vpop.f32.mrf.mxu0
      %v682 = vadd.f32 %v258, %v681
      %v683 = vpop.f32.mrf.mxu0
      %684 = vmatprep.mubr.f32.mxu0 0.0
      %685 = vmatmul.mubr.f32.gmra.mxu0 %v340
      %v686 = vpop.f32.mrf.mxu0
      %v687 = vadd.f32 %v258, %v686
      %v688 = vpop.f32.mrf.mxu0
      %689 = vmatprep.mubr.f32.mxu0 0.0
      %690 = vmatmul.mubr.f32.gmra.mxu0 %v343
      %v691 = vpop.f32.mrf.mxu0
      %v692 = vadd.f32 %v258, %v691
      %v693 = vpop.f32.mrf.mxu0
      %694 = vmatprep.mubr.f32.mxu0 0.0
      %695 = vmatmul.mubr.f32.gmra.mxu0 %v346
      %v696 = vpop.f32.mrf.mxu0
      %v697 = vadd.f32 %v258, %v696
      %v698 = vpop.f32.mrf.mxu0
      %699 = vmatprep.mubr.f32.mxu0 0.0
      %700 = vmatmul.mubr.f32.gmra.mxu0 %v349
      %v701 = vpop.f32.mrf.mxu0
      %v702 = vadd.f32 %v258, %v701
      %v703 = vpop.f32.mrf.mxu0
      %704 = vmatprep.mubr.f32.mxu0 0.0
      %705 = vmatmul.mubr.f32.gmra.mxu0 %v352
      %v706 = vpop.f32.mrf.mxu0
      %v707 = vadd.f32 %v258, %v706
      %v708 = vpop.f32.mrf.mxu0
      %709 = vmatprep.mubr.f32.mxu0 0.0
      %710 = vmatmul.mubr.f32.gmra.mxu0 %v355
      %v711 = vpop.f32.mrf.mxu0
      %v712 = vadd.f32 %v258, %v711
      %v713 = vpop.f32.mrf.mxu0
      %714 = vmatprep.mubr.f32.mxu0 0.0
      %715 = vmatmul.mubr.f32.gmra.mxu0 %v358
      %v716 = vpop.f32.mrf.mxu0
      %v717 = vadd.f32 %v258, %v716
      %v718 = vpop.f32.mrf.mxu0
      %719 = vmatprep.mubr.f32.mxu0 0.0
      %720 = vmatmul.mubr.f32.gmra.mxu0 %v361
      %v721 = vpop.f32.mrf.mxu0
      %v722 = vadd.f32 %v258, %v721
      %v723 = vpop.f32.mrf.mxu0
      %724 = vmatprep.mubr.f32.mxu0 0.0
      %725 = vmatmul.mubr.f32.gmra.mxu0 %v364
      %v726 = vpop.f32.mrf.mxu0
      %v727 = vadd.f32 %v258, %v726
      %v728 = vpop.f32.mrf.mxu0
      %729 = vmatprep.mubr.f32.mxu0 0.0
      %730 = vmatmul.mubr.f32.gmra.mxu0 %v367
      %v731 = vpop.f32.mrf.mxu0
      %v732 = vadd.f32 %v258, %v731
      %v733 = vpop.f32.mrf.mxu0
      %734 = vmatprep.mubr.f32.mxu0 0.0
      %735 = vmatmul.mubr.f32.gmra.mxu0 %v370
      %v736 = vpop.f32.mrf.mxu0
      %v737 = vadd.f32 %v258, %v736
      %v738 = vpop.f32.mrf.mxu0
      %739 = vmatprep.mubr.f32.mxu0 0.0
      %740 = vmatmul.mubr.f32.gmra.mxu0 %v373
      %v741 = vpop.f32.mrf.mxu0
      %v742 = vadd.f32 %v258, %v741
      %v743 = vpop.f32.mrf.mxu0
      %744 = vmatprep.mubr.f32.mxu0 0.0
      %745 = vmatmul.mubr.f32.gmra.mxu0 %v376
      %v746 = vpop.f32.mrf.mxu0
      %v747 = vadd.f32 %v258, %v746
      %v748 = vpop.f32.mrf.mxu0
      %749 = vmatprep.mubr.f32.mxu0 0.0
      %750 = vmatmul.mubr.f32.gmra.mxu0 %v379
      %v751 = vpop.f32.mrf.mxu0
      %v752 = vadd.f32 %v258, %v751
      %v753 = vpop.f32.mrf.mxu0
      %754 = vmatprep.mubr.f32.mxu0 0.0
      %755 = vmatmul.mubr.f32.gmra.mxu0 %v382
      %v756 = vpop.f32.mrf.mxu0
      %v757 = vadd.f32 %v258, %v756
      %v758 = vpop.f32.mrf.mxu0
      %759 = vmatprep.mubr.f32.mxu0 0.0
      %760 = vmatmul.mubr.f32.gmra.mxu0 %v385
      %v761 = vpop.f32.mrf.mxu0
      %v762 = vadd.f32 %v258, %v761
      %v763 = vpop.f32.mrf.mxu0
      %764 = vmatprep.mubr.f32.mxu0 0.0
      %765 = vmatmul.mubr.f32.gmra.mxu0 %v388
      %v766 = vpop.f32.mrf.mxu0
      %v767 = vadd.f32 %v258, %v766
      %v768 = vpop.f32.mrf.mxu0
      %769 = vmatprep.mubr.f32.mxu0 0.0
      %770 = vmatmul.mubr.f32.gmra.mxu0 %v391
      %v771 = vpop.f32.mrf.mxu0
      %v772 = vadd.f32 %v258, %v771
      %v773 = vpop.f32.mrf.mxu0
      %774 = vmatprep.mubr.f32.mxu0 0.0
      %775 = vmatmul.mubr.f32.gmra.mxu0 %v394
      %v776 = vpop.f32.mrf.mxu0
      %v777 = vadd.f32 %v258, %v776
      %v778 = vpop.f32.mrf.mxu0
      %779 = vmatprep.mubr.f32.mxu0 0.0
      %780 = vmatmul.mubr.f32.gmra.mxu0 %v397
      %v781 = vpop.f32.mrf.mxu0
      %v782 = vadd.f32 %v258, %v781
      %v783 = vpop.f32.mrf.mxu0
      %784 = vmatprep.mubr.f32.mxu0 0.0
      %785 = vmatmul.mubr.f32.gmra.mxu0 %v400
      %v786 = vpop.f32.mrf.mxu0
      %v787 = vadd.f32 %v258, %v786
      %v788 = vpop.f32.mrf.mxu0
      %789 = vmatprep.mubr.f32.mxu0 0.0
      %790 = vmatmul.mubr.f32.gmra.mxu0 %v403
      %v791 = vpop.f32.mrf.mxu0
      %v792 = vadd.f32 %v258, %v791
      %v793 = vpop.f32.mrf.mxu0
      %794 = vmatprep.mubr.f32.mxu0 0.0
      %795 = vmatmul.mubr.f32.gmra.mxu0 %v406
      %v796 = vpop.f32.mrf.mxu0
      %v797 = vadd.f32 %v258, %v796
      %v798 = vpop.f32.mrf.mxu0
      %799 = vmatprep.mubr.f32.mxu0 0.0
      %800 = vmatmul.mubr.f32.gmra.mxu0 %v409
      %v801 = vpop.f32.mrf.mxu0
      %v802 = vadd.f32 %v258, %v801
      %v803 = vpop.f32.mrf.mxu0
      %804 = vmatprep.mubr.f32.mxu0 0.0
      %805 = vmatmul.mubr.f32.gmra.mxu0 %v412
      %v806 = vpop.f32.mrf.mxu0
      %v807 = vadd.f32 %v258, %v806
      %v808 = vpop.f32.mrf.mxu0
      %809 = vmatprep.mubr.f32.mxu0 0.0
      %810 = vmatmul.mubr.f32.gmra.mxu0 %v415
      %v811 = vpop.f32.mrf.mxu0
      %v812 = vadd.f32 %v258, %v811
      %v813 = vpop.f32.mrf.mxu0
      %814 = vmatprep.mubr.f32.mxu0 0.0
      %815 = vmatmul.mubr.f32.gmra.mxu0 %v418
      %v816 = vpop.f32.mrf.mxu0
      %v817 = vadd.f32 %v258, %v816
      %v818 = vpop.f32.mrf.mxu0
      %819 = vmatprep.mubr.f32.mxu0 0.0
      %820 = vmatmul.mubr.f32.gmra.mxu0 %v421
      %v821 = vpop.f32.mrf.mxu0
      %v822 = vadd.f32 %v258, %v821
      %v823 = vpop.f32.mrf.mxu0
      %824 = vmatprep.mubr.f32.mxu0 0.0
      %825 = vmatmul.mubr.f32.gmra.mxu0 %v424
      %v826 = vpop.f32.mrf.mxu0
      %v827 = vadd.f32 %v258, %v826
      %v828 = vpop.f32.mrf.mxu0
      %829 = vmatprep.mubr.f32.mxu0 0.0
      %830 = vmatmul.mubr.f32.gmra.mxu0 %v427
      %v831 = vpop.f32.mrf.mxu0
      %v832 = vadd.f32 %v258, %v831
      %v833 = vpop.f32.mrf.mxu0
      %834 = vmatprep.mubr.f32.mxu0 0.0
      %835 = vmatmul.mubr.f32.gmra.mxu0 %v430
      %v836 = vpop.f32.mrf.mxu0
      %v837 = vadd.f32 %v258, %v836
      %v838 = vpop.f32.mrf.mxu0
      %839 = vmatprep.mubr.f32.mxu0 0.0
      %840 = vmatmul.mubr.f32.gmra.mxu0 %v433
      %v841 = vpop.f32.mrf.mxu0
      %v842 = vadd.f32 %v258, %v841
      %v843 = vpop.f32.mrf.mxu0
      %844 = vmatprep.mubr.f32.mxu0 0.0
      %845 = vmatmul.mubr.f32.gmra.mxu0 %v436
      %v846 = vpop.f32.mrf.mxu0
      %v847 = vadd.f32 %v258, %v846
      %v848 = vpop.f32.mrf.mxu0
      %849 = vmatprep.mubr.f32.mxu0 0.0
      %850 = vmatmul.mubr.f32.gmra.mxu0 %v439
      %v851 = vpop.f32.mrf.mxu0
      %v852 = vadd.f32 %v258, %v851
      %v853 = vpop.f32.mrf.mxu0
      %854 = vmatprep.mubr.f32.mxu0 0.0
      %855 = vmatmul.mubr.f32.gmra.mxu0 %v442
      %v856 = vpop.f32.mrf.mxu0
      %v857 = vadd.f32 %v258, %v856
      %v858 = vpop.f32.mrf.mxu0
      %859 = vmatprep.mubr.f32.mxu0 0.0
      %860 = vmatmul.mubr.f32.gmra.mxu0 %v445
      %v861 = vpop.f32.mrf.mxu0
      %v862 = vadd.f32 %v258, %v861
      %v863 = vpop.f32.mrf.mxu0
      %864 = vmatprep.mubr.f32.mxu0 0.0
      %865 = vmatmul.mubr.f32.gmra.mxu0 %v448
      %v866 = vpop.f32.mrf.mxu0
      %v867 = vadd.f32 %v258, %v866
      %v868 = vpop.f32.mrf.mxu0
      %869 = vmatprep.mubr.f32.mxu0 0.0
      %870 = vmatmul.mubr.f32.gmra.mxu0 %v451
      %v871 = vpop.f32.mrf.mxu0
      %v872 = vadd.f32 %v258, %v871
      %v873 = vpop.f32.mrf.mxu0
      %874 = vmatprep.mubr.f32.mxu0 0.0
      %875 = vmatmul.mubr.f32.gmra.mxu0 %v454
      %v876 = vpop.f32.mrf.mxu0
      %v877 = vadd.f32 %v258, %v876
      %v878 = vpop.f32.mrf.mxu0
      %879 = vmatprep.mubr.f32.mxu0 0.0
      %880 = vmatmul.mubr.f32.gmra.mxu0 %v457
      %v881 = vpop.f32.mrf.mxu0
      %v882 = vadd.f32 %v258, %v881
      %v883 = vpop.f32.mrf.mxu0
      %884 = vmatprep.mubr.f32.mxu0 0.0
      %885 = vmatmul.mubr.f32.gmra.mxu0 %v460
      %v886 = vpop.f32.mrf.mxu0
      %v887 = vadd.f32 %v258, %v886
      %v888 = vpop.f32.mrf.mxu0
      %889 = vmatprep.mubr.f32.mxu0 0.0
      %890 = vmatmul.mubr.f32.gmra.mxu0 %v463
      %v891 = vpop.f32.mrf.mxu0
      %v892 = vadd.f32 %v258, %v891
      %v893 = vpop.f32.mrf.mxu0
      %894 = vmatprep.mubr.f32.mxu0 0.0
      %895 = vmatmul.mubr.f32.gmra.mxu0 %v466
      %v896 = vpop.f32.mrf.mxu0
      %v897 = vadd.f32 %v258, %v896
      %v898 = vpop.f32.mrf.mxu0
      %899 = vmatprep.mubr.f32.mxu0 0.0
      %900 = vmatmul.mubr.f32.gmra.mxu0 %v469
      %v901 = vpop.f32.mrf.mxu0
      %v902 = vadd.f32 %v258, %v901
      %v903 = vpop.f32.mrf.mxu0
      %904 = vmatprep.mubr.f32.mxu0 0.0
      %905 = vmatmul.mubr.f32.gmra.mxu0 %v472
      %v906 = vpop.f32.mrf.mxu0
      %v907 = vadd.f32 %v258, %v906
      %v908 = vpop.f32.mrf.mxu0
      %909 = vmatprep.mubr.f32.mxu0 0.0
      %910 = vmatmul.mubr.f32.gmra.mxu0 %v475
      %v911 = vpop.f32.mrf.mxu0
      %v912 = vadd.f32 %v258, %v911
      %v913 = vpop.f32.mrf.mxu0
      %914 = vmatprep.mubr.f32.mxu0 0.0
      %915 = vmatmul.mubr.f32.gmra.mxu0 %v478
      %v916 = vpop.f32.mrf.mxu0
      %v917 = vadd.f32 %v258, %v916
      %v918 = vpop.f32.mrf.mxu0
      %919 = vmatprep.mubr.f32.mxu0 0.0
      %920 = vmatmul.mubr.f32.gmra.mxu0 %v481
      %v921 = vpop.f32.mrf.mxu0
      %v922 = vadd.f32 %v258, %v921
      %v923 = vpop.f32.mrf.mxu0
      %924 = vmatprep.mubr.f32.mxu0 0.0
      %925 = vmatmul.mubr.f32.gmra.mxu0 %v484
      %v926 = vpop.f32.mrf.mxu0
      %v927 = vadd.f32 %v258, %v926
      %v928 = vpop.f32.mrf.mxu0
      %929 = vdwg.mxu0
      %v930 = vmax.f32 %v557, 0.0
      %v931 = vmax.f32 %v562, 0.0
      %v932 = vmax.f32 %v567, 0.0
      %v933 = vmax.f32 %v572, 0.0
      %v934 = vmax.f32 %v577, 0.0
      %v935 = vmax.f32 %v582, 0.0
      %v936 = vmax.f32 %v587, 0.0
      %v937 = vmax.f32 %v592, 0.0
      %v938 = vmax.f32 %v597, 0.0
      %v939 = vmax.f32 %v602, 0.0
      %v940 = vmax.f32 %v607, 0.0
      %v941 = vmax.f32 %v612, 0.0
      %v942 = vmax.f32 %v617, 0.0
      %v943 = vmax.f32 %v622, 0.0
      %v944 = vmax.f32 %v627, 0.0
      %v945 = vmax.f32 %v632, 0.0
      %v946 = vmax.f32 %v637, 0.0
      %v947 = vmax.f32 %v642, 0.0
      %v948 = vmax.f32 %v647, 0.0
      %v949 = vmax.f32 %v652, 0.0
      %v950 = vmax.f32 %v657, 0.0
      %v951 = vmax.f32 %v662, 0.0
      %v952 = vmax.f32 %v667, 0.0
      %v953 = vmax.f32 %v672, 0.0
      %v954 = vmax.f32 %v677, 0.0
      %v955 = vmax.f32 %v682, 0.0
      %v956 = vmax.f32 %v687, 0.0
      %v957 = vmax.f32 %v692, 0.0
      %v958 = vmax.f32 %v697, 0.0
      %v959 = vmax.f32 %v702, 0.0
      %v960 = vmax.f32 %v707, 0.0
      %v961 = vmax.f32 %v712, 0.0
      %v962 = vmax.f32 %v717, 0.0
      %v963 = vmax.f32 %v722, 0.0
      %v964 = vmax.f32 %v727, 0.0
      %v965 = vmax.f32 %v732, 0.0
      %v966 = vmax.f32 %v737, 0.0
      %v967 = vmax.f32 %v742, 0.0
      %v968 = vmax.f32 %v747, 0.0
      %v969 = vmax.f32 %v752, 0.0
      %v970 = vmax.f32 %v757, 0.0
      %v971 = vmax.f32 %v762, 0.0
      %v972 = vmax.f32 %v767, 0.0
      %v973 = vmax.f32 %v772, 0.0
      %v974 = vmax.f32 %v777, 0.0
      %v975 = vmax.f32 %v782, 0.0
      %v976 = vmax.f32 %v787, 0.0
      %v977 = vmax.f32 %v792, 0.0
      %v978 = vmax.f32 %v797, 0.0
      %v979 = vmax.f32 %v802, 0.0
      %v980 = vmax.f32 %v807, 0.0
      %v981 = vmax.f32 %v812, 0.0
      %v982 = vmax.f32 %v817, 0.0
      %v983 = vmax.f32 %v822, 0.0
      %v984 = vmax.f32 %v827, 0.0
      %v985 = vmax.f32 %v832, 0.0
      %v986 = vmax.f32 %v837, 0.0
      %v987 = vmax.f32 %v842, 0.0
      %v988 = vmax.f32 %v847, 0.0
      %v989 = vmax.f32 %v852, 0.0
      %v990 = vmax.f32 %v857, 0.0
      %v991 = vmax.f32 %v862, 0.0
      %v992 = vmax.f32 %v867, 0.0
      %v993 = vmax.f32 %v872, 0.0
      %v994 = vmax.f32 %v877, 0.0
      %v995 = vmax.f32 %v882, 0.0
      %v996 = vmax.f32 %v887, 0.0
      %v997 = vmax.f32 %v892, 0.0
      %v998 = vmax.f32 %v897, 0.0
      %v999 = vmax.f32 %v902, 0.0
      %v1000 = vmax.f32 %v907, 0.0
      %v1001 = vmax.f32 %v912, 0.0
      %v1002 = vmax.f32 %v917, 0.0
      %v1003 = vmax.f32 %v922, 0.0
      %v1004 = vmax.f32 %v927, 0.0
      %vm1005 = vcmask 785408
      %1006 = vst.msk [vmem:[%s172] sm:$0xff] %vm1005, %v930
      %1007 = vst.msk [vmem:[%s172 + $0x8] sm:$0xff] %vm1005, %v931
      %1008 = vst.msk [vmem:[%s172 + $0x10] sm:$0xff] %vm1005, %v932
      %1009 = vst.msk [vmem:[%s172 + $0x18] sm:$0xff] %vm1005, %v933
      %1010 = vst.msk [vmem:[%s172 + $0x20] sm:$0xff] %vm1005, %v934
      %1011 = vst.msk [vmem:[%s172 + $0x28] sm:$0xff] %vm1005, %v935
      %1012 = vst.msk [vmem:[%s172 + $0x30] sm:$0xff] %vm1005, %v936
      %1013 = vst.msk [vmem:[%s172 + $0x38] sm:$0xff] %vm1005, %v937
      %1014 = vst.msk [vmem:[%s172 + $0x40] sm:$0xff] %vm1005, %v938
      %1015 = vst.msk [vmem:[%s172 + $0x48] sm:$0xff] %vm1005, %v939
      %1016 = vst.msk [vmem:[%s172 + $0x50] sm:$0xff] %vm1005, %v940
      %1017 = vst.msk [vmem:[%s172 + $0x58] sm:$0xff] %vm1005, %v941
      %1018 = vst.msk [vmem:[%s172 + $0x60] sm:$0xff] %vm1005, %v942
      %1019 = vst.msk [vmem:[%s172 + $0x68] sm:$0xff] %vm1005, %v943
      %1020 = vst.msk [vmem:[%s172 + $0x70] sm:$0xff] %vm1005, %v944
      %1021 = vst.msk [vmem:[%s172 + $0x78] sm:$0xff] %vm1005, %v945
      %1022 = vst.msk [vmem:[%s172 + $0x80] sm:$0xff] %vm1005, %v946
      %1023 = vst.msk [vmem:[%s172 + $0x88] sm:$0xff] %vm1005, %v947
      %1024 = vst.msk [vmem:[%s172 + $0x90] sm:$0xff] %vm1005, %v948
      %1025 = vst.msk [vmem:[%s172 + $0x98] sm:$0xff] %vm1005, %v949
      %1026 = vst.msk [vmem:[%s172 + $0xa0] sm:$0xff] %vm1005, %v950
      %1027 = vst.msk [vmem:[%s172 + $0xa8] sm:$0xff] %vm1005, %v951
      %1028 = vst.msk [vmem:[%s172 + $0xb0] sm:$0xff] %vm1005, %v952
      %1029 = vst.msk [vmem:[%s172 + $0xb8] sm:$0xff] %vm1005, %v953
      %1030 = vst.msk [vmem:[%s172 + $0xc0] sm:$0xff] %vm1005, %v954
      %1031 = vst.msk [vmem:[%s172 + $0xc8] sm:$0xff] %vm1005, %v955
      %1032 = vst.msk [vmem:[%s172 + $0xd0] sm:$0xff] %vm1005, %v956
      %1033 = vst.msk [vmem:[%s172 + $0xd8] sm:$0xff] %vm1005, %v957
      %1034 = vst.msk [vmem:[%s172 + $0xe0] sm:$0xff] %vm1005, %v958
      %1035 = vst.msk [vmem:[%s172 + $0xe8] sm:$0xff] %vm1005, %v959
      %1036 = vst.msk [vmem:[%s172 + $0xf0] sm:$0xff] %vm1005, %v960
      %1037 = vst.msk [vmem:[%s172 + $0xf8] sm:$0xff] %vm1005, %v961
      %1038 = vst.msk [vmem:[%s172 + $0x100] sm:$0xff] %vm1005, %v962
      %1039 = vst.msk [vmem:[%s172 + $0x108] sm:$0xff] %vm1005, %v963
      %1040 = vst.msk [vmem:[%s172 + $0x110] sm:$0xff] %vm1005, %v964
      %1041 = vst.msk [vmem:[%s172 + $0x118] sm:$0xff] %vm1005, %v965
      %1042 = vst.msk [vmem:[%s172 + $0x120] sm:$0xff] %vm1005, %v966
      %1043 = vst.msk [vmem:[%s172 + $0x128] sm:$0xff] %vm1005, %v967
      %1044 = vst.msk [vmem:[%s172 + $0x130] sm:$0xff] %vm1005, %v968
      %1045 = vst.msk [vmem:[%s172 + $0x138] sm:$0xff] %vm1005, %v969
      %1046 = vst.msk [vmem:[%s172 + $0x140] sm:$0xff] %vm1005, %v970
      %1047 = vst.msk [vmem:[%s172 + $0x148] sm:$0xff] %vm1005, %v971
      %1048 = vst.msk [vmem:[%s172 + $0x150] sm:$0xff] %vm1005, %v972
      %1049 = vst.msk [vmem:[%s172 + $0x158] sm:$0xff] %vm1005, %v973
      %1050 = vst.msk [vmem:[%s172 + $0x160] sm:$0xff] %vm1005, %v974
      %1051 = vst.msk [vmem:[%s172 + $0x168] sm:$0xff] %vm1005, %v975
      %1052 = vst.msk [vmem:[%s172 + $0x170] sm:$0xff] %vm1005, %v976
      %1053 = vst.msk [vmem:[%s172 + $0x178] sm:$0xff] %vm1005, %v977
      %1054 = vst.msk [vmem:[%s172 + $0x180] sm:$0xff] %vm1005, %v978
      %1055 = vst.msk [vmem:[%s172 + $0x188] sm:$0xff] %vm1005, %v979
      %1056 = vst.msk [vmem:[%s172 + $0x190] sm:$0xff] %vm1005, %v980
      %1057 = vst.msk [vmem:[%s172 + $0x198] sm:$0xff] %vm1005, %v981
      %1058 = vst.msk [vmem:[%s172 + $0x1a0] sm:$0xff] %vm1005, %v982
      %1059 = vst.msk [vmem:[%s172 + $0x1a8] sm:$0xff] %vm1005, %v983
      %1060 = vst.msk [vmem:[%s172 + $0x1b0] sm:$0xff] %vm1005, %v984
      %1061 = vst.msk [vmem:[%s172 + $0x1b8] sm:$0xff] %vm1005, %v985
      %1062 = vst.msk [vmem:[%s172 + $0x1c0] sm:$0xff] %vm1005, %v986
      %1063 = vst.msk [vmem:[%s172 + $0x1c8] sm:$0xff] %vm1005, %v987
      %1064 = vst.msk [vmem:[%s172 + $0x1d0] sm:$0xff] %vm1005, %v988
      %1065 = vst.msk [vmem:[%s172 + $0x1d8] sm:$0xff] %vm1005, %v989
      %1066 = vst.msk [vmem:[%s172 + $0x1e0] sm:$0xff] %vm1005, %v990
      %1067 = vst.msk [vmem:[%s172 + $0x1e8] sm:$0xff] %vm1005, %v991
      %1068 = vst.msk [vmem:[%s172 + $0x1f0] sm:$0xff] %vm1005, %v992
      %1069 = vst.msk [vmem:[%s172 + $0x1f8] sm:$0xff] %vm1005, %v993
      %1070 = vst.msk [vmem:[%s172 + $0x200] sm:$0xff] %vm1005, %v994
      %1071 = vst.msk [vmem:[%s172 + $0x208] sm:$0xff] %vm1005, %v995
      %1072 = vst.msk [vmem:[%s172 + $0x210] sm:$0xff] %vm1005, %v996
      %1073 = vst.msk [vmem:[%s172 + $0x218] sm:$0xff] %vm1005, %v997
      %1074 = vst.msk [vmem:[%s172 + $0x220] sm:$0xff] %vm1005, %v998
      %1075 = vst.msk [vmem:[%s172 + $0x228] sm:$0xff] %vm1005, %v999
      %1076 = vst.msk [vmem:[%s172 + $0x230] sm:$0xff] %vm1005, %v1000
      %1077 = vst.msk [vmem:[%s172 + $0x238] sm:$0xff] %vm1005, %v1001
      %1078 = vst.msk [vmem:[%s172 + $0x240] sm:$0xff] %vm1005, %v1002
      %1079 = vst.msk [vmem:[%s172 + $0x248] sm:$0xff] %vm1005, %v1003
      %1080 = vst.msk [vmem:[%s172 + $0x250] sm:$0xff] %vm1005, %v1004
      %s1081 = smul.u32 75, %s14
      %p1082 = scmp.lt.s32.totalorder %s1081, 224
      %s1083 = scalar_select %p1082, %s1081, 224
      %s1084 = smul.addr %s1083, 8
      %s1085 = scalar_lea.vmem %s3, %s1084
      // Predicated region
      $region33: #{network_phi_forward.4} parent=31 // pred_check
        %p1086 = pneg %p100
      $region34: #{network_phi_forward.4} parent=31 // pred_check_branch
        %1088 = sbr.rel (%p1086) target = $region36
      $region35: #{network_phi_forward.4} parent=31 // pred_region
        %s1089 = smul.u32 75, %s14
      $region36: #{network_phi_forward.4} parent=31 // pred_fallthru
        _
    $region32: #{network_phi_forward.4} parent=5 // pred_fallthru
      _
    %p1090 = scmp.le.s32.totalorder 2, %s9
    // Predicated region
    $region37: #{network_phi_forward.4} parent=5 // pred_check
      %p1091 = pneg %p1090
    $region38: #{network_phi_forward.4} parent=5 // pred_check_branch
      %1093 = sbr.rel (%p1091) target = $region40
    $region39: #{network_phi_forward.4} parent=5 // pred_region
      %s1094 = ssub.s32 %s9, 2
      // Predicated region
      $region41: #{network_phi_forward.4} parent=39 // pred_check
        %p1095 = pneg %p106
      $region42: #{network_phi_forward.4} parent=39 // pred_check_branch
        %1097 = sbr.rel (%p1095) target = $region44
      $region43: #{network_phi_forward.4} parent=39 // pred_region
        %s1098 = smul.u32 75, %s15
        %p1099 = scmp.lt.s32.totalorder %s1098, 224
        %s1100 = scalar_select %p1099, %s1098, 224
        %s1101 = smul.addr %s1100, 8
        %s1102 = scalar_lea.vmem %s3, %s1101
      $region44: #{network_phi_forward.4} parent=39 // pred_fallthru
        _
    $region40: #{network_phi_forward.4} parent=5 // pred_fallthru
      _
  $region6: #{network_phi_forward.4} parent=0 // loop_footer
    %s13 = sadd.s32 1, %s9
  $region7: #{network_phi_forward.4} parent=0 // loop_footer_branch
    %8 = sbr.rel target = $region3
  $region8: #{network_phi_forward.4} parent=0 // loop_exit
    _

// kernel: network_phi_forward.5
$region0: #{network_phi_forward.5}
  #allocation0 [shape = 'u32[]', space=smem, size = 0x4, offset = 0x4, fixed_abs, tag = 'smem constant byte address 0x4 - core index']
  #allocation1 [shape = 'u32[144,128]{1,0:T(1,128)}', space=vmem, size = 0x12000, scoped, tag = 'internal scratch']
  %s0 = inlined_call_operand.vmem [shape: f32[392,864], index: 0, kind: input, shape index: {}]
  %s1 = inlined_call_operand.vmem [shape: f32[864,96], index: 1, kind: input, shape index: {}]
  %s2 = inlined_call_operand.vmem [shape: f32[1,96], index: 2, kind: input, shape index: {}]
  %s3 = inlined_call_operand.vmem [shape: f32[392,96], index: 3, kind: output, shape index: {}]
  %s4 = sld [smem:[#allocation0]]
  $region22: #{network_phi_forward.5} parent=0
    _
  %s6 = ssub.s32 1, %s4
  %s7 = scalar_select 0, %s6, %s4
  // Predicated region
  $region2: #{network_phi_forward.5} parent=0 // pred_check
    _
  $region3: #{network_phi_forward.5} parent=0 // pred_check_branch
    %9 = sbr.rel (0) target = $region5
  $region4: #{network_phi_forward.5} parent=0 // pred_region
    _
  $region5: #{network_phi_forward.5} parent=0 // pred_fallthru
    _
  // Predicated region
  $region6: #{network_phi_forward.5} parent=0 // pred_check
    _
  $region7: #{network_phi_forward.5} parent=0 // pred_check_branch
    %11 = sbr.rel (0) target = $region9
  $region8: #{network_phi_forward.5} parent=0 // pred_region
    _
  $region9: #{network_phi_forward.5} parent=0 // pred_fallthru
    _
  // Predicated region
  $region10: #{network_phi_forward.5} parent=0 // pred_check
    _
  $region11: #{network_phi_forward.5} parent=0 // pred_check_branch
    %13 = sbr.rel (0) target = $region13
  $region12: #{network_phi_forward.5} parent=0 // pred_region
    _
  $region13: #{network_phi_forward.5} parent=0 // pred_fallthru
    _
  %v14 = vld [vmem:[%s0] sm:$0xff]
  %v15 = vld [vmem:[%s0 + $0x8] sm:$0xff]
  %v16 = vld [vmem:[%s0 + $0x10] sm:$0xff]
  %v17 = vld [vmem:[%s0 + $0x18] sm:$0xff]
  %v18 = vld [vmem:[%s0 + $0x20] sm:$0xff]
  %v19 = vld [vmem:[%s0 + $0x28] sm:$0xff]
  %v20 = vld [vmem:[%s0 + $0x30] sm:$0xff]
  %v21 = vld [vmem:[%s0 + $0x38] sm:$0xff]
  %v22 = vld [vmem:[%s0 + $0x40] sm:$0xff]
  %v23 = vld [vmem:[%s0 + $0x48] sm:$0xff]
  %v24 = vld [vmem:[%s0 + $0x50] sm:$0xff]
  %v25 = vld [vmem:[%s0 + $0x58] sm:$0xff]
  %v26 = vld [vmem:[%s0 + $0x60] sm:$0xff]
  %v27 = vld [vmem:[%s0 + $0x68] sm:$0xff]
  %v28 = vld [vmem:[%s0 + $0x70] sm:$0xff]
  %v29 = vld [vmem:[%s0 + $0x78] sm:$0xff]
  %v30 = vld [vmem:[%s0 + $0x80] sm:$0xff]
  %v31 = vld [vmem:[%s0 + $0x88] sm:$0xff]
  %v32 = vld [vmem:[%s0 + $0x90] sm:$0xff]
  %v33 = vld [vmem:[%s0 + $0x98] sm:$0xff]
  %v34 = vld [vmem:[%s0 + $0xa0] sm:$0xff]
  %v35 = vld [vmem:[%s0 + $0xa8] sm:$0xff]
  %v36 = vld [vmem:[%s0 + $0xb0] sm:$0xff]
  %v37 = vld [vmem:[%s0 + $0xb8] sm:$0xff]
  %v38 = vld [vmem:[%s0 + $0xc0] sm:$0xff]
  %v39 = vld [vmem:[%s0 + $0xc8] sm:$0xff]
  %v40 = vld [vmem:[%s0 + $0xd0] sm:$0xff]
  %v41 = vld [vmem:[%s0 + $0xd8] sm:$0xff]
  %v42 = vld [vmem:[%s0 + $0xe0] sm:$0xff]
  %v43 = vld [vmem:[%s0 + $0xe8] sm:$0xff]
  %v44 = vld [vmem:[%s0 + $0xf0] sm:$0xff]
  %v45 = vld [vmem:[%s0 + $0xf8] sm:$0xff]
  %v46 = vld [vmem:[%s0 + $0x100] sm:$0xff]
  %v47 = vld [vmem:[%s0 + $0x108] sm:$0xff]
  %v48 = vld [vmem:[%s0 + $0x110] sm:$0xff]
  %v49 = vld [vmem:[%s0 + $0x118] sm:$0xff]
  %v50 = vld [vmem:[%s0 + $0x120] sm:$0xff]
  %v51 = vld [vmem:[%s0 + $0x128] sm:$0xff]
  %v52 = vld [vmem:[%s0 + $0x130] sm:$0xff]
  %v53 = vld [vmem:[%s0 + $0x138] sm:$0xff]
  %v54 = vld [vmem:[%s0 + $0x140] sm:$0xff]
  %v55 = vld [vmem:[%s0 + $0x148] sm:$0xff]
  %v56 = vld [vmem:[%s0 + $0x150] sm:$0xff]
  %v57 = vld [vmem:[%s0 + $0x158] sm:$0xff]
  %v58 = vld [vmem:[%s0 + $0x160] sm:$0xff]
  %v59 = vld [vmem:[%s0 + $0x168] sm:$0xff]
  %v60 = vld [vmem:[%s0 + $0x170] sm:$0xff]
  %v61 = vld [vmem:[%s0 + $0x178] sm:$0xff]
  %v62 = vld [vmem:[%s0 + $0x180] sm:$0xff]
  %v63 = vld [vmem:[%s0 + $0x188] sm:$0xff]
  %v64 = vld [vmem:[%s0 + $0x190] sm:$0xff]
  %v65 = vld [vmem:[%s0 + $0x198] sm:$0xff]
  %v66 = vld [vmem:[%s0 + $0x1a0] sm:$0xff]
  %v67 = vld [vmem:[%s0 + $0x1a8] sm:$0xff]
  %v68 = vld [vmem:[%s0 + $0x1b0] sm:$0xff]
  %v69 = vld [vmem:[%s0 + $0x1b8] sm:$0xff]
  %v70 = vld [vmem:[%s0 + $0x1c0] sm:$0xff]
  %v71 = vld [vmem:[%s0 + $0x1c8] sm:$0xff]
  %v72 = vld [vmem:[%s0 + $0x1d0] sm:$0xff]
  %v73 = vld [vmem:[%s0 + $0x1d8] sm:$0xff]
  %v74 = vld [vmem:[%s0 + $0x1e0] sm:$0xff]
  %v75 = vld [vmem:[%s0 + $0x1e8] sm:$0xff]
  %v76 = vld [vmem:[%s0 + $0x1f0] sm:$0xff]
  %v77 = vld [vmem:[%s0 + $0x1f8] sm:$0xff]
  %v78 = vld [vmem:[%s0 + $0x200] sm:$0xff]
  %v79 = vld [vmem:[%s0 + $0x208] sm:$0xff]
  %v80 = vld [vmem:[%s0 + $0x210] sm:$0xff]
  %v81 = vld [vmem:[%s0 + $0x218] sm:$0xff]
  %v82 = vld [vmem:[%s0 + $0x220] sm:$0xff]
  %v83 = vld [vmem:[%s0 + $0x228] sm:$0xff]
  %v84 = vld [vmem:[%s0 + $0x230] sm:$0xff]
  %v85 = vld [vmem:[%s0 + $0x238] sm:$0xff]
  %v86 = vld [vmem:[%s0 + $0x240] sm:$0xff]
  %v87 = vld [vmem:[%s0 + $0x248] sm:$0xff]
  %v88 = vld [vmem:[%s0 + $0x250] sm:$0xff]
  %v89 = vld [vmem:[%s0 + $0x258] sm:$0xff]
  %v90 = vld [vmem:[%s0 + $0x260] sm:$0xff]
  %v91 = vld [vmem:[%s0 + $0x268] sm:$0xff]
  %v92 = vld [vmem:[%s0 + $0x270] sm:$0xff]
  %v93 = vld [vmem:[%s0 + $0x278] sm:$0xff]
  %v94 = vld [vmem:[%s0 + $0x280] sm:$0xff]
  %v95 = vld [vmem:[%s0 + $0x288] sm:$0xff]
  %v96 = vld [vmem:[%s0 + $0x290] sm:$0xff]
  %v97 = vld [vmem:[%s0 + $0x298] sm:$0xff]
  %v98 = vld [vmem:[%s0 + $0x2a0] sm:$0xff]
  %v99 = vld [vmem:[%s0 + $0x2a8] sm:$0xff]
  %v100 = vld [vmem:[%s0 + $0x2b0] sm:$0xff]
  %v101 = vld [vmem:[%s0 + $0x2b8] sm:$0xff]
  %v102 = vld [vmem:[%s0 + $0x2c0] sm:$0xff]
  %v103 = vld [vmem:[%s0 + $0x2c8] sm:$0xff]
  %v104 = vld [vmem:[%s0 + $0x2d0] sm:$0xff]
  %v105 = vld [vmem:[%s0 + $0x2d8] sm:$0xff]
  %v106 = vld [vmem:[%s0 + $0x2e0] sm:$0xff]
  %v107 = vld [vmem:[%s0 + $0x2e8] sm:$0xff]
  %v108 = vld [vmem:[%s0 + $0x2f0] sm:$0xff]
  %v109 = vld [vmem:[%s0 + $0x2f8] sm:$0xff]
  %v110 = vld [vmem:[%s0 + $0x300] sm:$0xff]
  %v111 = vld [vmem:[%s0 + $0x308] sm:$0xff]
  %v112 = vld [vmem:[%s0 + $0x310] sm:$0xff]
  %v113 = vld [vmem:[%s0 + $0x318] sm:$0xff]
  %v114 = vld [vmem:[%s0 + $0x320] sm:$0xff]
  %v115 = vld [vmem:[%s0 + $0x328] sm:$0xff]
  %v116 = vld [vmem:[%s0 + $0x330] sm:$0xff]
  %v117 = vld [vmem:[%s0 + $0x338] sm:$0xff]
  %v118 = vld [vmem:[%s0 + $0x340] sm:$0xff]
  %v119 = vld [vmem:[%s0 + $0x348] sm:$0xff]
  %v120 = vld [vmem:[%s0 + $0x350] sm:$0xff]
  %v121 = vld [vmem:[%s0 + $0x358] sm:$0xff]
  %v122 = vld [vmem:[%s0 + $0x360] sm:$0xff]
  %v123 = vld [vmem:[%s0 + $0x368] sm:$0xff]
  %v124 = vld [vmem:[%s0 + $0x370] sm:$0xff]
  %v125 = vld [vmem:[%s0 + $0x378] sm:$0xff]
  %v126 = vld [vmem:[%s0 + $0x380] sm:$0xff]
  %v127 = vld [vmem:[%s0 + $0x388] sm:$0xff]
  %v128 = vld [vmem:[%s0 + $0x390] sm:$0xff]
  %v129 = vld [vmem:[%s0 + $0x398] sm:$0xff]
  %v130 = vld [vmem:[%s0 + $0x3a0] sm:$0xff]
  %v131 = vld [vmem:[%s0 + $0x3a8] sm:$0xff]
  %v132 = vld [vmem:[%s0 + $0x3b0] sm:$0xff]
  %v133 = vld [vmem:[%s0 + $0x3b8] sm:$0xff]
  %v134 = vld [vmem:[%s0 + $0x3c0] sm:$0xff]
  %v135 = vld [vmem:[%s0 + $0x3c8] sm:$0xff]
  %v136 = vld [vmem:[%s0 + $0x3d0] sm:$0xff]
  %v137 = vld [vmem:[%s0 + $0x3d8] sm:$0xff]
  %v138 = vld [vmem:[%s0 + $0x3e0] sm:$0xff]
  %v139 = vld [vmem:[%s0 + $0x3e8] sm:$0xff]
  %v140 = vld [vmem:[%s0 + $0x3f0] sm:$0xff]
  %v141 = vld [vmem:[%s0 + $0x3f8] sm:$0xff]
  %v142 = vld [vmem:[%s0 + $0x400] sm:$0xff]
  %v143 = vld [vmem:[%s0 + $0x408] sm:$0xff]
  %v144 = vld [vmem:[%s0 + $0x410] sm:$0xff]
  %v145 = vld [vmem:[%s0 + $0x418] sm:$0xff]
  %v146 = vld [vmem:[%s0 + $0x420] sm:$0xff]
  %v147 = vld [vmem:[%s0 + $0x428] sm:$0xff]
  %v148 = vld [vmem:[%s0 + $0x430] sm:$0xff]
  %v149 = vld [vmem:[%s0 + $0x438] sm:$0xff]
  %v150 = vld [vmem:[%s0 + $0x440] sm:$0xff]
  %v151 = vld [vmem:[%s0 + $0x448] sm:$0xff]
  %v152 = vld [vmem:[%s0 + $0x450] sm:$0xff]
  %v153 = vld [vmem:[%s0 + $0x458] sm:$0xff]
  %v154 = vld [vmem:[%s0 + $0x460] sm:$0xff]
  %v155 = vld [vmem:[%s0 + $0x468] sm:$0xff]
  %v156 = vld [vmem:[%s0 + $0x470] sm:$0xff]
  %v157 = vld [vmem:[%s0 + $0x478] sm:$0xff]
  %v158 = vld [vmem:[%s0 + $0x480] sm:$0xff]
  %v159 = vld [vmem:[%s0 + $0x488] sm:$0xff]
  %v160 = vld [vmem:[%s0 + $0x490] sm:$0xff]
  %v161 = vld [vmem:[%s0 + $0x498] sm:$0xff]
  %v162 = vld [vmem:[%s0 + $0x4a0] sm:$0xff]
  %v163 = vld [vmem:[%s0 + $0x4a8] sm:$0xff]
  %v164 = vld [vmem:[%s0 + $0x4b0] sm:$0xff]
  %v165 = vld [vmem:[%s0 + $0x4b8] sm:$0xff]
  %v166 = vld [vmem:[%s0 + $0x4c0] sm:$0xff]
  %v167 = vld [vmem:[%s0 + $0x4c8] sm:$0xff]
  %v168 = vld [vmem:[%s0 + $0x4d0] sm:$0xff]
  %v169 = vld [vmem:[%s0 + $0x4d8] sm:$0xff]
  %v170 = vld [vmem:[%s0 + $0x4e0] sm:$0xff]
  %v171 = vld [vmem:[%s0 + $0x4e8] sm:$0xff]
  %v172 = vld [vmem:[%s0 + $0x4f0] sm:$0xff]
  %v173 = vld [vmem:[%s0 + $0x4f8] sm:$0xff]
  %v174 = vld [vmem:[%s0 + $0x500] sm:$0xff]
  %v175 = vld [vmem:[%s0 + $0x508] sm:$0xff]
  %v176 = vld [vmem:[%s0 + $0x510] sm:$0xff]
  %v177 = vld [vmem:[%s0 + $0x518] sm:$0xff]
  %v178 = vld [vmem:[%s0 + $0x520] sm:$0xff]
  %v179 = vld [vmem:[%s0 + $0x528] sm:$0xff]
  %v180 = vld [vmem:[%s0 + $0x530] sm:$0xff]
  %v181 = vld [vmem:[%s0 + $0x538] sm:$0xff]
  %v182 = vld [vmem:[%s0 + $0x540] sm:$0xff]
  %v183 = vld [vmem:[%s0 + $0x548] sm:$0xff]
  %v184 = vld [vmem:[%s0 + $0x550] sm:$0xff]
  %v185 = vld [vmem:[%s0 + $0x558] sm:$0xff]
  %v186 = vld [vmem:[%s0 + $0x560] sm:$0xff]
  %v187 = vld [vmem:[%s0 + $0x568] sm:$0xff]
  %v188 = vld [vmem:[%s0 + $0x570] sm:$0xff]
  %v189 = vld [vmem:[%s0 + $0x578] sm:$0xff]
  %v190 = vld [vmem:[%s0 + $0x580] sm:$0xff]
  %v191 = vld [vmem:[%s0 + $0x588] sm:$0xff]
  %v192 = vld [vmem:[%s0 + $0x590] sm:$0xff]
  %v193 = vld [vmem:[%s0 + $0x598] sm:$0xff]
  %v194 = vld [vmem:[%s0 + $0x5a0] sm:$0xff]
  %v195 = vld [vmem:[%s0 + $0x5a8] sm:$0xff]
  %v196 = vld [vmem:[%s0 + $0x5b0] sm:$0xff]
  %v197 = vld [vmem:[%s0 + $0x5b8] sm:$0xff]
  %v198 = vld [vmem:[%s0 + $0x5c0] sm:$0xff]
  %v199 = vld [vmem:[%s0 + $0x5c8] sm:$0xff]
  %v200 = vld [vmem:[%s0 + $0x5d0] sm:$0xff]
  %v201 = vld [vmem:[%s0 + $0x5d8] sm:$0xff]
  %v202 = vld [vmem:[%s0 + $0x5e0] sm:$0xff]
  %v203 = vld [vmem:[%s0 + $0x5e8] sm:$0xff]
  %v204 = vld [vmem:[%s0 + $0x5f0] sm:$0xff]
  %v205 = vld [vmem:[%s0 + $0x5f8] sm:$0xff]
  %v206 = vld [vmem:[%s0 + $0x600] sm:$0xff]
  %v207 = vld [vmem:[%s0 + $0x608] sm:$0xff]
  %v208 = vld [vmem:[%s0 + $0x610] sm:$0xff]
  %v209 = vld [vmem:[%s0 + $0x618] sm:$0xff]
  %v210 = vld [vmem:[%s0 + $0x620] sm:$0xff]
  %v211 = vld [vmem:[%s0 + $0x628] sm:$0xff]
  %v212 = vld [vmem:[%s0 + $0x630] sm:$0xff]
  %v213 = vld [vmem:[%s0 + $0x638] sm:$0xff]
  %v214 = vld [vmem:[%s0 + $0x640] sm:$0xff]
  %v215 = vld [vmem:[%s0 + $0x648] sm:$0xff]
  %v216 = vld [vmem:[%s0 + $0x650] sm:$0xff]
  %v217 = vld [vmem:[%s0 + $0x658] sm:$0xff]
  %v218 = vld [vmem:[%s0 + $0x660] sm:$0xff]
  %v219 = vld [vmem:[%s0 + $0x668] sm:$0xff]
  %v220 = vld [vmem:[%s0 + $0x670] sm:$0xff]
  %v221 = vld [vmem:[%s0 + $0x678] sm:$0xff]
  %v222 = vld [vmem:[%s0 + $0x680] sm:$0xff]
  %v223 = vld [vmem:[%s0 + $0x688] sm:$0xff]
  %v224 = vld [vmem:[%s0 + $0x690] sm:$0xff]
  %v225 = vld [vmem:[%s0 + $0x698] sm:$0xff]
  %v226 = vld [vmem:[%s0 + $0x6a0] sm:$0xff]
  %v227 = vld [vmem:[%s0 + $0x6a8] sm:$0xff]
  %v228 = vld [vmem:[%s0 + $0x6b0] sm:$0xff]
  %v229 = vld [vmem:[%s0 + $0x6b8] sm:$0xff]
  %v230 = vld [vmem:[%s0 + $0x6c0] sm:$0xff]
  %v231 = vld [vmem:[%s0 + $0x6c8] sm:$0xff]
  %v232 = vld [vmem:[%s0 + $0x6d0] sm:$0xff]
  %v233 = vld [vmem:[%s0 + $0x6d8] sm:$0xff]
  %v234 = vld [vmem:[%s0 + $0x6e0] sm:$0xff]
  %v235 = vld [vmem:[%s0 + $0x6e8] sm:$0xff]
  %v236 = vld [vmem:[%s0 + $0x6f0] sm:$0xff]
  %v237 = vld [vmem:[%s0 + $0x6f8] sm:$0xff]
  %v238 = vld [vmem:[%s0 + $0x700] sm:$0xff]
  %v239 = vld [vmem:[%s0 + $0x708] sm:$0xff]
  %v240 = vld [vmem:[%s0 + $0x710] sm:$0xff]
  %v241 = vld [vmem:[%s0 + $0x718] sm:$0xff]
  %v242 = vld [vmem:[%s0 + $0x720] sm:$0xff]
  %v243 = vld [vmem:[%s0 + $0x728] sm:$0xff]
  %v244 = vld [vmem:[%s0 + $0x730] sm:$0xff]
  %v245 = vld [vmem:[%s0 + $0x738] sm:$0xff]
  %v246 = vld [vmem:[%s0 + $0x740] sm:$0xff]
  %v247 = vld [vmem:[%s0 + $0x748] sm:$0xff]
  %v248 = vld [vmem:[%s0 + $0x750] sm:$0xff]
  %v249 = vld [vmem:[%s0 + $0x758] sm:$0xff]
  %v250 = vld [vmem:[%s0 + $0x760] sm:$0xff]
  %v251 = vld [vmem:[%s0 + $0x768] sm:$0xff]
  %v252 = vld [vmem:[%s0 + $0x770] sm:$0xff]
  %v253 = vld [vmem:[%s0 + $0x778] sm:$0xff]
  %v254 = vld [vmem:[%s0 + $0x780] sm:$0xff]
  %v255 = vld [vmem:[%s0 + $0x788] sm:$0xff]
  %v256 = vld [vmem:[%s0 + $0x790] sm:$0xff]
  %v257 = vld [vmem:[%s0 + $0x798] sm:$0xff]
  %v258 = vld [vmem:[%s0 + $0x7a0] sm:$0xff]
  %v259 = vld [vmem:[%s0 + $0x7a8] sm:$0xff]
  %v260 = vld [vmem:[%s0 + $0x7b0] sm:$0xff]
  %v261 = vld [vmem:[%s0 + $0x7b8] sm:$0xff]
  %v262 = vld [vmem:[%s0 + $0x7c0] sm:$0xff]
  %v263 = vld [vmem:[%s0 + $0x7c8] sm:$0xff]
  %v264 = vld [vmem:[%s0 + $0x7d0] sm:$0xff]
  %v265 = vld [vmem:[%s0 + $0x7d8] sm:$0xff]
  %v266 = vld [vmem:[%s0 + $0x7e0] sm:$0xff]
  %v267 = vld [vmem:[%s0 + $0x7e8] sm:$0xff]
  %v268 = vld [vmem:[%s0 + $0x7f0] sm:$0xff]
  %v269 = vld [vmem:[%s0 + $0x7f8] sm:$0xff]
  %v270 = vld [vmem:[%s0 + $0x800] sm:$0xff]
  %v271 = vld [vmem:[%s0 + $0x808] sm:$0xff]
  %v272 = vld [vmem:[%s0 + $0x810] sm:$0xff]
  %v273 = vld [vmem:[%s0 + $0x818] sm:$0xff]
  %v274 = vld [vmem:[%s0 + $0x820] sm:$0xff]
  %v275 = vld [vmem:[%s0 + $0x828] sm:$0xff]
  %v276 = vld [vmem:[%s0 + $0x830] sm:$0xff]
  %v277 = vld [vmem:[%s0 + $0x838] sm:$0xff]
  %v278 = vld [vmem:[%s0 + $0x840] sm:$0xff]
  %v279 = vld [vmem:[%s0 + $0x848] sm:$0xff]
  %v280 = vld [vmem:[%s0 + $0x850] sm:$0xff]
  %v281 = vld [vmem:[%s0 + $0x858] sm:$0xff]
  %v282 = vld [vmem:[%s0 + $0x860] sm:$0xff]
  %v283 = vld [vmem:[%s0 + $0x868] sm:$0xff]
  %v284 = vld [vmem:[%s0 + $0x870] sm:$0xff]
  %v285 = vld [vmem:[%s0 + $0x878] sm:$0xff]
  %v286 = vld [vmem:[%s0 + $0x880] sm:$0xff]
  %v287 = vld [vmem:[%s0 + $0x888] sm:$0xff]
  %v288 = vld [vmem:[%s0 + $0x890] sm:$0xff]
  %v289 = vld [vmem:[%s0 + $0x898] sm:$0xff]
  %v290 = vld [vmem:[%s0 + $0x8a0] sm:$0xff]
  %v291 = vld [vmem:[%s0 + $0x8a8] sm:$0xff]
  %v292 = vld [vmem:[%s0 + $0x8b0] sm:$0xff]
  %v293 = vld [vmem:[%s0 + $0x8b8] sm:$0xff]
  %v294 = vld [vmem:[%s0 + $0x8c0] sm:$0xff]
  %v295 = vld [vmem:[%s0 + $0x8c8] sm:$0xff]
  %v296 = vld [vmem:[%s0 + $0x8d0] sm:$0xff]
  %v297 = vld [vmem:[%s0 + $0x8d8] sm:$0xff]
  %v298 = vld [vmem:[%s0 + $0x8e0] sm:$0xff]
  %v299 = vld [vmem:[%s0 + $0x8e8] sm:$0xff]
  %v300 = vld [vmem:[%s0 + $0x8f0] sm:$0xff]
  %v301 = vld [vmem:[%s0 + $0x8f8] sm:$0xff]
  %v302 = vld [vmem:[%s0 + $0x900] sm:$0xff]
  %v303 = vld [vmem:[%s0 + $0x908] sm:$0xff]
  %v304 = vld [vmem:[%s0 + $0x910] sm:$0xff]
  %v305 = vld [vmem:[%s0 + $0x918] sm:$0xff]
  %v306 = vld [vmem:[%s0 + $0x920] sm:$0xff]
  %v307 = vld [vmem:[%s0 + $0x928] sm:$0xff]
  %v308 = vld [vmem:[%s0 + $0x930] sm:$0xff]
  %v309 = vld [vmem:[%s0 + $0x938] sm:$0xff]
  %v310 = vld [vmem:[%s0 + $0x940] sm:$0xff]
  %v311 = vld [vmem:[%s0 + $0x948] sm:$0xff]
  %v312 = vld [vmem:[%s0 + $0x950] sm:$0xff]
  %v313 = vld [vmem:[%s0 + $0x958] sm:$0xff]
  %v314 = vld [vmem:[%s0 + $0x960] sm:$0xff]
  %v315 = vld [vmem:[%s0 + $0x968] sm:$0xff]
  %v316 = vld [vmem:[%s0 + $0x970] sm:$0xff]
  %v317 = vld [vmem:[%s0 + $0x978] sm:$0xff]
  %v318 = vld [vmem:[%s0 + $0x980] sm:$0xff]
  %v319 = vld [vmem:[%s0 + $0x988] sm:$0xff]
  %v320 = vld [vmem:[%s0 + $0x990] sm:$0xff]
  %v321 = vld [vmem:[%s0 + $0x998] sm:$0xff]
  %v322 = vld [vmem:[%s0 + $0x9a0] sm:$0xff]
  %v323 = vld [vmem:[%s0 + $0x9a8] sm:$0xff]
  %v324 = vld [vmem:[%s0 + $0x9b0] sm:$0xff]
  %v325 = vld [vmem:[%s0 + $0x9b8] sm:$0xff]
  %v326 = vld [vmem:[%s0 + $0x9c0] sm:$0xff]
  %v327 = vld [vmem:[%s0 + $0x9c8] sm:$0xff]
  %v328 = vld [vmem:[%s0 + $0x9d0] sm:$0xff]
  %v329 = vld [vmem:[%s0 + $0x9d8] sm:$0xff]
  %v330 = vld [vmem:[%s0 + $0x9e0] sm:$0xff]
  %v331 = vld [vmem:[%s0 + $0x9e8] sm:$0xff]
  %v332 = vld [vmem:[%s0 + $0x9f0] sm:$0xff]
  %v333 = vld [vmem:[%s0 + $0x9f8] sm:$0xff]
  %v334 = vld [vmem:[%s0 + $0xa00] sm:$0xff]
  %v335 = vld [vmem:[%s0 + $0xa08] sm:$0xff]
  %v336 = vld [vmem:[%s0 + $0xa10] sm:$0xff]
  %v337 = vld [vmem:[%s0 + $0xa18] sm:$0xff]
  %v338 = vld [vmem:[%s0 + $0xa20] sm:$0xff]
  %v339 = vld [vmem:[%s0 + $0xa28] sm:$0xff]
  %v340 = vld [vmem:[%s0 + $0xa30] sm:$0xff]
  %v341 = vld [vmem:[%s0 + $0xa38] sm:$0xff]
  %v342 = vld [vmem:[%s0 + $0xa40] sm:$0xff]
  %v343 = vld [vmem:[%s0 + $0xa48] sm:$0xff]
  %v344 = vld [vmem:[%s0 + $0xa50] sm:$0xff]
  %v345 = vld [vmem:[%s0 + $0xa58] sm:$0xff]
  %v346 = vld [vmem:[%s0 + $0xa60] sm:$0xff]
  %v347 = vld [vmem:[%s0 + $0xa68] sm:$0xff]
  %v348 = vld [vmem:[%s0 + $0xa70] sm:$0xff]
  %v349 = vld [vmem:[%s0 + $0xa78] sm:$0xff]
  %v350 = vld [vmem:[%s0 + $0xa80] sm:$0xff]
  %v351 = vld [vmem:[%s0 + $0xa88] sm:$0xff]
  %v352 = vld [vmem:[%s0 + $0xa90] sm:$0xff]
  %v353 = vld [vmem:[%s0 + $0xa98] sm:$0xff]
  %v354 = vld [vmem:[%s0 + $0xaa0] sm:$0xff]
  %v355 = vld [vmem:[%s0 + $0xaa8] sm:$0xff]
  %v356 = vld [vmem:[%s0 + $0xab0] sm:$0xff]
  %v357 = vld [vmem:[%s1] sm:$0xff]
  %v358 = vld [vmem:[%s1 + $0x8] sm:$0xff]
  %v359 = vld [vmem:[%s1 + $0x10] sm:$0xff]
  %v360 = vld [vmem:[%s1 + $0x18] sm:$0xff]
  %v361 = vld [vmem:[%s1 + $0x20] sm:$0xff]
  %v362 = vld [vmem:[%s1 + $0x28] sm:$0xff]
  %v363 = vld [vmem:[%s1 + $0x30] sm:$0xff]
  %v364 = vld [vmem:[%s1 + $0x38] sm:$0xff]
  %v365 = vld [vmem:[%s1 + $0x40] sm:$0xff]
  %v366 = vld [vmem:[%s1 + $0x48] sm:$0xff]
  %v367 = vld [vmem:[%s1 + $0x50] sm:$0xff]
  %v368 = vld [vmem:[%s1 + $0x58] sm:$0xff]
  %v369 = vld [vmem:[%s1 + $0x60] sm:$0xff]
  %v370 = vld [vmem:[%s1 + $0x68] sm:$0xff]
  %v371 = vld [vmem:[%s1 + $0x70] sm:$0xff]
  %v372 = vld [vmem:[%s1 + $0x78] sm:$0xff]
  %v373 = vld [vmem:[%s1 + $0x80] sm:$0xff]
  %v374 = vld [vmem:[%s1 + $0x88] sm:$0xff]
  %v375 = vld [vmem:[%s1 + $0x90] sm:$0xff]
  %v376 = vld [vmem:[%s1 + $0x98] sm:$0xff]
  %v377 = vld [vmem:[%s1 + $0xa0] sm:$0xff]
  %v378 = vld [vmem:[%s1 + $0xa8] sm:$0xff]
  %v379 = vld [vmem:[%s1 + $0xb0] sm:$0xff]
  %v380 = vld [vmem:[%s1 + $0xb8] sm:$0xff]
  %v381 = vld [vmem:[%s1 + $0xc0] sm:$0xff]
  %v382 = vld [vmem:[%s1 + $0xc8] sm:$0xff]
  %v383 = vld [vmem:[%s1 + $0xd0] sm:$0xff]
  %v384 = vld [vmem:[%s1 + $0xd8] sm:$0xff]
  %v385 = vld [vmem:[%s1 + $0xe0] sm:$0xff]
  %v386 = vld [vmem:[%s1 + $0xe8] sm:$0xff]
  %v387 = vld [vmem:[%s1 + $0xf0] sm:$0xff]
  %v388 = vld [vmem:[%s1 + $0xf8] sm:$0xff]
  %v389 = vld [vmem:[%s1 + $0x100] sm:$0xff]
  %v390 = vld [vmem:[%s1 + $0x108] sm:$0xff]
  %v391 = vld [vmem:[%s1 + $0x110] sm:$0xff]
  %v392 = vld [vmem:[%s1 + $0x118] sm:$0xff]
  %v393 = vld [vmem:[%s1 + $0x120] sm:$0xff]
  %v394 = vld [vmem:[%s1 + $0x128] sm:$0xff]
  %v395 = vld [vmem:[%s1 + $0x130] sm:$0xff]
  %v396 = vld [vmem:[%s1 + $0x138] sm:$0xff]
  %v397 = vld [vmem:[%s1 + $0x140] sm:$0xff]
  %v398 = vld [vmem:[%s1 + $0x148] sm:$0xff]
  %v399 = vld [vmem:[%s1 + $0x150] sm:$0xff]
  %v400 = vld [vmem:[%s1 + $0x158] sm:$0xff]
  %v401 = vld [vmem:[%s1 + $0x160] sm:$0xff]
  %v402 = vld [vmem:[%s1 + $0x168] sm:$0xff]
  %v403 = vld [vmem:[%s1 + $0x170] sm:$0xff]
  %v404 = vld [vmem:[%s1 + $0x178] sm:$0xff]
  %v405 = vld [vmem:[%s1 + $0x180] sm:$0xff]
  %v406 = vld [vmem:[%s1 + $0x188] sm:$0xff]
  %v407 = vld [vmem:[%s1 + $0x190] sm:$0xff]
  %v408 = vld [vmem:[%s1 + $0x198] sm:$0xff]
  %v409 = vld [vmem:[%s1 + $0x1a0] sm:$0xff]
  %v410 = vld [vmem:[%s1 + $0x1a8] sm:$0xff]
  %v411 = vld [vmem:[%s1 + $0x1b0] sm:$0xff]
  %v412 = vld [vmem:[%s1 + $0x1b8] sm:$0xff]
  %v413 = vld [vmem:[%s1 + $0x1c0] sm:$0xff]
  %v414 = vld [vmem:[%s1 + $0x1c8] sm:$0xff]
  %v415 = vld [vmem:[%s1 + $0x1d0] sm:$0xff]
  %v416 = vld [vmem:[%s1 + $0x1d8] sm:$0xff]
  %v417 = vld [vmem:[%s1 + $0x1e0] sm:$0xff]
  %v418 = vld [vmem:[%s1 + $0x1e8] sm:$0xff]
  %v419 = vld [vmem:[%s1 + $0x1f0] sm:$0xff]
  %v420 = vld [vmem:[%s1 + $0x1f8] sm:$0xff]
  %v421 = vld [vmem:[%s1 + $0x200] sm:$0xff]
  %v422 = vld [vmem:[%s1 + $0x208] sm:$0xff]
  %v423 = vld [vmem:[%s1 + $0x210] sm:$0xff]
  %v424 = vld [vmem:[%s1 + $0x218] sm:$0xff]
  %v425 = vld [vmem:[%s1 + $0x220] sm:$0xff]
  %v426 = vld [vmem:[%s1 + $0x228] sm:$0xff]
  %v427 = vld [vmem:[%s1 + $0x230] sm:$0xff]
  %v428 = vld [vmem:[%s1 + $0x238] sm:$0xff]
  %v429 = vld [vmem:[%s1 + $0x240] sm:$0xff]
  %v430 = vld [vmem:[%s1 + $0x248] sm:$0xff]
  %v431 = vld [vmem:[%s1 + $0x250] sm:$0xff]
  %v432 = vld [vmem:[%s1 + $0x258] sm:$0xff]
  %v433 = vld [vmem:[%s1 + $0x260] sm:$0xff]
  %v434 = vld [vmem:[%s1 + $0x268] sm:$0xff]
  %v435 = vld [vmem:[%s1 + $0x270] sm:$0xff]
  %v436 = vld [vmem:[%s1 + $0x278] sm:$0xff]
  %v437 = vld [vmem:[%s1 + $0x280] sm:$0xff]
  %v438 = vld [vmem:[%s1 + $0x288] sm:$0xff]
  %v439 = vld [vmem:[%s1 + $0x290] sm:$0xff]
  %v440 = vld [vmem:[%s1 + $0x298] sm:$0xff]
  %v441 = vld [vmem:[%s1 + $0x2a0] sm:$0xff]
  %v442 = vld [vmem:[%s1 + $0x2a8] sm:$0xff]
  %v443 = vld [vmem:[%s1 + $0x2b0] sm:$0xff]
  %v444 = vld [vmem:[%s1 + $0x2b8] sm:$0xff]
  %v445 = vld [vmem:[%s1 + $0x2c0] sm:$0xff]
  %v446 = vld [vmem:[%s1 + $0x2c8] sm:$0xff]
  %v447 = vld [vmem:[%s1 + $0x2d0] sm:$0xff]
  %v448 = vld [vmem:[%s1 + $0x2d8] sm:$0xff]
  %v449 = vld [vmem:[%s1 + $0x2e0] sm:$0xff]
  %v450 = vld [vmem:[%s1 + $0x2e8] sm:$0xff]
  %v451 = vld [vmem:[%s1 + $0x2f0] sm:$0xff]
  %v452 = vld [vmem:[%s1 + $0x2f8] sm:$0xff]
  %v453 = vld [vmem:[%s1 + $0x300] sm:$0xff]
  %v454 = vld [vmem:[%s1 + $0x308] sm:$0xff]
  %v455 = vld [vmem:[%s1 + $0x310] sm:$0xff]
  %v456 = vld [vmem:[%s1 + $0x318] sm:$0xff]
  %v457 = vld [vmem:[%s1 + $0x320] sm:$0xff]
  %v458 = vld [vmem:[%s1 + $0x328] sm:$0xff]
  %v459 = vld [vmem:[%s1 + $0x330] sm:$0xff]
  %v460 = vld [vmem:[%s1 + $0x338] sm:$0xff]
  %v461 = vld [vmem:[%s1 + $0x340] sm:$0xff]
  %v462 = vld [vmem:[%s1 + $0x348] sm:$0xff]
  %v463 = vld [vmem:[%s1 + $0x350] sm:$0xff]
  %v464 = vld [vmem:[%s1 + $0x358] sm:$0xff]
  %v465 = vld [vmem:[%s2] sm:$0x1]
  %v467 = vlaneseq
  %v468 = vshrl.u32 %v467, 7
  %v469 = vsub.s32 0, %v468
  %v470 = vrot.slane %v465, %v469
  %vm472 = vcmask 785408
  %v474 = vsel %vm472, %v20, 0
  %v477 = vsel %vm472, %v27, 0
  %v480 = vsel %vm472, %v34, 0
  %v483 = vsel %vm472, %v41, 0
  %v486 = vsel %vm472, %v48, 0
  %v489 = vsel %vm472, %v55, 0
  %v492 = vsel %vm472, %v62, 0
  %v495 = vsel %vm472, %v69, 0
  %v498 = vsel %vm472, %v76, 0
  %v501 = vsel %vm472, %v83, 0
  %v504 = vsel %vm472, %v90, 0
  %v507 = vsel %vm472, %v97, 0
  %v510 = vsel %vm472, %v104, 0
  %v513 = vsel %vm472, %v111, 0
  %v516 = vsel %vm472, %v118, 0
  %v519 = vsel %vm472, %v125, 0
  %v522 = vsel %vm472, %v132, 0
  %v525 = vsel %vm472, %v139, 0
  %v528 = vsel %vm472, %v146, 0
  %v531 = vsel %vm472, %v153, 0
  %v534 = vsel %vm472, %v160, 0
  %v537 = vsel %vm472, %v167, 0
  %v540 = vsel %vm472, %v174, 0
  %v543 = vsel %vm472, %v181, 0
  %v546 = vsel %vm472, %v188, 0
  %v549 = vsel %vm472, %v195, 0
  %v552 = vsel %vm472, %v202, 0
  %v555 = vsel %vm472, %v209, 0
  %v558 = vsel %vm472, %v216, 0
  %v561 = vsel %vm472, %v223, 0
  %v564 = vsel %vm472, %v230, 0
  %v567 = vsel %vm472, %v237, 0
  %v570 = vsel %vm472, %v244, 0
  %v573 = vsel %vm472, %v251, 0
  %v576 = vsel %vm472, %v258, 0
  %v579 = vsel %vm472, %v265, 0
  %v582 = vsel %vm472, %v272, 0
  %v585 = vsel %vm472, %v279, 0
  %v588 = vsel %vm472, %v286, 0
  %v591 = vsel %vm472, %v293, 0
  %v594 = vsel %vm472, %v300, 0
  %v597 = vsel %vm472, %v307, 0
  %v600 = vsel %vm472, %v314, 0
  %v603 = vsel %vm472, %v321, 0
  %v606 = vsel %vm472, %v328, 0
  %v609 = vsel %vm472, %v335, 0
  %v612 = vsel %vm472, %v342, 0
  %v615 = vsel %vm472, %v349, 0
  %v618 = vsel %vm472, %v356, 0
  %620 = vmatprep.subr.mxu0 0.0
  %621 = vmatpush1.msra.mxu0 %v372
  %622 = vmatprep.subr.mxu0 0.0
  %623 = vmatpush1.msra.mxu0 %v371
  %624 = vmatprep.subr.mxu0 0.0
  %625 = vmatpush1.msra.mxu0 %v370
  %626 = vmatprep.subr.mxu0 0.0
  %627 = vmatpush1.msra.mxu0 %v369
  %628 = vmatprep.subr.mxu0 0.0
  %629 = vmatpush1.msra.mxu0 %v368
  %630 = vmatprep.subr.mxu0 0.0
  %631 = vmatpush1.msra.mxu0 %v367
  %632 = vmatprep.subr.mxu0 0.0
  %633 = vmatpush1.msra.mxu0 %v366
  %634 = vmatprep.subr.mxu0 0.0
  %635 = vmatpush1.msra.mxu0 %v365
  %636 = vmatprep.subr.mxu0 0.0
  %637 = vmatpush1.msra.mxu0 %v364
  %638 = vmatprep.subr.mxu0 0.0
  %639 = vmatpush1.msra.mxu0 %v363
  %640 = vmatprep.subr.mxu0 0.0
  %641 = vmatpush1.msra.mxu0 %v362
  %642 = vmatprep.subr.mxu0 0.0
  %643 = vmatpush1.msra.mxu0 %v361
  %644 = vmatprep.subr.mxu0 0.0
  %645 = vmatpush1.msra.mxu0 %v360
  %646 = vmatprep.subr.mxu0 0.0
  %647 = vmatpush1.msra.mxu0 %v359
  %648 = vmatprep.subr.mxu0 0.0
  %649 = vmatpush1.msra.mxu0 %v358
  %650 = vmatprep.subr.mxu0 0.0
  %651 = vmatpush1.msra.mxu0 %v357
  %652 = vmatprep.subr.mxu0 0.0
  %653 = vmatpush2.msra.mxu0 %v388
  %654 = vmatprep.subr.mxu0 0.0
  %655 = vmatpush2.msra.mxu0 %v387
  %656 = vmatprep.subr.mxu0 0.0
  %657 = vmatpush2.msra.mxu0 %v386
  %658 = vmatprep.subr.mxu0 0.0
  %659 = vmatpush2.msra.mxu0 %v385
  %660 = vmatprep.subr.mxu0 0.0
  %661 = vmatpush2.msra.mxu0 %v384
  %662 = vmatprep.subr.mxu0 0.0
  %663 = vmatpush2.msra.mxu0 %v383
  %664 = vmatprep.subr.mxu0 0.0
  %665 = vmatpush2.msra.mxu0 %v382
  %666 = vmatprep.subr.mxu0 0.0
  %667 = vmatpush2.msra.mxu0 %v381
  %668 = vmatprep.subr.mxu0 0.0
  %669 = vmatpush2.msra.mxu0 %v380
  %670 = vmatprep.subr.mxu0 0.0
  %671 = vmatpush2.msra.mxu0 %v379
  %672 = vmatprep.subr.mxu0 0.0
  %673 = vmatpush2.msra.mxu0 %v378
  %674 = vmatprep.subr.mxu0 0.0
  %675 = vmatpush2.msra.mxu0 %v377
  %676 = vmatprep.subr.mxu0 0.0
  %677 = vmatpush2.msra.mxu0 %v376
  %678 = vmatprep.subr.mxu0 0.0
  %679 = vmatpush2.msra.mxu0 %v375
  %680 = vmatprep.subr.mxu0 0.0
  %681 = vmatpush2.msra.mxu0 %v374
  %682 = vmatprep.subr.mxu0 0.0
  %683 = vmatpush2.msra.mxu0 %v373
  %684 = vmatprep.mubr.f32.mxu0 %v15
  %685 = vmatmul.mubr.f32.gmra.mxu0 %v14
  %v686 = vpop.f32.mrf.mxu0
  %v687 = vadd.f32 %v470, %v686
  %v688 = vpop.f32.mrf.mxu0
  %689 = vmatprep.mubr.f32.mxu0 %v22
  %690 = vmatmul.mubr.f32.gmra.mxu0 %v21
  %v691 = vpop.f32.mrf.mxu0
  %v692 = vadd.f32 %v470, %v691
  %v693 = vpop.f32.mrf.mxu0
  %694 = vmatprep.mubr.f32.mxu0 %v29
  %695 = vmatmul.mubr.f32.gmra.mxu0 %v28
  %v696 = vpop.f32.mrf.mxu0
  %v697 = vadd.f32 %v470, %v696
  %v698 = vpop.f32.mrf.mxu0
  %699 = vmatprep.mubr.f32.mxu0 %v36
  %700 = vmatmul.mubr.f32.gmra.mxu0 %v35
  %v701 = vpop.f32.mrf.mxu0
  %v702 = vadd.f32 %v470, %v701
  %v703 = vpop.f32.mrf.mxu0
  %704 = vmatprep.mubr.f32.mxu0 %v43
  %705 = vmatmul.mubr.f32.gmra.mxu0 %v42
  %v706 = vpop.f32.mrf.mxu0
  %v707 = vadd.f32 %v470, %v706
  %v708 = vpop.f32.mrf.mxu0
  %709 = vmatprep.mubr.f32.mxu0 %v50
  %710 = vmatmul.mubr.f32.gmra.mxu0 %v49
  %v711 = vpop.f32.mrf.mxu0
  %v712 = vadd.f32 %v470, %v711
  %v713 = vpop.f32.mrf.mxu0
  %714 = vmatprep.mubr.f32.mxu0 %v57
  %715 = vmatmul.mubr.f32.gmra.mxu0 %v56
  %v716 = vpop.f32.mrf.mxu0
  %v717 = vadd.f32 %v470, %v716
  %v718 = vpop.f32.mrf.mxu0
  %719 = vmatprep.mubr.f32.mxu0 %v64
  %720 = vmatmul.mubr.f32.gmra.mxu0 %v63
  %v721 = vpop.f32.mrf.mxu0
  %v722 = vadd.f32 %v470, %v721
  %v723 = vpop.f32.mrf.mxu0
  %724 = vmatprep.mubr.f32.mxu0 %v71
  %725 = vmatmul.mubr.f32.gmra.mxu0 %v70
  %v726 = vpop.f32.mrf.mxu0
  %v727 = vadd.f32 %v470, %v726
  %v728 = vpop.f32.mrf.mxu0
  %729 = vmatprep.mubr.f32.mxu0 %v78
  %730 = vmatmul.mubr.f32.gmra.mxu0 %v77
  %v731 = vpop.f32.mrf.mxu0
  %v732 = vadd.f32 %v470, %v731
  %v733 = vpop.f32.mrf.mxu0
  %734 = vmatprep.mubr.f32.mxu0 %v85
  %735 = vmatmul.mubr.f32.gmra.mxu0 %v84
  %v736 = vpop.f32.mrf.mxu0
  %v737 = vadd.f32 %v470, %v736
  %v738 = vpop.f32.mrf.mxu0
  %739 = vmatprep.mubr.f32.mxu0 %v92
  %740 = vmatmul.mubr.f32.gmra.mxu0 %v91
  %v741 = vpop.f32.mrf.mxu0
  %v742 = vadd.f32 %v470, %v741
  %v743 = vpop.f32.mrf.mxu0
  %744 = vmatprep.mubr.f32.mxu0 %v99
  %745 = vmatmul.mubr.f32.gmra.mxu0 %v98
  %v746 = vpop.f32.mrf.mxu0
  %v747 = vadd.f32 %v470, %v746
  %v748 = vpop.f32.mrf.mxu0
  %749 = vmatprep.mubr.f32.mxu0 %v106
  %750 = vmatmul.mubr.f32.gmra.mxu0 %v105
  %v751 = vpop.f32.mrf.mxu0
  %v752 = vadd.f32 %v470, %v751
  %v753 = vpop.f32.mrf.mxu0
  %754 = vmatprep.mubr.f32.mxu0 %v113
  %755 = vmatmul.mubr.f32.gmra.mxu0 %v112
  %v756 = vpop.f32.mrf.mxu0
  %v757 = vadd.f32 %v470, %v756
  %v758 = vpop.f32.mrf.mxu0
  %759 = vmatprep.mubr.f32.mxu0 %v120
  %760 = vmatmul.mubr.f32.gmra.mxu0 %v119
  %v761 = vpop.f32.mrf.mxu0
  %v762 = vadd.f32 %v470, %v761
  %v763 = vpop.f32.mrf.mxu0
  %764 = vmatprep.mubr.f32.mxu0 %v127
  %765 = vmatmul.mubr.f32.gmra.mxu0 %v126
  %v766 = vpop.f32.mrf.mxu0
  %v767 = vadd.f32 %v470, %v766
  %v768 = vpop.f32.mrf.mxu0
  %769 = vmatprep.mubr.f32.mxu0 %v134
  %770 = vmatmul.mubr.f32.gmra.mxu0 %v133
  %v771 = vpop.f32.mrf.mxu0
  %v772 = vadd.f32 %v470, %v771
  %v773 = vpop.f32.mrf.mxu0
  %774 = vmatprep.mubr.f32.mxu0 %v141
  %775 = vmatmul.mubr.f32.gmra.mxu0 %v140
  %v776 = vpop.f32.mrf.mxu0
  %v777 = vadd.f32 %v470, %v776
  %v778 = vpop.f32.mrf.mxu0
  %779 = vmatprep.mubr.f32.mxu0 %v148
  %780 = vmatmul.mubr.f32.gmra.mxu0 %v147
  %v781 = vpop.f32.mrf.mxu0
  %v782 = vadd.f32 %v470, %v781
  %v783 = vpop.f32.mrf.mxu0
  %784 = vmatprep.mubr.f32.mxu0 %v155
  %785 = vmatmul.mubr.f32.gmra.mxu0 %v154
  %v786 = vpop.f32.mrf.mxu0
  %v787 = vadd.f32 %v470, %v786
  %v788 = vpop.f32.mrf.mxu0
  %789 = vmatprep.mubr.f32.mxu0 %v162
  %790 = vmatmul.mubr.f32.gmra.mxu0 %v161
  %v791 = vpop.f32.mrf.mxu0
  %v792 = vadd.f32 %v470, %v791
  %v793 = vpop.f32.mrf.mxu0
  %794 = vmatprep.mubr.f32.mxu0 %v169
  %795 = vmatmul.mubr.f32.gmra.mxu0 %v168
  %v796 = vpop.f32.mrf.mxu0
  %v797 = vadd.f32 %v470, %v796
  %v798 = vpop.f32.mrf.mxu0
  %799 = vmatprep.mubr.f32.mxu0 %v176
  %800 = vmatmul.mubr.f32.gmra.mxu0 %v175
  %v801 = vpop.f32.mrf.mxu0
  %v802 = vadd.f32 %v470, %v801
  %v803 = vpop.f32.mrf.mxu0
  %804 = vmatprep.mubr.f32.mxu0 %v183
  %805 = vmatmul.mubr.f32.gmra.mxu0 %v182
  %v806 = vpop.f32.mrf.mxu0
  %v807 = vadd.f32 %v470, %v806
  %v808 = vpop.f32.mrf.mxu0
  %809 = vmatprep.mubr.f32.mxu0 %v190
  %810 = vmatmul.mubr.f32.gmra.mxu0 %v189
  %v811 = vpop.f32.mrf.mxu0
  %v812 = vadd.f32 %v470, %v811
  %v813 = vpop.f32.mrf.mxu0
  %814 = vmatprep.mubr.f32.mxu0 %v197
  %815 = vmatmul.mubr.f32.gmra.mxu0 %v196
  %v816 = vpop.f32.mrf.mxu0
  %v817 = vadd.f32 %v470, %v816
  %v818 = vpop.f32.mrf.mxu0
  %819 = vmatprep.mubr.f32.mxu0 %v204
  %820 = vmatmul.mubr.f32.gmra.mxu0 %v203
  %v821 = vpop.f32.mrf.mxu0
  %v822 = vadd.f32 %v470, %v821
  %v823 = vpop.f32.mrf.mxu0
  %824 = vmatprep.mubr.f32.mxu0 %v211
  %825 = vmatmul.mubr.f32.gmra.mxu0 %v210
  %v826 = vpop.f32.mrf.mxu0
  %v827 = vadd.f32 %v470, %v826
  %v828 = vpop.f32.mrf.mxu0
  %829 = vmatprep.mubr.f32.mxu0 %v218
  %830 = vmatmul.mubr.f32.gmra.mxu0 %v217
  %v831 = vpop.f32.mrf.mxu0
  %v832 = vadd.f32 %v470, %v831
  %v833 = vpop.f32.mrf.mxu0
  %834 = vmatprep.mubr.f32.mxu0 %v225
  %835 = vmatmul.mubr.f32.gmra.mxu0 %v224
  %v836 = vpop.f32.mrf.mxu0
  %v837 = vadd.f32 %v470, %v836
  %v838 = vpop.f32.mrf.mxu0
  %839 = vmatprep.mubr.f32.mxu0 %v232
  %840 = vmatmul.mubr.f32.gmra.mxu0 %v231
  %v841 = vpop.f32.mrf.mxu0
  %v842 = vadd.f32 %v470, %v841
  %v843 = vpop.f32.mrf.mxu0
  %844 = vmatprep.mubr.f32.mxu0 %v239
  %845 = vmatmul.mubr.f32.gmra.mxu0 %v238
  %v846 = vpop.f32.mrf.mxu0
  %v847 = vadd.f32 %v470, %v846
  %v848 = vpop.f32.mrf.mxu0
  %849 = vmatprep.mubr.f32.mxu0 %v246
  %850 = vmatmul.mubr.f32.gmra.mxu0 %v245
  %v851 = vpop.f32.mrf.mxu0
  %v852 = vadd.f32 %v470, %v851
  %v853 = vpop.f32.mrf.mxu0
  %854 = vmatprep.mubr.f32.mxu0 %v253
  %855 = vmatmul.mubr.f32.gmra.mxu0 %v252
  %v856 = vpop.f32.mrf.mxu0
  %v857 = vadd.f32 %v470, %v856
  %v858 = vpop.f32.mrf.mxu0
  %859 = vmatprep.mubr.f32.mxu0 %v260
  %860 = vmatmul.mubr.f32.gmra.mxu0 %v259
  %v861 = vpop.f32.mrf.mxu0
  %v862 = vadd.f32 %v470, %v861
  %v863 = vpop.f32.mrf.mxu0
  %864 = vmatprep.mubr.f32.mxu0 %v267
  %865 = vmatmul.mubr.f32.gmra.mxu0 %v266
  %v866 = vpop.f32.mrf.mxu0
  %v867 = vadd.f32 %v470, %v866
  %v868 = vpop.f32.mrf.mxu0
  %869 = vmatprep.mubr.f32.mxu0 %v274
  %870 = vmatmul.mubr.f32.gmra.mxu0 %v273
  %v871 = vpop.f32.mrf.mxu0
  %v872 = vadd.f32 %v470, %v871
  %v873 = vpop.f32.mrf.mxu0
  %874 = vmatprep.mubr.f32.mxu0 %v281
  %875 = vmatmul.mubr.f32.gmra.mxu0 %v280
  %v876 = vpop.f32.mrf.mxu0
  %v877 = vadd.f32 %v470, %v876
  %v878 = vpop.f32.mrf.mxu0
  %879 = vmatprep.mubr.f32.mxu0 %v288
  %880 = vmatmul.mubr.f32.gmra.mxu0 %v287
  %v881 = vpop.f32.mrf.mxu0
  %v882 = vadd.f32 %v470, %v881
  %v883 = vpop.f32.mrf.mxu0
  %884 = vmatprep.mubr.f32.mxu0 %v295
  %885 = vmatmul.mubr.f32.gmra.mxu0 %v294
  %v886 = vpop.f32.mrf.mxu0
  %v887 = vadd.f32 %v470, %v886
  %v888 = vpop.f32.mrf.mxu0
  %889 = vmatprep.mubr.f32.mxu0 %v302
  %890 = vmatmul.mubr.f32.gmra.mxu0 %v301
  %v891 = vpop.f32.mrf.mxu0
  %v892 = vadd.f32 %v470, %v891
  %v893 = vpop.f32.mrf.mxu0
  %894 = vmatprep.mubr.f32.mxu0 %v309
  %895 = vmatmul.mubr.f32.gmra.mxu0 %v308
  %v896 = vpop.f32.mrf.mxu0
  %v897 = vadd.f32 %v470, %v896
  %v898 = vpop.f32.mrf.mxu0
  %899 = vmatprep.mubr.f32.mxu0 %v316
  %900 = vmatmul.mubr.f32.gmra.mxu0 %v315
  %v901 = vpop.f32.mrf.mxu0
  %v902 = vadd.f32 %v470, %v901
  %v903 = vpop.f32.mrf.mxu0
  %904 = vmatprep.mubr.f32.mxu0 %v323
  %905 = vmatmul.mubr.f32.gmra.mxu0 %v322
  %v906 = vpop.f32.mrf.mxu0
  %v907 = vadd.f32 %v470, %v906
  %v908 = vpop.f32.mrf.mxu0
  %909 = vmatprep.mubr.f32.mxu0 %v330
  %910 = vmatmul.mubr.f32.gmra.mxu0 %v329
  %v911 = vpop.f32.mrf.mxu0
  %v912 = vadd.f32 %v470, %v911
  %v913 = vpop.f32.mrf.mxu0
  %914 = vmatprep.mubr.f32.mxu0 %v337
  %915 = vmatmul.mubr.f32.gmra.mxu0 %v336
  %v916 = vpop.f32.mrf.mxu0
  %v917 = vadd.f32 %v470, %v916
  %v918 = vpop.f32.mrf.mxu0
  %919 = vmatprep.mubr.f32.mxu0 %v344
  %920 = vmatmul.mubr.f32.gmra.mxu0 %v343
  %v921 = vpop.f32.mrf.mxu0
  %v922 = vadd.f32 %v470, %v921
  %v923 = vpop.f32.mrf.mxu0
  %924 = vmatprep.mubr.f32.mxu0 %v351
  %925 = vmatmul.mubr.f32.gmra.mxu0 %v350
  %v926 = vpop.f32.mrf.mxu0
  %v927 = vadd.f32 %v470, %v926
  %v928 = vpop.f32.mrf.mxu0
  %929 = vdwg.mxu0
  %930 = vmatprep.subr.mxu0 0.0
  %931 = vmatpush1.msra.mxu0 %v404
  %932 = vmatprep.subr.mxu0 0.0
  %933 = vmatpush1.msra.mxu0 %v403
  %934 = vmatprep.subr.mxu0 0.0
  %935 = vmatpush1.msra.mxu0 %v402
  %936 = vmatprep.subr.mxu0 0.0
  %937 = vmatpush1.msra.mxu0 %v401
  %938 = vmatprep.subr.mxu0 0.0
  %939 = vmatpush1.msra.mxu0 %v400
  %940 = vmatprep.subr.mxu0 0.0
  %941 = vmatpush1.msra.mxu0 %v399
  %942 = vmatprep.subr.mxu0 0.0
  %943 = vmatpush1.msra.mxu0 %v398
  %944 = vmatprep.subr.mxu0 0.0
  %945 = vmatpush1.msra.mxu0 %v397
  %946 = vmatprep.subr.mxu0 0.0
  %947 = vmatpush1.msra.mxu0 %v396
  %948 = vmatprep.subr.mxu0 0.0
  %949 = vmatpush1.msra.mxu0 %v395
  %950 = vmatprep.subr.mxu0 0.0
  %951 = vmatpush1.msra.mxu0 %v394
  %952 = vmatprep.subr.mxu0 0.0
  %953 = vmatpush1.msra.mxu0 %v393
  %954 = vmatprep.subr.mxu0 0.0
  %955 = vmatpush1.msra.mxu0 %v392
  %956 = vmatprep.subr.mxu0 0.0
  %957 = vmatpush1.msra.mxu0 %v391
  %958 = vmatprep.subr.mxu0 0.0
  %959 = vmatpush1.msra.mxu0 %v390
  %960 = vmatprep.subr.mxu0 0.0
  %961 = vmatpush1.msra.mxu0 %v389
  %962 = vmatprep.subr.mxu0 0.0
  %963 = vmatpush2.msra.mxu0 %v420
  %964 = vmatprep.subr.mxu0 0.0
  %965 = vmatpush2.msra.mxu0 %v419
  %966 = vmatprep.subr.mxu0 0.0
  %967 = vmatpush2.msra.mxu0 %v418
  %968 = vmatprep.subr.mxu0 0.0
  %969 = vmatpush2.msra.mxu0 %v417
  %970 = vmatprep.subr.mxu0 0.0
  %971 = vmatpush2.msra.mxu0 %v416
  %972 = vmatprep.subr.mxu0 0.0
  %973 = vmatpush2.msra.mxu0 %v415
  %974 = vmatprep.subr.mxu0 0.0
  %975 = vmatpush2.msra.mxu0 %v414
  %976 = vmatprep.subr.mxu0 0.0
  %977 = vmatpush2.msra.mxu0 %v413
  %978 = vmatprep.subr.mxu0 0.0
  %979 = vmatpush2.msra.mxu0 %v412
  %980 = vmatprep.subr.mxu0 0.0
  %981 = vmatpush2.msra.mxu0 %v411
  %982 = vmatprep.subr.mxu0 0.0
  %983 = vmatpush2.msra.mxu0 %v410
  %984 = vmatprep.subr.mxu0 0.0
  %985 = vmatpush2.msra.mxu0 %v409
  %986 = vmatprep.subr.mxu0 0.0
  %987 = vmatpush2.msra.mxu0 %v408
  %988 = vmatprep.subr.mxu0 0.0
  %989 = vmatpush2.msra.mxu0 %v407
  %990 = vmatprep.subr.mxu0 0.0
  %991 = vmatpush2.msra.mxu0 %v406
  %992 = vmatprep.subr.mxu0 0.0
  %993 = vmatpush2.msra.mxu0 %v405
  %994 = vmatprep.mubr.f32.mxu0 %v17
  %995 = vmatmul.mubr.f32.gmra.mxu0 %v16
  %v996 = vpop.f32.mrf.mxu0
  %v997 = vadd.f32 %v687, %v996
  %v998 = vpop.f32.mrf.mxu0
  %999 = vmatprep.mubr.f32.mxu0 %v24
  %1000 = vmatmul.mubr.f32.gmra.mxu0 %v23
  %v1001 = vpop.f32.mrf.mxu0
  %v1002 = vadd.f32 %v692, %v1001
  %v1003 = vpop.f32.mrf.mxu0
  %1004 = vmatprep.mubr.f32.mxu0 %v31
  %1005 = vmatmul.mubr.f32.gmra.mxu0 %v30
  %v1006 = vpop.f32.mrf.mxu0
  %v1007 = vadd.f32 %v697, %v1006
  %v1008 = vpop.f32.mrf.mxu0
  %1009 = vmatprep.mubr.f32.mxu0 %v38
  %1010 = vmatmul.mubr.f32.gmra.mxu0 %v37
  %v1011 = vpop.f32.mrf.mxu0
  %v1012 = vadd.f32 %v702, %v1011
  %v1013 = vpop.f32.mrf.mxu0
  %1014 = vmatprep.mubr.f32.mxu0 %v45
  %1015 = vmatmul.mubr.f32.gmra.mxu0 %v44
  %v1016 = vpop.f32.mrf.mxu0
  %v1017 = vadd.f32 %v707, %v1016
  %v1018 = vpop.f32.mrf.mxu0
  %1019 = vmatprep.mubr.f32.mxu0 %v52
  %1020 = vmatmul.mubr.f32.gmra.mxu0 %v51
  %v1021 = vpop.f32.mrf.mxu0
  %v1022 = vadd.f32 %v712, %v1021
  %v1023 = vpop.f32.mrf.mxu0
  %1024 = vmatprep.mubr.f32.mxu0 %v59
  %1025 = vmatmul.mubr.f32.gmra.mxu0 %v58
  %v1026 = vpop.f32.mrf.mxu0
  %v1027 = vadd.f32 %v717, %v1026
  %v1028 = vpop.f32.mrf.mxu0
  %1029 = vmatprep.mubr.f32.mxu0 %v66
  %1030 = vmatmul.mubr.f32.gmra.mxu0 %v65
  %v1031 = vpop.f32.mrf.mxu0
  %v1032 = vadd.f32 %v722, %v1031
  %v1033 = vpop.f32.mrf.mxu0
  %1034 = vmatprep.mubr.f32.mxu0 %v73
  %1035 = vmatmul.mubr.f32.gmra.mxu0 %v72
  %v1036 = vpop.f32.mrf.mxu0
  %v1037 = vadd.f32 %v727, %v1036
  %v1038 = vpop.f32.mrf.mxu0
  %1039 = vmatprep.mubr.f32.mxu0 %v80
  %1040 = vmatmul.mubr.f32.gmra.mxu0 %v79
  %v1041 = vpop.f32.mrf.mxu0
  %v1042 = vadd.f32 %v732, %v1041
  %v1043 = vpop.f32.mrf.mxu0
  %1044 = vmatprep.mubr.f32.mxu0 %v87
  %1045 = vmatmul.mubr.f32.gmra.mxu0 %v86
  %v1046 = vpop.f32.mrf.mxu0
  %v1047 = vadd.f32 %v737, %v1046
  %v1048 = vpop.f32.mrf.mxu0
  %1049 = vmatprep.mubr.f32.mxu0 %v94
  %1050 = vmatmul.mubr.f32.gmra.mxu0 %v93
  %v1051 = vpop.f32.mrf.mxu0
  %v1052 = vadd.f32 %v742, %v1051
  %v1053 = vpop.f32.mrf.mxu0
  %1054 = vmatprep.mubr.f32.mxu0 %v101
  %1055 = vmatmul.mubr.f32.gmra.mxu0 %v100
  %v1056 = vpop.f32.mrf.mxu0
  %v1057 = vadd.f32 %v747, %v1056
  %v1058 = vpop.f32.mrf.mxu0
  %1059 = vmatprep.mubr.f32.mxu0 %v108
  %1060 = vmatmul.mubr.f32.gmra.mxu0 %v107
  %v1061 = vpop.f32.mrf.mxu0
  %v1062 = vadd.f32 %v752, %v1061
  %v1063 = vpop.f32.mrf.mxu0
  %1064 = vmatprep.mubr.f32.mxu0 %v115
  %1065 = vmatmul.mubr.f32.gmra.mxu0 %v114
  %v1066 = vpop.f32.mrf.mxu0
  %v1067 = vadd.f32 %v757, %v1066
  %v1068 = vpop.f32.mrf.mxu0
  %1069 = vmatprep.mubr.f32.mxu0 %v122
  %1070 = vmatmul.mubr.f32.gmra.mxu0 %v121
  %v1071 = vpop.f32.mrf.mxu0
  %v1072 = vadd.f32 %v762, %v1071
  %v1073 = vpop.f32.mrf.mxu0
  %1074 = vmatprep.mubr.f32.mxu0 %v129
  %1075 = vmatmul.mubr.f32.gmra.mxu0 %v128
  %v1076 = vpop.f32.mrf.mxu0
  %v1077 = vadd.f32 %v767, %v1076
  %v1078 = vpop.f32.mrf.mxu0
  %1079 = vmatprep.mubr.f32.mxu0 %v136
  %1080 = vmatmul.mubr.f32.gmra.mxu0 %v135
  %v1081 = vpop.f32.mrf.mxu0
  %v1082 = vadd.f32 %v772, %v1081
  %v1083 = vpop.f32.mrf.mxu0
  %1084 = vmatprep.mubr.f32.mxu0 %v143
  %1085 = vmatmul.mubr.f32.gmra.mxu0 %v142
  %v1086 = vpop.f32.mrf.mxu0
  %v1087 = vadd.f32 %v777, %v1086
  %v1088 = vpop.f32.mrf.mxu0
  %1089 = vmatprep.mubr.f32.mxu0 %v150
  %1090 = vmatmul.mubr.f32.gmra.mxu0 %v149
  %v1091 = vpop.f32.mrf.mxu0
  %v1092 = vadd.f32 %v782, %v1091
  %v1093 = vpop.f32.mrf.mxu0
  %1094 = vmatprep.mubr.f32.mxu0 %v157
  %1095 = vmatmul.mubr.f32.gmra.mxu0 %v156
  %v1096 = vpop.f32.mrf.mxu0
  %v1097 = vadd.f32 %v787, %v1096
  %v1098 = vpop.f32.mrf.mxu0
  %1099 = vmatprep.mubr.f32.mxu0 %v164
  %1100 = vmatmul.mubr.f32.gmra.mxu0 %v163
  %v1101 = vpop.f32.mrf.mxu0
  %v1102 = vadd.f32 %v792, %v1101
  %v1103 = vpop.f32.mrf.mxu0
  %1104 = vmatprep.mubr.f32.mxu0 %v171
  %1105 = vmatmul.mubr.f32.gmra.mxu0 %v170
  %v1106 = vpop.f32.mrf.mxu0
  %v1107 = vadd.f32 %v797, %v1106
  %v1108 = vpop.f32.mrf.mxu0
  %1109 = vmatprep.mubr.f32.mxu0 %v178
  %1110 = vmatmul.mubr.f32.gmra.mxu0 %v177
  %v1111 = vpop.f32.mrf.mxu0
  %v1112 = vadd.f32 %v802, %v1111
  %v1113 = vpop.f32.mrf.mxu0
  %1114 = vmatprep.mubr.f32.mxu0 %v185
  %1115 = vmatmul.mubr.f32.gmra.mxu0 %v184
  %v1116 = vpop.f32.mrf.mxu0
  %v1117 = vadd.f32 %v807, %v1116
  %v1118 = vpop.f32.mrf.mxu0
  %1119 = vmatprep.mubr.f32.mxu0 %v192
  %1120 = vmatmul.mubr.f32.gmra.mxu0 %v191
  %v1121 = vpop.f32.mrf.mxu0
  %v1122 = vadd.f32 %v812, %v1121
  %v1123 = vpop.f32.mrf.mxu0
  %1124 = vmatprep.mubr.f32.mxu0 %v199
  %1125 = vmatmul.mubr.f32.gmra.mxu0 %v198
  %v1126 = vpop.f32.mrf.mxu0
  %v1127 = vadd.f32 %v817, %v1126
  %v1128 = vpop.f32.mrf.mxu0
  %1129 = vmatprep.mubr.f32.mxu0 %v206
  %1130 = vmatmul.mubr.f32.gmra.mxu0 %v205
  %v1131 = vpop.f32.mrf.mxu0
  %v1132 = vadd.f32 %v822, %v1131
  %v1133 = vpop.f32.mrf.mxu0
  %1134 = vmatprep.mubr.f32.mxu0 %v213
  %1135 = vmatmul.mubr.f32.gmra.mxu0 %v212
  %v1136 = vpop.f32.mrf.mxu0
  %v1137 = vadd.f32 %v827, %v1136
  %v1138 = vpop.f32.mrf.mxu0
  %1139 = vmatprep.mubr.f32.mxu0 %v220
  %1140 = vmatmul.mubr.f32.gmra.mxu0 %v219
  %v1141 = vpop.f32.mrf.mxu0
  %v1142 = vadd.f32 %v832, %v1141
  %v1143 = vpop.f32.mrf.mxu0
  %1144 = vmatprep.mubr.f32.mxu0 %v227
  %1145 = vmatmul.mubr.f32.gmra.mxu0 %v226
  %v1146 = vpop.f32.mrf.mxu0
  %v1147 = vadd.f32 %v837, %v1146
  %v1148 = vpop.f32.mrf.mxu0
  %1149 = vmatprep.mubr.f32.mxu0 %v234
  %1150 = vmatmul.mubr.f32.gmra.mxu0 %v233
  %v1151 = vpop.f32.mrf.mxu0
  %v1152 = vadd.f32 %v842, %v1151
  %v1153 = vpop.f32.mrf.mxu0
  %1154 = vmatprep.mubr.f32.mxu0 %v241
  %1155 = vmatmul.mubr.f32.gmra.mxu0 %v240
  %v1156 = vpop.f32.mrf.mxu0
  %v1157 = vadd.f32 %v847, %v1156
  %v1158 = vpop.f32.mrf.mxu0
  %1159 = vmatprep.mubr.f32.mxu0 %v248
  %1160 = vmatmul.mubr.f32.gmra.mxu0 %v247
  %v1161 = vpop.f32.mrf.mxu0
  %v1162 = vadd.f32 %v852, %v1161
  %v1163 = vpop.f32.mrf.mxu0
  %1164 = vmatprep.mubr.f32.mxu0 %v255
  %1165 = vmatmul.mubr.f32.gmra.mxu0 %v254
  %v1166 = vpop.f32.mrf.mxu0
  %v1167 = vadd.f32 %v857, %v1166
  %v1168 = vpop.f32.mrf.mxu0
  %1169 = vmatprep.mubr.f32.mxu0 %v262
  %1170 = vmatmul.mubr.f32.gmra.mxu0 %v261
  %v1171 = vpop.f32.mrf.mxu0
  %v1172 = vadd.f32 %v862, %v1171
  %v1173 = vpop.f32.mrf.mxu0
  %1174 = vmatprep.mubr.f32.mxu0 %v269
  %1175 = vmatmul.mubr.f32.gmra.mxu0 %v268
  %v1176 = vpop.f32.mrf.mxu0
  %v1177 = vadd.f32 %v867, %v1176
  %v1178 = vpop.f32.mrf.mxu0
  %1179 = vmatprep.mubr.f32.mxu0 %v276
  %1180 = vmatmul.mubr.f32.gmra.mxu0 %v275
  %v1181 = vpop.f32.mrf.mxu0
  %v1182 = vadd.f32 %v872, %v1181
  %v1183 = vpop.f32.mrf.mxu0
  %1184 = vmatprep.mubr.f32.mxu0 %v283
  %1185 = vmatmul.mubr.f32.gmra.mxu0 %v282
  %v1186 = vpop.f32.mrf.mxu0
  %v1187 = vadd.f32 %v877, %v1186
  %v1188 = vpop.f32.mrf.mxu0
  %1189 = vmatprep.mubr.f32.mxu0 %v290
  %1190 = vmatmul.mubr.f32.gmra.mxu0 %v289
  %v1191 = vpop.f32.mrf.mxu0
  %v1192 = vadd.f32 %v882, %v1191
  %v1193 = vpop.f32.mrf.mxu0
  %1194 = vmatprep.mubr.f32.mxu0 %v297
  %1195 = vmatmul.mubr.f32.gmra.mxu0 %v296
  %v1196 = vpop.f32.mrf.mxu0
  %v1197 = vadd.f32 %v887, %v1196
  %v1198 = vpop.f32.mrf.mxu0
  %1199 = vmatprep.mubr.f32.mxu0 %v304
  %1200 = vmatmul.mubr.f32.gmra.mxu0 %v303
  %v1201 = vpop.f32.mrf.mxu0
  %v1202 = vadd.f32 %v892, %v1201
  %v1203 = vpop.f32.mrf.mxu0
  %1204 = vmatprep.mubr.f32.mxu0 %v311
  %1205 = vmatmul.mubr.f32.gmra.mxu0 %v310
  %v1206 = vpop.f32.mrf.mxu0
  %v1207 = vadd.f32 %v897, %v1206
  %v1208 = vpop.f32.mrf.mxu0
  %1209 = vmatprep.mubr.f32.mxu0 %v318
  %1210 = vmatmul.mubr.f32.gmra.mxu0 %v317
  %v1211 = vpop.f32.mrf.mxu0
  %v1212 = vadd.f32 %v902, %v1211
  %v1213 = vpop.f32.mrf.mxu0
  %1214 = vmatprep.mubr.f32.mxu0 %v325
  %1215 = vmatmul.mubr.f32.gmra.mxu0 %v324
  %v1216 = vpop.f32.mrf.mxu0
  %v1217 = vadd.f32 %v907, %v1216
  %v1218 = vpop.f32.mrf.mxu0
  %1219 = vmatprep.mubr.f32.mxu0 %v332
  %1220 = vmatmul.mubr.f32.gmra.mxu0 %v331
  %v1221 = vpop.f32.mrf.mxu0
  %v1222 = vadd.f32 %v912, %v1221
  %v1223 = vpop.f32.mrf.mxu0
  %1224 = vmatprep.mubr.f32.mxu0 %v339
  %1225 = vmatmul.mubr.f32.gmra.mxu0 %v338
  %v1226 = vpop.f32.mrf.mxu0
  %v1227 = vadd.f32 %v917, %v1226
  %v1228 = vpop.f32.mrf.mxu0
  %1229 = vmatprep.mubr.f32.mxu0 %v346
  %1230 = vmatmul.mubr.f32.gmra.mxu0 %v345
  %v1231 = vpop.f32.mrf.mxu0
  %v1232 = vadd.f32 %v922, %v1231
  %v1233 = vpop.f32.mrf.mxu0
  %1234 = vmatprep.mubr.f32.mxu0 %v353
  %1235 = vmatmul.mubr.f32.gmra.mxu0 %v352
  %v1236 = vpop.f32.mrf.mxu0
  %v1237 = vadd.f32 %v927, %v1236
  %v1238 = vpop.f32.mrf.mxu0
  %1239 = vdwg.mxu0
  %1240 = vmatprep.subr.mxu0 0.0
  %1241 = vmatpush1.msra.mxu0 %v436
  %1242 = vmatprep.subr.mxu0 0.0
  %1243 = vmatpush1.msra.mxu0 %v435
  %1244 = vmatprep.subr.mxu0 0.0
  %1245 = vmatpush1.msra.mxu0 %v434
  %1246 = vmatprep.subr.mxu0 0.0
  %1247 = vmatpush1.msra.mxu0 %v433
  %1248 = vmatprep.subr.mxu0 0.0
  %1249 = vmatpush1.msra.mxu0 %v432
  %1250 = vmatprep.subr.mxu0 0.0
  %1251 = vmatpush1.msra.mxu0 %v431
  %1252 = vmatprep.subr.mxu0 0.0
  %1253 = vmatpush1.msra.mxu0 %v430
  %1254 = vmatprep.subr.mxu0 0.0
  %1255 = vmatpush1.msra.mxu0 %v429
  %1256 = vmatprep.subr.mxu0 0.0
  %1257 = vmatpush1.msra.mxu0 %v428
  %1258 = vmatprep.subr.mxu0 0.0
  %1259 = vmatpush1.msra.mxu0 %v427
  %1260 = vmatprep.subr.mxu0 0.0
  %1261 = vmatpush1.msra.mxu0 %v426
  %1262 = vmatprep.subr.mxu0 0.0
  %1263 = vmatpush1.msra.mxu0 %v425
  %1264 = vmatprep.subr.mxu0 0.0
  %1265 = vmatpush1.msra.mxu0 %v424
  %1266 = vmatprep.subr.mxu0 0.0
  %1267 = vmatpush1.msra.mxu0 %v423
  %1268 = vmatprep.subr.mxu0 0.0
  %1269 = vmatpush1.msra.mxu0 %v422
  %1270 = vmatprep.subr.mxu0 0.0
  %1271 = vmatpush1.msra.mxu0 %v421
  %1272 = vmatprep.subr.mxu0 0.0
  %1273 = vmatpush2.msra.mxu0 %v452
  %1274 = vmatprep.subr.mxu0 0.0
  %1275 = vmatpush2.msra.mxu0 %v451
  %1276 = vmatprep.subr.mxu0 0.0
  %1277 = vmatpush2.msra.mxu0 %v450
  %1278 = vmatprep.subr.mxu0 0.0
  %1279 = vmatpush2.msra.mxu0 %v449
  %1280 = vmatprep.subr.mxu0 0.0
  %1281 = vmatpush2.msra.mxu0 %v448
  %1282 = vmatprep.subr.mxu0 0.0
  %1283 = vmatpush2.msra.mxu0 %v447
  %1284 = vmatprep.subr.mxu0 0.0
  %1285 = vmatpush2.msra.mxu0 %v446
  %1286 = vmatprep.subr.mxu0 0.0
  %1287 = vmatpush2.msra.mxu0 %v445
  %1288 = vmatprep.subr.mxu0 0.0
  %1289 = vmatpush2.msra.mxu0 %v444
  %1290 = vmatprep.subr.mxu0 0.0
  %1291 = vmatpush2.msra.mxu0 %v443
  %1292 = vmatprep.subr.mxu0 0.0
  %1293 = vmatpush2.msra.mxu0 %v442
  %1294 = vmatprep.subr.mxu0 0.0
  %1295 = vmatpush2.msra.mxu0 %v441
  %1296 = vmatprep.subr.mxu0 0.0
  %1297 = vmatpush2.msra.mxu0 %v440
  %1298 = vmatprep.subr.mxu0 0.0
  %1299 = vmatpush2.msra.mxu0 %v439
  %1300 = vmatprep.subr.mxu0 0.0
  %1301 = vmatpush2.msra.mxu0 %v438
  %1302 = vmatprep.subr.mxu0 0.0
  %1303 = vmatpush2.msra.mxu0 %v437
  %1304 = vmatprep.mubr.f32.mxu0 %v19
  %1305 = vmatmul.mubr.f32.gmra.mxu0 %v18
  %v1306 = vpop.f32.mrf.mxu0
  %v1307 = vadd.f32 %v997, %v1306
  %v1308 = vpop.f32.mrf.mxu0
  %1309 = vmatprep.mubr.f32.mxu0 %v26
  %1310 = vmatmul.mubr.f32.gmra.mxu0 %v25
  %v1311 = vpop.f32.mrf.mxu0
  %v1312 = vadd.f32 %v1002, %v1311
  %v1313 = vpop.f32.mrf.mxu0
  %1314 = vmatprep.mubr.f32.mxu0 %v33
  %1315 = vmatmul.mubr.f32.gmra.mxu0 %v32
  %v1316 = vpop.f32.mrf.mxu0
  %v1317 = vadd.f32 %v1007, %v1316
  %v1318 = vpop.f32.mrf.mxu0
  %1319 = vmatprep.mubr.f32.mxu0 %v40
  %1320 = vmatmul.mubr.f32.gmra.mxu0 %v39
  %v1321 = vpop.f32.mrf.mxu0
  %v1322 = vadd.f32 %v1012, %v1321
  %v1323 = vpop.f32.mrf.mxu0
  %1324 = vmatprep.mubr.f32.mxu0 %v47
  %1325 = vmatmul.mubr.f32.gmra.mxu0 %v46
  %v1326 = vpop.f32.mrf.mxu0
  %v1327 = vadd.f32 %v1017, %v1326
  %v1328 = vpop.f32.mrf.mxu0
  %1329 = vmatprep.mubr.f32.mxu0 %v54
  %1330 = vmatmul.mubr.f32.gmra.mxu0 %v53
  %v1331 = vpop.f32.mrf.mxu0
  %v1332 = vadd.f32 %v1022, %v1331
  %v1333 = vpop.f32.mrf.mxu0
  %1334 = vmatprep.mubr.f32.mxu0 %v61
  %1335 = vmatmul.mubr.f32.gmra.mxu0 %v60
  %v1336 = vpop.f32.mrf.mxu0
  %v1337 = vadd.f32 %v1027, %v1336
  %v1338 = vpop.f32.mrf.mxu0
  %1339 = vmatprep.mubr.f32.mxu0 %v68
  %1340 = vmatmul.mubr.f32.gmra.mxu0 %v67
  %v1341 = vpop.f32.mrf.mxu0
  %v1342 = vadd.f32 %v1032, %v1341
  %v1343 = vpop.f32.mrf.mxu0
  %1344 = vmatprep.mubr.f32.mxu0 %v75
  %1345 = vmatmul.mubr.f32.gmra.mxu0 %v74
  %v1346 = vpop.f32.mrf.mxu0
  %v1347 = vadd.f32 %v1037, %v1346
  %v1348 = vpop.f32.mrf.mxu0
  %1349 = vmatprep.mubr.f32.mxu0 %v82
  %1350 = vmatmul.mubr.f32.gmra.mxu0 %v81
  %v1351 = vpop.f32.mrf.mxu0
  %v1352 = vadd.f32 %v1042, %v1351
  %v1353 = vpop.f32.mrf.mxu0
  %1354 = vmatprep.mubr.f32.mxu0 %v89
  %1355 = vmatmul.mubr.f32.gmra.mxu0 %v88
  %v1356 = vpop.f32.mrf.mxu0
  %v1357 = vadd.f32 %v1047, %v1356
  %v1358 = vpop.f32.mrf.mxu0
  %1359 = vmatprep.mubr.f32.mxu0 %v96
  %1360 = vmatmul.mubr.f32.gmra.mxu0 %v95
  %v1361 = vpop.f32.mrf.mxu0
  %v1362 = vadd.f32 %v1052, %v1361
  %v1363 = vpop.f32.mrf.mxu0
  %1364 = vmatprep.mubr.f32.mxu0 %v103
  %1365 = vmatmul.mubr.f32.gmra.mxu0 %v102
  %v1366 = vpop.f32.mrf.mxu0
  %v1367 = vadd.f32 %v1057, %v1366
  %v1368 = vpop.f32.mrf.mxu0
  %1369 = vmatprep.mubr.f32.mxu0 %v110
  %1370 = vmatmul.mubr.f32.gmra.mxu0 %v109
  %v1371 = vpop.f32.mrf.mxu0
  %v1372 = vadd.f32 %v1062, %v1371
  %v1373 = vpop.f32.mrf.mxu0
  %1374 = vmatprep.mubr.f32.mxu0 %v117
  %1375 = vmatmul.mubr.f32.gmra.mxu0 %v116
  %v1376 = vpop.f32.mrf.mxu0
  %v1377 = vadd.f32 %v1067, %v1376
  %v1378 = vpop.f32.mrf.mxu0
  %1379 = vmatprep.mubr.f32.mxu0 %v124
  %1380 = vmatmul.mubr.f32.gmra.mxu0 %v123
  %v1381 = vpop.f32.mrf.mxu0
  %v1382 = vadd.f32 %v1072, %v1381
  %v1383 = vpop.f32.mrf.mxu0
  %1384 = vmatprep.mubr.f32.mxu0 %v131
  %1385 = vmatmul.mubr.f32.gmra.mxu0 %v130
  %v1386 = vpop.f32.mrf.mxu0
  %v1387 = vadd.f32 %v1077, %v1386
  %v1388 = vpop.f32.mrf.mxu0
  %1389 = vmatprep.mubr.f32.mxu0 %v138
  %1390 = vmatmul.mubr.f32.gmra.mxu0 %v137
  %v1391 = vpop.f32.mrf.mxu0
  %v1392 = vadd.f32 %v1082, %v1391
  %v1393 = vpop.f32.mrf.mxu0
  %1394 = vmatprep.mubr.f32.mxu0 %v145
  %1395 = vmatmul.mubr.f32.gmra.mxu0 %v144
  %v1396 = vpop.f32.mrf.mxu0
  %v1397 = vadd.f32 %v1087, %v1396
  %v1398 = vpop.f32.mrf.mxu0
  %1399 = vmatprep.mubr.f32.mxu0 %v152
  %1400 = vmatmul.mubr.f32.gmra.mxu0 %v151
  %v1401 = vpop.f32.mrf.mxu0
  %v1402 = vadd.f32 %v1092, %v1401
  %v1403 = vpop.f32.mrf.mxu0
  %1404 = vmatprep.mubr.f32.mxu0 %v159
  %1405 = vmatmul.mubr.f32.gmra.mxu0 %v158
  %v1406 = vpop.f32.mrf.mxu0
  %v1407 = vadd.f32 %v1097, %v1406
  %v1408 = vpop.f32.mrf.mxu0
  %1409 = vmatprep.mubr.f32.mxu0 %v166
  %1410 = vmatmul.mubr.f32.gmra.mxu0 %v165
  %v1411 = vpop.f32.mrf.mxu0
  %v1412 = vadd.f32 %v1102, %v1411
  %v1413 = vpop.f32.mrf.mxu0
  %1414 = vmatprep.mubr.f32.mxu0 %v173
  %1415 = vmatmul.mubr.f32.gmra.mxu0 %v172
  %v1416 = vpop.f32.mrf.mxu0
  %v1417 = vadd.f32 %v1107, %v1416
  %v1418 = vpop.f32.mrf.mxu0
  %1419 = vmatprep.mubr.f32.mxu0 %v180
  %1420 = vmatmul.mubr.f32.gmra.mxu0 %v179
  %v1421 = vpop.f32.mrf.mxu0
  %v1422 = vadd.f32 %v1112, %v1421
  %v1423 = vpop.f32.mrf.mxu0
  %1424 = vmatprep.mubr.f32.mxu0 %v187
  %1425 = vmatmul.mubr.f32.gmra.mxu0 %v186
  %v1426 = vpop.f32.mrf.mxu0
  %v1427 = vadd.f32 %v1117, %v1426
  %v1428 = vpop.f32.mrf.mxu0
  %1429 = vmatprep.mubr.f32.mxu0 %v194
  %1430 = vmatmul.mubr.f32.gmra.mxu0 %v193
  %v1431 = vpop.f32.mrf.mxu0
  %v1432 = vadd.f32 %v1122, %v1431
  %v1433 = vpop.f32.mrf.mxu0
  %1434 = vmatprep.mubr.f32.mxu0 %v201
  %1435 = vmatmul.mubr.f32.gmra.mxu0 %v200
  %v1436 = vpop.f32.mrf.mxu0
  %v1437 = vadd.f32 %v1127, %v1436
  %v1438 = vpop.f32.mrf.mxu0
  %1439 = vmatprep.mubr.f32.mxu0 %v208
  %1440 = vmatmul.mubr.f32.gmra.mxu0 %v207
  %v1441 = vpop.f32.mrf.mxu0
  %v1442 = vadd.f32 %v1132, %v1441
  %v1443 = vpop.f32.mrf.mxu0
  %1444 = vmatprep.mubr.f32.mxu0 %v215
  %1445 = vmatmul.mubr.f32.gmra.mxu0 %v214
  %v1446 = vpop.f32.mrf.mxu0
  %v1447 = vadd.f32 %v1137, %v1446
  %v1448 = vpop.f32.mrf.mxu0
  %1449 = vmatprep.mubr.f32.mxu0 %v222
  %1450 = vmatmul.mubr.f32.gmra.mxu0 %v221
  %v1451 = vpop.f32.mrf.mxu0
  %v1452 = vadd.f32 %v1142, %v1451
  %v1453 = vpop.f32.mrf.mxu0
  %1454 = vmatprep.mubr.f32.mxu0 %v229
  %1455 = vmatmul.mubr.f32.gmra.mxu0 %v228
  %v1456 = vpop.f32.mrf.mxu0
  %v1457 = vadd.f32 %v1147, %v1456
  %v1458 = vpop.f32.mrf.mxu0
  %1459 = vmatprep.mubr.f32.mxu0 %v236
  %1460 = vmatmul.mubr.f32.gmra.mxu0 %v235
  %v1461 = vpop.f32.mrf.mxu0
  %v1462 = vadd.f32 %v1152, %v1461
  %v1463 = vpop.f32.mrf.mxu0
  %1464 = vmatprep.mubr.f32.mxu0 %v243
  %1465 = vmatmul.mubr.f32.gmra.mxu0 %v242
  %v1466 = vpop.f32.mrf.mxu0
  %v1467 = vadd.f32 %v1157, %v1466
  %v1468 = vpop.f32.mrf.mxu0
  %1469 = vmatprep.mubr.f32.mxu0 %v250
  %1470 = vmatmul.mubr.f32.gmra.mxu0 %v249
  %v1471 = vpop.f32.mrf.mxu0
  %v1472 = vadd.f32 %v1162, %v1471
  %v1473 = vpop.f32.mrf.mxu0
  %1474 = vmatprep.mubr.f32.mxu0 %v257
  %1475 = vmatmul.mubr.f32.gmra.mxu0 %v256
  %v1476 = vpop.f32.mrf.mxu0
  %v1477 = vadd.f32 %v1167, %v1476
  %v1478 = vpop.f32.mrf.mxu0
  %1479 = vmatprep.mubr.f32.mxu0 %v264
  %1480 = vmatmul.mubr.f32.gmra.mxu0 %v263
  %v1481 = vpop.f32.mrf.mxu0
  %v1482 = vadd.f32 %v1172, %v1481
  %v1483 = vpop.f32.mrf.mxu0
  %1484 = vmatprep.mubr.f32.mxu0 %v271
  %1485 = vmatmul.mubr.f32.gmra.mxu0 %v270
  %v1486 = vpop.f32.mrf.mxu0
  %v1487 = vadd.f32 %v1177, %v1486
  %v1488 = vpop.f32.mrf.mxu0
  %1489 = vmatprep.mubr.f32.mxu0 %v278
  %1490 = vmatmul.mubr.f32.gmra.mxu0 %v277
  %v1491 = vpop.f32.mrf.mxu0
  %v1492 = vadd.f32 %v1182, %v1491
  %v1493 = vpop.f32.mrf.mxu0
  %1494 = vmatprep.mubr.f32.mxu0 %v285
  %1495 = vmatmul.mubr.f32.gmra.mxu0 %v284
  %v1496 = vpop.f32.mrf.mxu0
  %v1497 = vadd.f32 %v1187, %v1496
  %v1498 = vpop.f32.mrf.mxu0
  %1499 = vmatprep.mubr.f32.mxu0 %v292
  %1500 = vmatmul.mubr.f32.gmra.mxu0 %v291
  %v1501 = vpop.f32.mrf.mxu0
  %v1502 = vadd.f32 %v1192, %v1501
  %v1503 = vpop.f32.mrf.mxu0
  %1504 = vmatprep.mubr.f32.mxu0 %v299
  %1505 = vmatmul.mubr.f32.gmra.mxu0 %v298
  %v1506 = vpop.f32.mrf.mxu0
  %v1507 = vadd.f32 %v1197, %v1506
  %v1508 = vpop.f32.mrf.mxu0
  %1509 = vmatprep.mubr.f32.mxu0 %v306
  %1510 = vmatmul.mubr.f32.gmra.mxu0 %v305
  %v1511 = vpop.f32.mrf.mxu0
  %v1512 = vadd.f32 %v1202, %v1511
  %v1513 = vpop.f32.mrf.mxu0
  %1514 = vmatprep.mubr.f32.mxu0 %v313
  %1515 = vmatmul.mubr.f32.gmra.mxu0 %v312
  %v1516 = vpop.f32.mrf.mxu0
  %v1517 = vadd.f32 %v1207, %v1516
  %v1518 = vpop.f32.mrf.mxu0
  %1519 = vmatprep.mubr.f32.mxu0 %v320
  %1520 = vmatmul.mubr.f32.gmra.mxu0 %v319
  %v1521 = vpop.f32.mrf.mxu0
  %v1522 = vadd.f32 %v1212, %v1521
  %v1523 = vpop.f32.mrf.mxu0
  %1524 = vmatprep.mubr.f32.mxu0 %v327
  %1525 = vmatmul.mubr.f32.gmra.mxu0 %v326
  %v1526 = vpop.f32.mrf.mxu0
  %v1527 = vadd.f32 %v1217, %v1526
  %v1528 = vpop.f32.mrf.mxu0
  %1529 = vmatprep.mubr.f32.mxu0 %v334
  %1530 = vmatmul.mubr.f32.gmra.mxu0 %v333
  %v1531 = vpop.f32.mrf.mxu0
  %v1532 = vadd.f32 %v1222, %v1531
  %v1533 = vpop.f32.mrf.mxu0
  %1534 = vmatprep.mubr.f32.mxu0 %v341
  %1535 = vmatmul.mubr.f32.gmra.mxu0 %v340
  %v1536 = vpop.f32.mrf.mxu0
  %v1537 = vadd.f32 %v1227, %v1536
  %v1538 = vpop.f32.mrf.mxu0
  %1539 = vmatprep.mubr.f32.mxu0 %v348
  %1540 = vmatmul.mubr.f32.gmra.mxu0 %v347
  %v1541 = vpop.f32.mrf.mxu0
  %v1542 = vadd.f32 %v1232, %v1541
  %v1543 = vpop.f32.mrf.mxu0
  %1544 = vmatprep.mubr.f32.mxu0 %v355
  %1545 = vmatmul.mubr.f32.gmra.mxu0 %v354
  %v1546 = vpop.f32.mrf.mxu0
  %v1547 = vadd.f32 %v1237, %v1546
  %v1548 = vpop.f32.mrf.mxu0
  %1549 = vdwg.mxu0
  %1550 = vmatprep.subr.mxu0 0.0
  %1551 = vmatpush1.msra.mxu0 0.0
  %1552 = vmatprep.subr.mxu0 0.0
  %1553 = vmatpush1.msra.mxu0 0.0
  %1554 = vmatprep.subr.mxu0 0.0
  %1555 = vmatpush1.msra.mxu0 0.0
  %1556 = vmatprep.subr.mxu0 0.0
  %1557 = vmatpush1.msra.mxu0 0.0
  %1558 = vmatprep.subr.mxu0 0.0
  %1559 = vmatpush1.msra.mxu0 %v464
  %1560 = vmatprep.subr.mxu0 0.0
  %1561 = vmatpush1.msra.mxu0 %v463
  %1562 = vmatprep.subr.mxu0 0.0
  %1563 = vmatpush1.msra.mxu0 %v462
  %1564 = vmatprep.subr.mxu0 0.0
  %1565 = vmatpush1.msra.mxu0 %v461
  %1566 = vmatprep.subr.mxu0 0.0
  %1567 = vmatpush1.msra.mxu0 %v460
  %1568 = vmatprep.subr.mxu0 0.0
  %1569 = vmatpush1.msra.mxu0 %v459
  %1570 = vmatprep.subr.mxu0 0.0
  %1571 = vmatpush1.msra.mxu0 %v458
  %1572 = vmatprep.subr.mxu0 0.0
  %1573 = vmatpush1.msra.mxu0 %v457
  %1574 = vmatprep.subr.mxu0 0.0
  %1575 = vmatpush1.msra.mxu0 %v456
  %1576 = vmatprep.subr.mxu0 0.0
  %1577 = vmatpush1.msra.mxu0 %v455
  %1578 = vmatprep.subr.mxu0 0.0
  %1579 = vmatpush1.msra.mxu0 %v454
  %1580 = vmatprep.subr.mxu0 0.0
  %1581 = vmatpush1.msra.mxu0 %v453
  %1582 = vmatprep.subr.mxu0 0.0
  %1583 = vmatpush2.msra.mxu0 0.0
  %1584 = vmatprep.subr.mxu0 0.0
  %1585 = vmatpush2.msra.mxu0 0.0
  %1586 = vmatprep.subr.mxu0 0.0
  %1587 = vmatpush2.msra.mxu0 0.0
  %1588 = vmatprep.subr.mxu0 0.0
  %1589 = vmatpush2.msra.mxu0 0.0
  %1590 = vmatprep.subr.mxu0 0.0
  %1591 = vmatpush2.msra.mxu0 0.0
  %1592 = vmatprep.subr.mxu0 0.0
  %1593 = vmatpush2.msra.mxu0 0.0
  %1594 = vmatprep.subr.mxu0 0.0
  %1595 = vmatpush2.msra.mxu0 0.0
  %1596 = vmatprep.subr.mxu0 0.0
  %1597 = vmatpush2.msra.mxu0 0.0
  %1598 = vmatprep.subr.mxu0 0.0
  %1599 = vmatpush2.msra.mxu0 0.0
  %1600 = vmatprep.subr.mxu0 0.0
  %1601 = vmatpush2.msra.mxu0 0.0
  %1602 = vmatprep.subr.mxu0 0.0
  %1603 = vmatpush2.msra.mxu0 0.0
  %1604 = vmatprep.subr.mxu0 0.0
  %1605 = vmatpush2.msra.mxu0 0.0
  %1606 = vmatprep.subr.mxu0 0.0
  %1607 = vmatpush2.msra.mxu0 0.0
  %1608 = vmatprep.subr.mxu0 0.0
  %1609 = vmatpush2.msra.mxu0 0.0
  %1610 = vmatprep.subr.mxu0 0.0
  %1611 = vmatpush2.msra.mxu0 0.0
  %1612 = vmatprep.subr.mxu0 0.0
  %1613 = vmatpush2.msra.mxu0 0.0
  %1614 = vmatprep.mubr.f32.mxu0 0.0
  %1615 = vmatmul.mubr.f32.gmra.mxu0 %v474
  %v1616 = vpop.f32.mrf.mxu0
  %v1617 = vadd.f32 %v1307, %v1616
  %v1618 = vpop.f32.mrf.mxu0
  %1619 = vmatprep.mubr.f32.mxu0 0.0
  %1620 = vmatmul.mubr.f32.gmra.mxu0 %v477
  %v1621 = vpop.f32.mrf.mxu0
  %v1622 = vadd.f32 %v1312, %v1621
  %v1623 = vpop.f32.mrf.mxu0
  %1624 = vmatprep.mubr.f32.mxu0 0.0
  %1625 = vmatmul.mubr.f32.gmra.mxu0 %v480
  %v1626 = vpop.f32.mrf.mxu0
  %v1627 = vadd.f32 %v1317, %v1626
  %v1628 = vpop.f32.mrf.mxu0
  %1629 = vmatprep.mubr.f32.mxu0 0.0
  %1630 = vmatmul.mubr.f32.gmra.mxu0 %v483
  %v1631 = vpop.f32.mrf.mxu0
  %v1632 = vadd.f32 %v1322, %v1631
  %v1633 = vpop.f32.mrf.mxu0
  %1634 = vmatprep.mubr.f32.mxu0 0.0
  %1635 = vmatmul.mubr.f32.gmra.mxu0 %v486
  %v1636 = vpop.f32.mrf.mxu0
  %v1637 = vadd.f32 %v1327, %v1636
  %v1638 = vpop.f32.mrf.mxu0
  %1639 = vmatprep.mubr.f32.mxu0 0.0
  %1640 = vmatmul.mubr.f32.gmra.mxu0 %v489
  %v1641 = vpop.f32.mrf.mxu0
  %v1642 = vadd.f32 %v1332, %v1641
  %v1643 = vpop.f32.mrf.mxu0
  %1644 = vmatprep.mubr.f32.mxu0 0.0
  %1645 = vmatmul.mubr.f32.gmra.mxu0 %v492
  %v1646 = vpop.f32.mrf.mxu0
  %v1647 = vadd.f32 %v1337, %v1646
  %v1648 = vpop.f32.mrf.mxu0
  %1649 = vmatprep.mubr.f32.mxu0 0.0
  %1650 = vmatmul.mubr.f32.gmra.mxu0 %v495
  %v1651 = vpop.f32.mrf.mxu0
  %v1652 = vadd.f32 %v1342, %v1651
  %v1653 = vpop.f32.mrf.mxu0
  %1654 = vmatprep.mubr.f32.mxu0 0.0
  %1655 = vmatmul.mubr.f32.gmra.mxu0 %v498
  %v1656 = vpop.f32.mrf.mxu0
  %v1657 = vadd.f32 %v1347, %v1656
  %v1658 = vpop.f32.mrf.mxu0
  %1659 = vmatprep.mubr.f32.mxu0 0.0
  %1660 = vmatmul.mubr.f32.gmra.mxu0 %v501
  %v1661 = vpop.f32.mrf.mxu0
  %v1662 = vadd.f32 %v1352, %v1661
  %v1663 = vpop.f32.mrf.mxu0
  %1664 = vmatprep.mubr.f32.mxu0 0.0
  %1665 = vmatmul.mubr.f32.gmra.mxu0 %v504
  %v1666 = vpop.f32.mrf.mxu0
  %v1667 = vadd.f32 %v1357, %v1666
  %v1668 = vpop.f32.mrf.mxu0
  %1669 = vmatprep.mubr.f32.mxu0 0.0
  %1670 = vmatmul.mubr.f32.gmra.mxu0 %v507
  %v1671 = vpop.f32.mrf.mxu0
  %v1672 = vadd.f32 %v1362, %v1671
  %v1673 = vpop.f32.mrf.mxu0
  %1674 = vmatprep.mubr.f32.mxu0 0.0
  %1675 = vmatmul.mubr.f32.gmra.mxu0 %v510
  %v1676 = vpop.f32.mrf.mxu0
  %v1677 = vadd.f32 %v1367, %v1676
  %v1678 = vpop.f32.mrf.mxu0
  %1679 = vmatprep.mubr.f32.mxu0 0.0
  %1680 = vmatmul.mubr.f32.gmra.mxu0 %v513
  %v1681 = vpop.f32.mrf.mxu0
  %v1682 = vadd.f32 %v1372, %v1681
  %v1683 = vpop.f32.mrf.mxu0
  %1684 = vmatprep.mubr.f32.mxu0 0.0
  %1685 = vmatmul.mubr.f32.gmra.mxu0 %v516
  %v1686 = vpop.f32.mrf.mxu0
  %v1687 = vadd.f32 %v1377, %v1686
  %v1688 = vpop.f32.mrf.mxu0
  %1689 = vmatprep.mubr.f32.mxu0 0.0
  %1690 = vmatmul.mubr.f32.gmra.mxu0 %v519
  %v1691 = vpop.f32.mrf.mxu0
  %v1692 = vadd.f32 %v1382, %v1691
  %v1693 = vpop.f32.mrf.mxu0
  %1694 = vmatprep.mubr.f32.mxu0 0.0
  %1695 = vmatmul.mubr.f32.gmra.mxu0 %v522
  %v1696 = vpop.f32.mrf.mxu0
  %v1697 = vadd.f32 %v1387, %v1696
  %v1698 = vpop.f32.mrf.mxu0
  %1699 = vmatprep.mubr.f32.mxu0 0.0
  %1700 = vmatmul.mubr.f32.gmra.mxu0 %v525
  %v1701 = vpop.f32.mrf.mxu0
  %v1702 = vadd.f32 %v1392, %v1701
  %v1703 = vpop.f32.mrf.mxu0
  %1704 = vmatprep.mubr.f32.mxu0 0.0
  %1705 = vmatmul.mubr.f32.gmra.mxu0 %v528
  %v1706 = vpop.f32.mrf.mxu0
  %v1707 = vadd.f32 %v1397, %v1706
  %v1708 = vpop.f32.mrf.mxu0
  %1709 = vmatprep.mubr.f32.mxu0 0.0
  %1710 = vmatmul.mubr.f32.gmra.mxu0 %v531
  %v1711 = vpop.f32.mrf.mxu0
  %v1712 = vadd.f32 %v1402, %v1711
  %v1713 = vpop.f32.mrf.mxu0
  %1714 = vmatprep.mubr.f32.mxu0 0.0
  %1715 = vmatmul.mubr.f32.gmra.mxu0 %v534
  %v1716 = vpop.f32.mrf.mxu0
  %v1717 = vadd.f32 %v1407, %v1716
  %v1718 = vpop.f32.mrf.mxu0
  %1719 = vmatprep.mubr.f32.mxu0 0.0
  %1720 = vmatmul.mubr.f32.gmra.mxu0 %v537
  %v1721 = vpop.f32.mrf.mxu0
  %v1722 = vadd.f32 %v1412, %v1721
  %v1723 = vpop.f32.mrf.mxu0
  %1724 = vmatprep.mubr.f32.mxu0 0.0
  %1725 = vmatmul.mubr.f32.gmra.mxu0 %v540
  %v1726 = vpop.f32.mrf.mxu0
  %v1727 = vadd.f32 %v1417, %v1726
  %v1728 = vpop.f32.mrf.mxu0
  %1729 = vmatprep.mubr.f32.mxu0 0.0
  %1730 = vmatmul.mubr.f32.gmra.mxu0 %v543
  %v1731 = vpop.f32.mrf.mxu0
  %v1732 = vadd.f32 %v1422, %v1731
  %v1733 = vpop.f32.mrf.mxu0
  %1734 = vmatprep.mubr.f32.mxu0 0.0
  %1735 = vmatmul.mubr.f32.gmra.mxu0 %v546
  %v1736 = vpop.f32.mrf.mxu0
  %v1737 = vadd.f32 %v1427, %v1736
  %v1738 = vpop.f32.mrf.mxu0
  %1739 = vmatprep.mubr.f32.mxu0 0.0
  %1740 = vmatmul.mubr.f32.gmra.mxu0 %v549
  %v1741 = vpop.f32.mrf.mxu0
  %v1742 = vadd.f32 %v1432, %v1741
  %v1743 = vpop.f32.mrf.mxu0
  %1744 = vmatprep.mubr.f32.mxu0 0.0
  %1745 = vmatmul.mubr.f32.gmra.mxu0 %v552
  %v1746 = vpop.f32.mrf.mxu0
  %v1747 = vadd.f32 %v1437, %v1746
  %v1748 = vpop.f32.mrf.mxu0
  %1749 = vmatprep.mubr.f32.mxu0 0.0
  %1750 = vmatmul.mubr.f32.gmra.mxu0 %v555
  %v1751 = vpop.f32.mrf.mxu0
  %v1752 = vadd.f32 %v1442, %v1751
  %v1753 = vpop.f32.mrf.mxu0
  %1754 = vmatprep.mubr.f32.mxu0 0.0
  %1755 = vmatmul.mubr.f32.gmra.mxu0 %v558
  %v1756 = vpop.f32.mrf.mxu0
  %v1757 = vadd.f32 %v1447, %v1756
  %v1758 = vpop.f32.mrf.mxu0
  %1759 = vmatprep.mubr.f32.mxu0 0.0
  %1760 = vmatmul.mubr.f32.gmra.mxu0 %v561
  %v1761 = vpop.f32.mrf.mxu0
  %v1762 = vadd.f32 %v1452, %v1761
  %v1763 = vpop.f32.mrf.mxu0
  %1764 = vmatprep.mubr.f32.mxu0 0.0
  %1765 = vmatmul.mubr.f32.gmra.mxu0 %v564
  %v1766 = vpop.f32.mrf.mxu0
  %v1767 = vadd.f32 %v1457, %v1766
  %v1768 = vpop.f32.mrf.mxu0
  %1769 = vmatprep.mubr.f32.mxu0 0.0
  %1770 = vmatmul.mubr.f32.gmra.mxu0 %v567
  %v1771 = vpop.f32.mrf.mxu0
  %v1772 = vadd.f32 %v1462, %v1771
  %v1773 = vpop.f32.mrf.mxu0
  %1774 = vmatprep.mubr.f32.mxu0 0.0
  %1775 = vmatmul.mubr.f32.gmra.mxu0 %v570
  %v1776 = vpop.f32.mrf.mxu0
  %v1777 = vadd.f32 %v1467, %v1776
  %v1778 = vpop.f32.mrf.mxu0
  %1779 = vmatprep.mubr.f32.mxu0 0.0
  %1780 = vmatmul.mubr.f32.gmra.mxu0 %v573
  %v1781 = vpop.f32.mrf.mxu0
  %v1782 = vadd.f32 %v1472, %v1781
  %v1783 = vpop.f32.mrf.mxu0
  %1784 = vmatprep.mubr.f32.mxu0 0.0
  %1785 = vmatmul.mubr.f32.gmra.mxu0 %v576
  %v1786 = vpop.f32.mrf.mxu0
  %v1787 = vadd.f32 %v1477, %v1786
  %v1788 = vpop.f32.mrf.mxu0
  %1789 = vmatprep.mubr.f32.mxu0 0.0
  %1790 = vmatmul.mubr.f32.gmra.mxu0 %v579
  %v1791 = vpop.f32.mrf.mxu0
  %v1792 = vadd.f32 %v1482, %v1791
  %v1793 = vpop.f32.mrf.mxu0
  %1794 = vmatprep.mubr.f32.mxu0 0.0
  %1795 = vmatmul.mubr.f32.gmra.mxu0 %v582
  %v1796 = vpop.f32.mrf.mxu0
  %v1797 = vadd.f32 %v1487, %v1796
  %v1798 = vpop.f32.mrf.mxu0
  %1799 = vmatprep.mubr.f32.mxu0 0.0
  %1800 = vmatmul.mubr.f32.gmra.mxu0 %v585
  %v1801 = vpop.f32.mrf.mxu0
  %v1802 = vadd.f32 %v1492, %v1801
  %v1803 = vpop.f32.mrf.mxu0
  %1804 = vmatprep.mubr.f32.mxu0 0.0
  %1805 = vmatmul.mubr.f32.gmra.mxu0 %v588
  %v1806 = vpop.f32.mrf.mxu0
  %v1807 = vadd.f32 %v1497, %v1806
  %v1808 = vpop.f32.mrf.mxu0
  %1809 = vmatprep.mubr.f32.mxu0 0.0
  %1810 = vmatmul.mubr.f32.gmra.mxu0 %v591
  %v1811 = vpop.f32.mrf.mxu0
  %v1812 = vadd.f32 %v1502, %v1811
  %v1813 = vpop.f32.mrf.mxu0
  %1814 = vmatprep.mubr.f32.mxu0 0.0
  %1815 = vmatmul.mubr.f32.gmra.mxu0 %v594
  %v1816 = vpop.f32.mrf.mxu0
  %v1817 = vadd.f32 %v1507, %v1816
  %v1818 = vpop.f32.mrf.mxu0
  %1819 = vmatprep.mubr.f32.mxu0 0.0
  %1820 = vmatmul.mubr.f32.gmra.mxu0 %v597
  %v1821 = vpop.f32.mrf.mxu0
  %v1822 = vadd.f32 %v1512, %v1821
  %v1823 = vpop.f32.mrf.mxu0
  %1824 = vmatprep.mubr.f32.mxu0 0.0
  %1825 = vmatmul.mubr.f32.gmra.mxu0 %v600
  %v1826 = vpop.f32.mrf.mxu0
  %v1827 = vadd.f32 %v1517, %v1826
  %v1828 = vpop.f32.mrf.mxu0
  %1829 = vmatprep.mubr.f32.mxu0 0.0
  %1830 = vmatmul.mubr.f32.gmra.mxu0 %v603
  %v1831 = vpop.f32.mrf.mxu0
  %v1832 = vadd.f32 %v1522, %v1831
  %v1833 = vpop.f32.mrf.mxu0
  %1834 = vmatprep.mubr.f32.mxu0 0.0
  %1835 = vmatmul.mubr.f32.gmra.mxu0 %v606
  %v1836 = vpop.f32.mrf.mxu0
  %v1837 = vadd.f32 %v1527, %v1836
  %v1838 = vpop.f32.mrf.mxu0
  %1839 = vmatprep.mubr.f32.mxu0 0.0
  %1840 = vmatmul.mubr.f32.gmra.mxu0 %v609
  %v1841 = vpop.f32.mrf.mxu0
  %v1842 = vadd.f32 %v1532, %v1841
  %v1843 = vpop.f32.mrf.mxu0
  %1844 = vmatprep.mubr.f32.mxu0 0.0
  %1845 = vmatmul.mubr.f32.gmra.mxu0 %v612
  %v1846 = vpop.f32.mrf.mxu0
  %v1847 = vadd.f32 %v1537, %v1846
  %v1848 = vpop.f32.mrf.mxu0
  %1849 = vmatprep.mubr.f32.mxu0 0.0
  %1850 = vmatmul.mubr.f32.gmra.mxu0 %v615
  %v1851 = vpop.f32.mrf.mxu0
  %v1852 = vadd.f32 %v1542, %v1851
  %v1853 = vpop.f32.mrf.mxu0
  %1854 = vmatprep.mubr.f32.mxu0 0.0
  %1855 = vmatmul.mubr.f32.gmra.mxu0 %v618
  %v1856 = vpop.f32.mrf.mxu0
  %v1857 = vadd.f32 %v1547, %v1856
  %v1858 = vpop.f32.mrf.mxu0
  %1859 = vdwg.mxu0
  %v1860 = vmax.f32 %v1617, 0.0
  %v1861 = vmax.f32 %v1622, 0.0
  %v1862 = vmax.f32 %v1627, 0.0
  %v1863 = vmax.f32 %v1632, 0.0
  %v1864 = vmax.f32 %v1637, 0.0
  %v1865 = vmax.f32 %v1642, 0.0
  %v1866 = vmax.f32 %v1647, 0.0
  %v1867 = vmax.f32 %v1652, 0.0
  %v1868 = vmax.f32 %v1657, 0.0
  %v1869 = vmax.f32 %v1662, 0.0
  %v1870 = vmax.f32 %v1667, 0.0
  %v1871 = vmax.f32 %v1672, 0.0
  %v1872 = vmax.f32 %v1677, 0.0
  %v1873 = vmax.f32 %v1682, 0.0
  %v1874 = vmax.f32 %v1687, 0.0
  %v1875 = vmax.f32 %v1692, 0.0
  %v1876 = vmax.f32 %v1697, 0.0
  %v1877 = vmax.f32 %v1702, 0.0
  %v1878 = vmax.f32 %v1707, 0.0
  %v1879 = vmax.f32 %v1712, 0.0
  %v1880 = vmax.f32 %v1717, 0.0
  %v1881 = vmax.f32 %v1722, 0.0
  %v1882 = vmax.f32 %v1727, 0.0
  %v1883 = vmax.f32 %v1732, 0.0
  %v1884 = vmax.f32 %v1737, 0.0
  %v1885 = vmax.f32 %v1742, 0.0
  %v1886 = vmax.f32 %v1747, 0.0
  %v1887 = vmax.f32 %v1752, 0.0
  %v1888 = vmax.f32 %v1757, 0.0
  %v1889 = vmax.f32 %v1762, 0.0
  %v1890 = vmax.f32 %v1767, 0.0
  %v1891 = vmax.f32 %v1772, 0.0
  %v1892 = vmax.f32 %v1777, 0.0
  %v1893 = vmax.f32 %v1782, 0.0
  %v1894 = vmax.f32 %v1787, 0.0
  %v1895 = vmax.f32 %v1792, 0.0
  %v1896 = vmax.f32 %v1797, 0.0
  %v1897 = vmax.f32 %v1802, 0.0
  %v1898 = vmax.f32 %v1807, 0.0
  %v1899 = vmax.f32 %v1812, 0.0
  %v1900 = vmax.f32 %v1817, 0.0
  %v1901 = vmax.f32 %v1822, 0.0
  %v1902 = vmax.f32 %v1827, 0.0
  %v1903 = vmax.f32 %v1832, 0.0
  %v1904 = vmax.f32 %v1837, 0.0
  %v1905 = vmax.f32 %v1842, 0.0
  %v1906 = vmax.f32 %v1847, 0.0
  %v1907 = vmax.f32 %v1852, 0.0
  %v1908 = vmax.f32 %v1857, 0.0
  %1909 = vst.msk [vmem:[%s3] sm:$0xff] %vm472, %v1860
  %1910 = vst.msk [vmem:[%s3 + $0x8] sm:$0xff] %vm472, %v1861
  %1911 = vst.msk [vmem:[%s3 + $0x10] sm:$0xff] %vm472, %v1862
  %1912 = vst.msk [vmem:[%s3 + $0x18] sm:$0xff] %vm472, %v1863
  %1913 = vst.msk [vmem:[%s3 + $0x20] sm:$0xff] %vm472, %v1864
  %1914 = vst.msk [vmem:[%s3 + $0x28] sm:$0xff] %vm472, %v1865
  %1915 = vst.msk [vmem:[%s3 + $0x30] sm:$0xff] %vm472, %v1866
  %1916 = vst.msk [vmem:[%s3 + $0x38] sm:$0xff] %vm472, %v1867
  %1917 = vst.msk [vmem:[%s3 + $0x40] sm:$0xff] %vm472, %v1868
  %1918 = vst.msk [vmem:[%s3 + $0x48] sm:$0xff] %vm472, %v1869
  %1919 = vst.msk [vmem:[%s3 + $0x50] sm:$0xff] %vm472, %v1870
  %1920 = vst.msk [vmem:[%s3 + $0x58] sm:$0xff] %vm472, %v1871
  %1921 = vst.msk [vmem:[%s3 + $0x60] sm:$0xff] %vm472, %v1872
  %1922 = vst.msk [vmem:[%s3 + $0x68] sm:$0xff] %vm472, %v1873
  %1923 = vst.msk [vmem:[%s3 + $0x70] sm:$0xff] %vm472, %v1874
  %1924 = vst.msk [vmem:[%s3 + $0x78] sm:$0xff] %vm472, %v1875
  %1925 = vst.msk [vmem:[%s3 + $0x80] sm:$0xff] %vm472, %v1876
  %1926 = vst.msk [vmem:[%s3 + $0x88] sm:$0xff] %vm472, %v1877
  %1927 = vst.msk [vmem:[%s3 + $0x90] sm:$0xff] %vm472, %v1878
  %1928 = vst.msk [vmem:[%s3 + $0x98] sm:$0xff] %vm472, %v1879
  %1929 = vst.msk [vmem:[%s3 + $0xa0] sm:$0xff] %vm472, %v1880
  %1930 = vst.msk [vmem:[%s3 + $0xa8] sm:$0xff] %vm472, %v1881
  %1931 = vst.msk [vmem:[%s3 + $0xb0] sm:$0xff] %vm472, %v1882
  %1932 = vst.msk [vmem:[%s3 + $0xb8] sm:$0xff] %vm472, %v1883
  %1933 = vst.msk [vmem:[%s3 + $0xc0] sm:$0xff] %vm472, %v1884
  %1934 = vst.msk [vmem:[%s3 + $0xc8] sm:$0xff] %vm472, %v1885
  %1935 = vst.msk [vmem:[%s3 + $0xd0] sm:$0xff] %vm472, %v1886
  %1936 = vst.msk [vmem:[%s3 + $0xd8] sm:$0xff] %vm472, %v1887
  %1937 = vst.msk [vmem:[%s3 + $0xe0] sm:$0xff] %vm472, %v1888
  %1938 = vst.msk [vmem:[%s3 + $0xe8] sm:$0xff] %vm472, %v1889
  %1939 = vst.msk [vmem:[%s3 + $0xf0] sm:$0xff] %vm472, %v1890
  %1940 = vst.msk [vmem:[%s3 + $0xf8] sm:$0xff] %vm472, %v1891
  %1941 = vst.msk [vmem:[%s3 + $0x100] sm:$0xff] %vm472, %v1892
  %1942 = vst.msk [vmem:[%s3 + $0x108] sm:$0xff] %vm472, %v1893
  %1943 = vst.msk [vmem:[%s3 + $0x110] sm:$0xff] %vm472, %v1894
  %1944 = vst.msk [vmem:[%s3 + $0x118] sm:$0xff] %vm472, %v1895
  %1945 = vst.msk [vmem:[%s3 + $0x120] sm:$0xff] %vm472, %v1896
  %1946 = vst.msk [vmem:[%s3 + $0x128] sm:$0xff] %vm472, %v1897
  %1947 = vst.msk [vmem:[%s3 + $0x130] sm:$0xff] %vm472, %v1898
  %1948 = vst.msk [vmem:[%s3 + $0x138] sm:$0xff] %vm472, %v1899
  %1949 = vst.msk [vmem:[%s3 + $0x140] sm:$0xff] %vm472, %v1900
  %1950 = vst.msk [vmem:[%s3 + $0x148] sm:$0xff] %vm472, %v1901
  %1951 = vst.msk [vmem:[%s3 + $0x150] sm:$0xff] %vm472, %v1902
  %1952 = vst.msk [vmem:[%s3 + $0x158] sm:$0xff] %vm472, %v1903
  %1953 = vst.msk [vmem:[%s3 + $0x160] sm:$0xff] %vm472, %v1904
  %1954 = vst.msk [vmem:[%s3 + $0x168] sm:$0xff] %vm472, %v1905
  %1955 = vst.msk [vmem:[%s3 + $0x170] sm:$0xff] %vm472, %v1906
  %1956 = vst.msk [vmem:[%s3 + $0x178] sm:$0xff] %vm472, %v1907
  %1957 = vst.msk [vmem:[%s3 + $0x180] sm:$0xff] %vm472, %v1908
  // Predicated region
  $region14: #{network_phi_forward.5} parent=0 // pred_check
    _
  $region15: #{network_phi_forward.5} parent=0 // pred_check_branch
    %1959 = sbr.rel (0) target = $region17
  $region16: #{network_phi_forward.5} parent=0 // pred_region
    _
  $region17: #{network_phi_forward.5} parent=0 // pred_fallthru
    _
  // Predicated region
  $region18: #{network_phi_forward.5} parent=0 // pred_check
    _
  $region19: #{network_phi_forward.5} parent=0 // pred_check_branch
    %1961 = sbr.rel (0) target = $region21
  $region20: #{network_phi_forward.5} parent=0 // pred_region
    _
  $region21: #{network_phi_forward.5} parent=0 // pred_fallthru
    _

// kernel: network_phi_forward.6
$region0: #{network_phi_forward.6}
  #allocation0 [shape = 'u32[]', space=smem, size = 0x4, offset = 0x4, fixed_abs, tag = 'smem constant byte address 0x4 - core index']
  #allocation1 [shape = 'u32[144,128]{1,0:T(1,128)}', space=vmem, size = 0x12000, scoped, tag = 'internal scratch']
  %s0 = inlined_call_operand.vmem [shape: f32[392,96], index: 0, kind: input, shape index: {}]
  %s1 = inlined_call_operand.vmem [shape: f32[96,192], index: 1, kind: input, shape index: {}]
  %s2 = inlined_call_operand.vmem [shape: f32[1,192], index: 2, kind: input, shape index: {}]
  %s3 = inlined_call_operand.vmem [shape: f32[192,10], index: 3, kind: input, shape index: {}]
  %s4 = inlined_call_operand.vmem [shape: f32[1,10], index: 4, kind: input, shape index: {}]
  %s5 = inlined_call_operand.vmem [shape: f32[392,10], index: 5, kind: output, shape index: {}]
  %s6 = sld [smem:[#allocation0]]
  $region30: #{network_phi_forward.6} parent=0
    _
  %s8 = ssub.s32 1, %s6
  %s9 = scalar_select 0, %s8, %s6
  // Predicated region
  $region2: #{network_phi_forward.6} parent=0 // pred_check
    _
  $region3: #{network_phi_forward.6} parent=0 // pred_check_branch
    %11 = sbr.rel (0) target = $region5
  $region4: #{network_phi_forward.6} parent=0 // pred_region
    _
  $region5: #{network_phi_forward.6} parent=0 // pred_fallthru
    _
  // Predicated region
  $region6: #{network_phi_forward.6} parent=0 // pred_check
    _
  $region7: #{network_phi_forward.6} parent=0 // pred_check_branch
    %13 = sbr.rel (0) target = $region9
  $region8: #{network_phi_forward.6} parent=0 // pred_region
    _
  $region9: #{network_phi_forward.6} parent=0 // pred_fallthru
    _
  // Predicated region
  $region10: #{network_phi_forward.6} parent=0 // pred_check
    _
  $region11: #{network_phi_forward.6} parent=0 // pred_check_branch
    %15 = sbr.rel (0) target = $region13
  $region12: #{network_phi_forward.6} parent=0 // pred_region
    _
  $region13: #{network_phi_forward.6} parent=0 // pred_fallthru
    _
  // Predicated region
  $region14: #{network_phi_forward.6} parent=0 // pred_check
    _
  $region15: #{network_phi_forward.6} parent=0 // pred_check_branch
    %17 = sbr.rel (0) target = $region17
  $region16: #{network_phi_forward.6} parent=0 // pred_region
    _
  $region17: #{network_phi_forward.6} parent=0 // pred_fallthru
    _
  // Predicated region
  $region18: #{network_phi_forward.6} parent=0 // pred_check
    _
  $region19: #{network_phi_forward.6} parent=0 // pred_check_branch
    %19 = sbr.rel (0) target = $region21
  $region20: #{network_phi_forward.6} parent=0 // pred_region
    _
  $region21: #{network_phi_forward.6} parent=0 // pred_fallthru
    _
  %v20 = vld [vmem:[%s0] sm:$0xff]
  %v21 = vld [vmem:[%s0 + $0x8] sm:$0xff]
  %v22 = vld [vmem:[%s0 + $0x10] sm:$0xff]
  %v23 = vld [vmem:[%s0 + $0x18] sm:$0xff]
  %v24 = vld [vmem:[%s0 + $0x20] sm:$0xff]
  %v25 = vld [vmem:[%s0 + $0x28] sm:$0xff]
  %v26 = vld [vmem:[%s0 + $0x30] sm:$0xff]
  %v27 = vld [vmem:[%s0 + $0x38] sm:$0xff]
  %v28 = vld [vmem:[%s0 + $0x40] sm:$0xff]
  %v29 = vld [vmem:[%s0 + $0x48] sm:$0xff]
  %v30 = vld [vmem:[%s0 + $0x50] sm:$0xff]
  %v31 = vld [vmem:[%s0 + $0x58] sm:$0xff]
  %v32 = vld [vmem:[%s0 + $0x60] sm:$0xff]
  %v33 = vld [vmem:[%s0 + $0x68] sm:$0xff]
  %v34 = vld [vmem:[%s0 + $0x70] sm:$0xff]
  %v35 = vld [vmem:[%s0 + $0x78] sm:$0xff]
  %v36 = vld [vmem:[%s0 + $0x80] sm:$0xff]
  %v37 = vld [vmem:[%s0 + $0x88] sm:$0xff]
  %v38 = vld [vmem:[%s0 + $0x90] sm:$0xff]
  %v39 = vld [vmem:[%s0 + $0x98] sm:$0xff]
  %v40 = vld [vmem:[%s0 + $0xa0] sm:$0xff]
  %v41 = vld [vmem:[%s0 + $0xa8] sm:$0xff]
  %v42 = vld [vmem:[%s0 + $0xb0] sm:$0xff]
  %v43 = vld [vmem:[%s0 + $0xb8] sm:$0xff]
  %v44 = vld [vmem:[%s0 + $0xc0] sm:$0xff]
  %v45 = vld [vmem:[%s0 + $0xc8] sm:$0xff]
  %v46 = vld [vmem:[%s0 + $0xd0] sm:$0xff]
  %v47 = vld [vmem:[%s0 + $0xd8] sm:$0xff]
  %v48 = vld [vmem:[%s0 + $0xe0] sm:$0xff]
  %v49 = vld [vmem:[%s0 + $0xe8] sm:$0xff]
  %v50 = vld [vmem:[%s0 + $0xf0] sm:$0xff]
  %v51 = vld [vmem:[%s0 + $0xf8] sm:$0xff]
  %v52 = vld [vmem:[%s0 + $0x100] sm:$0xff]
  %v53 = vld [vmem:[%s0 + $0x108] sm:$0xff]
  %v54 = vld [vmem:[%s0 + $0x110] sm:$0xff]
  %v55 = vld [vmem:[%s0 + $0x118] sm:$0xff]
  %v56 = vld [vmem:[%s0 + $0x120] sm:$0xff]
  %v57 = vld [vmem:[%s0 + $0x128] sm:$0xff]
  %v58 = vld [vmem:[%s0 + $0x130] sm:$0xff]
  %v59 = vld [vmem:[%s0 + $0x138] sm:$0xff]
  %v60 = vld [vmem:[%s0 + $0x140] sm:$0xff]
  %v61 = vld [vmem:[%s0 + $0x148] sm:$0xff]
  %v62 = vld [vmem:[%s0 + $0x150] sm:$0xff]
  %v63 = vld [vmem:[%s0 + $0x158] sm:$0xff]
  %v64 = vld [vmem:[%s0 + $0x160] sm:$0xff]
  %v65 = vld [vmem:[%s0 + $0x168] sm:$0xff]
  %v66 = vld [vmem:[%s0 + $0x170] sm:$0xff]
  %v67 = vld [vmem:[%s0 + $0x178] sm:$0xff]
  %v68 = vld [vmem:[%s0 + $0x180] sm:$0xff]
  %v69 = vld [vmem:[%s1] sm:$0xff]
  %v70 = vld [vmem:[%s1 + $0x8] sm:$0xff]
  %v71 = vld [vmem:[%s1 + $0x10] sm:$0xff]
  %v72 = vld [vmem:[%s1 + $0x18] sm:$0xff]
  %v73 = vld [vmem:[%s1 + $0x20] sm:$0xff]
  %v74 = vld [vmem:[%s1 + $0x28] sm:$0xff]
  %v75 = vld [vmem:[%s1 + $0x30] sm:$0xff]
  %v76 = vld [vmem:[%s1 + $0x38] sm:$0xff]
  %v77 = vld [vmem:[%s1 + $0x40] sm:$0xff]
  %v78 = vld [vmem:[%s1 + $0x48] sm:$0xff]
  %v79 = vld [vmem:[%s1 + $0x50] sm:$0xff]
  %v80 = vld [vmem:[%s1 + $0x58] sm:$0xff]
  %v81 = vld [vmem:[%s1 + $0x60] sm:$0xff]
  %v82 = vld [vmem:[%s1 + $0x68] sm:$0xff]
  %v83 = vld [vmem:[%s1 + $0x70] sm:$0xff]
  %v84 = vld [vmem:[%s1 + $0x78] sm:$0xff]
  %v85 = vld [vmem:[%s1 + $0x80] sm:$0xff]
  %v86 = vld [vmem:[%s1 + $0x88] sm:$0xff]
  %v87 = vld [vmem:[%s1 + $0x90] sm:$0xff]
  %v88 = vld [vmem:[%s1 + $0x98] sm:$0xff]
  %v89 = vld [vmem:[%s1 + $0xa0] sm:$0xff]
  %v90 = vld [vmem:[%s1 + $0xa8] sm:$0xff]
  %v91 = vld [vmem:[%s1 + $0xb0] sm:$0xff]
  %v92 = vld [vmem:[%s1 + $0xb8] sm:$0xff]
  %v93 = vld [vmem:[%s2] sm:$0x3]
  %v95 = vlaneseq
  %v96 = vshrl.u32 %v95, 7
  %v97 = vsub.s32 0, %v96
  %v98 = vrot.slane %v93, %v97
  %v99 = vlaneseq
  %v100 = vshrl.u32 %v99, 7
  %v101 = vsub.s32 1, %v100
  %v102 = vrot.slane %v93, %v101
  %vm105 = vcmask 785408
  %v107 = vsel %vm105, %v20, 0
  %v110 = vsel %vm105, %v21, 0
  %v113 = vsel %vm105, %v22, 0
  %v116 = vsel %vm105, %v23, 0
  %v119 = vsel %vm105, %v24, 0
  %v122 = vsel %vm105, %v25, 0
  %v125 = vsel %vm105, %v26, 0
  %v128 = vsel %vm105, %v27, 0
  %v131 = vsel %vm105, %v28, 0
  %v134 = vsel %vm105, %v29, 0
  %v137 = vsel %vm105, %v30, 0
  %v140 = vsel %vm105, %v31, 0
  %v143 = vsel %vm105, %v32, 0
  %v146 = vsel %vm105, %v33, 0
  %v149 = vsel %vm105, %v34, 0
  %v152 = vsel %vm105, %v35, 0
  %v155 = vsel %vm105, %v36, 0
  %v158 = vsel %vm105, %v37, 0
  %v161 = vsel %vm105, %v38, 0
  %v164 = vsel %vm105, %v39, 0
  %v167 = vsel %vm105, %v40, 0
  %v170 = vsel %vm105, %v41, 0
  %v173 = vsel %vm105, %v42, 0
  %v176 = vsel %vm105, %v43, 0
  %v179 = vsel %vm105, %v44, 0
  %v182 = vsel %vm105, %v45, 0
  %v185 = vsel %vm105, %v46, 0
  %v188 = vsel %vm105, %v47, 0
  %v191 = vsel %vm105, %v48, 0
  %v194 = vsel %vm105, %v49, 0
  %v197 = vsel %vm105, %v50, 0
  %v200 = vsel %vm105, %v51, 0
  %v203 = vsel %vm105, %v52, 0
  %v206 = vsel %vm105, %v53, 0
  %v209 = vsel %vm105, %v54, 0
  %v212 = vsel %vm105, %v55, 0
  %v215 = vsel %vm105, %v56, 0
  %v218 = vsel %vm105, %v57, 0
  %v221 = vsel %vm105, %v58, 0
  %v224 = vsel %vm105, %v59, 0
  %v227 = vsel %vm105, %v60, 0
  %v230 = vsel %vm105, %v61, 0
  %v233 = vsel %vm105, %v62, 0
  %v236 = vsel %vm105, %v63, 0
  %v239 = vsel %vm105, %v64, 0
  %v242 = vsel %vm105, %v65, 0
  %v245 = vsel %vm105, %v66, 0
  %v248 = vsel %vm105, %v67, 0
  %v251 = vsel %vm105, %v68, 0
  %253 = vmatprep.subr.mxu0 0.0
  %254 = vmatpush1.msra.mxu0 0.0
  %255 = vmatprep.subr.mxu0 0.0
  %256 = vmatpush1.msra.mxu0 0.0
  %257 = vmatprep.subr.mxu0 0.0
  %258 = vmatpush1.msra.mxu0 0.0
  %259 = vmatprep.subr.mxu0 0.0
  %260 = vmatpush1.msra.mxu0 0.0
  %261 = vmatprep.subr.mxu0 %v92
  %262 = vmatpush1.msra.mxu0 %v91
  %263 = vmatprep.subr.mxu0 %v90
  %264 = vmatpush1.msra.mxu0 %v89
  %265 = vmatprep.subr.mxu0 %v88
  %266 = vmatpush1.msra.mxu0 %v87
  %267 = vmatprep.subr.mxu0 %v86
  %268 = vmatpush1.msra.mxu0 %v85
  %269 = vmatprep.subr.mxu0 %v84
  %270 = vmatpush1.msra.mxu0 %v83
  %271 = vmatprep.subr.mxu0 %v82
  %272 = vmatpush1.msra.mxu0 %v81
  %273 = vmatprep.subr.mxu0 %v80
  %274 = vmatpush1.msra.mxu0 %v79
  %275 = vmatprep.subr.mxu0 %v78
  %276 = vmatpush1.msra.mxu0 %v77
  %277 = vmatprep.subr.mxu0 %v76
  %278 = vmatpush1.msra.mxu0 %v75
  %279 = vmatprep.subr.mxu0 %v74
  %280 = vmatpush1.msra.mxu0 %v73
  %281 = vmatprep.subr.mxu0 %v72
  %282 = vmatpush1.msra.mxu0 %v71
  %283 = vmatprep.subr.mxu0 %v70
  %284 = vmatpush1.msra.mxu0 %v69
  %285 = vmatprep.subr.mxu0 0.0
  %286 = vmatpush2.msra.mxu0 0.0
  %287 = vmatprep.subr.mxu0 0.0
  %288 = vmatpush2.msra.mxu0 0.0
  %289 = vmatprep.subr.mxu0 0.0
  %290 = vmatpush2.msra.mxu0 0.0
  %291 = vmatprep.subr.mxu0 0.0
  %292 = vmatpush2.msra.mxu0 0.0
  %293 = vmatprep.subr.mxu0 0.0
  %294 = vmatpush2.msra.mxu0 0.0
  %295 = vmatprep.subr.mxu0 0.0
  %296 = vmatpush2.msra.mxu0 0.0
  %297 = vmatprep.subr.mxu0 0.0
  %298 = vmatpush2.msra.mxu0 0.0
  %299 = vmatprep.subr.mxu0 0.0
  %300 = vmatpush2.msra.mxu0 0.0
  %301 = vmatprep.subr.mxu0 0.0
  %302 = vmatpush2.msra.mxu0 0.0
  %303 = vmatprep.subr.mxu0 0.0
  %304 = vmatpush2.msra.mxu0 0.0
  %305 = vmatprep.subr.mxu0 0.0
  %306 = vmatpush2.msra.mxu0 0.0
  %307 = vmatprep.subr.mxu0 0.0
  %308 = vmatpush2.msra.mxu0 0.0
  %309 = vmatprep.subr.mxu0 0.0
  %310 = vmatpush2.msra.mxu0 0.0
  %311 = vmatprep.subr.mxu0 0.0
  %312 = vmatpush2.msra.mxu0 0.0
  %313 = vmatprep.subr.mxu0 0.0
  %314 = vmatpush2.msra.mxu0 0.0
  %315 = vmatprep.subr.mxu0 0.0
  %316 = vmatpush2.msra.mxu0 0.0
  %317 = vmatprep.mubr.f32.mxu0 0.0
  %318 = vmatmul.mubr.f32.gmra.mxu0 %v107
  %v319 = vpop.f32.mrf.mxu0
  %v320 = vadd.f32 %v98, %v319
  %v321 = vpop.f32.mrf.mxu0
  %v322 = vadd.f32 %v102, %v321
  %323 = vmatprep.mubr.f32.mxu0 0.0
  %324 = vmatmul.mubr.f32.gmra.mxu0 %v110
  %v325 = vpop.f32.mrf.mxu0
  %v326 = vadd.f32 %v98, %v325
  %v327 = vpop.f32.mrf.mxu0
  %v328 = vadd.f32 %v102, %v327
  %329 = vmatprep.mubr.f32.mxu0 0.0
  %330 = vmatmul.mubr.f32.gmra.mxu0 %v113
  %v331 = vpop.f32.mrf.mxu0
  %v332 = vadd.f32 %v98, %v331
  %v333 = vpop.f32.mrf.mxu0
  %v334 = vadd.f32 %v102, %v333
  %335 = vmatprep.mubr.f32.mxu0 0.0
  %336 = vmatmul.mubr.f32.gmra.mxu0 %v116
  %v337 = vpop.f32.mrf.mxu0
  %v338 = vadd.f32 %v98, %v337
  %v339 = vpop.f32.mrf.mxu0
  %v340 = vadd.f32 %v102, %v339
  %341 = vmatprep.mubr.f32.mxu0 0.0
  %342 = vmatmul.mubr.f32.gmra.mxu0 %v119
  %v343 = vpop.f32.mrf.mxu0
  %v344 = vadd.f32 %v98, %v343
  %v345 = vpop.f32.mrf.mxu0
  %v346 = vadd.f32 %v102, %v345
  %347 = vmatprep.mubr.f32.mxu0 0.0
  %348 = vmatmul.mubr.f32.gmra.mxu0 %v122
  %v349 = vpop.f32.mrf.mxu0
  %v350 = vadd.f32 %v98, %v349
  %v351 = vpop.f32.mrf.mxu0
  %v352 = vadd.f32 %v102, %v351
  %353 = vmatprep.mubr.f32.mxu0 0.0
  %354 = vmatmul.mubr.f32.gmra.mxu0 %v125
  %v355 = vpop.f32.mrf.mxu0
  %v356 = vadd.f32 %v98, %v355
  %v357 = vpop.f32.mrf.mxu0
  %v358 = vadd.f32 %v102, %v357
  %359 = vmatprep.mubr.f32.mxu0 0.0
  %360 = vmatmul.mubr.f32.gmra.mxu0 %v128
  %v361 = vpop.f32.mrf.mxu0
  %v362 = vadd.f32 %v98, %v361
  %v363 = vpop.f32.mrf.mxu0
  %v364 = vadd.f32 %v102, %v363
  %365 = vmatprep.mubr.f32.mxu0 0.0
  %366 = vmatmul.mubr.f32.gmra.mxu0 %v131
  %v367 = vpop.f32.mrf.mxu0
  %v368 = vadd.f32 %v98, %v367
  %v369 = vpop.f32.mrf.mxu0
  %v370 = vadd.f32 %v102, %v369
  %371 = vmatprep.mubr.f32.mxu0 0.0
  %372 = vmatmul.mubr.f32.gmra.mxu0 %v134
  %v373 = vpop.f32.mrf.mxu0
  %v374 = vadd.f32 %v98, %v373
  %v375 = vpop.f32.mrf.mxu0
  %v376 = vadd.f32 %v102, %v375
  %377 = vmatprep.mubr.f32.mxu0 0.0
  %378 = vmatmul.mubr.f32.gmra.mxu0 %v137
  %v379 = vpop.f32.mrf.mxu0
  %v380 = vadd.f32 %v98, %v379
  %v381 = vpop.f32.mrf.mxu0
  %v382 = vadd.f32 %v102, %v381
  %383 = vmatprep.mubr.f32.mxu0 0.0
  %384 = vmatmul.mubr.f32.gmra.mxu0 %v140
  %v385 = vpop.f32.mrf.mxu0
  %v386 = vadd.f32 %v98, %v385
  %v387 = vpop.f32.mrf.mxu0
  %v388 = vadd.f32 %v102, %v387
  %389 = vmatprep.mubr.f32.mxu0 0.0
  %390 = vmatmul.mubr.f32.gmra.mxu0 %v143
  %v391 = vpop.f32.mrf.mxu0
  %v392 = vadd.f32 %v98, %v391
  %v393 = vpop.f32.mrf.mxu0
  %v394 = vadd.f32 %v102, %v393
  %395 = vmatprep.mubr.f32.mxu0 0.0
  %396 = vmatmul.mubr.f32.gmra.mxu0 %v146
  %v397 = vpop.f32.mrf.mxu0
  %v398 = vadd.f32 %v98, %v397
  %v399 = vpop.f32.mrf.mxu0
  %v400 = vadd.f32 %v102, %v399
  %401 = vmatprep.mubr.f32.mxu0 0.0
  %402 = vmatmul.mubr.f32.gmra.mxu0 %v149
  %v403 = vpop.f32.mrf.mxu0
  %v404 = vadd.f32 %v98, %v403
  %v405 = vpop.f32.mrf.mxu0
  %v406 = vadd.f32 %v102, %v405
  %407 = vmatprep.mubr.f32.mxu0 0.0
  %408 = vmatmul.mubr.f32.gmra.mxu0 %v152
  %v409 = vpop.f32.mrf.mxu0
  %v410 = vadd.f32 %v98, %v409
  %v411 = vpop.f32.mrf.mxu0
  %v412 = vadd.f32 %v102, %v411
  %413 = vmatprep.mubr.f32.mxu0 0.0
  %414 = vmatmul.mubr.f32.gmra.mxu0 %v155
  %v415 = vpop.f32.mrf.mxu0
  %v416 = vadd.f32 %v98, %v415
  %v417 = vpop.f32.mrf.mxu0
  %v418 = vadd.f32 %v102, %v417
  %419 = vmatprep.mubr.f32.mxu0 0.0
  %420 = vmatmul.mubr.f32.gmra.mxu0 %v158
  %v421 = vpop.f32.mrf.mxu0
  %v422 = vadd.f32 %v98, %v421
  %v423 = vpop.f32.mrf.mxu0
  %v424 = vadd.f32 %v102, %v423
  %425 = vmatprep.mubr.f32.mxu0 0.0
  %426 = vmatmul.mubr.f32.gmra.mxu0 %v161
  %v427 = vpop.f32.mrf.mxu0
  %v428 = vadd.f32 %v98, %v427
  %v429 = vpop.f32.mrf.mxu0
  %v430 = vadd.f32 %v102, %v429
  %431 = vmatprep.mubr.f32.mxu0 0.0
  %432 = vmatmul.mubr.f32.gmra.mxu0 %v164
  %v433 = vpop.f32.mrf.mxu0
  %v434 = vadd.f32 %v98, %v433
  %v435 = vpop.f32.mrf.mxu0
  %v436 = vadd.f32 %v102, %v435
  %437 = vmatprep.mubr.f32.mxu0 0.0
  %438 = vmatmul.mubr.f32.gmra.mxu0 %v167
  %v439 = vpop.f32.mrf.mxu0
  %v440 = vadd.f32 %v98, %v439
  %v441 = vpop.f32.mrf.mxu0
  %v442 = vadd.f32 %v102, %v441
  %443 = vmatprep.mubr.f32.mxu0 0.0
  %444 = vmatmul.mubr.f32.gmra.mxu0 %v170
  %v445 = vpop.f32.mrf.mxu0
  %v446 = vadd.f32 %v98, %v445
  %v447 = vpop.f32.mrf.mxu0
  %v448 = vadd.f32 %v102, %v447
  %449 = vmatprep.mubr.f32.mxu0 0.0
  %450 = vmatmul.mubr.f32.gmra.mxu0 %v173
  %v451 = vpop.f32.mrf.mxu0
  %v452 = vadd.f32 %v98, %v451
  %v453 = vpop.f32.mrf.mxu0
  %v454 = vadd.f32 %v102, %v453
  %455 = vmatprep.mubr.f32.mxu0 0.0
  %456 = vmatmul.mubr.f32.gmra.mxu0 %v176
  %v457 = vpop.f32.mrf.mxu0
  %v458 = vadd.f32 %v98, %v457
  %v459 = vpop.f32.mrf.mxu0
  %v460 = vadd.f32 %v102, %v459
  %461 = vmatprep.mubr.f32.mxu0 0.0
  %462 = vmatmul.mubr.f32.gmra.mxu0 %v179
  %v463 = vpop.f32.mrf.mxu0
  %v464 = vadd.f32 %v98, %v463
  %v465 = vpop.f32.mrf.mxu0
  %v466 = vadd.f32 %v102, %v465
  %467 = vmatprep.mubr.f32.mxu0 0.0
  %468 = vmatmul.mubr.f32.gmra.mxu0 %v182
  %v469 = vpop.f32.mrf.mxu0
  %v470 = vadd.f32 %v98, %v469
  %v471 = vpop.f32.mrf.mxu0
  %v472 = vadd.f32 %v102, %v471
  %473 = vmatprep.mubr.f32.mxu0 0.0
  %474 = vmatmul.mubr.f32.gmra.mxu0 %v185
  %v475 = vpop.f32.mrf.mxu0
  %v476 = vadd.f32 %v98, %v475
  %v477 = vpop.f32.mrf.mxu0
  %v478 = vadd.f32 %v102, %v477
  %479 = vmatprep.mubr.f32.mxu0 0.0
  %480 = vmatmul.mubr.f32.gmra.mxu0 %v188
  %v481 = vpop.f32.mrf.mxu0
  %v482 = vadd.f32 %v98, %v481
  %v483 = vpop.f32.mrf.mxu0
  %v484 = vadd.f32 %v102, %v483
  %485 = vmatprep.mubr.f32.mxu0 0.0
  %486 = vmatmul.mubr.f32.gmra.mxu0 %v191
  %v487 = vpop.f32.mrf.mxu0
  %v488 = vadd.f32 %v98, %v487
  %v489 = vpop.f32.mrf.mxu0
  %v490 = vadd.f32 %v102, %v489
  %491 = vmatprep.mubr.f32.mxu0 0.0
  %492 = vmatmul.mubr.f32.gmra.mxu0 %v194
  %v493 = vpop.f32.mrf.mxu0
  %v494 = vadd.f32 %v98, %v493
  %v495 = vpop.f32.mrf.mxu0
  %v496 = vadd.f32 %v102, %v495
  %497 = vmatprep.mubr.f32.mxu0 0.0
  %498 = vmatmul.mubr.f32.gmra.mxu0 %v197
  %v499 = vpop.f32.mrf.mxu0
  %v500 = vadd.f32 %v98, %v499
  %v501 = vpop.f32.mrf.mxu0
  %v502 = vadd.f32 %v102, %v501
  %503 = vmatprep.mubr.f32.mxu0 0.0
  %504 = vmatmul.mubr.f32.gmra.mxu0 %v200
  %v505 = vpop.f32.mrf.mxu0
  %v506 = vadd.f32 %v98, %v505
  %v507 = vpop.f32.mrf.mxu0
  %v508 = vadd.f32 %v102, %v507
  %509 = vmatprep.mubr.f32.mxu0 0.0
  %510 = vmatmul.mubr.f32.gmra.mxu0 %v203
  %v511 = vpop.f32.mrf.mxu0
  %v512 = vadd.f32 %v98, %v511
  %v513 = vpop.f32.mrf.mxu0
  %v514 = vadd.f32 %v102, %v513
  %515 = vmatprep.mubr.f32.mxu0 0.0
  %516 = vmatmul.mubr.f32.gmra.mxu0 %v206
  %v517 = vpop.f32.mrf.mxu0
  %v518 = vadd.f32 %v98, %v517
  %v519 = vpop.f32.mrf.mxu0
  %v520 = vadd.f32 %v102, %v519
  %521 = vmatprep.mubr.f32.mxu0 0.0
  %522 = vmatmul.mubr.f32.gmra.mxu0 %v209
  %v523 = vpop.f32.mrf.mxu0
  %v524 = vadd.f32 %v98, %v523
  %v525 = vpop.f32.mrf.mxu0
  %v526 = vadd.f32 %v102, %v525
  %527 = vmatprep.mubr.f32.mxu0 0.0
  %528 = vmatmul.mubr.f32.gmra.mxu0 %v212
  %v529 = vpop.f32.mrf.mxu0
  %v530 = vadd.f32 %v98, %v529
  %v531 = vpop.f32.mrf.mxu0
  %v532 = vadd.f32 %v102, %v531
  %533 = vmatprep.mubr.f32.mxu0 0.0
  %534 = vmatmul.mubr.f32.gmra.mxu0 %v215
  %v535 = vpop.f32.mrf.mxu0
  %v536 = vadd.f32 %v98, %v535
  %v537 = vpop.f32.mrf.mxu0
  %v538 = vadd.f32 %v102, %v537
  %539 = vmatprep.mubr.f32.mxu0 0.0
  %540 = vmatmul.mubr.f32.gmra.mxu0 %v218
  %v541 = vpop.f32.mrf.mxu0
  %v542 = vadd.f32 %v98, %v541
  %v543 = vpop.f32.mrf.mxu0
  %v544 = vadd.f32 %v102, %v543
  %545 = vmatprep.mubr.f32.mxu0 0.0
  %546 = vmatmul.mubr.f32.gmra.mxu0 %v221
  %v547 = vpop.f32.mrf.mxu0
  %v548 = vadd.f32 %v98, %v547
  %v549 = vpop.f32.mrf.mxu0
  %v550 = vadd.f32 %v102, %v549
  %551 = vmatprep.mubr.f32.mxu0 0.0
  %552 = vmatmul.mubr.f32.gmra.mxu0 %v224
  %v553 = vpop.f32.mrf.mxu0
  %v554 = vadd.f32 %v98, %v553
  %v555 = vpop.f32.mrf.mxu0
  %v556 = vadd.f32 %v102, %v555
  %557 = vmatprep.mubr.f32.mxu0 0.0
  %558 = vmatmul.mubr.f32.gmra.mxu0 %v227
  %v559 = vpop.f32.mrf.mxu0
  %v560 = vadd.f32 %v98, %v559
  %v561 = vpop.f32.mrf.mxu0
  %v562 = vadd.f32 %v102, %v561
  %563 = vmatprep.mubr.f32.mxu0 0.0
  %564 = vmatmul.mubr.f32.gmra.mxu0 %v230
  %v565 = vpop.f32.mrf.mxu0
  %v566 = vadd.f32 %v98, %v565
  %v567 = vpop.f32.mrf.mxu0
  %v568 = vadd.f32 %v102, %v567
  %569 = vmatprep.mubr.f32.mxu0 0.0
  %570 = vmatmul.mubr.f32.gmra.mxu0 %v233
  %v571 = vpop.f32.mrf.mxu0
  %v572 = vadd.f32 %v98, %v571
  %v573 = vpop.f32.mrf.mxu0
  %v574 = vadd.f32 %v102, %v573
  %575 = vmatprep.mubr.f32.mxu0 0.0
  %576 = vmatmul.mubr.f32.gmra.mxu0 %v236
  %v577 = vpop.f32.mrf.mxu0
  %v578 = vadd.f32 %v98, %v577
  %v579 = vpop.f32.mrf.mxu0
  %v580 = vadd.f32 %v102, %v579
  %581 = vmatprep.mubr.f32.mxu0 0.0
  %582 = vmatmul.mubr.f32.gmra.mxu0 %v239
  %v583 = vpop.f32.mrf.mxu0
  %v584 = vadd.f32 %v98, %v583
  %v585 = vpop.f32.mrf.mxu0
  %v586 = vadd.f32 %v102, %v585
  %587 = vmatprep.mubr.f32.mxu0 0.0
  %588 = vmatmul.mubr.f32.gmra.mxu0 %v242
  %v589 = vpop.f32.mrf.mxu0
  %v590 = vadd.f32 %v98, %v589
  %v591 = vpop.f32.mrf.mxu0
  %v592 = vadd.f32 %v102, %v591
  %593 = vmatprep.mubr.f32.mxu0 0.0
  %594 = vmatmul.mubr.f32.gmra.mxu0 %v245
  %v595 = vpop.f32.mrf.mxu0
  %v596 = vadd.f32 %v98, %v595
  %v597 = vpop.f32.mrf.mxu0
  %v598 = vadd.f32 %v102, %v597
  %599 = vmatprep.mubr.f32.mxu0 0.0
  %600 = vmatmul.mubr.f32.gmra.mxu0 %v248
  %v601 = vpop.f32.mrf.mxu0
  %v602 = vadd.f32 %v98, %v601
  %v603 = vpop.f32.mrf.mxu0
  %v604 = vadd.f32 %v102, %v603
  %605 = vmatprep.mubr.f32.mxu0 0.0
  %606 = vmatmul.mubr.f32.gmra.mxu0 %v251
  %v607 = vpop.f32.mrf.mxu0
  %v608 = vadd.f32 %v98, %v607
  %v609 = vpop.f32.mrf.mxu0
  %v610 = vadd.f32 %v102, %v609
  %611 = vdwg.mxu0
  %v612 = vmax.f32 %v320, 0.0
  %v613 = vmax.f32 %v322, 0.0
  %v614 = vmax.f32 %v326, 0.0
  %v615 = vmax.f32 %v328, 0.0
  %v616 = vmax.f32 %v332, 0.0
  %v617 = vmax.f32 %v334, 0.0
  %v618 = vmax.f32 %v338, 0.0
  %v619 = vmax.f32 %v340, 0.0
  %v620 = vmax.f32 %v344, 0.0
  %v621 = vmax.f32 %v346, 0.0
  %v622 = vmax.f32 %v350, 0.0
  %v623 = vmax.f32 %v352, 0.0
  %v624 = vmax.f32 %v356, 0.0
  %v625 = vmax.f32 %v358, 0.0
  %v626 = vmax.f32 %v362, 0.0
  %v627 = vmax.f32 %v364, 0.0
  %v628 = vmax.f32 %v368, 0.0
  %v629 = vmax.f32 %v370, 0.0
  %v630 = vmax.f32 %v374, 0.0
  %v631 = vmax.f32 %v376, 0.0
  %v632 = vmax.f32 %v380, 0.0
  %v633 = vmax.f32 %v382, 0.0
  %v634 = vmax.f32 %v386, 0.0
  %v635 = vmax.f32 %v388, 0.0
  %v636 = vmax.f32 %v392, 0.0
  %v637 = vmax.f32 %v394, 0.0
  %v638 = vmax.f32 %v398, 0.0
  %v639 = vmax.f32 %v400, 0.0
  %v640 = vmax.f32 %v404, 0.0
  %v641 = vmax.f32 %v406, 0.0
  %v642 = vmax.f32 %v410, 0.0
  %v643 = vmax.f32 %v412, 0.0
  %v644 = vmax.f32 %v416, 0.0
  %v645 = vmax.f32 %v418, 0.0
  %v646 = vmax.f32 %v422, 0.0
  %v647 = vmax.f32 %v424, 0.0
  %v648 = vmax.f32 %v428, 0.0
  %v649 = vmax.f32 %v430, 0.0
  %v650 = vmax.f32 %v434, 0.0
  %v651 = vmax.f32 %v436, 0.0
  %v652 = vmax.f32 %v440, 0.0
  %v653 = vmax.f32 %v442, 0.0
  %v654 = vmax.f32 %v446, 0.0
  %v655 = vmax.f32 %v448, 0.0
  %v656 = vmax.f32 %v452, 0.0
  %v657 = vmax.f32 %v454, 0.0
  %v658 = vmax.f32 %v458, 0.0
  %v659 = vmax.f32 %v460, 0.0
  %v660 = vmax.f32 %v464, 0.0
  %v661 = vmax.f32 %v466, 0.0
  %v662 = vmax.f32 %v470, 0.0
  %v663 = vmax.f32 %v472, 0.0
  %v664 = vmax.f32 %v476, 0.0
  %v665 = vmax.f32 %v478, 0.0
  %v666 = vmax.f32 %v482, 0.0
  %v667 = vmax.f32 %v484, 0.0
  %v668 = vmax.f32 %v488, 0.0
  %v669 = vmax.f32 %v490, 0.0
  %v670 = vmax.f32 %v494, 0.0
  %v671 = vmax.f32 %v496, 0.0
  %v672 = vmax.f32 %v500, 0.0
  %v673 = vmax.f32 %v502, 0.0
  %v674 = vmax.f32 %v506, 0.0
  %v675 = vmax.f32 %v508, 0.0
  %v676 = vmax.f32 %v512, 0.0
  %v677 = vmax.f32 %v514, 0.0
  %v678 = vmax.f32 %v518, 0.0
  %v679 = vmax.f32 %v520, 0.0
  %v680 = vmax.f32 %v524, 0.0
  %v681 = vmax.f32 %v526, 0.0
  %v682 = vmax.f32 %v530, 0.0
  %v683 = vmax.f32 %v532, 0.0
  %v684 = vmax.f32 %v536, 0.0
  %v685 = vmax.f32 %v538, 0.0
  %v686 = vmax.f32 %v542, 0.0
  %v687 = vmax.f32 %v544, 0.0
  %v688 = vmax.f32 %v548, 0.0
  %v689 = vmax.f32 %v550, 0.0
  %v690 = vmax.f32 %v554, 0.0
  %v691 = vmax.f32 %v556, 0.0
  %v692 = vmax.f32 %v560, 0.0
  %v693 = vmax.f32 %v562, 0.0
  %v694 = vmax.f32 %v566, 0.0
  %v695 = vmax.f32 %v568, 0.0
  %v696 = vmax.f32 %v572, 0.0
  %v697 = vmax.f32 %v574, 0.0
  %v698 = vmax.f32 %v578, 0.0
  %v699 = vmax.f32 %v580, 0.0
  %v700 = vmax.f32 %v584, 0.0
  %v701 = vmax.f32 %v586, 0.0
  %v702 = vmax.f32 %v590, 0.0
  %v703 = vmax.f32 %v592, 0.0
  %v704 = vmax.f32 %v596, 0.0
  %v705 = vmax.f32 %v598, 0.0
  %v706 = vmax.f32 %v602, 0.0
  %v707 = vmax.f32 %v604, 0.0
  %v708 = vmax.f32 %v608, 0.0
  %v709 = vmax.f32 %v610, 0.0
  %v710 = vld [vmem:[%s3] sm:$0xff]
  %v711 = vld [vmem:[%s3 + $0x8] sm:$0xff]
  %v712 = vld [vmem:[%s3 + $0x10] sm:$0xff]
  %v713 = vld [vmem:[%s3 + $0x18] sm:$0xff]
  %v714 = vld [vmem:[%s3 + $0x20] sm:$0xff]
  %v715 = vld [vmem:[%s3 + $0x28] sm:$0xff]
  %v716 = vld [vmem:[%s3 + $0x30] sm:$0xff]
  %v717 = vld [vmem:[%s3 + $0x38] sm:$0xff]
  %v718 = vld [vmem:[%s3 + $0x40] sm:$0xff]
  %v719 = vld [vmem:[%s3 + $0x48] sm:$0xff]
  %v720 = vld [vmem:[%s3 + $0x50] sm:$0xff]
  %v721 = vld [vmem:[%s3 + $0x58] sm:$0xff]
  %v722 = vld [vmem:[%s3 + $0x60] sm:$0xff]
  %v723 = vld [vmem:[%s3 + $0x68] sm:$0xff]
  %v724 = vld [vmem:[%s3 + $0x70] sm:$0xff]
  %v725 = vld [vmem:[%s3 + $0x78] sm:$0xff]
  %v726 = vld [vmem:[%s3 + $0x80] sm:$0xff]
  %v727 = vld [vmem:[%s3 + $0x88] sm:$0xff]
  %v728 = vld [vmem:[%s3 + $0x90] sm:$0xff]
  %v729 = vld [vmem:[%s3 + $0x98] sm:$0xff]
  %v730 = vld [vmem:[%s3 + $0xa0] sm:$0xff]
  %v731 = vld [vmem:[%s3 + $0xa8] sm:$0xff]
  %v732 = vld [vmem:[%s3 + $0xb0] sm:$0xff]
  %v733 = vld [vmem:[%s3 + $0xb8] sm:$0xff]
  %v734 = vld [vmem:[%s4] sm:$0x1]
  %v736 = vlaneseq
  %v737 = vshrl.u32 %v736, 7
  %v738 = vsub.s32 0, %v737
  %v739 = vrot.slane %v734, %v738
  %vm741 = vcmask 523264
  %v743 = vsel %vm741, %v613, 0
  %v746 = vsel %vm741, %v615, 0
  %v749 = vsel %vm741, %v617, 0
  %v752 = vsel %vm741, %v619, 0
  %v755 = vsel %vm741, %v621, 0
  %v758 = vsel %vm741, %v623, 0
  %v761 = vsel %vm741, %v625, 0
  %v764 = vsel %vm741, %v627, 0
  %v767 = vsel %vm741, %v629, 0
  %v770 = vsel %vm741, %v631, 0
  %v773 = vsel %vm741, %v633, 0
  %v776 = vsel %vm741, %v635, 0
  %v779 = vsel %vm741, %v637, 0
  %v782 = vsel %vm741, %v639, 0
  %v785 = vsel %vm741, %v641, 0
  %v788 = vsel %vm741, %v643, 0
  %v791 = vsel %vm741, %v645, 0
  %v794 = vsel %vm741, %v647, 0
  %v797 = vsel %vm741, %v649, 0
  %v800 = vsel %vm741, %v651, 0
  %v803 = vsel %vm741, %v653, 0
  %v806 = vsel %vm741, %v655, 0
  %v809 = vsel %vm741, %v657, 0
  %v812 = vsel %vm741, %v659, 0
  %v815 = vsel %vm741, %v661, 0
  %v818 = vsel %vm741, %v663, 0
  %v821 = vsel %vm741, %v665, 0
  %v824 = vsel %vm741, %v667, 0
  %v827 = vsel %vm741, %v669, 0
  %v830 = vsel %vm741, %v671, 0
  %v833 = vsel %vm741, %v673, 0
  %v836 = vsel %vm741, %v675, 0
  %v839 = vsel %vm741, %v677, 0
  %v842 = vsel %vm741, %v679, 0
  %v845 = vsel %vm741, %v681, 0
  %v848 = vsel %vm741, %v683, 0
  %v851 = vsel %vm741, %v685, 0
  %v854 = vsel %vm741, %v687, 0
  %v857 = vsel %vm741, %v689, 0
  %v860 = vsel %vm741, %v691, 0
  %v863 = vsel %vm741, %v693, 0
  %v866 = vsel %vm741, %v695, 0
  %v869 = vsel %vm741, %v697, 0
  %v872 = vsel %vm741, %v699, 0
  %v875 = vsel %vm741, %v701, 0
  %v878 = vsel %vm741, %v703, 0
  %v881 = vsel %vm741, %v705, 0
  %v884 = vsel %vm741, %v707, 0
  %v887 = vsel %vm741, %v709, 0
  %889 = vmatprep.subr.mxu0 0.0
  %890 = vmatpush1.msra.mxu0 %v725
  %891 = vmatprep.subr.mxu0 0.0
  %892 = vmatpush1.msra.mxu0 %v724
  %893 = vmatprep.subr.mxu0 0.0
  %894 = vmatpush1.msra.mxu0 %v723
  %895 = vmatprep.subr.mxu0 0.0
  %896 = vmatpush1.msra.mxu0 %v722
  %897 = vmatprep.subr.mxu0 0.0
  %898 = vmatpush1.msra.mxu0 %v721
  %899 = vmatprep.subr.mxu0 0.0
  %900 = vmatpush1.msra.mxu0 %v720
  %901 = vmatprep.subr.mxu0 0.0
  %902 = vmatpush1.msra.mxu0 %v719
  %903 = vmatprep.subr.mxu0 0.0
  %904 = vmatpush1.msra.mxu0 %v718
  %905 = vmatprep.subr.mxu0 0.0
  %906 = vmatpush1.msra.mxu0 %v717
  %907 = vmatprep.subr.mxu0 0.0
  %908 = vmatpush1.msra.mxu0 %v716
  %909 = vmatprep.subr.mxu0 0.0
  %910 = vmatpush1.msra.mxu0 %v715
  %911 = vmatprep.subr.mxu0 0.0
  %912 = vmatpush1.msra.mxu0 %v714
  %913 = vmatprep.subr.mxu0 0.0
  %914 = vmatpush1.msra.mxu0 %v713
  %915 = vmatprep.subr.mxu0 0.0
  %916 = vmatpush1.msra.mxu0 %v712
  %917 = vmatprep.subr.mxu0 0.0
  %918 = vmatpush1.msra.mxu0 %v711
  %919 = vmatprep.subr.mxu0 0.0
  %920 = vmatpush1.msra.mxu0 %v710
  %921 = vmatprep.subr.mxu0 0.0
  %922 = vmatpush2.msra.mxu0 0.0
  %923 = vmatprep.subr.mxu0 0.0
  %924 = vmatpush2.msra.mxu0 0.0
  %925 = vmatprep.subr.mxu0 0.0
  %926 = vmatpush2.msra.mxu0 0.0
  %927 = vmatprep.subr.mxu0 0.0
  %928 = vmatpush2.msra.mxu0 0.0
  %929 = vmatprep.subr.mxu0 0.0
  %930 = vmatpush2.msra.mxu0 0.0
  %931 = vmatprep.subr.mxu0 0.0
  %932 = vmatpush2.msra.mxu0 0.0
  %933 = vmatprep.subr.mxu0 0.0
  %934 = vmatpush2.msra.mxu0 0.0
  %935 = vmatprep.subr.mxu0 0.0
  %936 = vmatpush2.msra.mxu0 0.0
  %937 = vmatprep.subr.mxu0 0.0
  %938 = vmatpush2.msra.mxu0 %v733
  %939 = vmatprep.subr.mxu0 0.0
  %940 = vmatpush2.msra.mxu0 %v732
  %941 = vmatprep.subr.mxu0 0.0
  %942 = vmatpush2.msra.mxu0 %v731
  %943 = vmatprep.subr.mxu0 0.0
  %944 = vmatpush2.msra.mxu0 %v730
  %945 = vmatprep.subr.mxu0 0.0
  %946 = vmatpush2.msra.mxu0 %v729
  %947 = vmatprep.subr.mxu0 0.0
  %948 = vmatpush2.msra.mxu0 %v728
  %949 = vmatprep.subr.mxu0 0.0
  %950 = vmatpush2.msra.mxu0 %v727
  %951 = vmatprep.subr.mxu0 0.0
  %952 = vmatpush2.msra.mxu0 %v726
  %953 = vmatprep.mubr.f32.mxu0 %v743
  %954 = vmatmul.mubr.f32.gmra.mxu0 %v612
  %v955 = vpop.f32.mrf.mxu0
  %v956 = vadd.f32 %v739, %v955
  %v957 = vpop.f32.mrf.mxu0
  %958 = vmatprep.mubr.f32.mxu0 %v746
  %959 = vmatmul.mubr.f32.gmra.mxu0 %v614
  %v960 = vpop.f32.mrf.mxu0
  %v961 = vadd.f32 %v739, %v960
  %v962 = vpop.f32.mrf.mxu0
  %963 = vmatprep.mubr.f32.mxu0 %v749
  %964 = vmatmul.mubr.f32.gmra.mxu0 %v616
  %v965 = vpop.f32.mrf.mxu0
  %v966 = vadd.f32 %v739, %v965
  %v967 = vpop.f32.mrf.mxu0
  %968 = vmatprep.mubr.f32.mxu0 %v752
  %969 = vmatmul.mubr.f32.gmra.mxu0 %v618
  %v970 = vpop.f32.mrf.mxu0
  %v971 = vadd.f32 %v739, %v970
  %v972 = vpop.f32.mrf.mxu0
  %973 = vmatprep.mubr.f32.mxu0 %v755
  %974 = vmatmul.mubr.f32.gmra.mxu0 %v620
  %v975 = vpop.f32.mrf.mxu0
  %v976 = vadd.f32 %v739, %v975
  %v977 = vpop.f32.mrf.mxu0
  %978 = vmatprep.mubr.f32.mxu0 %v758
  %979 = vmatmul.mubr.f32.gmra.mxu0 %v622
  %v980 = vpop.f32.mrf.mxu0
  %v981 = vadd.f32 %v739, %v980
  %v982 = vpop.f32.mrf.mxu0
  %983 = vmatprep.mubr.f32.mxu0 %v761
  %984 = vmatmul.mubr.f32.gmra.mxu0 %v624
  %v985 = vpop.f32.mrf.mxu0
  %v986 = vadd.f32 %v739, %v985
  %v987 = vpop.f32.mrf.mxu0
  %988 = vmatprep.mubr.f32.mxu0 %v764
  %989 = vmatmul.mubr.f32.gmra.mxu0 %v626
  %v990 = vpop.f32.mrf.mxu0
  %v991 = vadd.f32 %v739, %v990
  %v992 = vpop.f32.mrf.mxu0
  %993 = vmatprep.mubr.f32.mxu0 %v767
  %994 = vmatmul.mubr.f32.gmra.mxu0 %v628
  %v995 = vpop.f32.mrf.mxu0
  %v996 = vadd.f32 %v739, %v995
  %v997 = vpop.f32.mrf.mxu0
  %998 = vmatprep.mubr.f32.mxu0 %v770
  %999 = vmatmul.mubr.f32.gmra.mxu0 %v630
  %v1000 = vpop.f32.mrf.mxu0
  %v1001 = vadd.f32 %v739, %v1000
  %v1002 = vpop.f32.mrf.mxu0
  %1003 = vmatprep.mubr.f32.mxu0 %v773
  %1004 = vmatmul.mubr.f32.gmra.mxu0 %v632
  %v1005 = vpop.f32.mrf.mxu0
  %v1006 = vadd.f32 %v739, %v1005
  %v1007 = vpop.f32.mrf.mxu0
  %1008 = vmatprep.mubr.f32.mxu0 %v776
  %1009 = vmatmul.mubr.f32.gmra.mxu0 %v634
  %v1010 = vpop.f32.mrf.mxu0
  %v1011 = vadd.f32 %v739, %v1010
  %v1012 = vpop.f32.mrf.mxu0
  %1013 = vmatprep.mubr.f32.mxu0 %v779
  %1014 = vmatmul.mubr.f32.gmra.mxu0 %v636
  %v1015 = vpop.f32.mrf.mxu0
  %v1016 = vadd.f32 %v739, %v1015
  %v1017 = vpop.f32.mrf.mxu0
  %1018 = vmatprep.mubr.f32.mxu0 %v782
  %1019 = vmatmul.mubr.f32.gmra.mxu0 %v638
  %v1020 = vpop.f32.mrf.mxu0
  %v1021 = vadd.f32 %v739, %v1020
  %v1022 = vpop.f32.mrf.mxu0
  %1023 = vmatprep.mubr.f32.mxu0 %v785
  %1024 = vmatmul.mubr.f32.gmra.mxu0 %v640
  %v1025 = vpop.f32.mrf.mxu0
  %v1026 = vadd.f32 %v739, %v1025
  %v1027 = vpop.f32.mrf.mxu0
  %1028 = vmatprep.mubr.f32.mxu0 %v788
  %1029 = vmatmul.mubr.f32.gmra.mxu0 %v642
  %v1030 = vpop.f32.mrf.mxu0
  %v1031 = vadd.f32 %v739, %v1030
  %v1032 = vpop.f32.mrf.mxu0
  %1033 = vmatprep.mubr.f32.mxu0 %v791
  %1034 = vmatmul.mubr.f32.gmra.mxu0 %v644
  %v1035 = vpop.f32.mrf.mxu0
  %v1036 = vadd.f32 %v739, %v1035
  %v1037 = vpop.f32.mrf.mxu0
  %1038 = vmatprep.mubr.f32.mxu0 %v794
  %1039 = vmatmul.mubr.f32.gmra.mxu0 %v646
  %v1040 = vpop.f32.mrf.mxu0
  %v1041 = vadd.f32 %v739, %v1040
  %v1042 = vpop.f32.mrf.mxu0
  %1043 = vmatprep.mubr.f32.mxu0 %v797
  %1044 = vmatmul.mubr.f32.gmra.mxu0 %v648
  %v1045 = vpop.f32.mrf.mxu0
  %v1046 = vadd.f32 %v739, %v1045
  %v1047 = vpop.f32.mrf.mxu0
  %1048 = vmatprep.mubr.f32.mxu0 %v800
  %1049 = vmatmul.mubr.f32.gmra.mxu0 %v650
  %v1050 = vpop.f32.mrf.mxu0
  %v1051 = vadd.f32 %v739, %v1050
  %v1052 = vpop.f32.mrf.mxu0
  %1053 = vmatprep.mubr.f32.mxu0 %v803
  %1054 = vmatmul.mubr.f32.gmra.mxu0 %v652
  %v1055 = vpop.f32.mrf.mxu0
  %v1056 = vadd.f32 %v739, %v1055
  %v1057 = vpop.f32.mrf.mxu0
  %1058 = vmatprep.mubr.f32.mxu0 %v806
  %1059 = vmatmul.mubr.f32.gmra.mxu0 %v654
  %v1060 = vpop.f32.mrf.mxu0
  %v1061 = vadd.f32 %v739, %v1060
  %v1062 = vpop.f32.mrf.mxu0
  %1063 = vmatprep.mubr.f32.mxu0 %v809
  %1064 = vmatmul.mubr.f32.gmra.mxu0 %v656
  %v1065 = vpop.f32.mrf.mxu0
  %v1066 = vadd.f32 %v739, %v1065
  %v1067 = vpop.f32.mrf.mxu0
  %1068 = vmatprep.mubr.f32.mxu0 %v812
  %1069 = vmatmul.mubr.f32.gmra.mxu0 %v658
  %v1070 = vpop.f32.mrf.mxu0
  %v1071 = vadd.f32 %v739, %v1070
  %v1072 = vpop.f32.mrf.mxu0
  %1073 = vmatprep.mubr.f32.mxu0 %v815
  %1074 = vmatmul.mubr.f32.gmra.mxu0 %v660
  %v1075 = vpop.f32.mrf.mxu0
  %v1076 = vadd.f32 %v739, %v1075
  %v1077 = vpop.f32.mrf.mxu0
  %1078 = vmatprep.mubr.f32.mxu0 %v818
  %1079 = vmatmul.mubr.f32.gmra.mxu0 %v662
  %v1080 = vpop.f32.mrf.mxu0
  %v1081 = vadd.f32 %v739, %v1080
  %v1082 = vpop.f32.mrf.mxu0
  %1083 = vmatprep.mubr.f32.mxu0 %v821
  %1084 = vmatmul.mubr.f32.gmra.mxu0 %v664
  %v1085 = vpop.f32.mrf.mxu0
  %v1086 = vadd.f32 %v739, %v1085
  %v1087 = vpop.f32.mrf.mxu0
  %1088 = vmatprep.mubr.f32.mxu0 %v824
  %1089 = vmatmul.mubr.f32.gmra.mxu0 %v666
  %v1090 = vpop.f32.mrf.mxu0
  %v1091 = vadd.f32 %v739, %v1090
  %v1092 = vpop.f32.mrf.mxu0
  %1093 = vmatprep.mubr.f32.mxu0 %v827
  %1094 = vmatmul.mubr.f32.gmra.mxu0 %v668
  %v1095 = vpop.f32.mrf.mxu0
  %v1096 = vadd.f32 %v739, %v1095
  %v1097 = vpop.f32.mrf.mxu0
  %1098 = vmatprep.mubr.f32.mxu0 %v830
  %1099 = vmatmul.mubr.f32.gmra.mxu0 %v670
  %v1100 = vpop.f32.mrf.mxu0
  %v1101 = vadd.f32 %v739, %v1100
  %v1102 = vpop.f32.mrf.mxu0
  %1103 = vmatprep.mubr.f32.mxu0 %v833
  %1104 = vmatmul.mubr.f32.gmra.mxu0 %v672
  %v1105 = vpop.f32.mrf.mxu0
  %v1106 = vadd.f32 %v739, %v1105
  %v1107 = vpop.f32.mrf.mxu0
  %1108 = vmatprep.mubr.f32.mxu0 %v836
  %1109 = vmatmul.mubr.f32.gmra.mxu0 %v674
  %v1110 = vpop.f32.mrf.mxu0
  %v1111 = vadd.f32 %v739, %v1110
  %v1112 = vpop.f32.mrf.mxu0
  %1113 = vmatprep.mubr.f32.mxu0 %v839
  %1114 = vmatmul.mubr.f32.gmra.mxu0 %v676
  %v1115 = vpop.f32.mrf.mxu0
  %v1116 = vadd.f32 %v739, %v1115
  %v1117 = vpop.f32.mrf.mxu0
  %1118 = vmatprep.mubr.f32.mxu0 %v842
  %1119 = vmatmul.mubr.f32.gmra.mxu0 %v678
  %v1120 = vpop.f32.mrf.mxu0
  %v1121 = vadd.f32 %v739, %v1120
  %v1122 = vpop.f32.mrf.mxu0
  %1123 = vmatprep.mubr.f32.mxu0 %v845
  %1124 = vmatmul.mubr.f32.gmra.mxu0 %v680
  %v1125 = vpop.f32.mrf.mxu0
  %v1126 = vadd.f32 %v739, %v1125
  %v1127 = vpop.f32.mrf.mxu0
  %1128 = vmatprep.mubr.f32.mxu0 %v848
  %1129 = vmatmul.mubr.f32.gmra.mxu0 %v682
  %v1130 = vpop.f32.mrf.mxu0
  %v1131 = vadd.f32 %v739, %v1130
  %v1132 = vpop.f32.mrf.mxu0
  %1133 = vmatprep.mubr.f32.mxu0 %v851
  %1134 = vmatmul.mubr.f32.gmra.mxu0 %v684
  %v1135 = vpop.f32.mrf.mxu0
  %v1136 = vadd.f32 %v739, %v1135
  %v1137 = vpop.f32.mrf.mxu0
  %1138 = vmatprep.mubr.f32.mxu0 %v854
  %1139 = vmatmul.mubr.f32.gmra.mxu0 %v686
  %v1140 = vpop.f32.mrf.mxu0
  %v1141 = vadd.f32 %v739, %v1140
  %v1142 = vpop.f32.mrf.mxu0
  %1143 = vmatprep.mubr.f32.mxu0 %v857
  %1144 = vmatmul.mubr.f32.gmra.mxu0 %v688
  %v1145 = vpop.f32.mrf.mxu0
  %v1146 = vadd.f32 %v739, %v1145
  %v1147 = vpop.f32.mrf.mxu0
  %1148 = vmatprep.mubr.f32.mxu0 %v860
  %1149 = vmatmul.mubr.f32.gmra.mxu0 %v690
  %v1150 = vpop.f32.mrf.mxu0
  %v1151 = vadd.f32 %v739, %v1150
  %v1152 = vpop.f32.mrf.mxu0
  %1153 = vmatprep.mubr.f32.mxu0 %v863
  %1154 = vmatmul.mubr.f32.gmra.mxu0 %v692
  %v1155 = vpop.f32.mrf.mxu0
  %v1156 = vadd.f32 %v739, %v1155
  %v1157 = vpop.f32.mrf.mxu0
  %1158 = vmatprep.mubr.f32.mxu0 %v866
  %1159 = vmatmul.mubr.f32.gmra.mxu0 %v694
  %v1160 = vpop.f32.mrf.mxu0
  %v1161 = vadd.f32 %v739, %v1160
  %v1162 = vpop.f32.mrf.mxu0
  %1163 = vmatprep.mubr.f32.mxu0 %v869
  %1164 = vmatmul.mubr.f32.gmra.mxu0 %v696
  %v1165 = vpop.f32.mrf.mxu0
  %v1166 = vadd.f32 %v739, %v1165
  %v1167 = vpop.f32.mrf.mxu0
  %1168 = vmatprep.mubr.f32.mxu0 %v872
  %1169 = vmatmul.mubr.f32.gmra.mxu0 %v698
  %v1170 = vpop.f32.mrf.mxu0
  %v1171 = vadd.f32 %v739, %v1170
  %v1172 = vpop.f32.mrf.mxu0
  %1173 = vmatprep.mubr.f32.mxu0 %v875
  %1174 = vmatmul.mubr.f32.gmra.mxu0 %v700
  %v1175 = vpop.f32.mrf.mxu0
  %v1176 = vadd.f32 %v739, %v1175
  %v1177 = vpop.f32.mrf.mxu0
  %1178 = vmatprep.mubr.f32.mxu0 %v878
  %1179 = vmatmul.mubr.f32.gmra.mxu0 %v702
  %v1180 = vpop.f32.mrf.mxu0
  %v1181 = vadd.f32 %v739, %v1180
  %v1182 = vpop.f32.mrf.mxu0
  %1183 = vmatprep.mubr.f32.mxu0 %v881
  %1184 = vmatmul.mubr.f32.gmra.mxu0 %v704
  %v1185 = vpop.f32.mrf.mxu0
  %v1186 = vadd.f32 %v739, %v1185
  %v1187 = vpop.f32.mrf.mxu0
  %1188 = vmatprep.mubr.f32.mxu0 %v884
  %1189 = vmatmul.mubr.f32.gmra.mxu0 %v706
  %v1190 = vpop.f32.mrf.mxu0
  %v1191 = vadd.f32 %v739, %v1190
  %v1192 = vpop.f32.mrf.mxu0
  %1193 = vmatprep.mubr.f32.mxu0 %v887
  %1194 = vmatmul.mubr.f32.gmra.mxu0 %v708
  %v1195 = vpop.f32.mrf.mxu0
  %v1196 = vadd.f32 %v739, %v1195
  %v1197 = vpop.f32.mrf.mxu0
  %1198 = vdwg.mxu0
  %v1199 = vmax.f32 %v956, 0.0
  %v1200 = vmax.f32 %v961, 0.0
  %v1201 = vmax.f32 %v966, 0.0
  %v1202 = vmax.f32 %v971, 0.0
  %v1203 = vmax.f32 %v976, 0.0
  %v1204 = vmax.f32 %v981, 0.0
  %v1205 = vmax.f32 %v986, 0.0
  %v1206 = vmax.f32 %v991, 0.0
  %v1207 = vmax.f32 %v996, 0.0
  %v1208 = vmax.f32 %v1001, 0.0
  %v1209 = vmax.f32 %v1006, 0.0
  %v1210 = vmax.f32 %v1011, 0.0
  %v1211 = vmax.f32 %v1016, 0.0
  %v1212 = vmax.f32 %v1021, 0.0
  %v1213 = vmax.f32 %v1026, 0.0
  %v1214 = vmax.f32 %v1031, 0.0
  %v1215 = vmax.f32 %v1036, 0.0
  %v1216 = vmax.f32 %v1041, 0.0
  %v1217 = vmax.f32 %v1046, 0.0
  %v1218 = vmax.f32 %v1051, 0.0
  %v1219 = vmax.f32 %v1056, 0.0
  %v1220 = vmax.f32 %v1061, 0.0
  %v1221 = vmax.f32 %v1066, 0.0
  %v1222 = vmax.f32 %v1071, 0.0
  %v1223 = vmax.f32 %v1076, 0.0
  %v1224 = vmax.f32 %v1081, 0.0
  %v1225 = vmax.f32 %v1086, 0.0
  %v1226 = vmax.f32 %v1091, 0.0
  %v1227 = vmax.f32 %v1096, 0.0
  %v1228 = vmax.f32 %v1101, 0.0
  %v1229 = vmax.f32 %v1106, 0.0
  %v1230 = vmax.f32 %v1111, 0.0
  %v1231 = vmax.f32 %v1116, 0.0
  %v1232 = vmax.f32 %v1121, 0.0
  %v1233 = vmax.f32 %v1126, 0.0
  %v1234 = vmax.f32 %v1131, 0.0
  %v1235 = vmax.f32 %v1136, 0.0
  %v1236 = vmax.f32 %v1141, 0.0
  %v1237 = vmax.f32 %v1146, 0.0
  %v1238 = vmax.f32 %v1151, 0.0
  %v1239 = vmax.f32 %v1156, 0.0
  %v1240 = vmax.f32 %v1161, 0.0
  %v1241 = vmax.f32 %v1166, 0.0
  %v1242 = vmax.f32 %v1171, 0.0
  %v1243 = vmax.f32 %v1176, 0.0
  %v1244 = vmax.f32 %v1181, 0.0
  %v1245 = vmax.f32 %v1186, 0.0
  %v1246 = vmax.f32 %v1191, 0.0
  %v1247 = vmax.f32 %v1196, 0.0
  %vm1248 = vcmask 80896
  %1249 = vst.msk [vmem:[%s5] sm:$0xff] %vm1248, %v1199
  %1250 = vst.msk [vmem:[%s5 + $0x8] sm:$0xff] %vm1248, %v1200
  %1251 = vst.msk [vmem:[%s5 + $0x10] sm:$0xff] %vm1248, %v1201
  %1252 = vst.msk [vmem:[%s5 + $0x18] sm:$0xff] %vm1248, %v1202
  %1253 = vst.msk [vmem:[%s5 + $0x20] sm:$0xff] %vm1248, %v1203
  %1254 = vst.msk [vmem:[%s5 + $0x28] sm:$0xff] %vm1248, %v1204
  %1255 = vst.msk [vmem:[%s5 + $0x30] sm:$0xff] %vm1248, %v1205
  %1256 = vst.msk [vmem:[%s5 + $0x38] sm:$0xff] %vm1248, %v1206
  %1257 = vst.msk [vmem:[%s5 + $0x40] sm:$0xff] %vm1248, %v1207
  %1258 = vst.msk [vmem:[%s5 + $0x48] sm:$0xff] %vm1248, %v1208
  %1259 = vst.msk [vmem:[%s5 + $0x50] sm:$0xff] %vm1248, %v1209
  %1260 = vst.msk [vmem:[%s5 + $0x58] sm:$0xff] %vm1248, %v1210
  %1261 = vst.msk [vmem:[%s5 + $0x60] sm:$0xff] %vm1248, %v1211
  %1262 = vst.msk [vmem:[%s5 + $0x68] sm:$0xff] %vm1248, %v1212
  %1263 = vst.msk [vmem:[%s5 + $0x70] sm:$0xff] %vm1248, %v1213
  %1264 = vst.msk [vmem:[%s5 + $0x78] sm:$0xff] %vm1248, %v1214
  %1265 = vst.msk [vmem:[%s5 + $0x80] sm:$0xff] %vm1248, %v1215
  %1266 = vst.msk [vmem:[%s5 + $0x88] sm:$0xff] %vm1248, %v1216
  %1267 = vst.msk [vmem:[%s5 + $0x90] sm:$0xff] %vm1248, %v1217
  %1268 = vst.msk [vmem:[%s5 + $0x98] sm:$0xff] %vm1248, %v1218
  %1269 = vst.msk [vmem:[%s5 + $0xa0] sm:$0xff] %vm1248, %v1219
  %1270 = vst.msk [vmem:[%s5 + $0xa8] sm:$0xff] %vm1248, %v1220
  %1271 = vst.msk [vmem:[%s5 + $0xb0] sm:$0xff] %vm1248, %v1221
  %1272 = vst.msk [vmem:[%s5 + $0xb8] sm:$0xff] %vm1248, %v1222
  %1273 = vst.msk [vmem:[%s5 + $0xc0] sm:$0xff] %vm1248, %v1223
  %1274 = vst.msk [vmem:[%s5 + $0xc8] sm:$0xff] %vm1248, %v1224
  %1275 = vst.msk [vmem:[%s5 + $0xd0] sm:$0xff] %vm1248, %v1225
  %1276 = vst.msk [vmem:[%s5 + $0xd8] sm:$0xff] %vm1248, %v1226
  %1277 = vst.msk [vmem:[%s5 + $0xe0] sm:$0xff] %vm1248, %v1227
  %1278 = vst.msk [vmem:[%s5 + $0xe8] sm:$0xff] %vm1248, %v1228
  %1279 = vst.msk [vmem:[%s5 + $0xf0] sm:$0xff] %vm1248, %v1229
  %1280 = vst.msk [vmem:[%s5 + $0xf8] sm:$0xff] %vm1248, %v1230
  %1281 = vst.msk [vmem:[%s5 + $0x100] sm:$0xff] %vm1248, %v1231
  %1282 = vst.msk [vmem:[%s5 + $0x108] sm:$0xff] %vm1248, %v1232
  %1283 = vst.msk [vmem:[%s5 + $0x110] sm:$0xff] %vm1248, %v1233
  %1284 = vst.msk [vmem:[%s5 + $0x118] sm:$0xff] %vm1248, %v1234
  %1285 = vst.msk [vmem:[%s5 + $0x120] sm:$0xff] %vm1248, %v1235
  %1286 = vst.msk [vmem:[%s5 + $0x128] sm:$0xff] %vm1248, %v1236
  %1287 = vst.msk [vmem:[%s5 + $0x130] sm:$0xff] %vm1248, %v1237
  %1288 = vst.msk [vmem:[%s5 + $0x138] sm:$0xff] %vm1248, %v1238
  %1289 = vst.msk [vmem:[%s5 + $0x140] sm:$0xff] %vm1248, %v1239
  %1290 = vst.msk [vmem:[%s5 + $0x148] sm:$0xff] %vm1248, %v1240
  %1291 = vst.msk [vmem:[%s5 + $0x150] sm:$0xff] %vm1248, %v1241
  %1292 = vst.msk [vmem:[%s5 + $0x158] sm:$0xff] %vm1248, %v1242
  %1293 = vst.msk [vmem:[%s5 + $0x160] sm:$0xff] %vm1248, %v1243
  %1294 = vst.msk [vmem:[%s5 + $0x168] sm:$0xff] %vm1248, %v1244
  %1295 = vst.msk [vmem:[%s5 + $0x170] sm:$0xff] %vm1248, %v1245
  %1296 = vst.msk [vmem:[%s5 + $0x178] sm:$0xff] %vm1248, %v1246
  %1297 = vst.msk [vmem:[%s5 + $0x180] sm:$0xff] %vm1248, %v1247
  // Predicated region
  $region22: #{network_phi_forward.6} parent=0 // pred_check
    _
  $region23: #{network_phi_forward.6} parent=0 // pred_check_branch
    %1299 = sbr.rel (0) target = $region25
  $region24: #{network_phi_forward.6} parent=0 // pred_region
    _
  $region25: #{network_phi_forward.6} parent=0 // pred_fallthru
    _
  // Predicated region
  $region26: #{network_phi_forward.6} parent=0 // pred_check
    _
  $region27: #{network_phi_forward.6} parent=0 // pred_check_branch
    %1301 = sbr.rel (0) target = $region29
  $region28: #{network_phi_forward.6} parent=0 // pred_region
    _
  $region29: #{network_phi_forward.6} parent=0 // pred_fallthru
    _

// kernel: network_phi_forward.7
$region0: #{network_phi_forward.7}
  #allocation0 [shape = 'u32[]', space=smem, size = 0x4, offset = 0x4, fixed_abs, tag = 'smem constant byte address 0x4 - core index']
  #allocation1 [shape = 'u32[144,128]{1,0:T(1,128)}', space=vmem, size = 0x12000, scoped, tag = 'internal scratch']
  %s0 = inlined_call_operand.vmem [shape: f32[8,1960], index: 0, kind: input, shape index: {}]
  %s1 = inlined_call_operand.vmem [shape: f32[1960,1000], index: 1, kind: input, shape index: {}]
  %s2 = inlined_call_operand.vmem [shape: f32[1,1000], index: 2, kind: input, shape index: {}]
  %s3 = inlined_call_operand.vmem [shape: f32[1000,1000], index: 3, kind: input, shape index: {}]
  %s4 = inlined_call_operand.vmem [shape: f32[1,1000], index: 4, kind: input, shape index: {}]
  %s5 = inlined_call_operand.vmem [shape: f32[1000,2], index: 5, kind: input, shape index: {}]
  %s6 = inlined_call_operand.vmem [shape: f32[1,2], index: 6, kind: input, shape index: {}]
  %s7 = inlined_call_operand.vmem [shape: f32[8,2], index: 7, kind: output, shape index: {}]
  %s8 = sld [smem:[#allocation0]]
  $region38: #{network_phi_forward.7} parent=0
    _
  %s10 = ssub.s32 1, %s8
  %s11 = scalar_select 0, %s10, %s8
  // Predicated region
  $region2: #{network_phi_forward.7} parent=0 // pred_check
    _
  $region3: #{network_phi_forward.7} parent=0 // pred_check_branch
    %13 = sbr.rel (0) target = $region5
  $region4: #{network_phi_forward.7} parent=0 // pred_region
    _
  $region5: #{network_phi_forward.7} parent=0 // pred_fallthru
    _
  // Predicated region
  $region6: #{network_phi_forward.7} parent=0 // pred_check
    _
  $region7: #{network_phi_forward.7} parent=0 // pred_check_branch
    %15 = sbr.rel (0) target = $region9
  $region8: #{network_phi_forward.7} parent=0 // pred_region
    _
  $region9: #{network_phi_forward.7} parent=0 // pred_fallthru
    _
  // Predicated region
  $region10: #{network_phi_forward.7} parent=0 // pred_check
    _
  $region11: #{network_phi_forward.7} parent=0 // pred_check_branch
    %17 = sbr.rel (0) target = $region13
  $region12: #{network_phi_forward.7} parent=0 // pred_region
    _
  $region13: #{network_phi_forward.7} parent=0 // pred_fallthru
    _
  // Predicated region
  $region14: #{network_phi_forward.7} parent=0 // pred_check
    _
  $region15: #{network_phi_forward.7} parent=0 // pred_check_branch
    %19 = sbr.rel (0) target = $region17
  $region16: #{network_phi_forward.7} parent=0 // pred_region
    _
  $region17: #{network_phi_forward.7} parent=0 // pred_fallthru
    _
  // Predicated region
  $region18: #{network_phi_forward.7} parent=0 // pred_check
    _
  $region19: #{network_phi_forward.7} parent=0 // pred_check_branch
    %21 = sbr.rel (0) target = $region21
  $region20: #{network_phi_forward.7} parent=0 // pred_region
    _
  $region21: #{network_phi_forward.7} parent=0 // pred_fallthru
    _
  // Predicated region
  $region22: #{network_phi_forward.7} parent=0 // pred_check
    _
  $region23: #{network_phi_forward.7} parent=0 // pred_check_branch
    %23 = sbr.rel (0) target = $region25
  $region24: #{network_phi_forward.7} parent=0 // pred_region
    _
  $region25: #{network_phi_forward.7} parent=0 // pred_fallthru
    _
  // Predicated region
  $region26: #{network_phi_forward.7} parent=0 // pred_check
    _
  $region27: #{network_phi_forward.7} parent=0 // pred_check_branch
    %25 = sbr.rel (0) target = $region29
  $region28: #{network_phi_forward.7} parent=0 // pred_region
    _
  $region29: #{network_phi_forward.7} parent=0 // pred_fallthru
    _
  %v26 = vld [vmem:[%s0] sm:$0xff]
  %v27 = vld [vmem:[%s0 + $0x8] sm:$0xff]
  %v28 = vld [vmem:[%s0 + $0x10] sm:$0xff]
  %v29 = vld [vmem:[%s0 + $0x18] sm:$0xff]
  %v30 = vld [vmem:[%s0 + $0x20] sm:$0xff]
  %v31 = vld [vmem:[%s0 + $0x28] sm:$0xff]
  %v32 = vld [vmem:[%s0 + $0x30] sm:$0xff]
  %v33 = vld [vmem:[%s0 + $0x38] sm:$0xff]
  %v34 = vld [vmem:[%s0 + $0x40] sm:$0xff]
  %v35 = vld [vmem:[%s0 + $0x48] sm:$0xff]
  %v36 = vld [vmem:[%s0 + $0x50] sm:$0xff]
  %v37 = vld [vmem:[%s0 + $0x58] sm:$0xff]
  %v38 = vld [vmem:[%s0 + $0x60] sm:$0xff]
  %v39 = vld [vmem:[%s0 + $0x68] sm:$0xff]
  %v40 = vld [vmem:[%s0 + $0x70] sm:$0xff]
  %v41 = vld [vmem:[%s0 + $0x78] sm:$0xff]
  %v42 = vld [vmem:[%s1] sm:$0xff]
  %v43 = vld [vmem:[%s1 + $0x8] sm:$0xff]
  %v44 = vld [vmem:[%s1 + $0x10] sm:$0xff]
  %v45 = vld [vmem:[%s1 + $0x18] sm:$0xff]
  %v46 = vld [vmem:[%s1 + $0x20] sm:$0xff]
  %v47 = vld [vmem:[%s1 + $0x28] sm:$0xff]
  %v48 = vld [vmem:[%s1 + $0x30] sm:$0xff]
  %v49 = vld [vmem:[%s1 + $0x38] sm:$0xff]
  %v50 = vld [vmem:[%s1 + $0x40] sm:$0xff]
  %v51 = vld [vmem:[%s1 + $0x48] sm:$0xff]
  %v52 = vld [vmem:[%s1 + $0x50] sm:$0xff]
  %v53 = vld [vmem:[%s1 + $0x58] sm:$0xff]
  %v54 = vld [vmem:[%s1 + $0x60] sm:$0xff]
  %v55 = vld [vmem:[%s1 + $0x68] sm:$0xff]
  %v56 = vld [vmem:[%s1 + $0x70] sm:$0xff]
  %v57 = vld [vmem:[%s1 + $0x78] sm:$0xff]
  %v58 = vld [vmem:[%s1 + $0x80] sm:$0xff]
  %v59 = vld [vmem:[%s1 + $0x88] sm:$0xff]
  %v60 = vld [vmem:[%s1 + $0x90] sm:$0xff]
  %v61 = vld [vmem:[%s1 + $0x98] sm:$0xff]
  %v62 = vld [vmem:[%s1 + $0xa0] sm:$0xff]
  %v63 = vld [vmem:[%s1 + $0xa8] sm:$0xff]
  %v64 = vld [vmem:[%s1 + $0xb0] sm:$0xff]
  %v65 = vld [vmem:[%s1 + $0xb8] sm:$0xff]
  %v66 = vld [vmem:[%s1 + $0xc0] sm:$0xff]
  %v67 = vld [vmem:[%s1 + $0xc8] sm:$0xff]
  %v68 = vld [vmem:[%s1 + $0xd0] sm:$0xff]
  %v69 = vld [vmem:[%s1 + $0xd8] sm:$0xff]
  %v70 = vld [vmem:[%s1 + $0xe0] sm:$0xff]
  %v71 = vld [vmem:[%s1 + $0xe8] sm:$0xff]
  %v72 = vld [vmem:[%s1 + $0xf0] sm:$0xff]
  %v73 = vld [vmem:[%s1 + $0xf8] sm:$0xff]
  %v74 = vld [vmem:[%s1 + $0x100] sm:$0xff]
  %v75 = vld [vmem:[%s1 + $0x108] sm:$0xff]
  %v76 = vld [vmem:[%s1 + $0x110] sm:$0xff]
  %v77 = vld [vmem:[%s1 + $0x118] sm:$0xff]
  %v78 = vld [vmem:[%s1 + $0x120] sm:$0xff]
  %v79 = vld [vmem:[%s1 + $0x128] sm:$0xff]
  %v80 = vld [vmem:[%s1 + $0x130] sm:$0xff]
  %v81 = vld [vmem:[%s1 + $0x138] sm:$0xff]
  %v82 = vld [vmem:[%s1 + $0x140] sm:$0xff]
  %v83 = vld [vmem:[%s1 + $0x148] sm:$0xff]
  %v84 = vld [vmem:[%s1 + $0x150] sm:$0xff]
  %v85 = vld [vmem:[%s1 + $0x158] sm:$0xff]
  %v86 = vld [vmem:[%s1 + $0x160] sm:$0xff]
  %v87 = vld [vmem:[%s1 + $0x168] sm:$0xff]
  %v88 = vld [vmem:[%s1 + $0x170] sm:$0xff]
  %v89 = vld [vmem:[%s1 + $0x178] sm:$0xff]
  %v90 = vld [vmem:[%s1 + $0x180] sm:$0xff]
  %v91 = vld [vmem:[%s1 + $0x188] sm:$0xff]
  %v92 = vld [vmem:[%s1 + $0x190] sm:$0xff]
  %v93 = vld [vmem:[%s1 + $0x198] sm:$0xff]
  %v94 = vld [vmem:[%s1 + $0x1a0] sm:$0xff]
  %v95 = vld [vmem:[%s1 + $0x1a8] sm:$0xff]
  %v96 = vld [vmem:[%s1 + $0x1b0] sm:$0xff]
  %v97 = vld [vmem:[%s1 + $0x1b8] sm:$0xff]
  %v98 = vld [vmem:[%s1 + $0x1c0] sm:$0xff]
  %v99 = vld [vmem:[%s1 + $0x1c8] sm:$0xff]
  %v100 = vld [vmem:[%s1 + $0x1d0] sm:$0xff]
  %v101 = vld [vmem:[%s1 + $0x1d8] sm:$0xff]
  %v102 = vld [vmem:[%s1 + $0x1e0] sm:$0xff]
  %v103 = vld [vmem:[%s1 + $0x1e8] sm:$0xff]
  %v104 = vld [vmem:[%s1 + $0x1f0] sm:$0xff]
  %v105 = vld [vmem:[%s1 + $0x1f8] sm:$0xff]
  %v106 = vld [vmem:[%s1 + $0x200] sm:$0xff]
  %v107 = vld [vmem:[%s1 + $0x208] sm:$0xff]
  %v108 = vld [vmem:[%s1 + $0x210] sm:$0xff]
  %v109 = vld [vmem:[%s1 + $0x218] sm:$0xff]
  %v110 = vld [vmem:[%s1 + $0x220] sm:$0xff]
  %v111 = vld [vmem:[%s1 + $0x228] sm:$0xff]
  %v112 = vld [vmem:[%s1 + $0x230] sm:$0xff]
  %v113 = vld [vmem:[%s1 + $0x238] sm:$0xff]
  %v114 = vld [vmem:[%s1 + $0x240] sm:$0xff]
  %v115 = vld [vmem:[%s1 + $0x248] sm:$0xff]
  %v116 = vld [vmem:[%s1 + $0x250] sm:$0xff]
  %v117 = vld [vmem:[%s1 + $0x258] sm:$0xff]
  %v118 = vld [vmem:[%s1 + $0x260] sm:$0xff]
  %v119 = vld [vmem:[%s1 + $0x268] sm:$0xff]
  %v120 = vld [vmem:[%s1 + $0x270] sm:$0xff]
  %v121 = vld [vmem:[%s1 + $0x278] sm:$0xff]
  %v122 = vld [vmem:[%s1 + $0x280] sm:$0xff]
  %v123 = vld [vmem:[%s1 + $0x288] sm:$0xff]
  %v124 = vld [vmem:[%s1 + $0x290] sm:$0xff]
  %v125 = vld [vmem:[%s1 + $0x298] sm:$0xff]
  %v126 = vld [vmem:[%s1 + $0x2a0] sm:$0xff]
  %v127 = vld [vmem:[%s1 + $0x2a8] sm:$0xff]
  %v128 = vld [vmem:[%s1 + $0x2b0] sm:$0xff]
  %v129 = vld [vmem:[%s1 + $0x2b8] sm:$0xff]
  %v130 = vld [vmem:[%s1 + $0x2c0] sm:$0xff]
  %v131 = vld [vmem:[%s1 + $0x2c8] sm:$0xff]
  %v132 = vld [vmem:[%s1 + $0x2d0] sm:$0xff]
  %v133 = vld [vmem:[%s1 + $0x2d8] sm:$0xff]
  %v134 = vld [vmem:[%s1 + $0x2e0] sm:$0xff]
  %v135 = vld [vmem:[%s1 + $0x2e8] sm:$0xff]
  %v136 = vld [vmem:[%s1 + $0x2f0] sm:$0xff]
  %v137 = vld [vmem:[%s1 + $0x2f8] sm:$0xff]
  %v138 = vld [vmem:[%s1 + $0x300] sm:$0xff]
  %v139 = vld [vmem:[%s1 + $0x308] sm:$0xff]
  %v140 = vld [vmem:[%s1 + $0x310] sm:$0xff]
  %v141 = vld [vmem:[%s1 + $0x318] sm:$0xff]
  %v142 = vld [vmem:[%s1 + $0x320] sm:$0xff]
  %v143 = vld [vmem:[%s1 + $0x328] sm:$0xff]
  %v144 = vld [vmem:[%s1 + $0x330] sm:$0xff]
  %v145 = vld [vmem:[%s1 + $0x338] sm:$0xff]
  %v146 = vld [vmem:[%s1 + $0x340] sm:$0xff]
  %v147 = vld [vmem:[%s1 + $0x348] sm:$0xff]
  %v148 = vld [vmem:[%s1 + $0x350] sm:$0xff]
  %v149 = vld [vmem:[%s1 + $0x358] sm:$0xff]
  %v150 = vld [vmem:[%s1 + $0x360] sm:$0xff]
  %v151 = vld [vmem:[%s1 + $0x368] sm:$0xff]
  %v152 = vld [vmem:[%s1 + $0x370] sm:$0xff]
  %v153 = vld [vmem:[%s1 + $0x378] sm:$0xff]
  %v154 = vld [vmem:[%s1 + $0x380] sm:$0xff]
  %v155 = vld [vmem:[%s1 + $0x388] sm:$0xff]
  %v156 = vld [vmem:[%s1 + $0x390] sm:$0xff]
  %v157 = vld [vmem:[%s1 + $0x398] sm:$0xff]
  %v158 = vld [vmem:[%s1 + $0x3a0] sm:$0xff]
  %v159 = vld [vmem:[%s1 + $0x3a8] sm:$0xff]
  %v160 = vld [vmem:[%s1 + $0x3b0] sm:$0xff]
  %v161 = vld [vmem:[%s1 + $0x3b8] sm:$0xff]
  %v162 = vld [vmem:[%s1 + $0x3c0] sm:$0xff]
  %v163 = vld [vmem:[%s1 + $0x3c8] sm:$0xff]
  %v164 = vld [vmem:[%s1 + $0x3d0] sm:$0xff]
  %v165 = vld [vmem:[%s1 + $0x3d8] sm:$0xff]
  %v166 = vld [vmem:[%s1 + $0x3e0] sm:$0xff]
  %v167 = vld [vmem:[%s1 + $0x3e8] sm:$0xff]
  %v168 = vld [vmem:[%s1 + $0x3f0] sm:$0xff]
  %v169 = vld [vmem:[%s1 + $0x3f8] sm:$0xff]
  %v170 = vld [vmem:[%s1 + $0x400] sm:$0xff]
  %v171 = vld [vmem:[%s1 + $0x408] sm:$0xff]
  %v172 = vld [vmem:[%s1 + $0x410] sm:$0xff]
  %v173 = vld [vmem:[%s1 + $0x418] sm:$0xff]
  %v174 = vld [vmem:[%s1 + $0x420] sm:$0xff]
  %v175 = vld [vmem:[%s1 + $0x428] sm:$0xff]
  %v176 = vld [vmem:[%s1 + $0x430] sm:$0xff]
  %v177 = vld [vmem:[%s1 + $0x438] sm:$0xff]
  %v178 = vld [vmem:[%s1 + $0x440] sm:$0xff]
  %v179 = vld [vmem:[%s1 + $0x448] sm:$0xff]
  %v180 = vld [vmem:[%s1 + $0x450] sm:$0xff]
  %v181 = vld [vmem:[%s1 + $0x458] sm:$0xff]
  %v182 = vld [vmem:[%s1 + $0x460] sm:$0xff]
  %v183 = vld [vmem:[%s1 + $0x468] sm:$0xff]
  %v184 = vld [vmem:[%s1 + $0x470] sm:$0xff]
  %v185 = vld [vmem:[%s1 + $0x478] sm:$0xff]
  %v186 = vld [vmem:[%s1 + $0x480] sm:$0xff]
  %v187 = vld [vmem:[%s1 + $0x488] sm:$0xff]
  %v188 = vld [vmem:[%s1 + $0x490] sm:$0xff]
  %v189 = vld [vmem:[%s1 + $0x498] sm:$0xff]
  %v190 = vld [vmem:[%s1 + $0x4a0] sm:$0xff]
  %v191 = vld [vmem:[%s1 + $0x4a8] sm:$0xff]
  %v192 = vld [vmem:[%s1 + $0x4b0] sm:$0xff]
  %v193 = vld [vmem:[%s1 + $0x4b8] sm:$0xff]
  %v194 = vld [vmem:[%s1 + $0x4c0] sm:$0xff]
  %v195 = vld [vmem:[%s1 + $0x4c8] sm:$0xff]
  %v196 = vld [vmem:[%s1 + $0x4d0] sm:$0xff]
  %v197 = vld [vmem:[%s1 + $0x4d8] sm:$0xff]
  %v198 = vld [vmem:[%s1 + $0x4e0] sm:$0xff]
  %v199 = vld [vmem:[%s1 + $0x4e8] sm:$0xff]
  %v200 = vld [vmem:[%s1 + $0x4f0] sm:$0xff]
  %v201 = vld [vmem:[%s1 + $0x4f8] sm:$0xff]
  %v202 = vld [vmem:[%s1 + $0x500] sm:$0xff]
  %v203 = vld [vmem:[%s1 + $0x508] sm:$0xff]
  %v204 = vld [vmem:[%s1 + $0x510] sm:$0xff]
  %v205 = vld [vmem:[%s1 + $0x518] sm:$0xff]
  %v206 = vld [vmem:[%s1 + $0x520] sm:$0xff]
  %v207 = vld [vmem:[%s1 + $0x528] sm:$0xff]
  %v208 = vld [vmem:[%s1 + $0x530] sm:$0xff]
  %v209 = vld [vmem:[%s1 + $0x538] sm:$0xff]
  %v210 = vld [vmem:[%s1 + $0x540] sm:$0xff]
  %v211 = vld [vmem:[%s1 + $0x548] sm:$0xff]
  %v212 = vld [vmem:[%s1 + $0x550] sm:$0xff]
  %v213 = vld [vmem:[%s1 + $0x558] sm:$0xff]
  %v214 = vld [vmem:[%s1 + $0x560] sm:$0xff]
  %v215 = vld [vmem:[%s1 + $0x568] sm:$0xff]
  %v216 = vld [vmem:[%s1 + $0x570] sm:$0xff]
  %v217 = vld [vmem:[%s1 + $0x578] sm:$0xff]
  %v218 = vld [vmem:[%s1 + $0x580] sm:$0xff]
  %v219 = vld [vmem:[%s1 + $0x588] sm:$0xff]
  %v220 = vld [vmem:[%s1 + $0x590] sm:$0xff]
  %v221 = vld [vmem:[%s1 + $0x598] sm:$0xff]
  %v222 = vld [vmem:[%s1 + $0x5a0] sm:$0xff]
  %v223 = vld [vmem:[%s1 + $0x5a8] sm:$0xff]
  %v224 = vld [vmem:[%s1 + $0x5b0] sm:$0xff]
  %v225 = vld [vmem:[%s1 + $0x5b8] sm:$0xff]
  %v226 = vld [vmem:[%s1 + $0x5c0] sm:$0xff]
  %v227 = vld [vmem:[%s1 + $0x5c8] sm:$0xff]
  %v228 = vld [vmem:[%s1 + $0x5d0] sm:$0xff]
  %v229 = vld [vmem:[%s1 + $0x5d8] sm:$0xff]
  %v230 = vld [vmem:[%s1 + $0x5e0] sm:$0xff]
  %v231 = vld [vmem:[%s1 + $0x5e8] sm:$0xff]
  %v232 = vld [vmem:[%s1 + $0x5f0] sm:$0xff]
  %v233 = vld [vmem:[%s1 + $0x5f8] sm:$0xff]
  %v234 = vld [vmem:[%s1 + $0x600] sm:$0xff]
  %v235 = vld [vmem:[%s1 + $0x608] sm:$0xff]
  %v236 = vld [vmem:[%s1 + $0x610] sm:$0xff]
  %v237 = vld [vmem:[%s1 + $0x618] sm:$0xff]
  %v238 = vld [vmem:[%s1 + $0x620] sm:$0xff]
  %v239 = vld [vmem:[%s1 + $0x628] sm:$0xff]
  %v240 = vld [vmem:[%s1 + $0x630] sm:$0xff]
  %v241 = vld [vmem:[%s1 + $0x638] sm:$0xff]
  %v242 = vld [vmem:[%s1 + $0x640] sm:$0xff]
  %v243 = vld [vmem:[%s1 + $0x648] sm:$0xff]
  %v244 = vld [vmem:[%s1 + $0x650] sm:$0xff]
  %v245 = vld [vmem:[%s1 + $0x658] sm:$0xff]
  %v246 = vld [vmem:[%s1 + $0x660] sm:$0xff]
  %v247 = vld [vmem:[%s1 + $0x668] sm:$0xff]
  %v248 = vld [vmem:[%s1 + $0x670] sm:$0xff]
  %v249 = vld [vmem:[%s1 + $0x678] sm:$0xff]
  %v250 = vld [vmem:[%s1 + $0x680] sm:$0xff]
  %v251 = vld [vmem:[%s1 + $0x688] sm:$0xff]
  %v252 = vld [vmem:[%s1 + $0x690] sm:$0xff]
  %v253 = vld [vmem:[%s1 + $0x698] sm:$0xff]
  %v254 = vld [vmem:[%s1 + $0x6a0] sm:$0xff]
  %v255 = vld [vmem:[%s1 + $0x6a8] sm:$0xff]
  %v256 = vld [vmem:[%s1 + $0x6b0] sm:$0xff]
  %v257 = vld [vmem:[%s1 + $0x6b8] sm:$0xff]
  %v258 = vld [vmem:[%s1 + $0x6c0] sm:$0xff]
  %v259 = vld [vmem:[%s1 + $0x6c8] sm:$0xff]
  %v260 = vld [vmem:[%s1 + $0x6d0] sm:$0xff]
  %v261 = vld [vmem:[%s1 + $0x6d8] sm:$0xff]
  %v262 = vld [vmem:[%s1 + $0x6e0] sm:$0xff]
  %v263 = vld [vmem:[%s1 + $0x6e8] sm:$0xff]
  %v264 = vld [vmem:[%s1 + $0x6f0] sm:$0xff]
  %v265 = vld [vmem:[%s1 + $0x6f8] sm:$0xff]
  %v266 = vld [vmem:[%s1 + $0x700] sm:$0xff]
  %v267 = vld [vmem:[%s1 + $0x708] sm:$0xff]
  %v268 = vld [vmem:[%s1 + $0x710] sm:$0xff]
  %v269 = vld [vmem:[%s1 + $0x718] sm:$0xff]
  %v270 = vld [vmem:[%s1 + $0x720] sm:$0xff]
  %v271 = vld [vmem:[%s1 + $0x728] sm:$0xff]
  %v272 = vld [vmem:[%s1 + $0x730] sm:$0xff]
  %v273 = vld [vmem:[%s1 + $0x738] sm:$0xff]
  %v274 = vld [vmem:[%s1 + $0x740] sm:$0xff]
  %v275 = vld [vmem:[%s1 + $0x748] sm:$0xff]
  %v276 = vld [vmem:[%s1 + $0x750] sm:$0xff]
  %v277 = vld [vmem:[%s1 + $0x758] sm:$0xff]
  %v278 = vld [vmem:[%s1 + $0x760] sm:$0xff]
  %v279 = vld [vmem:[%s1 + $0x768] sm:$0xff]
  %v280 = vld [vmem:[%s1 + $0x770] sm:$0xff]
  %v281 = vld [vmem:[%s1 + $0x778] sm:$0xff]
  %v282 = vld [vmem:[%s1 + $0x780] sm:$0xff]
  %v283 = vld [vmem:[%s1 + $0x788] sm:$0xff]
  %v284 = vld [vmem:[%s1 + $0x790] sm:$0xff]
  %v285 = vld [vmem:[%s1 + $0x798] sm:$0xff]
  %v286 = vld [vmem:[%s1 + $0x7a0] sm:$0xff]
  %v287 = vld [vmem:[%s1 + $0x7a8] sm:$0xff]
  %v288 = vld [vmem:[%s1 + $0x7b0] sm:$0xff]
  %v289 = vld [vmem:[%s1 + $0x7b8] sm:$0xff]
  %v290 = vld [vmem:[%s1 + $0x7c0] sm:$0xff]
  %v291 = vld [vmem:[%s1 + $0x7c8] sm:$0xff]
  %v292 = vld [vmem:[%s1 + $0x7d0] sm:$0xff]
  %v293 = vld [vmem:[%s1 + $0x7d8] sm:$0xff]
  %v294 = vld [vmem:[%s1 + $0x7e0] sm:$0xff]
  %v295 = vld [vmem:[%s1 + $0x7e8] sm:$0xff]
  %v296 = vld [vmem:[%s1 + $0x7f0] sm:$0xff]
  %v297 = vld [vmem:[%s1 + $0x7f8] sm:$0xff]
  %v298 = vld [vmem:[%s1 + $0x800] sm:$0xff]
  %v299 = vld [vmem:[%s1 + $0x808] sm:$0xff]
  %v300 = vld [vmem:[%s1 + $0x810] sm:$0xff]
  %v301 = vld [vmem:[%s1 + $0x818] sm:$0xff]
  %v302 = vld [vmem:[%s1 + $0x820] sm:$0xff]
  %v303 = vld [vmem:[%s1 + $0x828] sm:$0xff]
  %v304 = vld [vmem:[%s1 + $0x830] sm:$0xff]
  %v305 = vld [vmem:[%s1 + $0x838] sm:$0xff]
  %v306 = vld [vmem:[%s1 + $0x840] sm:$0xff]
  %v307 = vld [vmem:[%s1 + $0x848] sm:$0xff]
  %v308 = vld [vmem:[%s1 + $0x850] sm:$0xff]
  %v309 = vld [vmem:[%s1 + $0x858] sm:$0xff]
  %v310 = vld [vmem:[%s1 + $0x860] sm:$0xff]
  %v311 = vld [vmem:[%s1 + $0x868] sm:$0xff]
  %v312 = vld [vmem:[%s1 + $0x870] sm:$0xff]
  %v313 = vld [vmem:[%s1 + $0x878] sm:$0xff]
  %v314 = vld [vmem:[%s1 + $0x880] sm:$0xff]
  %v315 = vld [vmem:[%s1 + $0x888] sm:$0xff]
  %v316 = vld [vmem:[%s1 + $0x890] sm:$0xff]
  %v317 = vld [vmem:[%s1 + $0x898] sm:$0xff]
  %v318 = vld [vmem:[%s1 + $0x8a0] sm:$0xff]
  %v319 = vld [vmem:[%s1 + $0x8a8] sm:$0xff]
  %v320 = vld [vmem:[%s1 + $0x8b0] sm:$0xff]
  %v321 = vld [vmem:[%s1 + $0x8b8] sm:$0xff]
  %v322 = vld [vmem:[%s1 + $0x8c0] sm:$0xff]
  %v323 = vld [vmem:[%s1 + $0x8c8] sm:$0xff]
  %v324 = vld [vmem:[%s1 + $0x8d0] sm:$0xff]
  %v325 = vld [vmem:[%s1 + $0x8d8] sm:$0xff]
  %v326 = vld [vmem:[%s1 + $0x8e0] sm:$0xff]
  %v327 = vld [vmem:[%s1 + $0x8e8] sm:$0xff]
  %v328 = vld [vmem:[%s1 + $0x8f0] sm:$0xff]
  %v329 = vld [vmem:[%s1 + $0x8f8] sm:$0xff]
  %v330 = vld [vmem:[%s1 + $0x900] sm:$0xff]
  %v331 = vld [vmem:[%s1 + $0x908] sm:$0xff]
  %v332 = vld [vmem:[%s1 + $0x910] sm:$0xff]
  %v333 = vld [vmem:[%s1 + $0x918] sm:$0xff]
  %v334 = vld [vmem:[%s1 + $0x920] sm:$0xff]
  %v335 = vld [vmem:[%s1 + $0x928] sm:$0xff]
  %v336 = vld [vmem:[%s1 + $0x930] sm:$0xff]
  %v337 = vld [vmem:[%s1 + $0x938] sm:$0xff]
  %v338 = vld [vmem:[%s1 + $0x940] sm:$0xff]
  %v339 = vld [vmem:[%s1 + $0x948] sm:$0xff]
  %v340 = vld [vmem:[%s1 + $0x950] sm:$0xff]
  %v341 = vld [vmem:[%s1 + $0x958] sm:$0xff]
  %v342 = vld [vmem:[%s1 + $0x960] sm:$0xff]
  %v343 = vld [vmem:[%s1 + $0x968] sm:$0xff]
  %v344 = vld [vmem:[%s1 + $0x970] sm:$0xff]
  %v345 = vld [vmem:[%s1 + $0x978] sm:$0xff]
  %v346 = vld [vmem:[%s1 + $0x980] sm:$0xff]
  %v347 = vld [vmem:[%s1 + $0x988] sm:$0xff]
  %v348 = vld [vmem:[%s1 + $0x990] sm:$0xff]
  %v349 = vld [vmem:[%s1 + $0x998] sm:$0xff]
  %v350 = vld [vmem:[%s1 + $0x9a0] sm:$0xff]
  %v351 = vld [vmem:[%s1 + $0x9a8] sm:$0xff]
  %v352 = vld [vmem:[%s1 + $0x9b0] sm:$0xff]
  %v353 = vld [vmem:[%s1 + $0x9b8] sm:$0xff]
  %v354 = vld [vmem:[%s1 + $0x9c0] sm:$0xff]
  %v355 = vld [vmem:[%s1 + $0x9c8] sm:$0xff]
  %v356 = vld [vmem:[%s1 + $0x9d0] sm:$0xff]
  %v357 = vld [vmem:[%s1 + $0x9d8] sm:$0xff]
  %v358 = vld [vmem:[%s1 + $0x9e0] sm:$0xff]
  %v359 = vld [vmem:[%s1 + $0x9e8] sm:$0xff]
  %v360 = vld [vmem:[%s1 + $0x9f0] sm:$0xff]
  %v361 = vld [vmem:[%s1 + $0x9f8] sm:$0xff]
  %v362 = vld [vmem:[%s1 + $0xa00] sm:$0xff]
  %v363 = vld [vmem:[%s1 + $0xa08] sm:$0xff]
  %v364 = vld [vmem:[%s1 + $0xa10] sm:$0xff]
  %v365 = vld [vmem:[%s1 + $0xa18] sm:$0xff]
  %v366 = vld [vmem:[%s1 + $0xa20] sm:$0xff]
  %v367 = vld [vmem:[%s1 + $0xa28] sm:$0xff]
  %v368 = vld [vmem:[%s1 + $0xa30] sm:$0xff]
  %v369 = vld [vmem:[%s1 + $0xa38] sm:$0xff]
  %v370 = vld [vmem:[%s1 + $0xa40] sm:$0xff]
  %v371 = vld [vmem:[%s1 + $0xa48] sm:$0xff]
  %v372 = vld [vmem:[%s1 + $0xa50] sm:$0xff]
  %v373 = vld [vmem:[%s1 + $0xa58] sm:$0xff]
  %v374 = vld [vmem:[%s1 + $0xa60] sm:$0xff]
  %v375 = vld [vmem:[%s1 + $0xa68] sm:$0xff]
  %v376 = vld [vmem:[%s1 + $0xa70] sm:$0xff]
  %v377 = vld [vmem:[%s1 + $0xa78] sm:$0xff]
  %v378 = vld [vmem:[%s1 + $0xa80] sm:$0xff]
  %v379 = vld [vmem:[%s1 + $0xa88] sm:$0xff]
  %v380 = vld [vmem:[%s1 + $0xa90] sm:$0xff]
  %v381 = vld [vmem:[%s1 + $0xa98] sm:$0xff]
  %v382 = vld [vmem:[%s1 + $0xaa0] sm:$0xff]
  %v383 = vld [vmem:[%s1 + $0xaa8] sm:$0xff]
  %v384 = vld [vmem:[%s1 + $0xab0] sm:$0xff]
  %v385 = vld [vmem:[%s1 + $0xab8] sm:$0xff]
  %v386 = vld [vmem:[%s1 + $0xac0] sm:$0xff]
  %v387 = vld [vmem:[%s1 + $0xac8] sm:$0xff]
  %v388 = vld [vmem:[%s1 + $0xad0] sm:$0xff]
  %v389 = vld [vmem:[%s1 + $0xad8] sm:$0xff]
  %v390 = vld [vmem:[%s1 + $0xae0] sm:$0xff]
  %v391 = vld [vmem:[%s1 + $0xae8] sm:$0xff]
  %v392 = vld [vmem:[%s1 + $0xaf0] sm:$0xff]
  %v393 = vld [vmem:[%s1 + $0xaf8] sm:$0xff]
  %v394 = vld [vmem:[%s1 + $0xb00] sm:$0xff]
  %v395 = vld [vmem:[%s1 + $0xb08] sm:$0xff]
  %v396 = vld [vmem:[%s1 + $0xb10] sm:$0xff]
  %v397 = vld [vmem:[%s1 + $0xb18] sm:$0xff]
  %v398 = vld [vmem:[%s1 + $0xb20] sm:$0xff]
  %v399 = vld [vmem:[%s1 + $0xb28] sm:$0xff]
  %v400 = vld [vmem:[%s1 + $0xb30] sm:$0xff]
  %v401 = vld [vmem:[%s1 + $0xb38] sm:$0xff]
  %v402 = vld [vmem:[%s1 + $0xb40] sm:$0xff]
  %v403 = vld [vmem:[%s1 + $0xb48] sm:$0xff]
  %v404 = vld [vmem:[%s1 + $0xb50] sm:$0xff]
  %v405 = vld [vmem:[%s1 + $0xb58] sm:$0xff]
  %v406 = vld [vmem:[%s1 + $0xb60] sm:$0xff]
  %v407 = vld [vmem:[%s1 + $0xb68] sm:$0xff]
  %v408 = vld [vmem:[%s1 + $0xb70] sm:$0xff]
  %v409 = vld [vmem:[%s1 + $0xb78] sm:$0xff]
  %v410 = vld [vmem:[%s1 + $0xb80] sm:$0xff]
  %v411 = vld [vmem:[%s1 + $0xb88] sm:$0xff]
  %v412 = vld [vmem:[%s1 + $0xb90] sm:$0xff]
  %v413 = vld [vmem:[%s1 + $0xb98] sm:$0xff]
  %v414 = vld [vmem:[%s1 + $0xba0] sm:$0xff]
  %v415 = vld [vmem:[%s1 + $0xba8] sm:$0xff]
  %v416 = vld [vmem:[%s1 + $0xbb0] sm:$0xff]
  %v417 = vld [vmem:[%s1 + $0xbb8] sm:$0xff]
  %v418 = vld [vmem:[%s1 + $0xbc0] sm:$0xff]
  %v419 = vld [vmem:[%s1 + $0xbc8] sm:$0xff]
  %v420 = vld [vmem:[%s1 + $0xbd0] sm:$0xff]
  %v421 = vld [vmem:[%s1 + $0xbd8] sm:$0xff]
  %v422 = vld [vmem:[%s1 + $0xbe0] sm:$0xff]
  %v423 = vld [vmem:[%s1 + $0xbe8] sm:$0xff]
  %v424 = vld [vmem:[%s1 + $0xbf0] sm:$0xff]
  %v425 = vld [vmem:[%s1 + $0xbf8] sm:$0xff]
  %v426 = vld [vmem:[%s1 + $0xc00] sm:$0xff]
  %v427 = vld [vmem:[%s1 + $0xc08] sm:$0xff]
  %v428 = vld [vmem:[%s1 + $0xc10] sm:$0xff]
  %v429 = vld [vmem:[%s1 + $0xc18] sm:$0xff]
  %v430 = vld [vmem:[%s1 + $0xc20] sm:$0xff]
  %v431 = vld [vmem:[%s1 + $0xc28] sm:$0xff]
  %v432 = vld [vmem:[%s1 + $0xc30] sm:$0xff]
  %v433 = vld [vmem:[%s1 + $0xc38] sm:$0xff]
  %v434 = vld [vmem:[%s1 + $0xc40] sm:$0xff]
  %v435 = vld [vmem:[%s1 + $0xc48] sm:$0xff]
  %v436 = vld [vmem:[%s1 + $0xc50] sm:$0xff]
  %v437 = vld [vmem:[%s1 + $0xc58] sm:$0xff]
  %v438 = vld [vmem:[%s1 + $0xc60] sm:$0xff]
  %v439 = vld [vmem:[%s1 + $0xc68] sm:$0xff]
  %v440 = vld [vmem:[%s1 + $0xc70] sm:$0xff]
  %v441 = vld [vmem:[%s1 + $0xc78] sm:$0xff]
  %v442 = vld [vmem:[%s1 + $0xc80] sm:$0xff]
  %v443 = vld [vmem:[%s1 + $0xc88] sm:$0xff]
  %v444 = vld [vmem:[%s1 + $0xc90] sm:$0xff]
  %v445 = vld [vmem:[%s1 + $0xc98] sm:$0xff]
  %v446 = vld [vmem:[%s1 + $0xca0] sm:$0xff]
  %v447 = vld [vmem:[%s1 + $0xca8] sm:$0xff]
  %v448 = vld [vmem:[%s1 + $0xcb0] sm:$0xff]
  %v449 = vld [vmem:[%s1 + $0xcb8] sm:$0xff]
  %v450 = vld [vmem:[%s1 + $0xcc0] sm:$0xff]
  %v451 = vld [vmem:[%s1 + $0xcc8] sm:$0xff]
  %v452 = vld [vmem:[%s1 + $0xcd0] sm:$0xff]
  %v453 = vld [vmem:[%s1 + $0xcd8] sm:$0xff]
  %v454 = vld [vmem:[%s1 + $0xce0] sm:$0xff]
  %v455 = vld [vmem:[%s1 + $0xce8] sm:$0xff]
  %v456 = vld [vmem:[%s1 + $0xcf0] sm:$0xff]
  %v457 = vld [vmem:[%s1 + $0xcf8] sm:$0xff]
  %v458 = vld [vmem:[%s1 + $0xd00] sm:$0xff]
  %v459 = vld [vmem:[%s1 + $0xd08] sm:$0xff]
  %v460 = vld [vmem:[%s1 + $0xd10] sm:$0xff]
  %v461 = vld [vmem:[%s1 + $0xd18] sm:$0xff]
  %v462 = vld [vmem:[%s1 + $0xd20] sm:$0xff]
  %v463 = vld [vmem:[%s1 + $0xd28] sm:$0xff]
  %v464 = vld [vmem:[%s1 + $0xd30] sm:$0xff]
  %v465 = vld [vmem:[%s1 + $0xd38] sm:$0xff]
  %v466 = vld [vmem:[%s1 + $0xd40] sm:$0xff]
  %v467 = vld [vmem:[%s1 + $0xd48] sm:$0xff]
  %v468 = vld [vmem:[%s1 + $0xd50] sm:$0xff]
  %v469 = vld [vmem:[%s1 + $0xd58] sm:$0xff]
  %v470 = vld [vmem:[%s1 + $0xd60] sm:$0xff]
  %v471 = vld [vmem:[%s1 + $0xd68] sm:$0xff]
  %v472 = vld [vmem:[%s1 + $0xd70] sm:$0xff]
  %v473 = vld [vmem:[%s1 + $0xd78] sm:$0xff]
  %v474 = vld [vmem:[%s1 + $0xd80] sm:$0xff]
  %v475 = vld [vmem:[%s1 + $0xd88] sm:$0xff]
  %v476 = vld [vmem:[%s1 + $0xd90] sm:$0xff]
  %v477 = vld [vmem:[%s1 + $0xd98] sm:$0xff]
  %v478 = vld [vmem:[%s1 + $0xda0] sm:$0xff]
  %v479 = vld [vmem:[%s1 + $0xda8] sm:$0xff]
  %v480 = vld [vmem:[%s1 + $0xdb0] sm:$0xff]
  %v481 = vld [vmem:[%s1 + $0xdb8] sm:$0xff]
  %v482 = vld [vmem:[%s1 + $0xdc0] sm:$0xff]
  %v483 = vld [vmem:[%s1 + $0xdc8] sm:$0xff]
  %v484 = vld [vmem:[%s1 + $0xdd0] sm:$0xff]
  %v485 = vld [vmem:[%s1 + $0xdd8] sm:$0xff]
  %v486 = vld [vmem:[%s1 + $0xde0] sm:$0xff]
  %v487 = vld [vmem:[%s1 + $0xde8] sm:$0xff]
  %v488 = vld [vmem:[%s1 + $0xdf0] sm:$0xff]
  %v489 = vld [vmem:[%s1 + $0xdf8] sm:$0xff]
  %v490 = vld [vmem:[%s1 + $0xe00] sm:$0xff]
  %v491 = vld [vmem:[%s1 + $0xe08] sm:$0xff]
  %v492 = vld [vmem:[%s1 + $0xe10] sm:$0xff]
  %v493 = vld [vmem:[%s1 + $0xe18] sm:$0xff]
  %v494 = vld [vmem:[%s1 + $0xe20] sm:$0xff]
  %v495 = vld [vmem:[%s1 + $0xe28] sm:$0xff]
  %v496 = vld [vmem:[%s1 + $0xe30] sm:$0xff]
  %v497 = vld [vmem:[%s1 + $0xe38] sm:$0xff]
  %v498 = vld [vmem:[%s1 + $0xe40] sm:$0xff]
  %v499 = vld [vmem:[%s1 + $0xe48] sm:$0xff]
  %v500 = vld [vmem:[%s1 + $0xe50] sm:$0xff]
  %v501 = vld [vmem:[%s1 + $0xe58] sm:$0xff]
  %v502 = vld [vmem:[%s1 + $0xe60] sm:$0xff]
  %v503 = vld [vmem:[%s1 + $0xe68] sm:$0xff]
  %v504 = vld [vmem:[%s1 + $0xe70] sm:$0xff]
  %v505 = vld [vmem:[%s1 + $0xe78] sm:$0xff]
  %v506 = vld [vmem:[%s1 + $0xe80] sm:$0xff]
  %v507 = vld [vmem:[%s1 + $0xe88] sm:$0xff]
  %v508 = vld [vmem:[%s1 + $0xe90] sm:$0xff]
  %v509 = vld [vmem:[%s1 + $0xe98] sm:$0xff]
  %v510 = vld [vmem:[%s1 + $0xea0] sm:$0xff]
  %v511 = vld [vmem:[%s1 + $0xea8] sm:$0xff]
  %v512 = vld [vmem:[%s1 + $0xeb0] sm:$0xff]
  %v513 = vld [vmem:[%s1 + $0xeb8] sm:$0xff]
  %v514 = vld [vmem:[%s1 + $0xec0] sm:$0xff]
  %v515 = vld [vmem:[%s1 + $0xec8] sm:$0xff]
  %v516 = vld [vmem:[%s1 + $0xed0] sm:$0xff]
  %v517 = vld [vmem:[%s1 + $0xed8] sm:$0xff]
  %v518 = vld [vmem:[%s1 + $0xee0] sm:$0xff]
  %v519 = vld [vmem:[%s1 + $0xee8] sm:$0xff]
  %v520 = vld [vmem:[%s1 + $0xef0] sm:$0xff]
  %v521 = vld [vmem:[%s1 + $0xef8] sm:$0xff]
  %v522 = vld [vmem:[%s1 + $0xf00] sm:$0xff]
  %v523 = vld [vmem:[%s1 + $0xf08] sm:$0xff]
  %v524 = vld [vmem:[%s1 + $0xf10] sm:$0xff]
  %v525 = vld [vmem:[%s1 + $0xf18] sm:$0xff]
  %v526 = vld [vmem:[%s1 + $0xf20] sm:$0xff]
  %v527 = vld [vmem:[%s1 + $0xf28] sm:$0xff]
  %v528 = vld [vmem:[%s1 + $0xf30] sm:$0xff]
  %v529 = vld [vmem:[%s1 + $0xf38] sm:$0xff]
  %v530 = vld [vmem:[%s1 + $0xf40] sm:$0xff]
  %v531 = vld [vmem:[%s1 + $0xf48] sm:$0xff]
  %v532 = vld [vmem:[%s1 + $0xf50] sm:$0xff]
  %v533 = vld [vmem:[%s1 + $0xf58] sm:$0xff]
  %v534 = vld [vmem:[%s1 + $0xf60] sm:$0xff]
  %v535 = vld [vmem:[%s1 + $0xf68] sm:$0xff]
  %v536 = vld [vmem:[%s1 + $0xf70] sm:$0xff]
  %v537 = vld [vmem:[%s1 + $0xf78] sm:$0xff]
  %v538 = vld [vmem:[%s1 + $0xf80] sm:$0xff]
  %v539 = vld [vmem:[%s1 + $0xf88] sm:$0xff]
  %v540 = vld [vmem:[%s1 + $0xf90] sm:$0xff]
  %v541 = vld [vmem:[%s1 + $0xf98] sm:$0xff]
  %v542 = vld [vmem:[%s1 + $0xfa0] sm:$0xff]
  %v543 = vld [vmem:[%s1 + $0xfa8] sm:$0xff]
  %v544 = vld [vmem:[%s1 + $0xfb0] sm:$0xff]
  %v545 = vld [vmem:[%s1 + $0xfb8] sm:$0xff]
  %v546 = vld [vmem:[%s1 + $0xfc0] sm:$0xff]
  %v547 = vld [vmem:[%s1 + $0xfc8] sm:$0xff]
  %v548 = vld [vmem:[%s1 + $0xfd0] sm:$0xff]
  %v549 = vld [vmem:[%s1 + $0xfd8] sm:$0xff]
  %v550 = vld [vmem:[%s1 + $0xfe0] sm:$0xff]
  %v551 = vld [vmem:[%s1 + $0xfe8] sm:$0xff]
  %v552 = vld [vmem:[%s1 + $0xff0] sm:$0xff]
  %v553 = vld [vmem:[%s1 + $0xff8] sm:$0xff]
  %v554 = vld [vmem:[%s1 + $0x1000] sm:$0xff]
  %v555 = vld [vmem:[%s1 + $0x1008] sm:$0xff]
  %v556 = vld [vmem:[%s1 + $0x1010] sm:$0xff]
  %v557 = vld [vmem:[%s1 + $0x1018] sm:$0xff]
  %v558 = vld [vmem:[%s1 + $0x1020] sm:$0xff]
  %v559 = vld [vmem:[%s1 + $0x1028] sm:$0xff]
  %v560 = vld [vmem:[%s1 + $0x1030] sm:$0xff]
  %v561 = vld [vmem:[%s1 + $0x1038] sm:$0xff]
  %v562 = vld [vmem:[%s1 + $0x1040] sm:$0xff]
  %v563 = vld [vmem:[%s1 + $0x1048] sm:$0xff]
  %v564 = vld [vmem:[%s1 + $0x1050] sm:$0xff]
  %v565 = vld [vmem:[%s1 + $0x1058] sm:$0xff]
  %v566 = vld [vmem:[%s1 + $0x1060] sm:$0xff]
  %v567 = vld [vmem:[%s1 + $0x1068] sm:$0xff]
  %v568 = vld [vmem:[%s1 + $0x1070] sm:$0xff]
  %v569 = vld [vmem:[%s1 + $0x1078] sm:$0xff]
  %v570 = vld [vmem:[%s1 + $0x1080] sm:$0xff]
  %v571 = vld [vmem:[%s1 + $0x1088] sm:$0xff]
  %v572 = vld [vmem:[%s1 + $0x1090] sm:$0xff]
  %v573 = vld [vmem:[%s1 + $0x1098] sm:$0xff]
  %v574 = vld [vmem:[%s1 + $0x10a0] sm:$0xff]
  %v575 = vld [vmem:[%s1 + $0x10a8] sm:$0xff]
  %v576 = vld [vmem:[%s1 + $0x10b0] sm:$0xff]
  %v577 = vld [vmem:[%s1 + $0x10b8] sm:$0xff]
  %v578 = vld [vmem:[%s1 + $0x10c0] sm:$0xff]
  %v579 = vld [vmem:[%s1 + $0x10c8] sm:$0xff]
  %v580 = vld [vmem:[%s1 + $0x10d0] sm:$0xff]
  %v581 = vld [vmem:[%s1 + $0x10d8] sm:$0xff]
  %v582 = vld [vmem:[%s1 + $0x10e0] sm:$0xff]
  %v583 = vld [vmem:[%s1 + $0x10e8] sm:$0xff]
  %v584 = vld [vmem:[%s1 + $0x10f0] sm:$0xff]
  %v585 = vld [vmem:[%s1 + $0x10f8] sm:$0xff]
  %v586 = vld [vmem:[%s1 + $0x1100] sm:$0xff]
  %v587 = vld [vmem:[%s1 + $0x1108] sm:$0xff]
  %v588 = vld [vmem:[%s1 + $0x1110] sm:$0xff]
  %v589 = vld [vmem:[%s1 + $0x1118] sm:$0xff]
  %v590 = vld [vmem:[%s1 + $0x1120] sm:$0xff]
  %v591 = vld [vmem:[%s1 + $0x1128] sm:$0xff]
  %v592 = vld [vmem:[%s1 + $0x1130] sm:$0xff]
  %v593 = vld [vmem:[%s1 + $0x1138] sm:$0xff]
  %v594 = vld [vmem:[%s1 + $0x1140] sm:$0xff]
  %v595 = vld [vmem:[%s1 + $0x1148] sm:$0xff]
  %v596 = vld [vmem:[%s1 + $0x1150] sm:$0xff]
  %v597 = vld [vmem:[%s1 + $0x1158] sm:$0xff]
  %v598 = vld [vmem:[%s1 + $0x1160] sm:$0xff]
  %v599 = vld [vmem:[%s1 + $0x1168] sm:$0xff]
  %v600 = vld [vmem:[%s1 + $0x1170] sm:$0xff]
  %v601 = vld [vmem:[%s1 + $0x1178] sm:$0xff]
  %v602 = vld [vmem:[%s1 + $0x1180] sm:$0xff]
  %v603 = vld [vmem:[%s1 + $0x1188] sm:$0xff]
  %v604 = vld [vmem:[%s1 + $0x1190] sm:$0xff]
  %v605 = vld [vmem:[%s1 + $0x1198] sm:$0xff]
  %v606 = vld [vmem:[%s1 + $0x11a0] sm:$0xff]
  %v607 = vld [vmem:[%s1 + $0x11a8] sm:$0xff]
  %v608 = vld [vmem:[%s1 + $0x11b0] sm:$0xff]
  %v609 = vld [vmem:[%s1 + $0x11b8] sm:$0xff]
  %v610 = vld [vmem:[%s1 + $0x11c0] sm:$0xff]
  %v611 = vld [vmem:[%s1 + $0x11c8] sm:$0xff]
  %v612 = vld [vmem:[%s1 + $0x11d0] sm:$0xff]
  %v613 = vld [vmem:[%s1 + $0x11d8] sm:$0xff]
  %v614 = vld [vmem:[%s1 + $0x11e0] sm:$0xff]
  %v615 = vld [vmem:[%s1 + $0x11e8] sm:$0xff]
  %v616 = vld [vmem:[%s1 + $0x11f0] sm:$0xff]
  %v617 = vld [vmem:[%s1 + $0x11f8] sm:$0xff]
  %v618 = vld [vmem:[%s1 + $0x1200] sm:$0xff]
  %v619 = vld [vmem:[%s1 + $0x1208] sm:$0xff]
  %v620 = vld [vmem:[%s1 + $0x1210] sm:$0xff]
  %v621 = vld [vmem:[%s1 + $0x1218] sm:$0xff]
  %v622 = vld [vmem:[%s1 + $0x1220] sm:$0xff]
  %v623 = vld [vmem:[%s1 + $0x1228] sm:$0xff]
  %v624 = vld [vmem:[%s1 + $0x1230] sm:$0xff]
  %v625 = vld [vmem:[%s1 + $0x1238] sm:$0xff]
  %v626 = vld [vmem:[%s1 + $0x1240] sm:$0xff]
  %v627 = vld [vmem:[%s1 + $0x1248] sm:$0xff]
  %v628 = vld [vmem:[%s1 + $0x1250] sm:$0xff]
  %v629 = vld [vmem:[%s1 + $0x1258] sm:$0xff]
  %v630 = vld [vmem:[%s1 + $0x1260] sm:$0xff]
  %v631 = vld [vmem:[%s1 + $0x1268] sm:$0xff]
  %v632 = vld [vmem:[%s1 + $0x1270] sm:$0xff]
  %v633 = vld [vmem:[%s1 + $0x1278] sm:$0xff]
  %v634 = vld [vmem:[%s1 + $0x1280] sm:$0xff]
  %v635 = vld [vmem:[%s1 + $0x1288] sm:$0xff]
  %v636 = vld [vmem:[%s1 + $0x1290] sm:$0xff]
  %v637 = vld [vmem:[%s1 + $0x1298] sm:$0xff]
  %v638 = vld [vmem:[%s1 + $0x12a0] sm:$0xff]
  %v639 = vld [vmem:[%s1 + $0x12a8] sm:$0xff]
  %v640 = vld [vmem:[%s1 + $0x12b0] sm:$0xff]
  %v641 = vld [vmem:[%s1 + $0x12b8] sm:$0xff]
  %v642 = vld [vmem:[%s1 + $0x12c0] sm:$0xff]
  %v643 = vld [vmem:[%s1 + $0x12c8] sm:$0xff]
  %v644 = vld [vmem:[%s1 + $0x12d0] sm:$0xff]
  %v645 = vld [vmem:[%s1 + $0x12d8] sm:$0xff]
  %v646 = vld [vmem:[%s1 + $0x12e0] sm:$0xff]
  %v647 = vld [vmem:[%s1 + $0x12e8] sm:$0xff]
  %v648 = vld [vmem:[%s1 + $0x12f0] sm:$0xff]
  %v649 = vld [vmem:[%s1 + $0x12f8] sm:$0xff]
  %v650 = vld [vmem:[%s1 + $0x1300] sm:$0xff]
  %v651 = vld [vmem:[%s1 + $0x1308] sm:$0xff]
  %v652 = vld [vmem:[%s1 + $0x1310] sm:$0xff]
  %v653 = vld [vmem:[%s1 + $0x1318] sm:$0xff]
  %v654 = vld [vmem:[%s1 + $0x1320] sm:$0xff]
  %v655 = vld [vmem:[%s1 + $0x1328] sm:$0xff]
  %v656 = vld [vmem:[%s1 + $0x1330] sm:$0xff]
  %v657 = vld [vmem:[%s1 + $0x1338] sm:$0xff]
  %v658 = vld [vmem:[%s1 + $0x1340] sm:$0xff]
  %v659 = vld [vmem:[%s1 + $0x1348] sm:$0xff]
  %v660 = vld [vmem:[%s1 + $0x1350] sm:$0xff]
  %v661 = vld [vmem:[%s1 + $0x1358] sm:$0xff]
  %v662 = vld [vmem:[%s1 + $0x1360] sm:$0xff]
  %v663 = vld [vmem:[%s1 + $0x1368] sm:$0xff]
  %v664 = vld [vmem:[%s1 + $0x1370] sm:$0xff]
  %v665 = vld [vmem:[%s1 + $0x1378] sm:$0xff]
  %v666 = vld [vmem:[%s1 + $0x1380] sm:$0xff]
  %v667 = vld [vmem:[%s1 + $0x1388] sm:$0xff]
  %v668 = vld [vmem:[%s1 + $0x1390] sm:$0xff]
  %v669 = vld [vmem:[%s1 + $0x1398] sm:$0xff]
  %v670 = vld [vmem:[%s1 + $0x13a0] sm:$0xff]
  %v671 = vld [vmem:[%s1 + $0x13a8] sm:$0xff]
  %v672 = vld [vmem:[%s1 + $0x13b0] sm:$0xff]
  %v673 = vld [vmem:[%s1 + $0x13b8] sm:$0xff]
  %v674 = vld [vmem:[%s1 + $0x13c0] sm:$0xff]
  %v675 = vld [vmem:[%s1 + $0x13c8] sm:$0xff]
  %v676 = vld [vmem:[%s1 + $0x13d0] sm:$0xff]
  %v677 = vld [vmem:[%s1 + $0x13d8] sm:$0xff]
  %v678 = vld [vmem:[%s1 + $0x13e0] sm:$0xff]
  %v679 = vld [vmem:[%s1 + $0x13e8] sm:$0xff]
  %v680 = vld [vmem:[%s1 + $0x13f0] sm:$0xff]
  %v681 = vld [vmem:[%s1 + $0x13f8] sm:$0xff]
  %v682 = vld [vmem:[%s1 + $0x1400] sm:$0xff]
  %v683 = vld [vmem:[%s1 + $0x1408] sm:$0xff]
  %v684 = vld [vmem:[%s1 + $0x1410] sm:$0xff]
  %v685 = vld [vmem:[%s1 + $0x1418] sm:$0xff]
  %v686 = vld [vmem:[%s1 + $0x1420] sm:$0xff]
  %v687 = vld [vmem:[%s1 + $0x1428] sm:$0xff]
  %v688 = vld [vmem:[%s1 + $0x1430] sm:$0xff]
  %v689 = vld [vmem:[%s1 + $0x1438] sm:$0xff]
  %v690 = vld [vmem:[%s1 + $0x1440] sm:$0xff]
  %v691 = vld [vmem:[%s1 + $0x1448] sm:$0xff]
  %v692 = vld [vmem:[%s1 + $0x1450] sm:$0xff]
  %v693 = vld [vmem:[%s1 + $0x1458] sm:$0xff]
  %v694 = vld [vmem:[%s1 + $0x1460] sm:$0xff]
  %v695 = vld [vmem:[%s1 + $0x1468] sm:$0xff]
  %v696 = vld [vmem:[%s1 + $0x1470] sm:$0xff]
  %v697 = vld [vmem:[%s1 + $0x1478] sm:$0xff]
  %v698 = vld [vmem:[%s1 + $0x1480] sm:$0xff]
  %v699 = vld [vmem:[%s1 + $0x1488] sm:$0xff]
  %v700 = vld [vmem:[%s1 + $0x1490] sm:$0xff]
  %v701 = vld [vmem:[%s1 + $0x1498] sm:$0xff]
  %v702 = vld [vmem:[%s1 + $0x14a0] sm:$0xff]
  %v703 = vld [vmem:[%s1 + $0x14a8] sm:$0xff]
  %v704 = vld [vmem:[%s1 + $0x14b0] sm:$0xff]
  %v705 = vld [vmem:[%s1 + $0x14b8] sm:$0xff]
  %v706 = vld [vmem:[%s1 + $0x14c0] sm:$0xff]
  %v707 = vld [vmem:[%s1 + $0x14c8] sm:$0xff]
  %v708 = vld [vmem:[%s1 + $0x14d0] sm:$0xff]
  %v709 = vld [vmem:[%s1 + $0x14d8] sm:$0xff]
  %v710 = vld [vmem:[%s1 + $0x14e0] sm:$0xff]
  %v711 = vld [vmem:[%s1 + $0x14e8] sm:$0xff]
  %v712 = vld [vmem:[%s1 + $0x14f0] sm:$0xff]
  %v713 = vld [vmem:[%s1 + $0x14f8] sm:$0xff]
  %v714 = vld [vmem:[%s1 + $0x1500] sm:$0xff]
  %v715 = vld [vmem:[%s1 + $0x1508] sm:$0xff]
  %v716 = vld [vmem:[%s1 + $0x1510] sm:$0xff]
  %v717 = vld [vmem:[%s1 + $0x1518] sm:$0xff]
  %v718 = vld [vmem:[%s1 + $0x1520] sm:$0xff]
  %v719 = vld [vmem:[%s1 + $0x1528] sm:$0xff]
  %v720 = vld [vmem:[%s1 + $0x1530] sm:$0xff]
  %v721 = vld [vmem:[%s1 + $0x1538] sm:$0xff]
  %v722 = vld [vmem:[%s1 + $0x1540] sm:$0xff]
  %v723 = vld [vmem:[%s1 + $0x1548] sm:$0xff]
  %v724 = vld [vmem:[%s1 + $0x1550] sm:$0xff]
  %v725 = vld [vmem:[%s1 + $0x1558] sm:$0xff]
  %v726 = vld [vmem:[%s1 + $0x1560] sm:$0xff]
  %v727 = vld [vmem:[%s1 + $0x1568] sm:$0xff]
  %v728 = vld [vmem:[%s1 + $0x1570] sm:$0xff]
  %v729 = vld [vmem:[%s1 + $0x1578] sm:$0xff]
  %v730 = vld [vmem:[%s1 + $0x1580] sm:$0xff]
  %v731 = vld [vmem:[%s1 + $0x1588] sm:$0xff]
  %v732 = vld [vmem:[%s1 + $0x1590] sm:$0xff]
  %v733 = vld [vmem:[%s1 + $0x1598] sm:$0xff]
  %v734 = vld [vmem:[%s1 + $0x15a0] sm:$0xff]
  %v735 = vld [vmem:[%s1 + $0x15a8] sm:$0xff]
  %v736 = vld [vmem:[%s1 + $0x15b0] sm:$0xff]
  %v737 = vld [vmem:[%s1 + $0x15b8] sm:$0xff]
  %v738 = vld [vmem:[%s1 + $0x15c0] sm:$0xff]
  %v739 = vld [vmem:[%s1 + $0x15c8] sm:$0xff]
  %v740 = vld [vmem:[%s1 + $0x15d0] sm:$0xff]
  %v741 = vld [vmem:[%s1 + $0x15d8] sm:$0xff]
  %v742 = vld [vmem:[%s1 + $0x15e0] sm:$0xff]
  %v743 = vld [vmem:[%s1 + $0x15e8] sm:$0xff]
  %v744 = vld [vmem:[%s1 + $0x15f0] sm:$0xff]
  %v745 = vld [vmem:[%s1 + $0x15f8] sm:$0xff]
  %v746 = vld [vmem:[%s1 + $0x1600] sm:$0xff]
  %v747 = vld [vmem:[%s1 + $0x1608] sm:$0xff]
  %v748 = vld [vmem:[%s1 + $0x1610] sm:$0xff]
  %v749 = vld [vmem:[%s1 + $0x1618] sm:$0xff]
  %v750 = vld [vmem:[%s1 + $0x1620] sm:$0xff]
  %v751 = vld [vmem:[%s1 + $0x1628] sm:$0xff]
  %v752 = vld [vmem:[%s1 + $0x1630] sm:$0xff]
  %v753 = vld [vmem:[%s1 + $0x1638] sm:$0xff]
  %v754 = vld [vmem:[%s1 + $0x1640] sm:$0xff]
  %v755 = vld [vmem:[%s1 + $0x1648] sm:$0xff]
  %v756 = vld [vmem:[%s1 + $0x1650] sm:$0xff]
  %v757 = vld [vmem:[%s1 + $0x1658] sm:$0xff]
  %v758 = vld [vmem:[%s1 + $0x1660] sm:$0xff]
  %v759 = vld [vmem:[%s1 + $0x1668] sm:$0xff]
  %v760 = vld [vmem:[%s1 + $0x1670] sm:$0xff]
  %v761 = vld [vmem:[%s1 + $0x1678] sm:$0xff]
  %v762 = vld [vmem:[%s1 + $0x1680] sm:$0xff]
  %v763 = vld [vmem:[%s1 + $0x1688] sm:$0xff]
  %v764 = vld [vmem:[%s1 + $0x1690] sm:$0xff]
  %v765 = vld [vmem:[%s1 + $0x1698] sm:$0xff]
  %v766 = vld [vmem:[%s1 + $0x16a0] sm:$0xff]
  %v767 = vld [vmem:[%s1 + $0x16a8] sm:$0xff]
  %v768 = vld [vmem:[%s1 + $0x16b0] sm:$0xff]
  %v769 = vld [vmem:[%s1 + $0x16b8] sm:$0xff]
  %v770 = vld [vmem:[%s1 + $0x16c0] sm:$0xff]
  %v771 = vld [vmem:[%s1 + $0x16c8] sm:$0xff]
  %v772 = vld [vmem:[%s1 + $0x16d0] sm:$0xff]
  %v773 = vld [vmem:[%s1 + $0x16d8] sm:$0xff]
  %v774 = vld [vmem:[%s1 + $0x16e0] sm:$0xff]
  %v775 = vld [vmem:[%s1 + $0x16e8] sm:$0xff]
  %v776 = vld [vmem:[%s1 + $0x16f0] sm:$0xff]
  %v777 = vld [vmem:[%s1 + $0x16f8] sm:$0xff]
  %v778 = vld [vmem:[%s1 + $0x1700] sm:$0xff]
  %v779 = vld [vmem:[%s1 + $0x1708] sm:$0xff]
  %v780 = vld [vmem:[%s1 + $0x1710] sm:$0xff]
  %v781 = vld [vmem:[%s1 + $0x1718] sm:$0xff]
  %v782 = vld [vmem:[%s1 + $0x1720] sm:$0xff]
  %v783 = vld [vmem:[%s1 + $0x1728] sm:$0xff]
  %v784 = vld [vmem:[%s1 + $0x1730] sm:$0xff]
  %v785 = vld [vmem:[%s1 + $0x1738] sm:$0xff]
  %v786 = vld [vmem:[%s1 + $0x1740] sm:$0xff]
  %v787 = vld [vmem:[%s1 + $0x1748] sm:$0xff]
  %v788 = vld [vmem:[%s1 + $0x1750] sm:$0xff]
  %v789 = vld [vmem:[%s1 + $0x1758] sm:$0xff]
  %v790 = vld [vmem:[%s1 + $0x1760] sm:$0xff]
  %v791 = vld [vmem:[%s1 + $0x1768] sm:$0xff]
  %v792 = vld [vmem:[%s1 + $0x1770] sm:$0xff]
  %v793 = vld [vmem:[%s1 + $0x1778] sm:$0xff]
  %v794 = vld [vmem:[%s1 + $0x1780] sm:$0xff]
  %v795 = vld [vmem:[%s1 + $0x1788] sm:$0xff]
  %v796 = vld [vmem:[%s1 + $0x1790] sm:$0xff]
  %v797 = vld [vmem:[%s1 + $0x1798] sm:$0xff]
  %v798 = vld [vmem:[%s1 + $0x17a0] sm:$0xff]
  %v799 = vld [vmem:[%s1 + $0x17a8] sm:$0xff]
  %v800 = vld [vmem:[%s1 + $0x17b0] sm:$0xff]
  %v801 = vld [vmem:[%s1 + $0x17b8] sm:$0xff]
  %v802 = vld [vmem:[%s1 + $0x17c0] sm:$0xff]
  %v803 = vld [vmem:[%s1 + $0x17c8] sm:$0xff]
  %v804 = vld [vmem:[%s1 + $0x17d0] sm:$0xff]
  %v805 = vld [vmem:[%s1 + $0x17d8] sm:$0xff]
  %v806 = vld [vmem:[%s1 + $0x17e0] sm:$0xff]
  %v807 = vld [vmem:[%s1 + $0x17e8] sm:$0xff]
  %v808 = vld [vmem:[%s1 + $0x17f0] sm:$0xff]
  %v809 = vld [vmem:[%s1 + $0x17f8] sm:$0xff]
  %v810 = vld [vmem:[%s1 + $0x1800] sm:$0xff]
  %v811 = vld [vmem:[%s1 + $0x1808] sm:$0xff]
  %v812 = vld [vmem:[%s1 + $0x1810] sm:$0xff]
  %v813 = vld [vmem:[%s1 + $0x1818] sm:$0xff]
  %v814 = vld [vmem:[%s1 + $0x1820] sm:$0xff]
  %v815 = vld [vmem:[%s1 + $0x1828] sm:$0xff]
  %v816 = vld [vmem:[%s1 + $0x1830] sm:$0xff]
  %v817 = vld [vmem:[%s1 + $0x1838] sm:$0xff]
  %v818 = vld [vmem:[%s1 + $0x1840] sm:$0xff]
  %v819 = vld [vmem:[%s1 + $0x1848] sm:$0xff]
  %v820 = vld [vmem:[%s1 + $0x1850] sm:$0xff]
  %v821 = vld [vmem:[%s1 + $0x1858] sm:$0xff]
  %v822 = vld [vmem:[%s1 + $0x1860] sm:$0xff]
  %v823 = vld [vmem:[%s1 + $0x1868] sm:$0xff]
  %v824 = vld [vmem:[%s1 + $0x1870] sm:$0xff]
  %v825 = vld [vmem:[%s1 + $0x1878] sm:$0xff]
  %v826 = vld [vmem:[%s1 + $0x1880] sm:$0xff]
  %v827 = vld [vmem:[%s1 + $0x1888] sm:$0xff]
  %v828 = vld [vmem:[%s1 + $0x1890] sm:$0xff]
  %v829 = vld [vmem:[%s1 + $0x1898] sm:$0xff]
  %v830 = vld [vmem:[%s1 + $0x18a0] sm:$0xff]
  %v831 = vld [vmem:[%s1 + $0x18a8] sm:$0xff]
  %v832 = vld [vmem:[%s1 + $0x18b0] sm:$0xff]
  %v833 = vld [vmem:[%s1 + $0x18b8] sm:$0xff]
  %v834 = vld [vmem:[%s1 + $0x18c0] sm:$0xff]
  %v835 = vld [vmem:[%s1 + $0x18c8] sm:$0xff]
  %v836 = vld [vmem:[%s1 + $0x18d0] sm:$0xff]
  %v837 = vld [vmem:[%s1 + $0x18d8] sm:$0xff]
  %v838 = vld [vmem:[%s1 + $0x18e0] sm:$0xff]
  %v839 = vld [vmem:[%s1 + $0x18e8] sm:$0xff]
  %v840 = vld [vmem:[%s1 + $0x18f0] sm:$0xff]
  %v841 = vld [vmem:[%s1 + $0x18f8] sm:$0xff]
  %v842 = vld [vmem:[%s1 + $0x1900] sm:$0xff]
  %v843 = vld [vmem:[%s1 + $0x1908] sm:$0xff]
  %v844 = vld [vmem:[%s1 + $0x1910] sm:$0xff]
  %v845 = vld [vmem:[%s1 + $0x1918] sm:$0xff]
  %v846 = vld [vmem:[%s1 + $0x1920] sm:$0xff]
  %v847 = vld [vmem:[%s1 + $0x1928] sm:$0xff]
  %v848 = vld [vmem:[%s1 + $0x1930] sm:$0xff]
  %v849 = vld [vmem:[%s1 + $0x1938] sm:$0xff]
  %v850 = vld [vmem:[%s1 + $0x1940] sm:$0xff]
  %v851 = vld [vmem:[%s1 + $0x1948] sm:$0xff]
  %v852 = vld [vmem:[%s1 + $0x1950] sm:$0xff]
  %v853 = vld [vmem:[%s1 + $0x1958] sm:$0xff]
  %v854 = vld [vmem:[%s1 + $0x1960] sm:$0xff]
  %v855 = vld [vmem:[%s1 + $0x1968] sm:$0xff]
  %v856 = vld [vmem:[%s1 + $0x1970] sm:$0xff]
  %v857 = vld [vmem:[%s1 + $0x1978] sm:$0xff]
  %v858 = vld [vmem:[%s1 + $0x1980] sm:$0xff]
  %v859 = vld [vmem:[%s1 + $0x1988] sm:$0xff]
  %v860 = vld [vmem:[%s1 + $0x1990] sm:$0xff]
  %v861 = vld [vmem:[%s1 + $0x1998] sm:$0xff]
  %v862 = vld [vmem:[%s1 + $0x19a0] sm:$0xff]
  %v863 = vld [vmem:[%s1 + $0x19a8] sm:$0xff]
  %v864 = vld [vmem:[%s1 + $0x19b0] sm:$0xff]
  %v865 = vld [vmem:[%s1 + $0x19b8] sm:$0xff]
  %v866 = vld [vmem:[%s1 + $0x19c0] sm:$0xff]
  %v867 = vld [vmem:[%s1 + $0x19c8] sm:$0xff]
  %v868 = vld [vmem:[%s1 + $0x19d0] sm:$0xff]
  %v869 = vld [vmem:[%s1 + $0x19d8] sm:$0xff]
  %v870 = vld [vmem:[%s1 + $0x19e0] sm:$0xff]
  %v871 = vld [vmem:[%s1 + $0x19e8] sm:$0xff]
  %v872 = vld [vmem:[%s1 + $0x19f0] sm:$0xff]
  %v873 = vld [vmem:[%s1 + $0x19f8] sm:$0xff]
  %v874 = vld [vmem:[%s1 + $0x1a00] sm:$0xff]
  %v875 = vld [vmem:[%s1 + $0x1a08] sm:$0xff]
  %v876 = vld [vmem:[%s1 + $0x1a10] sm:$0xff]
  %v877 = vld [vmem:[%s1 + $0x1a18] sm:$0xff]
  %v878 = vld [vmem:[%s1 + $0x1a20] sm:$0xff]
  %v879 = vld [vmem:[%s1 + $0x1a28] sm:$0xff]
  %v880 = vld [vmem:[%s1 + $0x1a30] sm:$0xff]
  %v881 = vld [vmem:[%s1 + $0x1a38] sm:$0xff]
  %v882 = vld [vmem:[%s1 + $0x1a40] sm:$0xff]
  %v883 = vld [vmem:[%s1 + $0x1a48] sm:$0xff]
  %v884 = vld [vmem:[%s1 + $0x1a50] sm:$0xff]
  %v885 = vld [vmem:[%s1 + $0x1a58] sm:$0xff]
  %v886 = vld [vmem:[%s1 + $0x1a60] sm:$0xff]
  %v887 = vld [vmem:[%s1 + $0x1a68] sm:$0xff]
  %v888 = vld [vmem:[%s1 + $0x1a70] sm:$0xff]
  %v889 = vld [vmem:[%s1 + $0x1a78] sm:$0xff]
  %v890 = vld [vmem:[%s1 + $0x1a80] sm:$0xff]
  %v891 = vld [vmem:[%s1 + $0x1a88] sm:$0xff]
  %v892 = vld [vmem:[%s1 + $0x1a90] sm:$0xff]
  %v893 = vld [vmem:[%s1 + $0x1a98] sm:$0xff]
  %v894 = vld [vmem:[%s1 + $0x1aa0] sm:$0xff]
  %v895 = vld [vmem:[%s1 + $0x1aa8] sm:$0xff]
  %v896 = vld [vmem:[%s1 + $0x1ab0] sm:$0xff]
  %v897 = vld [vmem:[%s1 + $0x1ab8] sm:$0xff]
  %v898 = vld [vmem:[%s1 + $0x1ac0] sm:$0xff]
  %v899 = vld [vmem:[%s1 + $0x1ac8] sm:$0xff]
  %v900 = vld [vmem:[%s1 + $0x1ad0] sm:$0xff]
  %v901 = vld [vmem:[%s1 + $0x1ad8] sm:$0xff]
  %v902 = vld [vmem:[%s1 + $0x1ae0] sm:$0xff]
  %v903 = vld [vmem:[%s1 + $0x1ae8] sm:$0xff]
  %v904 = vld [vmem:[%s1 + $0x1af0] sm:$0xff]
  %v905 = vld [vmem:[%s1 + $0x1af8] sm:$0xff]
  %v906 = vld [vmem:[%s1 + $0x1b00] sm:$0xff]
  %v907 = vld [vmem:[%s1 + $0x1b08] sm:$0xff]
  %v908 = vld [vmem:[%s1 + $0x1b10] sm:$0xff]
  %v909 = vld [vmem:[%s1 + $0x1b18] sm:$0xff]
  %v910 = vld [vmem:[%s1 + $0x1b20] sm:$0xff]
  %v911 = vld [vmem:[%s1 + $0x1b28] sm:$0xff]
  %v912 = vld [vmem:[%s1 + $0x1b30] sm:$0xff]
  %v913 = vld [vmem:[%s1 + $0x1b38] sm:$0xff]
  %v914 = vld [vmem:[%s1 + $0x1b40] sm:$0xff]
  %v915 = vld [vmem:[%s1 + $0x1b48] sm:$0xff]
  %v916 = vld [vmem:[%s1 + $0x1b50] sm:$0xff]
  %v917 = vld [vmem:[%s1 + $0x1b58] sm:$0xff]
  %v918 = vld [vmem:[%s1 + $0x1b60] sm:$0xff]
  %v919 = vld [vmem:[%s1 + $0x1b68] sm:$0xff]
  %v920 = vld [vmem:[%s1 + $0x1b70] sm:$0xff]
  %v921 = vld [vmem:[%s1 + $0x1b78] sm:$0xff]
  %v922 = vld [vmem:[%s1 + $0x1b80] sm:$0xff]
  %v923 = vld [vmem:[%s1 + $0x1b88] sm:$0xff]
  %v924 = vld [vmem:[%s1 + $0x1b90] sm:$0xff]
  %v925 = vld [vmem:[%s1 + $0x1b98] sm:$0xff]
  %v926 = vld [vmem:[%s1 + $0x1ba0] sm:$0xff]
  %v927 = vld [vmem:[%s1 + $0x1ba8] sm:$0xff]
  %v928 = vld [vmem:[%s1 + $0x1bb0] sm:$0xff]
  %v929 = vld [vmem:[%s1 + $0x1bb8] sm:$0xff]
  %v930 = vld [vmem:[%s1 + $0x1bc0] sm:$0xff]
  %v931 = vld [vmem:[%s1 + $0x1bc8] sm:$0xff]
  %v932 = vld [vmem:[%s1 + $0x1bd0] sm:$0xff]
  %v933 = vld [vmem:[%s1 + $0x1bd8] sm:$0xff]
  %v934 = vld [vmem:[%s1 + $0x1be0] sm:$0xff]
  %v935 = vld [vmem:[%s1 + $0x1be8] sm:$0xff]
  %v936 = vld [vmem:[%s1 + $0x1bf0] sm:$0xff]
  %v937 = vld [vmem:[%s1 + $0x1bf8] sm:$0xff]
  %v938 = vld [vmem:[%s1 + $0x1c00] sm:$0xff]
  %v939 = vld [vmem:[%s1 + $0x1c08] sm:$0xff]
  %v940 = vld [vmem:[%s1 + $0x1c10] sm:$0xff]
  %v941 = vld [vmem:[%s1 + $0x1c18] sm:$0xff]
  %v942 = vld [vmem:[%s1 + $0x1c20] sm:$0xff]
  %v943 = vld [vmem:[%s1 + $0x1c28] sm:$0xff]
  %v944 = vld [vmem:[%s1 + $0x1c30] sm:$0xff]
  %v945 = vld [vmem:[%s1 + $0x1c38] sm:$0xff]
  %v946 = vld [vmem:[%s1 + $0x1c40] sm:$0xff]
  %v947 = vld [vmem:[%s1 + $0x1c48] sm:$0xff]
  %v948 = vld [vmem:[%s1 + $0x1c50] sm:$0xff]
  %v949 = vld [vmem:[%s1 + $0x1c58] sm:$0xff]
  %v950 = vld [vmem:[%s1 + $0x1c60] sm:$0xff]
  %v951 = vld [vmem:[%s1 + $0x1c68] sm:$0xff]
  %v952 = vld [vmem:[%s1 + $0x1c70] sm:$0xff]
  %v953 = vld [vmem:[%s1 + $0x1c78] sm:$0xff]
  %v954 = vld [vmem:[%s1 + $0x1c80] sm:$0xff]
  %v955 = vld [vmem:[%s1 + $0x1c88] sm:$0xff]
  %v956 = vld [vmem:[%s1 + $0x1c90] sm:$0xff]
  %v957 = vld [vmem:[%s1 + $0x1c98] sm:$0xff]
  %v958 = vld [vmem:[%s1 + $0x1ca0] sm:$0xff]
  %v959 = vld [vmem:[%s1 + $0x1ca8] sm:$0xff]
  %v960 = vld [vmem:[%s1 + $0x1cb0] sm:$0xff]
  %v961 = vld [vmem:[%s1 + $0x1cb8] sm:$0xff]
  %v962 = vld [vmem:[%s1 + $0x1cc0] sm:$0xff]
  %v963 = vld [vmem:[%s1 + $0x1cc8] sm:$0xff]
  %v964 = vld [vmem:[%s1 + $0x1cd0] sm:$0xff]
  %v965 = vld [vmem:[%s1 + $0x1cd8] sm:$0xff]
  %v966 = vld [vmem:[%s1 + $0x1ce0] sm:$0xff]
  %v967 = vld [vmem:[%s1 + $0x1ce8] sm:$0xff]
  %v968 = vld [vmem:[%s1 + $0x1cf0] sm:$0xff]
  %v969 = vld [vmem:[%s1 + $0x1cf8] sm:$0xff]
  %v970 = vld [vmem:[%s1 + $0x1d00] sm:$0xff]
  %v971 = vld [vmem:[%s1 + $0x1d08] sm:$0xff]
  %v972 = vld [vmem:[%s1 + $0x1d10] sm:$0xff]
  %v973 = vld [vmem:[%s1 + $0x1d18] sm:$0xff]
  %v974 = vld [vmem:[%s1 + $0x1d20] sm:$0xff]
  %v975 = vld [vmem:[%s1 + $0x1d28] sm:$0xff]
  %v976 = vld [vmem:[%s1 + $0x1d30] sm:$0xff]
  %v977 = vld [vmem:[%s1 + $0x1d38] sm:$0xff]
  %v978 = vld [vmem:[%s1 + $0x1d40] sm:$0xff]
  %v979 = vld [vmem:[%s1 + $0x1d48] sm:$0xff]
  %v980 = vld [vmem:[%s1 + $0x1d50] sm:$0xff]
  %v981 = vld [vmem:[%s1 + $0x1d58] sm:$0xff]
  %v982 = vld [vmem:[%s1 + $0x1d60] sm:$0xff]
  %v983 = vld [vmem:[%s1 + $0x1d68] sm:$0xff]
  %v984 = vld [vmem:[%s1 + $0x1d70] sm:$0xff]
  %v985 = vld [vmem:[%s1 + $0x1d78] sm:$0xff]
  %v986 = vld [vmem:[%s1 + $0x1d80] sm:$0xff]
  %v987 = vld [vmem:[%s1 + $0x1d88] sm:$0xff]
  %v988 = vld [vmem:[%s1 + $0x1d90] sm:$0xff]
  %v989 = vld [vmem:[%s1 + $0x1d98] sm:$0xff]
  %v990 = vld [vmem:[%s1 + $0x1da0] sm:$0xff]
  %v991 = vld [vmem:[%s1 + $0x1da8] sm:$0xff]
  %v992 = vld [vmem:[%s1 + $0x1db0] sm:$0xff]
  %v993 = vld [vmem:[%s1 + $0x1db8] sm:$0xff]
  %v994 = vld [vmem:[%s1 + $0x1dc0] sm:$0xff]
  %v995 = vld [vmem:[%s1 + $0x1dc8] sm:$0xff]
  %v996 = vld [vmem:[%s1 + $0x1dd0] sm:$0xff]
  %v997 = vld [vmem:[%s1 + $0x1dd8] sm:$0xff]
  %v998 = vld [vmem:[%s1 + $0x1de0] sm:$0xff]
  %v999 = vld [vmem:[%s1 + $0x1de8] sm:$0xff]
  %v1000 = vld [vmem:[%s1 + $0x1df0] sm:$0xff]
  %v1001 = vld [vmem:[%s1 + $0x1df8] sm:$0xff]
  %v1002 = vld [vmem:[%s1 + $0x1e00] sm:$0xff]
  %v1003 = vld [vmem:[%s1 + $0x1e08] sm:$0xff]
  %v1004 = vld [vmem:[%s1 + $0x1e10] sm:$0xff]
  %v1005 = vld [vmem:[%s1 + $0x1e18] sm:$0xff]
  %v1006 = vld [vmem:[%s1 + $0x1e20] sm:$0xff]
  %v1007 = vld [vmem:[%s1 + $0x1e28] sm:$0xff]
  %v1008 = vld [vmem:[%s1 + $0x1e30] sm:$0xff]
  %v1009 = vld [vmem:[%s1 + $0x1e38] sm:$0xff]
  %v1010 = vld [vmem:[%s1 + $0x1e40] sm:$0xff]
  %v1011 = vld [vmem:[%s1 + $0x1e48] sm:$0xff]
  %v1012 = vld [vmem:[%s1 + $0x1e50] sm:$0xff]
  %v1013 = vld [vmem:[%s1 + $0x1e58] sm:$0xff]
  %v1014 = vld [vmem:[%s1 + $0x1e60] sm:$0xff]
  %v1015 = vld [vmem:[%s1 + $0x1e68] sm:$0xff]
  %v1016 = vld [vmem:[%s1 + $0x1e70] sm:$0xff]
  %v1017 = vld [vmem:[%s1 + $0x1e78] sm:$0xff]
  %v1018 = vld [vmem:[%s1 + $0x1e80] sm:$0xff]
  %v1019 = vld [vmem:[%s1 + $0x1e88] sm:$0xff]
  %v1020 = vld [vmem:[%s1 + $0x1e90] sm:$0xff]
  %v1021 = vld [vmem:[%s1 + $0x1e98] sm:$0xff]
  %v1022 = vld [vmem:[%s1 + $0x1ea0] sm:$0xff]
  %v1023 = vld [vmem:[%s1 + $0x1ea8] sm:$0xff]
  %v1024 = vld [vmem:[%s1 + $0x1eb0] sm:$0xff]
  %v1025 = vld [vmem:[%s1 + $0x1eb8] sm:$0xff]
  %v1026 = vld [vmem:[%s1 + $0x1ec0] sm:$0xff]
  %v1027 = vld [vmem:[%s1 + $0x1ec8] sm:$0xff]
  %v1028 = vld [vmem:[%s1 + $0x1ed0] sm:$0xff]
  %v1029 = vld [vmem:[%s1 + $0x1ed8] sm:$0xff]
  %v1030 = vld [vmem:[%s1 + $0x1ee0] sm:$0xff]
  %v1031 = vld [vmem:[%s1 + $0x1ee8] sm:$0xff]
  %v1032 = vld [vmem:[%s1 + $0x1ef0] sm:$0xff]
  %v1033 = vld [vmem:[%s1 + $0x1ef8] sm:$0xff]
  %v1034 = vld [vmem:[%s1 + $0x1f00] sm:$0xff]
  %v1035 = vld [vmem:[%s1 + $0x1f08] sm:$0xff]
  %v1036 = vld [vmem:[%s1 + $0x1f10] sm:$0xff]
  %v1037 = vld [vmem:[%s1 + $0x1f18] sm:$0xff]
  %v1038 = vld [vmem:[%s1 + $0x1f20] sm:$0xff]
  %v1039 = vld [vmem:[%s1 + $0x1f28] sm:$0xff]
  %v1040 = vld [vmem:[%s1 + $0x1f30] sm:$0xff]
  %v1041 = vld [vmem:[%s1 + $0x1f38] sm:$0xff]
  %v1042 = vld [vmem:[%s1 + $0x1f40] sm:$0xff]
  %v1043 = vld [vmem:[%s1 + $0x1f48] sm:$0xff]
  %v1044 = vld [vmem:[%s1 + $0x1f50] sm:$0xff]
  %v1045 = vld [vmem:[%s1 + $0x1f58] sm:$0xff]
  %v1046 = vld [vmem:[%s1 + $0x1f60] sm:$0xff]
  %v1047 = vld [vmem:[%s1 + $0x1f68] sm:$0xff]
  %v1048 = vld [vmem:[%s1 + $0x1f70] sm:$0xff]
  %v1049 = vld [vmem:[%s1 + $0x1f78] sm:$0xff]
  %v1050 = vld [vmem:[%s1 + $0x1f80] sm:$0xff]
  %v1051 = vld [vmem:[%s1 + $0x1f88] sm:$0xff]
  %v1052 = vld [vmem:[%s1 + $0x1f90] sm:$0xff]
  %v1053 = vld [vmem:[%s1 + $0x1f98] sm:$0xff]
  %v1054 = vld [vmem:[%s1 + $0x1fa0] sm:$0xff]
  %v1055 = vld [vmem:[%s1 + $0x1fa8] sm:$0xff]
  %v1056 = vld [vmem:[%s1 + $0x1fb0] sm:$0xff]
  %v1057 = vld [vmem:[%s1 + $0x1fb8] sm:$0xff]
  %v1058 = vld [vmem:[%s1 + $0x1fc0] sm:$0xff]
  %v1059 = vld [vmem:[%s1 + $0x1fc8] sm:$0xff]
  %v1060 = vld [vmem:[%s1 + $0x1fd0] sm:$0xff]
  %v1061 = vld [vmem:[%s1 + $0x1fd8] sm:$0xff]
  %v1062 = vld [vmem:[%s1 + $0x1fe0] sm:$0xff]
  %v1063 = vld [vmem:[%s1 + $0x1fe8] sm:$0xff]
  %v1064 = vld [vmem:[%s1 + $0x1ff0] sm:$0xff]
  %v1065 = vld [vmem:[%s1 + $0x1ff8] sm:$0xff]
  %v1066 = vld [vmem:[%s1 + $0x2000] sm:$0xff]
  %v1067 = vld [vmem:[%s1 + $0x2008] sm:$0xff]
  %v1068 = vld [vmem:[%s1 + $0x2010] sm:$0xff]
  %v1069 = vld [vmem:[%s1 + $0x2018] sm:$0xff]
  %v1070 = vld [vmem:[%s1 + $0x2020] sm:$0xff]
  %v1071 = vld [vmem:[%s1 + $0x2028] sm:$0xff]
  %v1072 = vld [vmem:[%s1 + $0x2030] sm:$0xff]
  %v1073 = vld [vmem:[%s1 + $0x2038] sm:$0xff]
  %v1074 = vld [vmem:[%s1 + $0x2040] sm:$0xff]
  %v1075 = vld [vmem:[%s1 + $0x2048] sm:$0xff]
  %v1076 = vld [vmem:[%s1 + $0x2050] sm:$0xff]
  %v1077 = vld [vmem:[%s1 + $0x2058] sm:$0xff]
  %v1078 = vld [vmem:[%s1 + $0x2060] sm:$0xff]
  %v1079 = vld [vmem:[%s1 + $0x2068] sm:$0xff]
  %v1080 = vld [vmem:[%s1 + $0x2070] sm:$0xff]
  %v1081 = vld [vmem:[%s1 + $0x2078] sm:$0xff]
  %v1082 = vld [vmem:[%s1 + $0x2080] sm:$0xff]
  %v1083 = vld [vmem:[%s1 + $0x2088] sm:$0xff]
  %v1084 = vld [vmem:[%s1 + $0x2090] sm:$0xff]
  %v1085 = vld [vmem:[%s1 + $0x2098] sm:$0xff]
  %v1086 = vld [vmem:[%s1 + $0x20a0] sm:$0xff]
  %v1087 = vld [vmem:[%s1 + $0x20a8] sm:$0xff]
  %v1088 = vld [vmem:[%s1 + $0x20b0] sm:$0xff]
  %v1089 = vld [vmem:[%s1 + $0x20b8] sm:$0xff]
  %v1090 = vld [vmem:[%s1 + $0x20c0] sm:$0xff]
  %v1091 = vld [vmem:[%s1 + $0x20c8] sm:$0xff]
  %v1092 = vld [vmem:[%s1 + $0x20d0] sm:$0xff]
  %v1093 = vld [vmem:[%s1 + $0x20d8] sm:$0xff]
  %v1094 = vld [vmem:[%s1 + $0x20e0] sm:$0xff]
  %v1095 = vld [vmem:[%s1 + $0x20e8] sm:$0xff]
  %v1096 = vld [vmem:[%s1 + $0x20f0] sm:$0xff]
  %v1097 = vld [vmem:[%s1 + $0x20f8] sm:$0xff]
  %v1098 = vld [vmem:[%s1 + $0x2100] sm:$0xff]
  %v1099 = vld [vmem:[%s1 + $0x2108] sm:$0xff]
  %v1100 = vld [vmem:[%s1 + $0x2110] sm:$0xff]
  %v1101 = vld [vmem:[%s1 + $0x2118] sm:$0xff]
  %v1102 = vld [vmem:[%s1 + $0x2120] sm:$0xff]
  %v1103 = vld [vmem:[%s1 + $0x2128] sm:$0xff]
  %v1104 = vld [vmem:[%s1 + $0x2130] sm:$0xff]
  %v1105 = vld [vmem:[%s1 + $0x2138] sm:$0xff]
  %v1106 = vld [vmem:[%s1 + $0x2140] sm:$0xff]
  %v1107 = vld [vmem:[%s1 + $0x2148] sm:$0xff]
  %v1108 = vld [vmem:[%s1 + $0x2150] sm:$0xff]
  %v1109 = vld [vmem:[%s1 + $0x2158] sm:$0xff]
  %v1110 = vld [vmem:[%s1 + $0x2160] sm:$0xff]
  %v1111 = vld [vmem:[%s1 + $0x2168] sm:$0xff]
  %v1112 = vld [vmem:[%s1 + $0x2170] sm:$0xff]
  %v1113 = vld [vmem:[%s1 + $0x2178] sm:$0xff]
  %v1114 = vld [vmem:[%s1 + $0x2180] sm:$0xff]
  %v1115 = vld [vmem:[%s1 + $0x2188] sm:$0xff]
  %v1116 = vld [vmem:[%s1 + $0x2190] sm:$0xff]
  %v1117 = vld [vmem:[%s1 + $0x2198] sm:$0xff]
  %v1118 = vld [vmem:[%s1 + $0x21a0] sm:$0xff]
  %v1119 = vld [vmem:[%s1 + $0x21a8] sm:$0xff]
  %v1120 = vld [vmem:[%s1 + $0x21b0] sm:$0xff]
  %v1121 = vld [vmem:[%s1 + $0x21b8] sm:$0xff]
  %v1122 = vld [vmem:[%s1 + $0x21c0] sm:$0xff]
  %v1123 = vld [vmem:[%s1 + $0x21c8] sm:$0xff]
  %v1124 = vld [vmem:[%s1 + $0x21d0] sm:$0xff]
  %v1125 = vld [vmem:[%s1 + $0x21d8] sm:$0xff]
  %v1126 = vld [vmem:[%s1 + $0x21e0] sm:$0xff]
  %v1127 = vld [vmem:[%s1 + $0x21e8] sm:$0xff]
  %v1128 = vld [vmem:[%s1 + $0x21f0] sm:$0xff]
  %v1129 = vld [vmem:[%s1 + $0x21f8] sm:$0xff]
  %v1130 = vld [vmem:[%s1 + $0x2200] sm:$0xff]
  %v1131 = vld [vmem:[%s1 + $0x2208] sm:$0xff]
  %v1132 = vld [vmem:[%s1 + $0x2210] sm:$0xff]
  %v1133 = vld [vmem:[%s1 + $0x2218] sm:$0xff]
  %v1134 = vld [vmem:[%s1 + $0x2220] sm:$0xff]
  %v1135 = vld [vmem:[%s1 + $0x2228] sm:$0xff]
  %v1136 = vld [vmem:[%s1 + $0x2230] sm:$0xff]
  %v1137 = vld [vmem:[%s1 + $0x2238] sm:$0xff]
  %v1138 = vld [vmem:[%s1 + $0x2240] sm:$0xff]
  %v1139 = vld [vmem:[%s1 + $0x2248] sm:$0xff]
  %v1140 = vld [vmem:[%s1 + $0x2250] sm:$0xff]
  %v1141 = vld [vmem:[%s1 + $0x2258] sm:$0xff]
  %v1142 = vld [vmem:[%s1 + $0x2260] sm:$0xff]
  %v1143 = vld [vmem:[%s1 + $0x2268] sm:$0xff]
  %v1144 = vld [vmem:[%s1 + $0x2270] sm:$0xff]
  %v1145 = vld [vmem:[%s1 + $0x2278] sm:$0xff]
  %v1146 = vld [vmem:[%s1 + $0x2280] sm:$0xff]
  %v1147 = vld [vmem:[%s1 + $0x2288] sm:$0xff]
  %v1148 = vld [vmem:[%s1 + $0x2290] sm:$0xff]
  %v1149 = vld [vmem:[%s1 + $0x2298] sm:$0xff]
  %v1150 = vld [vmem:[%s1 + $0x22a0] sm:$0xff]
  %v1151 = vld [vmem:[%s1 + $0x22a8] sm:$0xff]
  %v1152 = vld [vmem:[%s1 + $0x22b0] sm:$0xff]
  %v1153 = vld [vmem:[%s1 + $0x22b8] sm:$0xff]
  %v1154 = vld [vmem:[%s1 + $0x22c0] sm:$0xff]
  %v1155 = vld [vmem:[%s1 + $0x22c8] sm:$0xff]
  %v1156 = vld [vmem:[%s1 + $0x22d0] sm:$0xff]
  %v1157 = vld [vmem:[%s1 + $0x22d8] sm:$0xff]
  %v1158 = vld [vmem:[%s1 + $0x22e0] sm:$0xff]
  %v1159 = vld [vmem:[%s1 + $0x22e8] sm:$0xff]
  %v1160 = vld [vmem:[%s1 + $0x22f0] sm:$0xff]
  %v1161 = vld [vmem:[%s1 + $0x22f8] sm:$0xff]
  %v1162 = vld [vmem:[%s1 + $0x2300] sm:$0xff]
  %v1163 = vld [vmem:[%s1 + $0x2308] sm:$0xff]
  %v1164 = vld [vmem:[%s1 + $0x2310] sm:$0xff]
  %v1165 = vld [vmem:[%s1 + $0x2318] sm:$0xff]
  %v1166 = vld [vmem:[%s1 + $0x2320] sm:$0xff]
  %v1167 = vld [vmem:[%s1 + $0x2328] sm:$0xff]
  %v1168 = vld [vmem:[%s1 + $0x2330] sm:$0xff]
  %v1169 = vld [vmem:[%s1 + $0x2338] sm:$0xff]
  %v1170 = vld [vmem:[%s1 + $0x2340] sm:$0xff]
  %v1171 = vld [vmem:[%s1 + $0x2348] sm:$0xff]
  %v1172 = vld [vmem:[%s1 + $0x2350] sm:$0xff]
  %v1173 = vld [vmem:[%s1 + $0x2358] sm:$0xff]
  %v1174 = vld [vmem:[%s1 + $0x2360] sm:$0xff]
  %v1175 = vld [vmem:[%s1 + $0x2368] sm:$0xff]
  %v1176 = vld [vmem:[%s1 + $0x2370] sm:$0xff]
  %v1177 = vld [vmem:[%s1 + $0x2378] sm:$0xff]
  %v1178 = vld [vmem:[%s1 + $0x2380] sm:$0xff]
  %v1179 = vld [vmem:[%s1 + $0x2388] sm:$0xff]
  %v1180 = vld [vmem:[%s1 + $0x2390] sm:$0xff]
  %v1181 = vld [vmem:[%s1 + $0x2398] sm:$0xff]
  %v1182 = vld [vmem:[%s1 + $0x23a0] sm:$0xff]
  %v1183 = vld [vmem:[%s1 + $0x23a8] sm:$0xff]
  %v1184 = vld [vmem:[%s1 + $0x23b0] sm:$0xff]
  %v1185 = vld [vmem:[%s1 + $0x23b8] sm:$0xff]
  %v1186 = vld [vmem:[%s1 + $0x23c0] sm:$0xff]
  %v1187 = vld [vmem:[%s1 + $0x23c8] sm:$0xff]
  %v1188 = vld [vmem:[%s1 + $0x23d0] sm:$0xff]
  %v1189 = vld [vmem:[%s1 + $0x23d8] sm:$0xff]
  %v1190 = vld [vmem:[%s1 + $0x23e0] sm:$0xff]
  %v1191 = vld [vmem:[%s1 + $0x23e8] sm:$0xff]
  %v1192 = vld [vmem:[%s1 + $0x23f0] sm:$0xff]
  %v1193 = vld [vmem:[%s1 + $0x23f8] sm:$0xff]
  %v1194 = vld [vmem:[%s1 + $0x2400] sm:$0xff]
  %v1195 = vld [vmem:[%s1 + $0x2408] sm:$0xff]
  %v1196 = vld [vmem:[%s1 + $0x2410] sm:$0xff]
  %v1197 = vld [vmem:[%s1 + $0x2418] sm:$0xff]
  %v1198 = vld [vmem:[%s1 + $0x2420] sm:$0xff]
  %v1199 = vld [vmem:[%s1 + $0x2428] sm:$0xff]
  %v1200 = vld [vmem:[%s1 + $0x2430] sm:$0xff]
  %v1201 = vld [vmem:[%s1 + $0x2438] sm:$0xff]
  %v1202 = vld [vmem:[%s1 + $0x2440] sm:$0xff]
  %v1203 = vld [vmem:[%s1 + $0x2448] sm:$0xff]
  %v1204 = vld [vmem:[%s1 + $0x2450] sm:$0xff]
  %v1205 = vld [vmem:[%s1 + $0x2458] sm:$0xff]
  %v1206 = vld [vmem:[%s1 + $0x2460] sm:$0xff]
  %v1207 = vld [vmem:[%s1 + $0x2468] sm:$0xff]
  %v1208 = vld [vmem:[%s1 + $0x2470] sm:$0xff]
  %v1209 = vld [vmem:[%s1 + $0x2478] sm:$0xff]
  %v1210 = vld [vmem:[%s1 + $0x2480] sm:$0xff]
  %v1211 = vld [vmem:[%s1 + $0x2488] sm:$0xff]
  %v1212 = vld [vmem:[%s1 + $0x2490] sm:$0xff]
  %v1213 = vld [vmem:[%s1 + $0x2498] sm:$0xff]
  %v1214 = vld [vmem:[%s1 + $0x24a0] sm:$0xff]
  %v1215 = vld [vmem:[%s1 + $0x24a8] sm:$0xff]
  %v1216 = vld [vmem:[%s1 + $0x24b0] sm:$0xff]
  %v1217 = vld [vmem:[%s1 + $0x24b8] sm:$0xff]
  %v1218 = vld [vmem:[%s1 + $0x24c0] sm:$0xff]
  %v1219 = vld [vmem:[%s1 + $0x24c8] sm:$0xff]
  %v1220 = vld [vmem:[%s1 + $0x24d0] sm:$0xff]
  %v1221 = vld [vmem:[%s1 + $0x24d8] sm:$0xff]
  %v1222 = vld [vmem:[%s1 + $0x24e0] sm:$0xff]
  %v1223 = vld [vmem:[%s1 + $0x24e8] sm:$0xff]
  %v1224 = vld [vmem:[%s1 + $0x24f0] sm:$0xff]
  %v1225 = vld [vmem:[%s1 + $0x24f8] sm:$0xff]
  %v1226 = vld [vmem:[%s1 + $0x2500] sm:$0xff]
  %v1227 = vld [vmem:[%s1 + $0x2508] sm:$0xff]
  %v1228 = vld [vmem:[%s1 + $0x2510] sm:$0xff]
  %v1229 = vld [vmem:[%s1 + $0x2518] sm:$0xff]
  %v1230 = vld [vmem:[%s1 + $0x2520] sm:$0xff]
  %v1231 = vld [vmem:[%s1 + $0x2528] sm:$0xff]
  %v1232 = vld [vmem:[%s1 + $0x2530] sm:$0xff]
  %v1233 = vld [vmem:[%s1 + $0x2538] sm:$0xff]
  %v1234 = vld [vmem:[%s1 + $0x2540] sm:$0xff]
  %v1235 = vld [vmem:[%s1 + $0x2548] sm:$0xff]
  %v1236 = vld [vmem:[%s1 + $0x2550] sm:$0xff]
  %v1237 = vld [vmem:[%s1 + $0x2558] sm:$0xff]
  %v1238 = vld [vmem:[%s1 + $0x2560] sm:$0xff]
  %v1239 = vld [vmem:[%s1 + $0x2568] sm:$0xff]
  %v1240 = vld [vmem:[%s1 + $0x2570] sm:$0xff]
  %v1241 = vld [vmem:[%s1 + $0x2578] sm:$0xff]
  %v1242 = vld [vmem:[%s1 + $0x2580] sm:$0xff]
  %v1243 = vld [vmem:[%s1 + $0x2588] sm:$0xff]
  %v1244 = vld [vmem:[%s1 + $0x2590] sm:$0xff]
  %v1245 = vld [vmem:[%s1 + $0x2598] sm:$0xff]
  %v1246 = vld [vmem:[%s1 + $0x25a0] sm:$0xff]
  %v1247 = vld [vmem:[%s1 + $0x25a8] sm:$0xff]
  %v1248 = vld [vmem:[%s1 + $0x25b0] sm:$0xff]
  %v1249 = vld [vmem:[%s1 + $0x25b8] sm:$0xff]
  %v1250 = vld [vmem:[%s1 + $0x25c0] sm:$0xff]
  %v1251 = vld [vmem:[%s1 + $0x25c8] sm:$0xff]
  %v1252 = vld [vmem:[%s1 + $0x25d0] sm:$0xff]
  %v1253 = vld [vmem:[%s1 + $0x25d8] sm:$0xff]
  %v1254 = vld [vmem:[%s1 + $0x25e0] sm:$0xff]
  %v1255 = vld [vmem:[%s1 + $0x25e8] sm:$0xff]
  %v1256 = vld [vmem:[%s1 + $0x25f0] sm:$0xff]
  %v1257 = vld [vmem:[%s1 + $0x25f8] sm:$0xff]
  %v1258 = vld [vmem:[%s1 + $0x2600] sm:$0xff]
  %v1259 = vld [vmem:[%s1 + $0x2608] sm:$0xff]
  %v1260 = vld [vmem:[%s1 + $0x2610] sm:$0xff]
  %v1261 = vld [vmem:[%s1 + $0x2618] sm:$0xff]
  %v1262 = vld [vmem:[%s1 + $0x2620] sm:$0xff]
  %v1263 = vld [vmem:[%s1 + $0x2628] sm:$0xff]
  %v1264 = vld [vmem:[%s1 + $0x2630] sm:$0xff]
  %v1265 = vld [vmem:[%s1 + $0x2638] sm:$0xff]
  %v1266 = vld [vmem:[%s1 + $0x2640] sm:$0xff]
  %v1267 = vld [vmem:[%s1 + $0x2648] sm:$0xff]
  %v1268 = vld [vmem:[%s1 + $0x2650] sm:$0xff]
  %v1269 = vld [vmem:[%s1 + $0x2658] sm:$0xff]
  %v1270 = vld [vmem:[%s1 + $0x2660] sm:$0xff]
  %v1271 = vld [vmem:[%s1 + $0x2668] sm:$0xff]
  %v1272 = vld [vmem:[%s1 + $0x2670] sm:$0xff]
  %v1273 = vld [vmem:[%s1 + $0x2678] sm:$0xff]
  %v1274 = vld [vmem:[%s1 + $0x2680] sm:$0xff]
  %v1275 = vld [vmem:[%s1 + $0x2688] sm:$0xff]
  %v1276 = vld [vmem:[%s1 + $0x2690] sm:$0xff]
  %v1277 = vld [vmem:[%s1 + $0x2698] sm:$0xff]
  %v1278 = vld [vmem:[%s1 + $0x26a0] sm:$0xff]
  %v1279 = vld [vmem:[%s1 + $0x26a8] sm:$0xff]
  %v1280 = vld [vmem:[%s1 + $0x26b0] sm:$0xff]
  %v1281 = vld [vmem:[%s1 + $0x26b8] sm:$0xff]
  %v1282 = vld [vmem:[%s1 + $0x26c0] sm:$0xff]
  %v1283 = vld [vmem:[%s1 + $0x26c8] sm:$0xff]
  %v1284 = vld [vmem:[%s1 + $0x26d0] sm:$0xff]
  %v1285 = vld [vmem:[%s1 + $0x26d8] sm:$0xff]
  %v1286 = vld [vmem:[%s1 + $0x26e0] sm:$0xff]
  %v1287 = vld [vmem:[%s1 + $0x26e8] sm:$0xff]
  %v1288 = vld [vmem:[%s1 + $0x26f0] sm:$0xff]
  %v1289 = vld [vmem:[%s1 + $0x26f8] sm:$0xff]
  %v1290 = vld [vmem:[%s1 + $0x2700] sm:$0xff]
  %v1291 = vld [vmem:[%s1 + $0x2708] sm:$0xff]
  %v1292 = vld [vmem:[%s1 + $0x2710] sm:$0xff]
  %v1293 = vld [vmem:[%s1 + $0x2718] sm:$0xff]
  %v1294 = vld [vmem:[%s1 + $0x2720] sm:$0xff]
  %v1295 = vld [vmem:[%s1 + $0x2728] sm:$0xff]
  %v1296 = vld [vmem:[%s1 + $0x2730] sm:$0xff]
  %v1297 = vld [vmem:[%s1 + $0x2738] sm:$0xff]
  %v1298 = vld [vmem:[%s1 + $0x2740] sm:$0xff]
  %v1299 = vld [vmem:[%s1 + $0x2748] sm:$0xff]
  %v1300 = vld [vmem:[%s1 + $0x2750] sm:$0xff]
  %v1301 = vld [vmem:[%s1 + $0x2758] sm:$0xff]
  %v1302 = vld [vmem:[%s1 + $0x2760] sm:$0xff]
  %v1303 = vld [vmem:[%s1 + $0x2768] sm:$0xff]
  %v1304 = vld [vmem:[%s1 + $0x2770] sm:$0xff]
  %v1305 = vld [vmem:[%s1 + $0x2778] sm:$0xff]
  %v1306 = vld [vmem:[%s1 + $0x2780] sm:$0xff]
  %v1307 = vld [vmem:[%s1 + $0x2788] sm:$0xff]
  %v1308 = vld [vmem:[%s1 + $0x2790] sm:$0xff]
  %v1309 = vld [vmem:[%s1 + $0x2798] sm:$0xff]
  %v1310 = vld [vmem:[%s1 + $0x27a0] sm:$0xff]
  %v1311 = vld [vmem:[%s1 + $0x27a8] sm:$0xff]
  %v1312 = vld [vmem:[%s1 + $0x27b0] sm:$0xff]
  %v1313 = vld [vmem:[%s1 + $0x27b8] sm:$0xff]
  %v1314 = vld [vmem:[%s1 + $0x27c0] sm:$0xff]
  %v1315 = vld [vmem:[%s1 + $0x27c8] sm:$0xff]
  %v1316 = vld [vmem:[%s1 + $0x27d0] sm:$0xff]
  %v1317 = vld [vmem:[%s1 + $0x27d8] sm:$0xff]
  %v1318 = vld [vmem:[%s1 + $0x27e0] sm:$0xff]
  %v1319 = vld [vmem:[%s1 + $0x27e8] sm:$0xff]
  %v1320 = vld [vmem:[%s1 + $0x27f0] sm:$0xff]
  %v1321 = vld [vmem:[%s1 + $0x27f8] sm:$0xff]
  %v1322 = vld [vmem:[%s1 + $0x2800] sm:$0xff]
  %v1323 = vld [vmem:[%s1 + $0x2808] sm:$0xff]
  %v1324 = vld [vmem:[%s1 + $0x2810] sm:$0xff]
  %v1325 = vld [vmem:[%s1 + $0x2818] sm:$0xff]
  %v1326 = vld [vmem:[%s1 + $0x2820] sm:$0xff]
  %v1327 = vld [vmem:[%s1 + $0x2828] sm:$0xff]
  %v1328 = vld [vmem:[%s1 + $0x2830] sm:$0xff]
  %v1329 = vld [vmem:[%s1 + $0x2838] sm:$0xff]
  %v1330 = vld [vmem:[%s1 + $0x2840] sm:$0xff]
  %v1331 = vld [vmem:[%s1 + $0x2848] sm:$0xff]
  %v1332 = vld [vmem:[%s1 + $0x2850] sm:$0xff]
  %v1333 = vld [vmem:[%s1 + $0x2858] sm:$0xff]
  %v1334 = vld [vmem:[%s1 + $0x2860] sm:$0xff]
  %v1335 = vld [vmem:[%s1 + $0x2868] sm:$0xff]
  %v1336 = vld [vmem:[%s1 + $0x2870] sm:$0xff]
  %v1337 = vld [vmem:[%s1 + $0x2878] sm:$0xff]
  %v1338 = vld [vmem:[%s1 + $0x2880] sm:$0xff]
  %v1339 = vld [vmem:[%s1 + $0x2888] sm:$0xff]
  %v1340 = vld [vmem:[%s1 + $0x2890] sm:$0xff]
  %v1341 = vld [vmem:[%s1 + $0x2898] sm:$0xff]
  %v1342 = vld [vmem:[%s1 + $0x28a0] sm:$0xff]
  %v1343 = vld [vmem:[%s1 + $0x28a8] sm:$0xff]
  %v1344 = vld [vmem:[%s1 + $0x28b0] sm:$0xff]
  %v1345 = vld [vmem:[%s1 + $0x28b8] sm:$0xff]
  %v1346 = vld [vmem:[%s1 + $0x28c0] sm:$0xff]
  %v1347 = vld [vmem:[%s1 + $0x28c8] sm:$0xff]
  %v1348 = vld [vmem:[%s1 + $0x28d0] sm:$0xff]
  %v1349 = vld [vmem:[%s1 + $0x28d8] sm:$0xff]
  %v1350 = vld [vmem:[%s1 + $0x28e0] sm:$0xff]
  %v1351 = vld [vmem:[%s1 + $0x28e8] sm:$0xff]
  %v1352 = vld [vmem:[%s1 + $0x28f0] sm:$0xff]
  %v1353 = vld [vmem:[%s1 + $0x28f8] sm:$0xff]
  %v1354 = vld [vmem:[%s1 + $0x2900] sm:$0xff]
  %v1355 = vld [vmem:[%s1 + $0x2908] sm:$0xff]
  %v1356 = vld [vmem:[%s1 + $0x2910] sm:$0xff]
  %v1357 = vld [vmem:[%s1 + $0x2918] sm:$0xff]
  %v1358 = vld [vmem:[%s1 + $0x2920] sm:$0xff]
  %v1359 = vld [vmem:[%s1 + $0x2928] sm:$0xff]
  %v1360 = vld [vmem:[%s1 + $0x2930] sm:$0xff]
  %v1361 = vld [vmem:[%s1 + $0x2938] sm:$0xff]
  %v1362 = vld [vmem:[%s1 + $0x2940] sm:$0xff]
  %v1363 = vld [vmem:[%s1 + $0x2948] sm:$0xff]
  %v1364 = vld [vmem:[%s1 + $0x2950] sm:$0xff]
  %v1365 = vld [vmem:[%s1 + $0x2958] sm:$0xff]
  %v1366 = vld [vmem:[%s1 + $0x2960] sm:$0xff]
  %v1367 = vld [vmem:[%s1 + $0x2968] sm:$0xff]
  %v1368 = vld [vmem:[%s1 + $0x2970] sm:$0xff]
  %v1369 = vld [vmem:[%s1 + $0x2978] sm:$0xff]
  %v1370 = vld [vmem:[%s1 + $0x2980] sm:$0xff]
  %v1371 = vld [vmem:[%s1 + $0x2988] sm:$0xff]
  %v1372 = vld [vmem:[%s1 + $0x2990] sm:$0xff]
  %v1373 = vld [vmem:[%s1 + $0x2998] sm:$0xff]
  %v1374 = vld [vmem:[%s1 + $0x29a0] sm:$0xff]
  %v1375 = vld [vmem:[%s1 + $0x29a8] sm:$0xff]
  %v1376 = vld [vmem:[%s1 + $0x29b0] sm:$0xff]
  %v1377 = vld [vmem:[%s1 + $0x29b8] sm:$0xff]
  %v1378 = vld [vmem:[%s1 + $0x29c0] sm:$0xff]
  %v1379 = vld [vmem:[%s1 + $0x29c8] sm:$0xff]
  %v1380 = vld [vmem:[%s1 + $0x29d0] sm:$0xff]
  %v1381 = vld [vmem:[%s1 + $0x29d8] sm:$0xff]
  %v1382 = vld [vmem:[%s1 + $0x29e0] sm:$0xff]
  %v1383 = vld [vmem:[%s1 + $0x29e8] sm:$0xff]
  %v1384 = vld [vmem:[%s1 + $0x29f0] sm:$0xff]
  %v1385 = vld [vmem:[%s1 + $0x29f8] sm:$0xff]
  %v1386 = vld [vmem:[%s1 + $0x2a00] sm:$0xff]
  %v1387 = vld [vmem:[%s1 + $0x2a08] sm:$0xff]
  %v1388 = vld [vmem:[%s1 + $0x2a10] sm:$0xff]
  %v1389 = vld [vmem:[%s1 + $0x2a18] sm:$0xff]
  %v1390 = vld [vmem:[%s1 + $0x2a20] sm:$0xff]
  %v1391 = vld [vmem:[%s1 + $0x2a28] sm:$0xff]
  %v1392 = vld [vmem:[%s1 + $0x2a30] sm:$0xff]
  %v1393 = vld [vmem:[%s1 + $0x2a38] sm:$0xff]
  %v1394 = vld [vmem:[%s1 + $0x2a40] sm:$0xff]
  %v1395 = vld [vmem:[%s1 + $0x2a48] sm:$0xff]
  %v1396 = vld [vmem:[%s1 + $0x2a50] sm:$0xff]
  %v1397 = vld [vmem:[%s1 + $0x2a58] sm:$0xff]
  %v1398 = vld [vmem:[%s1 + $0x2a60] sm:$0xff]
  %v1399 = vld [vmem:[%s1 + $0x2a68] sm:$0xff]
  %v1400 = vld [vmem:[%s1 + $0x2a70] sm:$0xff]
  %v1401 = vld [vmem:[%s1 + $0x2a78] sm:$0xff]
  %v1402 = vld [vmem:[%s1 + $0x2a80] sm:$0xff]
  %v1403 = vld [vmem:[%s1 + $0x2a88] sm:$0xff]
  %v1404 = vld [vmem:[%s1 + $0x2a90] sm:$0xff]
  %v1405 = vld [vmem:[%s1 + $0x2a98] sm:$0xff]
  %v1406 = vld [vmem:[%s1 + $0x2aa0] sm:$0xff]
  %v1407 = vld [vmem:[%s1 + $0x2aa8] sm:$0xff]
  %v1408 = vld [vmem:[%s1 + $0x2ab0] sm:$0xff]
  %v1409 = vld [vmem:[%s1 + $0x2ab8] sm:$0xff]
  %v1410 = vld [vmem:[%s1 + $0x2ac0] sm:$0xff]
  %v1411 = vld [vmem:[%s1 + $0x2ac8] sm:$0xff]
  %v1412 = vld [vmem:[%s1 + $0x2ad0] sm:$0xff]
  %v1413 = vld [vmem:[%s1 + $0x2ad8] sm:$0xff]
  %v1414 = vld [vmem:[%s1 + $0x2ae0] sm:$0xff]
  %v1415 = vld [vmem:[%s1 + $0x2ae8] sm:$0xff]
  %v1416 = vld [vmem:[%s1 + $0x2af0] sm:$0xff]
  %v1417 = vld [vmem:[%s1 + $0x2af8] sm:$0xff]
  %v1418 = vld [vmem:[%s1 + $0x2b00] sm:$0xff]
  %v1419 = vld [vmem:[%s1 + $0x2b08] sm:$0xff]
  %v1420 = vld [vmem:[%s1 + $0x2b10] sm:$0xff]
  %v1421 = vld [vmem:[%s1 + $0x2b18] sm:$0xff]
  %v1422 = vld [vmem:[%s1 + $0x2b20] sm:$0xff]
  %v1423 = vld [vmem:[%s1 + $0x2b28] sm:$0xff]
  %v1424 = vld [vmem:[%s1 + $0x2b30] sm:$0xff]
  %v1425 = vld [vmem:[%s1 + $0x2b38] sm:$0xff]
  %v1426 = vld [vmem:[%s1 + $0x2b40] sm:$0xff]
  %v1427 = vld [vmem:[%s1 + $0x2b48] sm:$0xff]
  %v1428 = vld [vmem:[%s1 + $0x2b50] sm:$0xff]
  %v1429 = vld [vmem:[%s1 + $0x2b58] sm:$0xff]
  %v1430 = vld [vmem:[%s1 + $0x2b60] sm:$0xff]
  %v1431 = vld [vmem:[%s1 + $0x2b68] sm:$0xff]
  %v1432 = vld [vmem:[%s1 + $0x2b70] sm:$0xff]
  %v1433 = vld [vmem:[%s1 + $0x2b78] sm:$0xff]
  %v1434 = vld [vmem:[%s1 + $0x2b80] sm:$0xff]
  %v1435 = vld [vmem:[%s1 + $0x2b88] sm:$0xff]
  %v1436 = vld [vmem:[%s1 + $0x2b90] sm:$0xff]
  %v1437 = vld [vmem:[%s1 + $0x2b98] sm:$0xff]
  %v1438 = vld [vmem:[%s1 + $0x2ba0] sm:$0xff]
  %v1439 = vld [vmem:[%s1 + $0x2ba8] sm:$0xff]
  %v1440 = vld [vmem:[%s1 + $0x2bb0] sm:$0xff]
  %v1441 = vld [vmem:[%s1 + $0x2bb8] sm:$0xff]
  %v1442 = vld [vmem:[%s1 + $0x2bc0] sm:$0xff]
  %v1443 = vld [vmem:[%s1 + $0x2bc8] sm:$0xff]
  %v1444 = vld [vmem:[%s1 + $0x2bd0] sm:$0xff]
  %v1445 = vld [vmem:[%s1 + $0x2bd8] sm:$0xff]
  %v1446 = vld [vmem:[%s1 + $0x2be0] sm:$0xff]
  %v1447 = vld [vmem:[%s1 + $0x2be8] sm:$0xff]
  %v1448 = vld [vmem:[%s1 + $0x2bf0] sm:$0xff]
  %v1449 = vld [vmem:[%s1 + $0x2bf8] sm:$0xff]
  %v1450 = vld [vmem:[%s1 + $0x2c00] sm:$0xff]
  %v1451 = vld [vmem:[%s1 + $0x2c08] sm:$0xff]
  %v1452 = vld [vmem:[%s1 + $0x2c10] sm:$0xff]
  %v1453 = vld [vmem:[%s1 + $0x2c18] sm:$0xff]
  %v1454 = vld [vmem:[%s1 + $0x2c20] sm:$0xff]
  %v1455 = vld [vmem:[%s1 + $0x2c28] sm:$0xff]
  %v1456 = vld [vmem:[%s1 + $0x2c30] sm:$0xff]
  %v1457 = vld [vmem:[%s1 + $0x2c38] sm:$0xff]
  %v1458 = vld [vmem:[%s1 + $0x2c40] sm:$0xff]
  %v1459 = vld [vmem:[%s1 + $0x2c48] sm:$0xff]
  %v1460 = vld [vmem:[%s1 + $0x2c50] sm:$0xff]
  %v1461 = vld [vmem:[%s1 + $0x2c58] sm:$0xff]
  %v1462 = vld [vmem:[%s1 + $0x2c60] sm:$0xff]
  %v1463 = vld [vmem:[%s1 + $0x2c68] sm:$0xff]
  %v1464 = vld [vmem:[%s1 + $0x2c70] sm:$0xff]
  %v1465 = vld [vmem:[%s1 + $0x2c78] sm:$0xff]
  %v1466 = vld [vmem:[%s1 + $0x2c80] sm:$0xff]
  %v1467 = vld [vmem:[%s1 + $0x2c88] sm:$0xff]
  %v1468 = vld [vmem:[%s1 + $0x2c90] sm:$0xff]
  %v1469 = vld [vmem:[%s1 + $0x2c98] sm:$0xff]
  %v1470 = vld [vmem:[%s1 + $0x2ca0] sm:$0xff]
  %v1471 = vld [vmem:[%s1 + $0x2ca8] sm:$0xff]
  %v1472 = vld [vmem:[%s1 + $0x2cb0] sm:$0xff]
  %v1473 = vld [vmem:[%s1 + $0x2cb8] sm:$0xff]
  %v1474 = vld [vmem:[%s1 + $0x2cc0] sm:$0xff]
  %v1475 = vld [vmem:[%s1 + $0x2cc8] sm:$0xff]
  %v1476 = vld [vmem:[%s1 + $0x2cd0] sm:$0xff]
  %v1477 = vld [vmem:[%s1 + $0x2cd8] sm:$0xff]
  %v1478 = vld [vmem:[%s1 + $0x2ce0] sm:$0xff]
  %v1479 = vld [vmem:[%s1 + $0x2ce8] sm:$0xff]
  %v1480 = vld [vmem:[%s1 + $0x2cf0] sm:$0xff]
  %v1481 = vld [vmem:[%s1 + $0x2cf8] sm:$0xff]
  %v1482 = vld [vmem:[%s1 + $0x2d00] sm:$0xff]
  %v1483 = vld [vmem:[%s1 + $0x2d08] sm:$0xff]
  %v1484 = vld [vmem:[%s1 + $0x2d10] sm:$0xff]
  %v1485 = vld [vmem:[%s1 + $0x2d18] sm:$0xff]
  %v1486 = vld [vmem:[%s1 + $0x2d20] sm:$0xff]
  %v1487 = vld [vmem:[%s1 + $0x2d28] sm:$0xff]
  %v1488 = vld [vmem:[%s1 + $0x2d30] sm:$0xff]
  %v1489 = vld [vmem:[%s1 + $0x2d38] sm:$0xff]
  %v1490 = vld [vmem:[%s1 + $0x2d40] sm:$0xff]
  %v1491 = vld [vmem:[%s1 + $0x2d48] sm:$0xff]
  %v1492 = vld [vmem:[%s1 + $0x2d50] sm:$0xff]
  %v1493 = vld [vmem:[%s1 + $0x2d58] sm:$0xff]
  %v1494 = vld [vmem:[%s1 + $0x2d60] sm:$0xff]
  %v1495 = vld [vmem:[%s1 + $0x2d68] sm:$0xff]
  %v1496 = vld [vmem:[%s1 + $0x2d70] sm:$0xff]
  %v1497 = vld [vmem:[%s1 + $0x2d78] sm:$0xff]
  %v1498 = vld [vmem:[%s1 + $0x2d80] sm:$0xff]
  %v1499 = vld [vmem:[%s1 + $0x2d88] sm:$0xff]
  %v1500 = vld [vmem:[%s1 + $0x2d90] sm:$0xff]
  %v1501 = vld [vmem:[%s1 + $0x2d98] sm:$0xff]
  %v1502 = vld [vmem:[%s1 + $0x2da0] sm:$0xff]
  %v1503 = vld [vmem:[%s1 + $0x2da8] sm:$0xff]
  %v1504 = vld [vmem:[%s1 + $0x2db0] sm:$0xff]
  %v1505 = vld [vmem:[%s1 + $0x2db8] sm:$0xff]
  %v1506 = vld [vmem:[%s1 + $0x2dc0] sm:$0xff]
  %v1507 = vld [vmem:[%s1 + $0x2dc8] sm:$0xff]
  %v1508 = vld [vmem:[%s1 + $0x2dd0] sm:$0xff]
  %v1509 = vld [vmem:[%s1 + $0x2dd8] sm:$0xff]
  %v1510 = vld [vmem:[%s1 + $0x2de0] sm:$0xff]
  %v1511 = vld [vmem:[%s1 + $0x2de8] sm:$0xff]
  %v1512 = vld [vmem:[%s1 + $0x2df0] sm:$0xff]
  %v1513 = vld [vmem:[%s1 + $0x2df8] sm:$0xff]
  %v1514 = vld [vmem:[%s1 + $0x2e00] sm:$0xff]
  %v1515 = vld [vmem:[%s1 + $0x2e08] sm:$0xff]
  %v1516 = vld [vmem:[%s1 + $0x2e10] sm:$0xff]
  %v1517 = vld [vmem:[%s1 + $0x2e18] sm:$0xff]
  %v1518 = vld [vmem:[%s1 + $0x2e20] sm:$0xff]
  %v1519 = vld [vmem:[%s1 + $0x2e28] sm:$0xff]
  %v1520 = vld [vmem:[%s1 + $0x2e30] sm:$0xff]
  %v1521 = vld [vmem:[%s1 + $0x2e38] sm:$0xff]
  %v1522 = vld [vmem:[%s1 + $0x2e40] sm:$0xff]
  %v1523 = vld [vmem:[%s1 + $0x2e48] sm:$0xff]
  %v1524 = vld [vmem:[%s1 + $0x2e50] sm:$0xff]
  %v1525 = vld [vmem:[%s1 + $0x2e58] sm:$0xff]
  %v1526 = vld [vmem:[%s1 + $0x2e60] sm:$0xff]
  %v1527 = vld [vmem:[%s1 + $0x2e68] sm:$0xff]
  %v1528 = vld [vmem:[%s1 + $0x2e70] sm:$0xff]
  %v1529 = vld [vmem:[%s1 + $0x2e78] sm:$0xff]
  %v1530 = vld [vmem:[%s1 + $0x2e80] sm:$0xff]
  %v1531 = vld [vmem:[%s1 + $0x2e88] sm:$0xff]
  %v1532 = vld [vmem:[%s1 + $0x2e90] sm:$0xff]
  %v1533 = vld [vmem:[%s1 + $0x2e98] sm:$0xff]
  %v1534 = vld [vmem:[%s1 + $0x2ea0] sm:$0xff]
  %v1535 = vld [vmem:[%s1 + $0x2ea8] sm:$0xff]
  %v1536 = vld [vmem:[%s1 + $0x2eb0] sm:$0xff]
  %v1537 = vld [vmem:[%s1 + $0x2eb8] sm:$0xff]
  %v1538 = vld [vmem:[%s1 + $0x2ec0] sm:$0xff]
  %v1539 = vld [vmem:[%s1 + $0x2ec8] sm:$0xff]
  %v1540 = vld [vmem:[%s1 + $0x2ed0] sm:$0xff]
  %v1541 = vld [vmem:[%s1 + $0x2ed8] sm:$0xff]
  %v1542 = vld [vmem:[%s1 + $0x2ee0] sm:$0xff]
  %v1543 = vld [vmem:[%s1 + $0x2ee8] sm:$0xff]
  %v1544 = vld [vmem:[%s1 + $0x2ef0] sm:$0xff]
  %v1545 = vld [vmem:[%s1 + $0x2ef8] sm:$0xff]
  %v1546 = vld [vmem:[%s1 + $0x2f00] sm:$0xff]
  %v1547 = vld [vmem:[%s1 + $0x2f08] sm:$0xff]
  %v1548 = vld [vmem:[%s1 + $0x2f10] sm:$0xff]
  %v1549 = vld [vmem:[%s1 + $0x2f18] sm:$0xff]
  %v1550 = vld [vmem:[%s1 + $0x2f20] sm:$0xff]
  %v1551 = vld [vmem:[%s1 + $0x2f28] sm:$0xff]
  %v1552 = vld [vmem:[%s1 + $0x2f30] sm:$0xff]
  %v1553 = vld [vmem:[%s1 + $0x2f38] sm:$0xff]
  %v1554 = vld [vmem:[%s1 + $0x2f40] sm:$0xff]
  %v1555 = vld [vmem:[%s1 + $0x2f48] sm:$0xff]
  %v1556 = vld [vmem:[%s1 + $0x2f50] sm:$0xff]
  %v1557 = vld [vmem:[%s1 + $0x2f58] sm:$0xff]
  %v1558 = vld [vmem:[%s1 + $0x2f60] sm:$0xff]
  %v1559 = vld [vmem:[%s1 + $0x2f68] sm:$0xff]
  %v1560 = vld [vmem:[%s1 + $0x2f70] sm:$0xff]
  %v1561 = vld [vmem:[%s1 + $0x2f78] sm:$0xff]
  %v1562 = vld [vmem:[%s1 + $0x2f80] sm:$0xff]
  %v1563 = vld [vmem:[%s1 + $0x2f88] sm:$0xff]
  %v1564 = vld [vmem:[%s1 + $0x2f90] sm:$0xff]
  %v1565 = vld [vmem:[%s1 + $0x2f98] sm:$0xff]
  %v1566 = vld [vmem:[%s1 + $0x2fa0] sm:$0xff]
  %v1567 = vld [vmem:[%s1 + $0x2fa8] sm:$0xff]
  %v1568 = vld [vmem:[%s1 + $0x2fb0] sm:$0xff]
  %v1569 = vld [vmem:[%s1 + $0x2fb8] sm:$0xff]
  %v1570 = vld [vmem:[%s1 + $0x2fc0] sm:$0xff]
  %v1571 = vld [vmem:[%s1 + $0x2fc8] sm:$0xff]
  %v1572 = vld [vmem:[%s1 + $0x2fd0] sm:$0xff]
  %v1573 = vld [vmem:[%s1 + $0x2fd8] sm:$0xff]
  %v1574 = vld [vmem:[%s1 + $0x2fe0] sm:$0xff]
  %v1575 = vld [vmem:[%s1 + $0x2fe8] sm:$0xff]
  %v1576 = vld [vmem:[%s1 + $0x2ff0] sm:$0xff]
  %v1577 = vld [vmem:[%s1 + $0x2ff8] sm:$0xff]
  %v1578 = vld [vmem:[%s1 + $0x3000] sm:$0xff]
  %v1579 = vld [vmem:[%s1 + $0x3008] sm:$0xff]
  %v1580 = vld [vmem:[%s1 + $0x3010] sm:$0xff]
  %v1581 = vld [vmem:[%s1 + $0x3018] sm:$0xff]
  %v1582 = vld [vmem:[%s1 + $0x3020] sm:$0xff]
  %v1583 = vld [vmem:[%s1 + $0x3028] sm:$0xff]
  %v1584 = vld [vmem:[%s1 + $0x3030] sm:$0xff]
  %v1585 = vld [vmem:[%s1 + $0x3038] sm:$0xff]
  %v1586 = vld [vmem:[%s1 + $0x3040] sm:$0xff]
  %v1587 = vld [vmem:[%s1 + $0x3048] sm:$0xff]
  %v1588 = vld [vmem:[%s1 + $0x3050] sm:$0xff]
  %v1589 = vld [vmem:[%s1 + $0x3058] sm:$0xff]
  %v1590 = vld [vmem:[%s1 + $0x3060] sm:$0xff]
  %v1591 = vld [vmem:[%s1 + $0x3068] sm:$0xff]
  %v1592 = vld [vmem:[%s1 + $0x3070] sm:$0xff]
  %v1593 = vld [vmem:[%s1 + $0x3078] sm:$0xff]
  %v1594 = vld [vmem:[%s1 + $0x3080] sm:$0xff]
  %v1595 = vld [vmem:[%s1 + $0x3088] sm:$0xff]
  %v1596 = vld [vmem:[%s1 + $0x3090] sm:$0xff]
  %v1597 = vld [vmem:[%s1 + $0x3098] sm:$0xff]
  %v1598 = vld [vmem:[%s1 + $0x30a0] sm:$0xff]
  %v1599 = vld [vmem:[%s1 + $0x30a8] sm:$0xff]
  %v1600 = vld [vmem:[%s1 + $0x30b0] sm:$0xff]
  %v1601 = vld [vmem:[%s1 + $0x30b8] sm:$0xff]
  %v1602 = vld [vmem:[%s1 + $0x30c0] sm:$0xff]
  %v1603 = vld [vmem:[%s1 + $0x30c8] sm:$0xff]
  %v1604 = vld [vmem:[%s1 + $0x30d0] sm:$0xff]
  %v1605 = vld [vmem:[%s1 + $0x30d8] sm:$0xff]
  %v1606 = vld [vmem:[%s1 + $0x30e0] sm:$0xff]
  %v1607 = vld [vmem:[%s1 + $0x30e8] sm:$0xff]
  %v1608 = vld [vmem:[%s1 + $0x30f0] sm:$0xff]
  %v1609 = vld [vmem:[%s1 + $0x30f8] sm:$0xff]
  %v1610 = vld [vmem:[%s1 + $0x3100] sm:$0xff]
  %v1611 = vld [vmem:[%s1 + $0x3108] sm:$0xff]
  %v1612 = vld [vmem:[%s1 + $0x3110] sm:$0xff]
  %v1613 = vld [vmem:[%s1 + $0x3118] sm:$0xff]
  %v1614 = vld [vmem:[%s1 + $0x3120] sm:$0xff]
  %v1615 = vld [vmem:[%s1 + $0x3128] sm:$0xff]
  %v1616 = vld [vmem:[%s1 + $0x3130] sm:$0xff]
  %v1617 = vld [vmem:[%s1 + $0x3138] sm:$0xff]
  %v1618 = vld [vmem:[%s1 + $0x3140] sm:$0xff]
  %v1619 = vld [vmem:[%s1 + $0x3148] sm:$0xff]
  %v1620 = vld [vmem:[%s1 + $0x3150] sm:$0xff]
  %v1621 = vld [vmem:[%s1 + $0x3158] sm:$0xff]
  %v1622 = vld [vmem:[%s1 + $0x3160] sm:$0xff]
  %v1623 = vld [vmem:[%s1 + $0x3168] sm:$0xff]
  %v1624 = vld [vmem:[%s1 + $0x3170] sm:$0xff]
  %v1625 = vld [vmem:[%s1 + $0x3178] sm:$0xff]
  %v1626 = vld [vmem:[%s1 + $0x3180] sm:$0xff]
  %v1627 = vld [vmem:[%s1 + $0x3188] sm:$0xff]
  %v1628 = vld [vmem:[%s1 + $0x3190] sm:$0xff]
  %v1629 = vld [vmem:[%s1 + $0x3198] sm:$0xff]
  %v1630 = vld [vmem:[%s1 + $0x31a0] sm:$0xff]
  %v1631 = vld [vmem:[%s1 + $0x31a8] sm:$0xff]
  %v1632 = vld [vmem:[%s1 + $0x31b0] sm:$0xff]
  %v1633 = vld [vmem:[%s1 + $0x31b8] sm:$0xff]
  %v1634 = vld [vmem:[%s1 + $0x31c0] sm:$0xff]
  %v1635 = vld [vmem:[%s1 + $0x31c8] sm:$0xff]
  %v1636 = vld [vmem:[%s1 + $0x31d0] sm:$0xff]
  %v1637 = vld [vmem:[%s1 + $0x31d8] sm:$0xff]
  %v1638 = vld [vmem:[%s1 + $0x31e0] sm:$0xff]
  %v1639 = vld [vmem:[%s1 + $0x31e8] sm:$0xff]
  %v1640 = vld [vmem:[%s1 + $0x31f0] sm:$0xff]
  %v1641 = vld [vmem:[%s1 + $0x31f8] sm:$0xff]
  %v1642 = vld [vmem:[%s1 + $0x3200] sm:$0xff]
  %v1643 = vld [vmem:[%s1 + $0x3208] sm:$0xff]
  %v1644 = vld [vmem:[%s1 + $0x3210] sm:$0xff]
  %v1645 = vld [vmem:[%s1 + $0x3218] sm:$0xff]
  %v1646 = vld [vmem:[%s1 + $0x3220] sm:$0xff]
  %v1647 = vld [vmem:[%s1 + $0x3228] sm:$0xff]
  %v1648 = vld [vmem:[%s1 + $0x3230] sm:$0xff]
  %v1649 = vld [vmem:[%s1 + $0x3238] sm:$0xff]
  %v1650 = vld [vmem:[%s1 + $0x3240] sm:$0xff]
  %v1651 = vld [vmem:[%s1 + $0x3248] sm:$0xff]
  %v1652 = vld [vmem:[%s1 + $0x3250] sm:$0xff]
  %v1653 = vld [vmem:[%s1 + $0x3258] sm:$0xff]
  %v1654 = vld [vmem:[%s1 + $0x3260] sm:$0xff]
  %v1655 = vld [vmem:[%s1 + $0x3268] sm:$0xff]
  %v1656 = vld [vmem:[%s1 + $0x3270] sm:$0xff]
  %v1657 = vld [vmem:[%s1 + $0x3278] sm:$0xff]
  %v1658 = vld [vmem:[%s1 + $0x3280] sm:$0xff]
  %v1659 = vld [vmem:[%s1 + $0x3288] sm:$0xff]
  %v1660 = vld [vmem:[%s1 + $0x3290] sm:$0xff]
  %v1661 = vld [vmem:[%s1 + $0x3298] sm:$0xff]
  %v1662 = vld [vmem:[%s1 + $0x32a0] sm:$0xff]
  %v1663 = vld [vmem:[%s1 + $0x32a8] sm:$0xff]
  %v1664 = vld [vmem:[%s1 + $0x32b0] sm:$0xff]
  %v1665 = vld [vmem:[%s1 + $0x32b8] sm:$0xff]
  %v1666 = vld [vmem:[%s1 + $0x32c0] sm:$0xff]
  %v1667 = vld [vmem:[%s1 + $0x32c8] sm:$0xff]
  %v1668 = vld [vmem:[%s1 + $0x32d0] sm:$0xff]
  %v1669 = vld [vmem:[%s1 + $0x32d8] sm:$0xff]
  %v1670 = vld [vmem:[%s1 + $0x32e0] sm:$0xff]
  %v1671 = vld [vmem:[%s1 + $0x32e8] sm:$0xff]
  %v1672 = vld [vmem:[%s1 + $0x32f0] sm:$0xff]
  %v1673 = vld [vmem:[%s1 + $0x32f8] sm:$0xff]
  %v1674 = vld [vmem:[%s1 + $0x3300] sm:$0xff]
  %v1675 = vld [vmem:[%s1 + $0x3308] sm:$0xff]
  %v1676 = vld [vmem:[%s1 + $0x3310] sm:$0xff]
  %v1677 = vld [vmem:[%s1 + $0x3318] sm:$0xff]
  %v1678 = vld [vmem:[%s1 + $0x3320] sm:$0xff]
  %v1679 = vld [vmem:[%s1 + $0x3328] sm:$0xff]
  %v1680 = vld [vmem:[%s1 + $0x3330] sm:$0xff]
  %v1681 = vld [vmem:[%s1 + $0x3338] sm:$0xff]
  %v1682 = vld [vmem:[%s1 + $0x3340] sm:$0xff]
  %v1683 = vld [vmem:[%s1 + $0x3348] sm:$0xff]
  %v1684 = vld [vmem:[%s1 + $0x3350] sm:$0xff]
  %v1685 = vld [vmem:[%s1 + $0x3358] sm:$0xff]
  %v1686 = vld [vmem:[%s1 + $0x3360] sm:$0xff]
  %v1687 = vld [vmem:[%s1 + $0x3368] sm:$0xff]
  %v1688 = vld [vmem:[%s1 + $0x3370] sm:$0xff]
  %v1689 = vld [vmem:[%s1 + $0x3378] sm:$0xff]
  %v1690 = vld [vmem:[%s1 + $0x3380] sm:$0xff]
  %v1691 = vld [vmem:[%s1 + $0x3388] sm:$0xff]
  %v1692 = vld [vmem:[%s1 + $0x3390] sm:$0xff]
  %v1693 = vld [vmem:[%s1 + $0x3398] sm:$0xff]
  %v1694 = vld [vmem:[%s1 + $0x33a0] sm:$0xff]
  %v1695 = vld [vmem:[%s1 + $0x33a8] sm:$0xff]
  %v1696 = vld [vmem:[%s1 + $0x33b0] sm:$0xff]
  %v1697 = vld [vmem:[%s1 + $0x33b8] sm:$0xff]
  %v1698 = vld [vmem:[%s1 + $0x33c0] sm:$0xff]
  %v1699 = vld [vmem:[%s1 + $0x33c8] sm:$0xff]
  %v1700 = vld [vmem:[%s1 + $0x33d0] sm:$0xff]
  %v1701 = vld [vmem:[%s1 + $0x33d8] sm:$0xff]
  %v1702 = vld [vmem:[%s1 + $0x33e0] sm:$0xff]
  %v1703 = vld [vmem:[%s1 + $0x33e8] sm:$0xff]
  %v1704 = vld [vmem:[%s1 + $0x33f0] sm:$0xff]
  %v1705 = vld [vmem:[%s1 + $0x33f8] sm:$0xff]
  %v1706 = vld [vmem:[%s1 + $0x3400] sm:$0xff]
  %v1707 = vld [vmem:[%s1 + $0x3408] sm:$0xff]
  %v1708 = vld [vmem:[%s1 + $0x3410] sm:$0xff]
  %v1709 = vld [vmem:[%s1 + $0x3418] sm:$0xff]
  %v1710 = vld [vmem:[%s1 + $0x3420] sm:$0xff]
  %v1711 = vld [vmem:[%s1 + $0x3428] sm:$0xff]
  %v1712 = vld [vmem:[%s1 + $0x3430] sm:$0xff]
  %v1713 = vld [vmem:[%s1 + $0x3438] sm:$0xff]
  %v1714 = vld [vmem:[%s1 + $0x3440] sm:$0xff]
  %v1715 = vld [vmem:[%s1 + $0x3448] sm:$0xff]
  %v1716 = vld [vmem:[%s1 + $0x3450] sm:$0xff]
  %v1717 = vld [vmem:[%s1 + $0x3458] sm:$0xff]
  %v1718 = vld [vmem:[%s1 + $0x3460] sm:$0xff]
  %v1719 = vld [vmem:[%s1 + $0x3468] sm:$0xff]
  %v1720 = vld [vmem:[%s1 + $0x3470] sm:$0xff]
  %v1721 = vld [vmem:[%s1 + $0x3478] sm:$0xff]
  %v1722 = vld [vmem:[%s1 + $0x3480] sm:$0xff]
  %v1723 = vld [vmem:[%s1 + $0x3488] sm:$0xff]
  %v1724 = vld [vmem:[%s1 + $0x3490] sm:$0xff]
  %v1725 = vld [vmem:[%s1 + $0x3498] sm:$0xff]
  %v1726 = vld [vmem:[%s1 + $0x34a0] sm:$0xff]
  %v1727 = vld [vmem:[%s1 + $0x34a8] sm:$0xff]
  %v1728 = vld [vmem:[%s1 + $0x34b0] sm:$0xff]
  %v1729 = vld [vmem:[%s1 + $0x34b8] sm:$0xff]
  %v1730 = vld [vmem:[%s1 + $0x34c0] sm:$0xff]
  %v1731 = vld [vmem:[%s1 + $0x34c8] sm:$0xff]
  %v1732 = vld [vmem:[%s1 + $0x34d0] sm:$0xff]
  %v1733 = vld [vmem:[%s1 + $0x34d8] sm:$0xff]
  %v1734 = vld [vmem:[%s1 + $0x34e0] sm:$0xff]
  %v1735 = vld [vmem:[%s1 + $0x34e8] sm:$0xff]
  %v1736 = vld [vmem:[%s1 + $0x34f0] sm:$0xff]
  %v1737 = vld [vmem:[%s1 + $0x34f8] sm:$0xff]
  %v1738 = vld [vmem:[%s1 + $0x3500] sm:$0xff]
  %v1739 = vld [vmem:[%s1 + $0x3508] sm:$0xff]
  %v1740 = vld [vmem:[%s1 + $0x3510] sm:$0xff]
  %v1741 = vld [vmem:[%s1 + $0x3518] sm:$0xff]
  %v1742 = vld [vmem:[%s1 + $0x3520] sm:$0xff]
  %v1743 = vld [vmem:[%s1 + $0x3528] sm:$0xff]
  %v1744 = vld [vmem:[%s1 + $0x3530] sm:$0xff]
  %v1745 = vld [vmem:[%s1 + $0x3538] sm:$0xff]
  %v1746 = vld [vmem:[%s1 + $0x3540] sm:$0xff]
  %v1747 = vld [vmem:[%s1 + $0x3548] sm:$0xff]
  %v1748 = vld [vmem:[%s1 + $0x3550] sm:$0xff]
  %v1749 = vld [vmem:[%s1 + $0x3558] sm:$0xff]
  %v1750 = vld [vmem:[%s1 + $0x3560] sm:$0xff]
  %v1751 = vld [vmem:[%s1 + $0x3568] sm:$0xff]
  %v1752 = vld [vmem:[%s1 + $0x3570] sm:$0xff]
  %v1753 = vld [vmem:[%s1 + $0x3578] sm:$0xff]
  %v1754 = vld [vmem:[%s1 + $0x3580] sm:$0xff]
  %v1755 = vld [vmem:[%s1 + $0x3588] sm:$0xff]
  %v1756 = vld [vmem:[%s1 + $0x3590] sm:$0xff]
  %v1757 = vld [vmem:[%s1 + $0x3598] sm:$0xff]
  %v1758 = vld [vmem:[%s1 + $0x35a0] sm:$0xff]
  %v1759 = vld [vmem:[%s1 + $0x35a8] sm:$0xff]
  %v1760 = vld [vmem:[%s1 + $0x35b0] sm:$0xff]
  %v1761 = vld [vmem:[%s1 + $0x35b8] sm:$0xff]
  %v1762 = vld [vmem:[%s1 + $0x35c0] sm:$0xff]
  %v1763 = vld [vmem:[%s1 + $0x35c8] sm:$0xff]
  %v1764 = vld [vmem:[%s1 + $0x35d0] sm:$0xff]
  %v1765 = vld [vmem:[%s1 + $0x35d8] sm:$0xff]
  %v1766 = vld [vmem:[%s1 + $0x35e0] sm:$0xff]
  %v1767 = vld [vmem:[%s1 + $0x35e8] sm:$0xff]
  %v1768 = vld [vmem:[%s1 + $0x35f0] sm:$0xff]
  %v1769 = vld [vmem:[%s1 + $0x35f8] sm:$0xff]
  %v1770 = vld [vmem:[%s1 + $0x3600] sm:$0xff]
  %v1771 = vld [vmem:[%s1 + $0x3608] sm:$0xff]
  %v1772 = vld [vmem:[%s1 + $0x3610] sm:$0xff]
  %v1773 = vld [vmem:[%s1 + $0x3618] sm:$0xff]
  %v1774 = vld [vmem:[%s1 + $0x3620] sm:$0xff]
  %v1775 = vld [vmem:[%s1 + $0x3628] sm:$0xff]
  %v1776 = vld [vmem:[%s1 + $0x3630] sm:$0xff]
  %v1777 = vld [vmem:[%s1 + $0x3638] sm:$0xff]
  %v1778 = vld [vmem:[%s1 + $0x3640] sm:$0xff]
  %v1779 = vld [vmem:[%s1 + $0x3648] sm:$0xff]
  %v1780 = vld [vmem:[%s1 + $0x3650] sm:$0xff]
  %v1781 = vld [vmem:[%s1 + $0x3658] sm:$0xff]
  %v1782 = vld [vmem:[%s1 + $0x3660] sm:$0xff]
  %v1783 = vld [vmem:[%s1 + $0x3668] sm:$0xff]
  %v1784 = vld [vmem:[%s1 + $0x3670] sm:$0xff]
  %v1785 = vld [vmem:[%s1 + $0x3678] sm:$0xff]
  %v1786 = vld [vmem:[%s1 + $0x3680] sm:$0xff]
  %v1787 = vld [vmem:[%s1 + $0x3688] sm:$0xff]
  %v1788 = vld [vmem:[%s1 + $0x3690] sm:$0xff]
  %v1789 = vld [vmem:[%s1 + $0x3698] sm:$0xff]
  %v1790 = vld [vmem:[%s1 + $0x36a0] sm:$0xff]
  %v1791 = vld [vmem:[%s1 + $0x36a8] sm:$0xff]
  %v1792 = vld [vmem:[%s1 + $0x36b0] sm:$0xff]
  %v1793 = vld [vmem:[%s1 + $0x36b8] sm:$0xff]
  %v1794 = vld [vmem:[%s1 + $0x36c0] sm:$0xff]
  %v1795 = vld [vmem:[%s1 + $0x36c8] sm:$0xff]
  %v1796 = vld [vmem:[%s1 + $0x36d0] sm:$0xff]
  %v1797 = vld [vmem:[%s1 + $0x36d8] sm:$0xff]
  %v1798 = vld [vmem:[%s1 + $0x36e0] sm:$0xff]
  %v1799 = vld [vmem:[%s1 + $0x36e8] sm:$0xff]
  %v1800 = vld [vmem:[%s1 + $0x36f0] sm:$0xff]
  %v1801 = vld [vmem:[%s1 + $0x36f8] sm:$0xff]
  %v1802 = vld [vmem:[%s1 + $0x3700] sm:$0xff]
  %v1803 = vld [vmem:[%s1 + $0x3708] sm:$0xff]
  %v1804 = vld [vmem:[%s1 + $0x3710] sm:$0xff]
  %v1805 = vld [vmem:[%s1 + $0x3718] sm:$0xff]
  %v1806 = vld [vmem:[%s1 + $0x3720] sm:$0xff]
  %v1807 = vld [vmem:[%s1 + $0x3728] sm:$0xff]
  %v1808 = vld [vmem:[%s1 + $0x3730] sm:$0xff]
  %v1809 = vld [vmem:[%s1 + $0x3738] sm:$0xff]
  %v1810 = vld [vmem:[%s1 + $0x3740] sm:$0xff]
  %v1811 = vld [vmem:[%s1 + $0x3748] sm:$0xff]
  %v1812 = vld [vmem:[%s1 + $0x3750] sm:$0xff]
  %v1813 = vld [vmem:[%s1 + $0x3758] sm:$0xff]
  %v1814 = vld [vmem:[%s1 + $0x3760] sm:$0xff]
  %v1815 = vld [vmem:[%s1 + $0x3768] sm:$0xff]
  %v1816 = vld [vmem:[%s1 + $0x3770] sm:$0xff]
  %v1817 = vld [vmem:[%s1 + $0x3778] sm:$0xff]
  %v1818 = vld [vmem:[%s1 + $0x3780] sm:$0xff]
  %v1819 = vld [vmem:[%s1 + $0x3788] sm:$0xff]
  %v1820 = vld [vmem:[%s1 + $0x3790] sm:$0xff]
  %v1821 = vld [vmem:[%s1 + $0x3798] sm:$0xff]
  %v1822 = vld [vmem:[%s1 + $0x37a0] sm:$0xff]
  %v1823 = vld [vmem:[%s1 + $0x37a8] sm:$0xff]
  %v1824 = vld [vmem:[%s1 + $0x37b0] sm:$0xff]
  %v1825 = vld [vmem:[%s1 + $0x37b8] sm:$0xff]
  %v1826 = vld [vmem:[%s1 + $0x37c0] sm:$0xff]
  %v1827 = vld [vmem:[%s1 + $0x37c8] sm:$0xff]
  %v1828 = vld [vmem:[%s1 + $0x37d0] sm:$0xff]
  %v1829 = vld [vmem:[%s1 + $0x37d8] sm:$0xff]
  %v1830 = vld [vmem:[%s1 + $0x37e0] sm:$0xff]
  %v1831 = vld [vmem:[%s1 + $0x37e8] sm:$0xff]
  %v1832 = vld [vmem:[%s1 + $0x37f0] sm:$0xff]
  %v1833 = vld [vmem:[%s1 + $0x37f8] sm:$0xff]
  %v1834 = vld [vmem:[%s1 + $0x3800] sm:$0xff]
  %v1835 = vld [vmem:[%s1 + $0x3808] sm:$0xff]
  %v1836 = vld [vmem:[%s1 + $0x3810] sm:$0xff]
  %v1837 = vld [vmem:[%s1 + $0x3818] sm:$0xff]
  %v1838 = vld [vmem:[%s1 + $0x3820] sm:$0xff]
  %v1839 = vld [vmem:[%s1 + $0x3828] sm:$0xff]
  %v1840 = vld [vmem:[%s1 + $0x3830] sm:$0xff]
  %v1841 = vld [vmem:[%s1 + $0x3838] sm:$0xff]
  %v1842 = vld [vmem:[%s1 + $0x3840] sm:$0xff]
  %v1843 = vld [vmem:[%s1 + $0x3848] sm:$0xff]
  %v1844 = vld [vmem:[%s1 + $0x3850] sm:$0xff]
  %v1845 = vld [vmem:[%s1 + $0x3858] sm:$0xff]
  %v1846 = vld [vmem:[%s1 + $0x3860] sm:$0xff]
  %v1847 = vld [vmem:[%s1 + $0x3868] sm:$0xff]
  %v1848 = vld [vmem:[%s1 + $0x3870] sm:$0xff]
  %v1849 = vld [vmem:[%s1 + $0x3878] sm:$0xff]
  %v1850 = vld [vmem:[%s1 + $0x3880] sm:$0xff]
  %v1851 = vld [vmem:[%s1 + $0x3888] sm:$0xff]
  %v1852 = vld [vmem:[%s1 + $0x3890] sm:$0xff]
  %v1853 = vld [vmem:[%s1 + $0x3898] sm:$0xff]
  %v1854 = vld [vmem:[%s1 + $0x38a0] sm:$0xff]
  %v1855 = vld [vmem:[%s1 + $0x38a8] sm:$0xff]
  %v1856 = vld [vmem:[%s1 + $0x38b0] sm:$0xff]
  %v1857 = vld [vmem:[%s1 + $0x38b8] sm:$0xff]
  %v1858 = vld [vmem:[%s1 + $0x38c0] sm:$0xff]
  %v1859 = vld [vmem:[%s1 + $0x38c8] sm:$0xff]
  %v1860 = vld [vmem:[%s1 + $0x38d0] sm:$0xff]
  %v1861 = vld [vmem:[%s1 + $0x38d8] sm:$0xff]
  %v1862 = vld [vmem:[%s1 + $0x38e0] sm:$0xff]
  %v1863 = vld [vmem:[%s1 + $0x38e8] sm:$0xff]
  %v1864 = vld [vmem:[%s1 + $0x38f0] sm:$0xff]
  %v1865 = vld [vmem:[%s1 + $0x38f8] sm:$0xff]
  %v1866 = vld [vmem:[%s1 + $0x3900] sm:$0xff]
  %v1867 = vld [vmem:[%s1 + $0x3908] sm:$0xff]
  %v1868 = vld [vmem:[%s1 + $0x3910] sm:$0xff]
  %v1869 = vld [vmem:[%s1 + $0x3918] sm:$0xff]
  %v1870 = vld [vmem:[%s1 + $0x3920] sm:$0xff]
  %v1871 = vld [vmem:[%s1 + $0x3928] sm:$0xff]
  %v1872 = vld [vmem:[%s1 + $0x3930] sm:$0xff]
  %v1873 = vld [vmem:[%s1 + $0x3938] sm:$0xff]
  %v1874 = vld [vmem:[%s1 + $0x3940] sm:$0xff]
  %v1875 = vld [vmem:[%s1 + $0x3948] sm:$0xff]
  %v1876 = vld [vmem:[%s1 + $0x3950] sm:$0xff]
  %v1877 = vld [vmem:[%s1 + $0x3958] sm:$0xff]
  %v1878 = vld [vmem:[%s1 + $0x3960] sm:$0xff]
  %v1879 = vld [vmem:[%s1 + $0x3968] sm:$0xff]
  %v1880 = vld [vmem:[%s1 + $0x3970] sm:$0xff]
  %v1881 = vld [vmem:[%s1 + $0x3978] sm:$0xff]
  %v1882 = vld [vmem:[%s1 + $0x3980] sm:$0xff]
  %v1883 = vld [vmem:[%s1 + $0x3988] sm:$0xff]
  %v1884 = vld [vmem:[%s1 + $0x3990] sm:$0xff]
  %v1885 = vld [vmem:[%s1 + $0x3998] sm:$0xff]
  %v1886 = vld [vmem:[%s1 + $0x39a0] sm:$0xff]
  %v1887 = vld [vmem:[%s1 + $0x39a8] sm:$0xff]
  %v1888 = vld [vmem:[%s1 + $0x39b0] sm:$0xff]
  %v1889 = vld [vmem:[%s1 + $0x39b8] sm:$0xff]
  %v1890 = vld [vmem:[%s1 + $0x39c0] sm:$0xff]
  %v1891 = vld [vmem:[%s1 + $0x39c8] sm:$0xff]
  %v1892 = vld [vmem:[%s1 + $0x39d0] sm:$0xff]
  %v1893 = vld [vmem:[%s1 + $0x39d8] sm:$0xff]
  %v1894 = vld [vmem:[%s1 + $0x39e0] sm:$0xff]
  %v1895 = vld [vmem:[%s1 + $0x39e8] sm:$0xff]
  %v1896 = vld [vmem:[%s1 + $0x39f0] sm:$0xff]
  %v1897 = vld [vmem:[%s1 + $0x39f8] sm:$0xff]
  %v1898 = vld [vmem:[%s1 + $0x3a00] sm:$0xff]
  %v1899 = vld [vmem:[%s1 + $0x3a08] sm:$0xff]
  %v1900 = vld [vmem:[%s1 + $0x3a10] sm:$0xff]
  %v1901 = vld [vmem:[%s1 + $0x3a18] sm:$0xff]
  %v1902 = vld [vmem:[%s1 + $0x3a20] sm:$0xff]
  %v1903 = vld [vmem:[%s1 + $0x3a28] sm:$0xff]
  %v1904 = vld [vmem:[%s1 + $0x3a30] sm:$0xff]
  %v1905 = vld [vmem:[%s1 + $0x3a38] sm:$0xff]
  %v1906 = vld [vmem:[%s1 + $0x3a40] sm:$0xff]
  %v1907 = vld [vmem:[%s1 + $0x3a48] sm:$0xff]
  %v1908 = vld [vmem:[%s1 + $0x3a50] sm:$0xff]
  %v1909 = vld [vmem:[%s1 + $0x3a58] sm:$0xff]
  %v1910 = vld [vmem:[%s1 + $0x3a60] sm:$0xff]
  %v1911 = vld [vmem:[%s1 + $0x3a68] sm:$0xff]
  %v1912 = vld [vmem:[%s1 + $0x3a70] sm:$0xff]
  %v1913 = vld [vmem:[%s1 + $0x3a78] sm:$0xff]
  %v1914 = vld [vmem:[%s1 + $0x3a80] sm:$0xff]
  %v1915 = vld [vmem:[%s1 + $0x3a88] sm:$0xff]
  %v1916 = vld [vmem:[%s1 + $0x3a90] sm:$0xff]
  %v1917 = vld [vmem:[%s1 + $0x3a98] sm:$0xff]
  %v1918 = vld [vmem:[%s1 + $0x3aa0] sm:$0xff]
  %v1919 = vld [vmem:[%s1 + $0x3aa8] sm:$0xff]
  %v1920 = vld [vmem:[%s1 + $0x3ab0] sm:$0xff]
  %v1921 = vld [vmem:[%s1 + $0x3ab8] sm:$0xff]
  %v1922 = vld [vmem:[%s1 + $0x3ac0] sm:$0xff]
  %v1923 = vld [vmem:[%s1 + $0x3ac8] sm:$0xff]
  %v1924 = vld [vmem:[%s1 + $0x3ad0] sm:$0xff]
  %v1925 = vld [vmem:[%s1 + $0x3ad8] sm:$0xff]
  %v1926 = vld [vmem:[%s1 + $0x3ae0] sm:$0xff]
  %v1927 = vld [vmem:[%s1 + $0x3ae8] sm:$0xff]
  %v1928 = vld [vmem:[%s1 + $0x3af0] sm:$0xff]
  %v1929 = vld [vmem:[%s1 + $0x3af8] sm:$0xff]
  %v1930 = vld [vmem:[%s1 + $0x3b00] sm:$0xff]
  %v1931 = vld [vmem:[%s1 + $0x3b08] sm:$0xff]
  %v1932 = vld [vmem:[%s1 + $0x3b10] sm:$0xff]
  %v1933 = vld [vmem:[%s1 + $0x3b18] sm:$0xff]
  %v1934 = vld [vmem:[%s1 + $0x3b20] sm:$0xff]
  %v1935 = vld [vmem:[%s1 + $0x3b28] sm:$0xff]
  %v1936 = vld [vmem:[%s1 + $0x3b30] sm:$0xff]
  %v1937 = vld [vmem:[%s1 + $0x3b38] sm:$0xff]
  %v1938 = vld [vmem:[%s1 + $0x3b40] sm:$0xff]
  %v1939 = vld [vmem:[%s1 + $0x3b48] sm:$0xff]
  %v1940 = vld [vmem:[%s1 + $0x3b50] sm:$0xff]
  %v1941 = vld [vmem:[%s1 + $0x3b58] sm:$0xff]
  %v1942 = vld [vmem:[%s1 + $0x3b60] sm:$0xff]
  %v1943 = vld [vmem:[%s1 + $0x3b68] sm:$0xff]
  %v1944 = vld [vmem:[%s1 + $0x3b70] sm:$0xff]
  %v1945 = vld [vmem:[%s1 + $0x3b78] sm:$0xff]
  %v1946 = vld [vmem:[%s1 + $0x3b80] sm:$0xff]
  %v1947 = vld [vmem:[%s1 + $0x3b88] sm:$0xff]
  %v1948 = vld [vmem:[%s1 + $0x3b90] sm:$0xff]
  %v1949 = vld [vmem:[%s1 + $0x3b98] sm:$0xff]
  %v1950 = vld [vmem:[%s1 + $0x3ba0] sm:$0xff]
  %v1951 = vld [vmem:[%s1 + $0x3ba8] sm:$0xff]
  %v1952 = vld [vmem:[%s1 + $0x3bb0] sm:$0xff]
  %v1953 = vld [vmem:[%s1 + $0x3bb8] sm:$0xff]
  %v1954 = vld [vmem:[%s1 + $0x3bc0] sm:$0xff]
  %v1955 = vld [vmem:[%s1 + $0x3bc8] sm:$0xff]
  %v1956 = vld [vmem:[%s1 + $0x3bd0] sm:$0xff]
  %v1957 = vld [vmem:[%s1 + $0x3bd8] sm:$0xff]
  %v1958 = vld [vmem:[%s1 + $0x3be0] sm:$0xff]
  %v1959 = vld [vmem:[%s1 + $0x3be8] sm:$0xff]
  %v1960 = vld [vmem:[%s1 + $0x3bf0] sm:$0xff]
  %v1961 = vld [vmem:[%s1 + $0x3bf8] sm:$0xff]
  %v1962 = vld [vmem:[%s1 + $0x3c00] sm:$0xff]
  %v1963 = vld [vmem:[%s1 + $0x3c08] sm:$0xff]
  %v1964 = vld [vmem:[%s1 + $0x3c10] sm:$0xff]
  %v1965 = vld [vmem:[%s1 + $0x3c18] sm:$0xff]
  %v1966 = vld [vmem:[%s1 + $0x3c20] sm:$0xff]
  %v1967 = vld [vmem:[%s1 + $0x3c28] sm:$0xff]
  %v1968 = vld [vmem:[%s1 + $0x3c30] sm:$0xff]
  %v1969 = vld [vmem:[%s1 + $0x3c38] sm:$0xff]
  %v1970 = vld [vmem:[%s1 + $0x3c40] sm:$0xff]
  %v1971 = vld [vmem:[%s1 + $0x3c48] sm:$0xff]
  %v1972 = vld [vmem:[%s1 + $0x3c50] sm:$0xff]
  %v1973 = vld [vmem:[%s1 + $0x3c58] sm:$0xff]
  %v1974 = vld [vmem:[%s1 + $0x3c60] sm:$0xff]
  %v1975 = vld [vmem:[%s1 + $0x3c68] sm:$0xff]
  %v1976 = vld [vmem:[%s1 + $0x3c70] sm:$0xff]
  %v1977 = vld [vmem:[%s1 + $0x3c78] sm:$0xff]
  %v1978 = vld [vmem:[%s1 + $0x3c80] sm:$0xff]
  %v1979 = vld [vmem:[%s1 + $0x3c88] sm:$0xff]
  %v1980 = vld [vmem:[%s1 + $0x3c90] sm:$0xff]
  %v1981 = vld [vmem:[%s1 + $0x3c98] sm:$0xff]
  %v1982 = vld [vmem:[%s1 + $0x3ca0] sm:$0xff]
  %v1983 = vld [vmem:[%s1 + $0x3ca8] sm:$0xff]
  %v1984 = vld [vmem:[%s1 + $0x3cb0] sm:$0xff]
  %v1985 = vld [vmem:[%s1 + $0x3cb8] sm:$0xff]
  %v1986 = vld [vmem:[%s1 + $0x3cc0] sm:$0xff]
  %v1987 = vld [vmem:[%s1 + $0x3cc8] sm:$0xff]
  %v1988 = vld [vmem:[%s1 + $0x3cd0] sm:$0xff]
  %v1989 = vld [vmem:[%s1 + $0x3cd8] sm:$0xff]
  %v1990 = vld [vmem:[%s1 + $0x3ce0] sm:$0xff]
  %v1991 = vld [vmem:[%s1 + $0x3ce8] sm:$0xff]
  %v1992 = vld [vmem:[%s1 + $0x3cf0] sm:$0xff]
  %v1993 = vld [vmem:[%s1 + $0x3cf8] sm:$0xff]
  %v1994 = vld [vmem:[%s1 + $0x3d00] sm:$0xff]
  %v1995 = vld [vmem:[%s1 + $0x3d08] sm:$0xff]
  %v1996 = vld [vmem:[%s1 + $0x3d10] sm:$0xff]
  %v1997 = vld [vmem:[%s1 + $0x3d18] sm:$0xff]
  %v1998 = vld [vmem:[%s1 + $0x3d20] sm:$0xff]
  %v1999 = vld [vmem:[%s1 + $0x3d28] sm:$0xff]
  %v2000 = vld [vmem:[%s1 + $0x3d30] sm:$0xff]
  %v2001 = vld [vmem:[%s1 + $0x3d38] sm:$0xff]
  %v2002 = vld [vmem:[%s2] sm:$0xff]
  %v2004 = vlaneseq
  %v2005 = vshrl.u32 %v2004, 7
  %v2006 = vsub.s32 0, %v2005
  %v2007 = vrot.slane %v2002, %v2006
  %v2008 = vlaneseq
  %v2009 = vshrl.u32 %v2008, 7
  %v2010 = vsub.s32 1, %v2009
  %v2011 = vrot.slane %v2002, %v2010
  %v2012 = vlaneseq
  %v2013 = vshrl.u32 %v2012, 7
  %v2014 = vsub.s32 2, %v2013
  %v2015 = vrot.slane %v2002, %v2014
  %v2016 = vlaneseq
  %v2017 = vshrl.u32 %v2016, 7
  %v2018 = vsub.s32 3, %v2017
  %v2019 = vrot.slane %v2002, %v2018
  %v2020 = vlaneseq
  %v2021 = vshrl.u32 %v2020, 7
  %v2022 = vsub.s32 4, %v2021
  %v2023 = vrot.slane %v2002, %v2022
  %v2024 = vlaneseq
  %v2025 = vshrl.u32 %v2024, 7
  %v2026 = vsub.s32 5, %v2025
  %v2027 = vrot.slane %v2002, %v2026
  %v2028 = vlaneseq
  %v2029 = vshrl.u32 %v2028, 7
  %v2030 = vsub.s32 6, %v2029
  %v2031 = vrot.slane %v2002, %v2030
  %v2032 = vlaneseq
  %v2033 = vshrl.u32 %v2032, 7
  %v2034 = vsub.s32 7, %v2033
  %v2035 = vrot.slane %v2002, %v2034
  %vm2044 = vcmask 326656
  %v2046 = vsel %vm2044, %v41, 0
  %2048 = vmatprep.subr.mxu0 %v163
  %2049 = vmatpush1.msra.mxu0 %v162
  %2050 = vmatprep.subr.mxu0 %v155
  %2051 = vmatpush1.msra.mxu0 %v154
  %2052 = vmatprep.subr.mxu0 %v147
  %2053 = vmatpush1.msra.mxu0 %v146
  %2054 = vmatprep.subr.mxu0 %v139
  %2055 = vmatpush1.msra.mxu0 %v138
  %2056 = vmatprep.subr.mxu0 %v131
  %2057 = vmatpush1.msra.mxu0 %v130
  %2058 = vmatprep.subr.mxu0 %v123
  %2059 = vmatpush1.msra.mxu0 %v122
  %2060 = vmatprep.subr.mxu0 %v115
  %2061 = vmatpush1.msra.mxu0 %v114
  %2062 = vmatprep.subr.mxu0 %v107
  %2063 = vmatpush1.msra.mxu0 %v106
  %2064 = vmatprep.subr.mxu0 %v99
  %2065 = vmatpush1.msra.mxu0 %v98
  %2066 = vmatprep.subr.mxu0 %v91
  %2067 = vmatpush1.msra.mxu0 %v90
  %2068 = vmatprep.subr.mxu0 %v83
  %2069 = vmatpush1.msra.mxu0 %v82
  %2070 = vmatprep.subr.mxu0 %v75
  %2071 = vmatpush1.msra.mxu0 %v74
  %2072 = vmatprep.subr.mxu0 %v67
  %2073 = vmatpush1.msra.mxu0 %v66
  %2074 = vmatprep.subr.mxu0 %v59
  %2075 = vmatpush1.msra.mxu0 %v58
  %2076 = vmatprep.subr.mxu0 %v51
  %2077 = vmatpush1.msra.mxu0 %v50
  %2078 = vmatprep.subr.mxu0 %v43
  %2079 = vmatpush1.msra.mxu0 %v42
  %2080 = vmatprep.subr.mxu0 %v291
  %2081 = vmatpush2.msra.mxu0 %v290
  %2082 = vmatprep.subr.mxu0 %v283
  %2083 = vmatpush2.msra.mxu0 %v282
  %2084 = vmatprep.subr.mxu0 %v275
  %2085 = vmatpush2.msra.mxu0 %v274
  %2086 = vmatprep.subr.mxu0 %v267
  %2087 = vmatpush2.msra.mxu0 %v266
  %2088 = vmatprep.subr.mxu0 %v259
  %2089 = vmatpush2.msra.mxu0 %v258
  %2090 = vmatprep.subr.mxu0 %v251
  %2091 = vmatpush2.msra.mxu0 %v250
  %2092 = vmatprep.subr.mxu0 %v243
  %2093 = vmatpush2.msra.mxu0 %v242
  %2094 = vmatprep.subr.mxu0 %v235
  %2095 = vmatpush2.msra.mxu0 %v234
  %2096 = vmatprep.subr.mxu0 %v227
  %2097 = vmatpush2.msra.mxu0 %v226
  %2098 = vmatprep.subr.mxu0 %v219
  %2099 = vmatpush2.msra.mxu0 %v218
  %2100 = vmatprep.subr.mxu0 %v211
  %2101 = vmatpush2.msra.mxu0 %v210
  %2102 = vmatprep.subr.mxu0 %v203
  %2103 = vmatpush2.msra.mxu0 %v202
  %2104 = vmatprep.subr.mxu0 %v195
  %2105 = vmatpush2.msra.mxu0 %v194
  %2106 = vmatprep.subr.mxu0 %v187
  %2107 = vmatpush2.msra.mxu0 %v186
  %2108 = vmatprep.subr.mxu0 %v179
  %2109 = vmatpush2.msra.mxu0 %v178
  %2110 = vmatprep.subr.mxu0 %v171
  %2111 = vmatpush2.msra.mxu0 %v170
  %2112 = vmatprep.mubr.f32.mxu0 %v27
  %2113 = vmatmul.mubr.f32.gmra.mxu0 %v26
  %v2114 = vpop.f32.mrf.mxu0
  %v2115 = vadd.f32 %v2007, %v2114
  %v2116 = vpop.f32.mrf.mxu0
  %v2117 = vadd.f32 %v2011, %v2116
  %2118 = vdwg.mxu0
  %2119 = vmatprep.subr.mxu0 %v419
  %2120 = vmatpush1.msra.mxu0 %v418
  %2121 = vmatprep.subr.mxu0 %v411
  %2122 = vmatpush1.msra.mxu0 %v410
  %2123 = vmatprep.subr.mxu0 %v403
  %2124 = vmatpush1.msra.mxu0 %v402
  %2125 = vmatprep.subr.mxu0 %v395
  %2126 = vmatpush1.msra.mxu0 %v394
  %2127 = vmatprep.subr.mxu0 %v387
  %2128 = vmatpush1.msra.mxu0 %v386
  %2129 = vmatprep.subr.mxu0 %v379
  %2130 = vmatpush1.msra.mxu0 %v378
  %2131 = vmatprep.subr.mxu0 %v371
  %2132 = vmatpush1.msra.mxu0 %v370
  %2133 = vmatprep.subr.mxu0 %v363
  %2134 = vmatpush1.msra.mxu0 %v362
  %2135 = vmatprep.subr.mxu0 %v355
  %2136 = vmatpush1.msra.mxu0 %v354
  %2137 = vmatprep.subr.mxu0 %v347
  %2138 = vmatpush1.msra.mxu0 %v346
  %2139 = vmatprep.subr.mxu0 %v339
  %2140 = vmatpush1.msra.mxu0 %v338
  %2141 = vmatprep.subr.mxu0 %v331
  %2142 = vmatpush1.msra.mxu0 %v330
  %2143 = vmatprep.subr.mxu0 %v323
  %2144 = vmatpush1.msra.mxu0 %v322
  %2145 = vmatprep.subr.mxu0 %v315
  %2146 = vmatpush1.msra.mxu0 %v314
  %2147 = vmatprep.subr.mxu0 %v307
  %2148 = vmatpush1.msra.mxu0 %v306
  %2149 = vmatprep.subr.mxu0 %v299
  %2150 = vmatpush1.msra.mxu0 %v298
  %2151 = vmatprep.subr.mxu0 %v547
  %2152 = vmatpush2.msra.mxu0 %v546
  %2153 = vmatprep.subr.mxu0 %v539
  %2154 = vmatpush2.msra.mxu0 %v538
  %2155 = vmatprep.subr.mxu0 %v531
  %2156 = vmatpush2.msra.mxu0 %v530
  %2157 = vmatprep.subr.mxu0 %v523
  %2158 = vmatpush2.msra.mxu0 %v522
  %2159 = vmatprep.subr.mxu0 %v515
  %2160 = vmatpush2.msra.mxu0 %v514
  %2161 = vmatprep.subr.mxu0 %v507
  %2162 = vmatpush2.msra.mxu0 %v506
  %2163 = vmatprep.subr.mxu0 %v499
  %2164 = vmatpush2.msra.mxu0 %v498
  %2165 = vmatprep.subr.mxu0 %v491
  %2166 = vmatpush2.msra.mxu0 %v490
  %2167 = vmatprep.subr.mxu0 %v483
  %2168 = vmatpush2.msra.mxu0 %v482
  %2169 = vmatprep.subr.mxu0 %v475
  %2170 = vmatpush2.msra.mxu0 %v474
  %2171 = vmatprep.subr.mxu0 %v467
  %2172 = vmatpush2.msra.mxu0 %v466
  %2173 = vmatprep.subr.mxu0 %v459
  %2174 = vmatpush2.msra.mxu0 %v458
  %2175 = vmatprep.subr.mxu0 %v451
  %2176 = vmatpush2.msra.mxu0 %v450
  %2177 = vmatprep.subr.mxu0 %v443
  %2178 = vmatpush2.msra.mxu0 %v442
  %2179 = vmatprep.subr.mxu0 %v435
  %2180 = vmatpush2.msra.mxu0 %v434
  %2181 = vmatprep.subr.mxu0 %v427
  %2182 = vmatpush2.msra.mxu0 %v426
  %2183 = vmatprep.mubr.f32.mxu0 %v29
  %2184 = vmatmul.mubr.f32.gmra.mxu0 %v28
  %v2185 = vpop.f32.mrf.mxu0
  %v2186 = vadd.f32 %v2115, %v2185
  %v2187 = vpop.f32.mrf.mxu0
  %v2188 = vadd.f32 %v2117, %v2187
  %2189 = vdwg.mxu0
  %2190 = vmatprep.subr.mxu0 %v675
  %2191 = vmatpush1.msra.mxu0 %v674
  %2192 = vmatprep.subr.mxu0 %v667
  %2193 = vmatpush1.msra.mxu0 %v666
  %2194 = vmatprep.subr.mxu0 %v659
  %2195 = vmatpush1.msra.mxu0 %v658
  %2196 = vmatprep.subr.mxu0 %v651
  %2197 = vmatpush1.msra.mxu0 %v650
  %2198 = vmatprep.subr.mxu0 %v643
  %2199 = vmatpush1.msra.mxu0 %v642
  %2200 = vmatprep.subr.mxu0 %v635
  %2201 = vmatpush1.msra.mxu0 %v634
  %2202 = vmatprep.subr.mxu0 %v627
  %2203 = vmatpush1.msra.mxu0 %v626
  %2204 = vmatprep.subr.mxu0 %v619
  %2205 = vmatpush1.msra.mxu0 %v618
  %2206 = vmatprep.subr.mxu0 %v611
  %2207 = vmatpush1.msra.mxu0 %v610
  %2208 = vmatprep.subr.mxu0 %v603
  %2209 = vmatpush1.msra.mxu0 %v602
  %2210 = vmatprep.subr.mxu0 %v595
  %2211 = vmatpush1.msra.mxu0 %v594
  %2212 = vmatprep.subr.mxu0 %v587
  %2213 = vmatpush1.msra.mxu0 %v586
  %2214 = vmatprep.subr.mxu0 %v579
  %2215 = vmatpush1.msra.mxu0 %v578
  %2216 = vmatprep.subr.mxu0 %v571
  %2217 = vmatpush1.msra.mxu0 %v570
  %2218 = vmatprep.subr.mxu0 %v563
  %2219 = vmatpush1.msra.mxu0 %v562
  %2220 = vmatprep.subr.mxu0 %v555
  %2221 = vmatpush1.msra.mxu0 %v554
  %2222 = vmatprep.subr.mxu0 %v803
  %2223 = vmatpush2.msra.mxu0 %v802
  %2224 = vmatprep.subr.mxu0 %v795
  %2225 = vmatpush2.msra.mxu0 %v794
  %2226 = vmatprep.subr.mxu0 %v787
  %2227 = vmatpush2.msra.mxu0 %v786
  %2228 = vmatprep.subr.mxu0 %v779
  %2229 = vmatpush2.msra.mxu0 %v778
  %2230 = vmatprep.subr.mxu0 %v771
  %2231 = vmatpush2.msra.mxu0 %v770
  %2232 = vmatprep.subr.mxu0 %v763
  %2233 = vmatpush2.msra.mxu0 %v762
  %2234 = vmatprep.subr.mxu0 %v755
  %2235 = vmatpush2.msra.mxu0 %v754
  %2236 = vmatprep.subr.mxu0 %v747
  %2237 = vmatpush2.msra.mxu0 %v746
  %2238 = vmatprep.subr.mxu0 %v739
  %2239 = vmatpush2.msra.mxu0 %v738
  %2240 = vmatprep.subr.mxu0 %v731
  %2241 = vmatpush2.msra.mxu0 %v730
  %2242 = vmatprep.subr.mxu0 %v723
  %2243 = vmatpush2.msra.mxu0 %v722
  %2244 = vmatprep.subr.mxu0 %v715
  %2245 = vmatpush2.msra.mxu0 %v714
  %2246 = vmatprep.subr.mxu0 %v707
  %2247 = vmatpush2.msra.mxu0 %v706
  %2248 = vmatprep.subr.mxu0 %v699
  %2249 = vmatpush2.msra.mxu0 %v698
  %2250 = vmatprep.subr.mxu0 %v691
  %2251 = vmatpush2.msra.mxu0 %v690
  %2252 = vmatprep.subr.mxu0 %v683
  %2253 = vmatpush2.msra.mxu0 %v682
  %2254 = vmatprep.mubr.f32.mxu0 %v31
  %2255 = vmatmul.mubr.f32.gmra.mxu0 %v30
  %v2256 = vpop.f32.mrf.mxu0
  %v2257 = vadd.f32 %v2186, %v2256
  %v2258 = vpop.f32.mrf.mxu0
  %v2259 = vadd.f32 %v2188, %v2258
  %2260 = vdwg.mxu0
  %2261 = vmatprep.subr.mxu0 %v931
  %2262 = vmatpush1.msra.mxu0 %v930
  %2263 = vmatprep.subr.mxu0 %v923
  %2264 = vmatpush1.msra.mxu0 %v922
  %2265 = vmatprep.subr.mxu0 %v915
  %2266 = vmatpush1.msra.mxu0 %v914
  %2267 = vmatprep.subr.mxu0 %v907
  %2268 = vmatpush1.msra.mxu0 %v906
  %2269 = vmatprep.subr.mxu0 %v899
  %2270 = vmatpush1.msra.mxu0 %v898
  %2271 = vmatprep.subr.mxu0 %v891
  %2272 = vmatpush1.msra.mxu0 %v890
  %2273 = vmatprep.subr.mxu0 %v883
  %2274 = vmatpush1.msra.mxu0 %v882
  %2275 = vmatprep.subr.mxu0 %v875
  %2276 = vmatpush1.msra.mxu0 %v874
  %2277 = vmatprep.subr.mxu0 %v867
  %2278 = vmatpush1.msra.mxu0 %v866
  %2279 = vmatprep.subr.mxu0 %v859
  %2280 = vmatpush1.msra.mxu0 %v858
  %2281 = vmatprep.subr.mxu0 %v851
  %2282 = vmatpush1.msra.mxu0 %v850
  %2283 = vmatprep.subr.mxu0 %v843
  %2284 = vmatpush1.msra.mxu0 %v842
  %2285 = vmatprep.subr.mxu0 %v835
  %2286 = vmatpush1.msra.mxu0 %v834
  %2287 = vmatprep.subr.mxu0 %v827
  %2288 = vmatpush1.msra.mxu0 %v826
  %2289 = vmatprep.subr.mxu0 %v819
  %2290 = vmatpush1.msra.mxu0 %v818
  %2291 = vmatprep.subr.mxu0 %v811
  %2292 = vmatpush1.msra.mxu0 %v810
  %2293 = vmatprep.subr.mxu0 %v1059
  %2294 = vmatpush2.msra.mxu0 %v1058
  %2295 = vmatprep.subr.mxu0 %v1051
  %2296 = vmatpush2.msra.mxu0 %v1050
  %2297 = vmatprep.subr.mxu0 %v1043
  %2298 = vmatpush2.msra.mxu0 %v1042
  %2299 = vmatprep.subr.mxu0 %v1035
  %2300 = vmatpush2.msra.mxu0 %v1034
  %2301 = vmatprep.subr.mxu0 %v1027
  %2302 = vmatpush2.msra.mxu0 %v1026
  %2303 = vmatprep.subr.mxu0 %v1019
  %2304 = vmatpush2.msra.mxu0 %v1018
  %2305 = vmatprep.subr.mxu0 %v1011
  %2306 = vmatpush2.msra.mxu0 %v1010
  %2307 = vmatprep.subr.mxu0 %v1003
  %2308 = vmatpush2.msra.mxu0 %v1002
  %2309 = vmatprep.subr.mxu0 %v995
  %2310 = vmatpush2.msra.mxu0 %v994
  %2311 = vmatprep.subr.mxu0 %v987
  %2312 = vmatpush2.msra.mxu0 %v986
  %2313 = vmatprep.subr.mxu0 %v979
  %2314 = vmatpush2.msra.mxu0 %v978
  %2315 = vmatprep.subr.mxu0 %v971
  %2316 = vmatpush2.msra.mxu0 %v970
  %2317 = vmatprep.subr.mxu0 %v963
  %2318 = vmatpush2.msra.mxu0 %v962
  %2319 = vmatprep.subr.mxu0 %v955
  %2320 = vmatpush2.msra.mxu0 %v954
  %2321 = vmatprep.subr.mxu0 %v947
  %2322 = vmatpush2.msra.mxu0 %v946
  %2323 = vmatprep.subr.mxu0 %v939
  %2324 = vmatpush2.msra.mxu0 %v938
  %2325 = vmatprep.mubr.f32.mxu0 %v33
  %2326 = vmatmul.mubr.f32.gmra.mxu0 %v32
  %v2327 = vpop.f32.mrf.mxu0
  %v2328 = vadd.f32 %v2257, %v2327
  %v2329 = vpop.f32.mrf.mxu0
  %v2330 = vadd.f32 %v2259, %v2329
  %2331 = vdwg.mxu0
  %2332 = vmatprep.subr.mxu0 %v1187
  %2333 = vmatpush1.msra.mxu0 %v1186
  %2334 = vmatprep.subr.mxu0 %v1179
  %2335 = vmatpush1.msra.mxu0 %v1178
  %2336 = vmatprep.subr.mxu0 %v1171
  %2337 = vmatpush1.msra.mxu0 %v1170
  %2338 = vmatprep.subr.mxu0 %v1163
  %2339 = vmatpush1.msra.mxu0 %v1162
  %2340 = vmatprep.subr.mxu0 %v1155
  %2341 = vmatpush1.msra.mxu0 %v1154
  %2342 = vmatprep.subr.mxu0 %v1147
  %2343 = vmatpush1.msra.mxu0 %v1146
  %2344 = vmatprep.subr.mxu0 %v1139
  %2345 = vmatpush1.msra.mxu0 %v1138
  %2346 = vmatprep.subr.mxu0 %v1131
  %2347 = vmatpush1.msra.mxu0 %v1130
  %2348 = vmatprep.subr.mxu0 %v1123
  %2349 = vmatpush1.msra.mxu0 %v1122
  %2350 = vmatprep.subr.mxu0 %v1115
  %2351 = vmatpush1.msra.mxu0 %v1114
  %2352 = vmatprep.subr.mxu0 %v1107
  %2353 = vmatpush1.msra.mxu0 %v1106
  %2354 = vmatprep.subr.mxu0 %v1099
  %2355 = vmatpush1.msra.mxu0 %v1098
  %2356 = vmatprep.subr.mxu0 %v1091
  %2357 = vmatpush1.msra.mxu0 %v1090
  %2358 = vmatprep.subr.mxu0 %v1083
  %2359 = vmatpush1.msra.mxu0 %v1082
  %2360 = vmatprep.subr.mxu0 %v1075
  %2361 = vmatpush1.msra.mxu0 %v1074
  %2362 = vmatprep.subr.mxu0 %v1067
  %2363 = vmatpush1.msra.mxu0 %v1066
  %2364 = vmatprep.subr.mxu0 %v1315
  %2365 = vmatpush2.msra.mxu0 %v1314
  %2366 = vmatprep.subr.mxu0 %v1307
  %2367 = vmatpush2.msra.mxu0 %v1306
  %2368 = vmatprep.subr.mxu0 %v1299
  %2369 = vmatpush2.msra.mxu0 %v1298
  %2370 = vmatprep.subr.mxu0 %v1291
  %2371 = vmatpush2.msra.mxu0 %v1290
  %2372 = vmatprep.subr.mxu0 %v1283
  %2373 = vmatpush2.msra.mxu0 %v1282
  %2374 = vmatprep.subr.mxu0 %v1275
  %2375 = vmatpush2.msra.mxu0 %v1274
  %2376 = vmatprep.subr.mxu0 %v1267
  %2377 = vmatpush2.msra.mxu0 %v1266
  %2378 = vmatprep.subr.mxu0 %v1259
  %2379 = vmatpush2.msra.mxu0 %v1258
  %2380 = vmatprep.subr.mxu0 %v1251
  %2381 = vmatpush2.msra.mxu0 %v1250
  %2382 = vmatprep.subr.mxu0 %v1243
  %2383 = vmatpush2.msra.mxu0 %v1242
  %2384 = vmatprep.subr.mxu0 %v1235
  %2385 = vmatpush2.msra.mxu0 %v1234
  %2386 = vmatprep.subr.mxu0 %v1227
  %2387 = vmatpush2.msra.mxu0 %v1226
  %2388 = vmatprep.subr.mxu0 %v1219
  %2389 = vmatpush2.msra.mxu0 %v1218
  %2390 = vmatprep.subr.mxu0 %v1211
  %2391 = vmatpush2.msra.mxu0 %v1210
  %2392 = vmatprep.subr.mxu0 %v1203
  %2393 = vmatpush2.msra.mxu0 %v1202
  %2394 = vmatprep.subr.mxu0 %v1195
  %2395 = vmatpush2.msra.mxu0 %v1194
  %2396 = vmatprep.mubr.f32.mxu0 %v35
  %2397 = vmatmul.mubr.f32.gmra.mxu0 %v34
  %v2398 = vpop.f32.mrf.mxu0
  %v2399 = vadd.f32 %v2328, %v2398
  %v2400 = vpop.f32.mrf.mxu0
  %v2401 = vadd.f32 %v2330, %v2400
  %2402 = vdwg.mxu0
  %2403 = vmatprep.subr.mxu0 %v1443
  %2404 = vmatpush1.msra.mxu0 %v1442
  %2405 = vmatprep.subr.mxu0 %v1435
  %2406 = vmatpush1.msra.mxu0 %v1434
  %2407 = vmatprep.subr.mxu0 %v1427
  %2408 = vmatpush1.msra.mxu0 %v1426
  %2409 = vmatprep.subr.mxu0 %v1419
  %2410 = vmatpush1.msra.mxu0 %v1418
  %2411 = vmatprep.subr.mxu0 %v1411
  %2412 = vmatpush1.msra.mxu0 %v1410
  %2413 = vmatprep.subr.mxu0 %v1403
  %2414 = vmatpush1.msra.mxu0 %v1402
  %2415 = vmatprep.subr.mxu0 %v1395
  %2416 = vmatpush1.msra.mxu0 %v1394
  %2417 = vmatprep.subr.mxu0 %v1387
  %2418 = vmatpush1.msra.mxu0 %v1386
  %2419 = vmatprep.subr.mxu0 %v1379
  %2420 = vmatpush1.msra.mxu0 %v1378
  %2421 = vmatprep.subr.mxu0 %v1371
  %2422 = vmatpush1.msra.mxu0 %v1370
  %2423 = vmatprep.subr.mxu0 %v1363
  %2424 = vmatpush1.msra.mxu0 %v1362
  %2425 = vmatprep.subr.mxu0 %v1355
  %2426 = vmatpush1.msra.mxu0 %v1354
  %2427 = vmatprep.subr.mxu0 %v1347
  %2428 = vmatpush1.msra.mxu0 %v1346
  %2429 = vmatprep.subr.mxu0 %v1339
  %2430 = vmatpush1.msra.mxu0 %v1338
  %2431 = vmatprep.subr.mxu0 %v1331
  %2432 = vmatpush1.msra.mxu0 %v1330
  %2433 = vmatprep.subr.mxu0 %v1323
  %2434 = vmatpush1.msra.mxu0 %v1322
  %2435 = vmatprep.subr.mxu0 %v1571
  %2436 = vmatpush2.msra.mxu0 %v1570
  %2437 = vmatprep.subr.mxu0 %v1563
  %2438 = vmatpush2.msra.mxu0 %v1562
  %2439 = vmatprep.subr.mxu0 %v1555
  %2440 = vmatpush2.msra.mxu0 %v1554
  %2441 = vmatprep.subr.mxu0 %v1547
  %2442 = vmatpush2.msra.mxu0 %v1546
  %2443 = vmatprep.subr.mxu0 %v1539
  %2444 = vmatpush2.msra.mxu0 %v1538
  %2445 = vmatprep.subr.mxu0 %v1531
  %2446 = vmatpush2.msra.mxu0 %v1530
  %2447 = vmatprep.subr.mxu0 %v1523
  %2448 = vmatpush2.msra.mxu0 %v1522
  %2449 = vmatprep.subr.mxu0 %v1515
  %2450 = vmatpush2.msra.mxu0 %v1514
  %2451 = vmatprep.subr.mxu0 %v1507
  %2452 = vmatpush2.msra.mxu0 %v1506
  %2453 = vmatprep.subr.mxu0 %v1499
  %2454 = vmatpush2.msra.mxu0 %v1498
  %2455 = vmatprep.subr.mxu0 %v1491
  %2456 = vmatpush2.msra.mxu0 %v1490
  %2457 = vmatprep.subr.mxu0 %v1483
  %2458 = vmatpush2.msra.mxu0 %v1482
  %2459 = vmatprep.subr.mxu0 %v1475
  %2460 = vmatpush2.msra.mxu0 %v1474
  %2461 = vmatprep.subr.mxu0 %v1467
  %2462 = vmatpush2.msra.mxu0 %v1466
  %2463 = vmatprep.subr.mxu0 %v1459
  %2464 = vmatpush2.msra.mxu0 %v1458
  %2465 = vmatprep.subr.mxu0 %v1451
  %2466 = vmatpush2.msra.mxu0 %v1450
  %2467 = vmatprep.mubr.f32.mxu0 %v37
  %2468 = vmatmul.mubr.f32.gmra.mxu0 %v36
  %v2469 = vpop.f32.mrf.mxu0
  %v2470 = vadd.f32 %v2399, %v2469
  %v2471 = vpop.f32.mrf.mxu0
  %v2472 = vadd.f32 %v2401, %v2471
  %2473 = vdwg.mxu0
  %2474 = vmatprep.subr.mxu0 %v1699
  %2475 = vmatpush1.msra.mxu0 %v1698
  %2476 = vmatprep.subr.mxu0 %v1691
  %2477 = vmatpush1.msra.mxu0 %v1690
  %2478 = vmatprep.subr.mxu0 %v1683
  %2479 = vmatpush1.msra.mxu0 %v1682
  %2480 = vmatprep.subr.mxu0 %v1675
  %2481 = vmatpush1.msra.mxu0 %v1674
  %2482 = vmatprep.subr.mxu0 %v1667
  %2483 = vmatpush1.msra.mxu0 %v1666
  %2484 = vmatprep.subr.mxu0 %v1659
  %2485 = vmatpush1.msra.mxu0 %v1658
  %2486 = vmatprep.subr.mxu0 %v1651
  %2487 = vmatpush1.msra.mxu0 %v1650
  %2488 = vmatprep.subr.mxu0 %v1643
  %2489 = vmatpush1.msra.mxu0 %v1642
  %2490 = vmatprep.subr.mxu0 %v1635
  %2491 = vmatpush1.msra.mxu0 %v1634
  %2492 = vmatprep.subr.mxu0 %v1627
  %2493 = vmatpush1.msra.mxu0 %v1626
  %2494 = vmatprep.subr.mxu0 %v1619
  %2495 = vmatpush1.msra.mxu0 %v1618
  %2496 = vmatprep.subr.mxu0 %v1611
  %2497 = vmatpush1.msra.mxu0 %v1610
  %2498 = vmatprep.subr.mxu0 %v1603
  %2499 = vmatpush1.msra.mxu0 %v1602
  %2500 = vmatprep.subr.mxu0 %v1595
  %2501 = vmatpush1.msra.mxu0 %v1594
  %2502 = vmatprep.subr.mxu0 %v1587
  %2503 = vmatpush1.msra.mxu0 %v1586
  %2504 = vmatprep.subr.mxu0 %v1579
  %2505 = vmatpush1.msra.mxu0 %v1578
  %2506 = vmatprep.subr.mxu0 %v1827
  %2507 = vmatpush2.msra.mxu0 %v1826
  %2508 = vmatprep.subr.mxu0 %v1819
  %2509 = vmatpush2.msra.mxu0 %v1818
  %2510 = vmatprep.subr.mxu0 %v1811
  %2511 = vmatpush2.msra.mxu0 %v1810
  %2512 = vmatprep.subr.mxu0 %v1803
  %2513 = vmatpush2.msra.mxu0 %v1802
  %2514 = vmatprep.subr.mxu0 %v1795
  %2515 = vmatpush2.msra.mxu0 %v1794
  %2516 = vmatprep.subr.mxu0 %v1787
  %2517 = vmatpush2.msra.mxu0 %v1786
  %2518 = vmatprep.subr.mxu0 %v1779
  %2519 = vmatpush2.msra.mxu0 %v1778
  %2520 = vmatprep.subr.mxu0 %v1771
  %2521 = vmatpush2.msra.mxu0 %v1770
  %2522 = vmatprep.subr.mxu0 %v1763
  %2523 = vmatpush2.msra.mxu0 %v1762
  %2524 = vmatprep.subr.mxu0 %v1755
  %2525 = vmatpush2.msra.mxu0 %v1754
  %2526 = vmatprep.subr.mxu0 %v1747
  %2527 = vmatpush2.msra.mxu0 %v1746
  %2528 = vmatprep.subr.mxu0 %v1739
  %2529 = vmatpush2.msra.mxu0 %v1738
  %2530 = vmatprep.subr.mxu0 %v1731
  %2531 = vmatpush2.msra.mxu0 %v1730
  %2532 = vmatprep.subr.mxu0 %v1723
  %2533 = vmatpush2.msra.mxu0 %v1722
  %2534 = vmatprep.subr.mxu0 %v1715
  %2535 = vmatpush2.msra.mxu0 %v1714
  %2536 = vmatprep.subr.mxu0 %v1707
  %2537 = vmatpush2.msra.mxu0 %v1706
  %2538 = vmatprep.mubr.f32.mxu0 %v39
  %2539 = vmatmul.mubr.f32.gmra.mxu0 %v38
  %v2540 = vpop.f32.mrf.mxu0
  %v2541 = vadd.f32 %v2470, %v2540
  %v2542 = vpop.f32.mrf.mxu0
  %v2543 = vadd.f32 %v2472, %v2542
  %2544 = vdwg.mxu0
  %2545 = vmatprep.subr.mxu0 %v1955
  %2546 = vmatpush1.msra.mxu0 %v1954
  %2547 = vmatprep.subr.mxu0 %v1947
  %2548 = vmatpush1.msra.mxu0 %v1946
  %2549 = vmatprep.subr.mxu0 %v1939
  %2550 = vmatpush1.msra.mxu0 %v1938
  %2551 = vmatprep.subr.mxu0 %v1931
  %2552 = vmatpush1.msra.mxu0 %v1930
  %2553 = vmatprep.subr.mxu0 %v1923
  %2554 = vmatpush1.msra.mxu0 %v1922
  %2555 = vmatprep.subr.mxu0 %v1915
  %2556 = vmatpush1.msra.mxu0 %v1914
  %2557 = vmatprep.subr.mxu0 %v1907
  %2558 = vmatpush1.msra.mxu0 %v1906
  %2559 = vmatprep.subr.mxu0 %v1899
  %2560 = vmatpush1.msra.mxu0 %v1898
  %2561 = vmatprep.subr.mxu0 %v1891
  %2562 = vmatpush1.msra.mxu0 %v1890
  %2563 = vmatprep.subr.mxu0 %v1883
  %2564 = vmatpush1.msra.mxu0 %v1882
  %2565 = vmatprep.subr.mxu0 %v1875
  %2566 = vmatpush1.msra.mxu0 %v1874
  %2567 = vmatprep.subr.mxu0 %v1867
  %2568 = vmatpush1.msra.mxu0 %v1866
  %2569 = vmatprep.subr.mxu0 %v1859
  %2570 = vmatpush1.msra.mxu0 %v1858
  %2571 = vmatprep.subr.mxu0 %v1851
  %2572 = vmatpush1.msra.mxu0 %v1850
  %2573 = vmatprep.subr.mxu0 %v1843
  %2574 = vmatpush1.msra.mxu0 %v1842
  %2575 = vmatprep.subr.mxu0 %v1835
  %2576 = vmatpush1.msra.mxu0 %v1834
  %2577 = vmatprep.subr.mxu0 0.0
  %2578 = vmatpush2.msra.mxu0 0.0
  %2579 = vmatprep.subr.mxu0 0.0
  %2580 = vmatpush2.msra.mxu0 0.0
  %2581 = vmatprep.subr.mxu0 0.0
  %2582 = vmatpush2.msra.mxu0 0.0
  %2583 = vmatprep.subr.mxu0 0.0
  %2584 = vmatpush2.msra.mxu0 0.0
  %2585 = vmatprep.subr.mxu0 0.0
  %2586 = vmatpush2.msra.mxu0 0.0
  %2587 = vmatprep.subr.mxu0 0.0
  %2588 = vmatpush2.msra.mxu0 0.0
  %2589 = vmatprep.subr.mxu0 0.0
  %2590 = vmatpush2.msra.mxu0 0.0
  %2591 = vmatprep.subr.mxu0 0.0
  %2592 = vmatpush2.msra.mxu0 0.0
  %2593 = vmatprep.subr.mxu0 0.0
  %2594 = vmatpush2.msra.mxu0 0.0
  %2595 = vmatprep.subr.mxu0 0.0
  %2596 = vmatpush2.msra.mxu0 0.0
  %2597 = vmatprep.subr.mxu0 0.0
  %2598 = vmatpush2.msra.mxu0 0.0
  %2599 = vmatprep.subr.mxu0 %v1995
  %2600 = vmatpush2.msra.mxu0 %v1994
  %2601 = vmatprep.subr.mxu0 %v1987
  %2602 = vmatpush2.msra.mxu0 %v1986
  %2603 = vmatprep.subr.mxu0 %v1979
  %2604 = vmatpush2.msra.mxu0 %v1978
  %2605 = vmatprep.subr.mxu0 %v1971
  %2606 = vmatpush2.msra.mxu0 %v1970
  %2607 = vmatprep.subr.mxu0 %v1963
  %2608 = vmatpush2.msra.mxu0 %v1962
  %2609 = vmatprep.mubr.f32.mxu0 %v2046
  %2610 = vmatmul.mubr.f32.gmra.mxu0 %v40
  %v2611 = vpop.f32.mrf.mxu0
  %v2612 = vadd.f32 %v2541, %v2611
  %v2613 = vpop.f32.mrf.mxu0
  %v2614 = vadd.f32 %v2543, %v2613
  %2615 = vdwg.mxu0
  %2616 = vmatprep.subr.mxu0 %v165
  %2617 = vmatpush1.msra.mxu0 %v164
  %2618 = vmatprep.subr.mxu0 %v157
  %2619 = vmatpush1.msra.mxu0 %v156
  %2620 = vmatprep.subr.mxu0 %v149
  %2621 = vmatpush1.msra.mxu0 %v148
  %2622 = vmatprep.subr.mxu0 %v141
  %2623 = vmatpush1.msra.mxu0 %v140
  %2624 = vmatprep.subr.mxu0 %v133
  %2625 = vmatpush1.msra.mxu0 %v132
  %2626 = vmatprep.subr.mxu0 %v125
  %2627 = vmatpush1.msra.mxu0 %v124
  %2628 = vmatprep.subr.mxu0 %v117
  %2629 = vmatpush1.msra.mxu0 %v116
  %2630 = vmatprep.subr.mxu0 %v109
  %2631 = vmatpush1.msra.mxu0 %v108
  %2632 = vmatprep.subr.mxu0 %v101
  %2633 = vmatpush1.msra.mxu0 %v100
  %2634 = vmatprep.subr.mxu0 %v93
  %2635 = vmatpush1.msra.mxu0 %v92
  %2636 = vmatprep.subr.mxu0 %v85
  %2637 = vmatpush1.msra.mxu0 %v84
  %2638 = vmatprep.subr.mxu0 %v77
  %2639 = vmatpush1.msra.mxu0 %v76
  %2640 = vmatprep.subr.mxu0 %v69
  %2641 = vmatpush1.msra.mxu0 %v68
  %2642 = vmatprep.subr.mxu0 %v61
  %2643 = vmatpush1.msra.mxu0 %v60
  %2644 = vmatprep.subr.mxu0 %v53
  %2645 = vmatpush1.msra.mxu0 %v52
  %2646 = vmatprep.subr.mxu0 %v45
  %2647 = vmatpush1.msra.mxu0 %v44
  %2648 = vmatprep.subr.mxu0 %v293
  %2649 = vmatpush2.msra.mxu0 %v292
  %2650 = vmatprep.subr.mxu0 %v285
  %2651 = vmatpush2.msra.mxu0 %v284
  %2652 = vmatprep.subr.mxu0 %v277
  %2653 = vmatpush2.msra.mxu0 %v276
  %2654 = vmatprep.subr.mxu0 %v269
  %2655 = vmatpush2.msra.mxu0 %v268
  %2656 = vmatprep.subr.mxu0 %v261
  %2657 = vmatpush2.msra.mxu0 %v260
  %2658 = vmatprep.subr.mxu0 %v253
  %2659 = vmatpush2.msra.mxu0 %v252
  %2660 = vmatprep.subr.mxu0 %v245
  %2661 = vmatpush2.msra.mxu0 %v244
  %2662 = vmatprep.subr.mxu0 %v237
  %2663 = vmatpush2.msra.mxu0 %v236
  %2664 = vmatprep.subr.mxu0 %v229
  %2665 = vmatpush2.msra.mxu0 %v228
  %2666 = vmatprep.subr.mxu0 %v221
  %2667 = vmatpush2.msra.mxu0 %v220
  %2668 = vmatprep.subr.mxu0 %v213
  %2669 = vmatpush2.msra.mxu0 %v212
  %2670 = vmatprep.subr.mxu0 %v205
  %2671 = vmatpush2.msra.mxu0 %v204
  %2672 = vmatprep.subr.mxu0 %v197
  %2673 = vmatpush2.msra.mxu0 %v196
  %2674 = vmatprep.subr.mxu0 %v189
  %2675 = vmatpush2.msra.mxu0 %v188
  %2676 = vmatprep.subr.mxu0 %v181
  %2677 = vmatpush2.msra.mxu0 %v180
  %2678 = vmatprep.subr.mxu0 %v173
  %2679 = vmatpush2.msra.mxu0 %v172
  %2680 = vmatprep.mubr.f32.mxu0 %v27
  %2681 = vmatmul.mubr.f32.gmra.mxu0 %v26
  %v2682 = vpop.f32.mrf.mxu0
  %v2683 = vadd.f32 %v2015, %v2682
  %v2684 = vpop.f32.mrf.mxu0
  %v2685 = vadd.f32 %v2019, %v2684
  %2686 = vdwg.mxu0
  %2687 = vmatprep.subr.mxu0 %v421
  %2688 = vmatpush1.msra.mxu0 %v420
  %2689 = vmatprep.subr.mxu0 %v413
  %2690 = vmatpush1.msra.mxu0 %v412
  %2691 = vmatprep.subr.mxu0 %v405
  %2692 = vmatpush1.msra.mxu0 %v404
  %2693 = vmatprep.subr.mxu0 %v397
  %2694 = vmatpush1.msra.mxu0 %v396
  %2695 = vmatprep.subr.mxu0 %v389
  %2696 = vmatpush1.msra.mxu0 %v388
  %2697 = vmatprep.subr.mxu0 %v381
  %2698 = vmatpush1.msra.mxu0 %v380
  %2699 = vmatprep.subr.mxu0 %v373
  %2700 = vmatpush1.msra.mxu0 %v372
  %2701 = vmatprep.subr.mxu0 %v365
  %2702 = vmatpush1.msra.mxu0 %v364
  %2703 = vmatprep.subr.mxu0 %v357
  %2704 = vmatpush1.msra.mxu0 %v356
  %2705 = vmatprep.subr.mxu0 %v349
  %2706 = vmatpush1.msra.mxu0 %v348
  %2707 = vmatprep.subr.mxu0 %v341
  %2708 = vmatpush1.msra.mxu0 %v340
  %2709 = vmatprep.subr.mxu0 %v333
  %2710 = vmatpush1.msra.mxu0 %v332
  %2711 = vmatprep.subr.mxu0 %v325
  %2712 = vmatpush1.msra.mxu0 %v324
  %2713 = vmatprep.subr.mxu0 %v317
  %2714 = vmatpush1.msra.mxu0 %v316
  %2715 = vmatprep.subr.mxu0 %v309
  %2716 = vmatpush1.msra.mxu0 %v308
  %2717 = vmatprep.subr.mxu0 %v301
  %2718 = vmatpush1.msra.mxu0 %v300
  %2719 = vmatprep.subr.mxu0 %v549
  %2720 = vmatpush2.msra.mxu0 %v548
  %2721 = vmatprep.subr.mxu0 %v541
  %2722 = vmatpush2.msra.mxu0 %v540
  %2723 = vmatprep.subr.mxu0 %v533
  %2724 = vmatpush2.msra.mxu0 %v532
  %2725 = vmatprep.subr.mxu0 %v525
  %2726 = vmatpush2.msra.mxu0 %v524
  %2727 = vmatprep.subr.mxu0 %v517
  %2728 = vmatpush2.msra.mxu0 %v516
  %2729 = vmatprep.subr.mxu0 %v509
  %2730 = vmatpush2.msra.mxu0 %v508
  %2731 = vmatprep.subr.mxu0 %v501
  %2732 = vmatpush2.msra.mxu0 %v500
  %2733 = vmatprep.subr.mxu0 %v493
  %2734 = vmatpush2.msra.mxu0 %v492
  %2735 = vmatprep.subr.mxu0 %v485
  %2736 = vmatpush2.msra.mxu0 %v484
  %2737 = vmatprep.subr.mxu0 %v477
  %2738 = vmatpush2.msra.mxu0 %v476
  %2739 = vmatprep.subr.mxu0 %v469
  %2740 = vmatpush2.msra.mxu0 %v468
  %2741 = vmatprep.subr.mxu0 %v461
  %2742 = vmatpush2.msra.mxu0 %v460
  %2743 = vmatprep.subr.mxu0 %v453
  %2744 = vmatpush2.msra.mxu0 %v452
  %2745 = vmatprep.subr.mxu0 %v445
  %2746 = vmatpush2.msra.mxu0 %v444
  %2747 = vmatprep.subr.mxu0 %v437
  %2748 = vmatpush2.msra.mxu0 %v436
  %2749 = vmatprep.subr.mxu0 %v429
  %2750 = vmatpush2.msra.mxu0 %v428
  %2751 = vmatprep.mubr.f32.mxu0 %v29
  %2752 = vmatmul.mubr.f32.gmra.mxu0 %v28
  %v2753 = vpop.f32.mrf.mxu0
  %v2754 = vadd.f32 %v2683, %v2753
  %v2755 = vpop.f32.mrf.mxu0
  %v2756 = vadd.f32 %v2685, %v2755
  %2757 = vdwg.mxu0
  %2758 = vmatprep.subr.mxu0 %v677
  %2759 = vmatpush1.msra.mxu0 %v676
  %2760 = vmatprep.subr.mxu0 %v669
  %2761 = vmatpush1.msra.mxu0 %v668
  %2762 = vmatprep.subr.mxu0 %v661
  %2763 = vmatpush1.msra.mxu0 %v660
  %2764 = vmatprep.subr.mxu0 %v653
  %2765 = vmatpush1.msra.mxu0 %v652
  %2766 = vmatprep.subr.mxu0 %v645
  %2767 = vmatpush1.msra.mxu0 %v644
  %2768 = vmatprep.subr.mxu0 %v637
  %2769 = vmatpush1.msra.mxu0 %v636
  %2770 = vmatprep.subr.mxu0 %v629
  %2771 = vmatpush1.msra.mxu0 %v628
  %2772 = vmatprep.subr.mxu0 %v621
  %2773 = vmatpush1.msra.mxu0 %v620
  %2774 = vmatprep.subr.mxu0 %v613
  %2775 = vmatpush1.msra.mxu0 %v612
  %2776 = vmatprep.subr.mxu0 %v605
  %2777 = vmatpush1.msra.mxu0 %v604
  %2778 = vmatprep.subr.mxu0 %v597
  %2779 = vmatpush1.msra.mxu0 %v596
  %2780 = vmatprep.subr.mxu0 %v589
  %2781 = vmatpush1.msra.mxu0 %v588
  %2782 = vmatprep.subr.mxu0 %v581
  %2783 = vmatpush1.msra.mxu0 %v580
  %2784 = vmatprep.subr.mxu0 %v573
  %2785 = vmatpush1.msra.mxu0 %v572
  %2786 = vmatprep.subr.mxu0 %v565
  %2787 = vmatpush1.msra.mxu0 %v564
  %2788 = vmatprep.subr.mxu0 %v557
  %2789 = vmatpush1.msra.mxu0 %v556
  %2790 = vmatprep.subr.mxu0 %v805
  %2791 = vmatpush2.msra.mxu0 %v804
  %2792 = vmatprep.subr.mxu0 %v797
  %2793 = vmatpush2.msra.mxu0 %v796
  %2794 = vmatprep.subr.mxu0 %v789
  %2795 = vmatpush2.msra.mxu0 %v788
  %2796 = vmatprep.subr.mxu0 %v781
  %2797 = vmatpush2.msra.mxu0 %v780
  %2798 = vmatprep.subr.mxu0 %v773
  %2799 = vmatpush2.msra.mxu0 %v772
  %2800 = vmatprep.subr.mxu0 %v765
  %2801 = vmatpush2.msra.mxu0 %v764
  %2802 = vmatprep.subr.mxu0 %v757
  %2803 = vmatpush2.msra.mxu0 %v756
  %2804 = vmatprep.subr.mxu0 %v749
  %2805 = vmatpush2.msra.mxu0 %v748
  %2806 = vmatprep.subr.mxu0 %v741
  %2807 = vmatpush2.msra.mxu0 %v740
  %2808 = vmatprep.subr.mxu0 %v733
  %2809 = vmatpush2.msra.mxu0 %v732
  %2810 = vmatprep.subr.mxu0 %v725
  %2811 = vmatpush2.msra.mxu0 %v724
  %2812 = vmatprep.subr.mxu0 %v717
  %2813 = vmatpush2.msra.mxu0 %v716
  %2814 = vmatprep.subr.mxu0 %v709
  %2815 = vmatpush2.msra.mxu0 %v708
  %2816 = vmatprep.subr.mxu0 %v701
  %2817 = vmatpush2.msra.mxu0 %v700
  %2818 = vmatprep.subr.mxu0 %v693
  %2819 = vmatpush2.msra.mxu0 %v692
  %2820 = vmatprep.subr.mxu0 %v685
  %2821 = vmatpush2.msra.mxu0 %v684
  %2822 = vmatprep.mubr.f32.mxu0 %v31
  %2823 = vmatmul.mubr.f32.gmra.mxu0 %v30
  %v2824 = vpop.f32.mrf.mxu0
  %v2825 = vadd.f32 %v2754, %v2824
  %v2826 = vpop.f32.mrf.mxu0
  %v2827 = vadd.f32 %v2756, %v2826
  %2828 = vdwg.mxu0
  %2829 = vmatprep.subr.mxu0 %v933
  %2830 = vmatpush1.msra.mxu0 %v932
  %2831 = vmatprep.subr.mxu0 %v925
  %2832 = vmatpush1.msra.mxu0 %v924
  %2833 = vmatprep.subr.mxu0 %v917
  %2834 = vmatpush1.msra.mxu0 %v916
  %2835 = vmatprep.subr.mxu0 %v909
  %2836 = vmatpush1.msra.mxu0 %v908
  %2837 = vmatprep.subr.mxu0 %v901
  %2838 = vmatpush1.msra.mxu0 %v900
  %2839 = vmatprep.subr.mxu0 %v893
  %2840 = vmatpush1.msra.mxu0 %v892
  %2841 = vmatprep.subr.mxu0 %v885
  %2842 = vmatpush1.msra.mxu0 %v884
  %2843 = vmatprep.subr.mxu0 %v877
  %2844 = vmatpush1.msra.mxu0 %v876
  %2845 = vmatprep.subr.mxu0 %v869
  %2846 = vmatpush1.msra.mxu0 %v868
  %2847 = vmatprep.subr.mxu0 %v861
  %2848 = vmatpush1.msra.mxu0 %v860
  %2849 = vmatprep.subr.mxu0 %v853
  %2850 = vmatpush1.msra.mxu0 %v852
  %2851 = vmatprep.subr.mxu0 %v845
  %2852 = vmatpush1.msra.mxu0 %v844
  %2853 = vmatprep.subr.mxu0 %v837
  %2854 = vmatpush1.msra.mxu0 %v836
  %2855 = vmatprep.subr.mxu0 %v829
  %2856 = vmatpush1.msra.mxu0 %v828
  %2857 = vmatprep.subr.mxu0 %v821
  %2858 = vmatpush1.msra.mxu0 %v820
  %2859 = vmatprep.subr.mxu0 %v813
  %2860 = vmatpush1.msra.mxu0 %v812
  %2861 = vmatprep.subr.mxu0 %v1061
  %2862 = vmatpush2.msra.mxu0 %v1060
  %2863 = vmatprep.subr.mxu0 %v1053
  %2864 = vmatpush2.msra.mxu0 %v1052
  %2865 = vmatprep.subr.mxu0 %v1045
  %2866 = vmatpush2.msra.mxu0 %v1044
  %2867 = vmatprep.subr.mxu0 %v1037
  %2868 = vmatpush2.msra.mxu0 %v1036
  %2869 = vmatprep.subr.mxu0 %v1029
  %2870 = vmatpush2.msra.mxu0 %v1028
  %2871 = vmatprep.subr.mxu0 %v1021
  %2872 = vmatpush2.msra.mxu0 %v1020
  %2873 = vmatprep.subr.mxu0 %v1013
  %2874 = vmatpush2.msra.mxu0 %v1012
  %2875 = vmatprep.subr.mxu0 %v1005
  %2876 = vmatpush2.msra.mxu0 %v1004
  %2877 = vmatprep.subr.mxu0 %v997
  %2878 = vmatpush2.msra.mxu0 %v996
  %2879 = vmatprep.subr.mxu0 %v989
  %2880 = vmatpush2.msra.mxu0 %v988
  %2881 = vmatprep.subr.mxu0 %v981
  %2882 = vmatpush2.msra.mxu0 %v980
  %2883 = vmatprep.subr.mxu0 %v973
  %2884 = vmatpush2.msra.mxu0 %v972
  %2885 = vmatprep.subr.mxu0 %v965
  %2886 = vmatpush2.msra.mxu0 %v964
  %2887 = vmatprep.subr.mxu0 %v957
  %2888 = vmatpush2.msra.mxu0 %v956
  %2889 = vmatprep.subr.mxu0 %v949
  %2890 = vmatpush2.msra.mxu0 %v948
  %2891 = vmatprep.subr.mxu0 %v941
  %2892 = vmatpush2.msra.mxu0 %v940
  %2893 = vmatprep.mubr.f32.mxu0 %v33
  %2894 = vmatmul.mubr.f32.gmra.mxu0 %v32
  %v2895 = vpop.f32.mrf.mxu0
  %v2896 = vadd.f32 %v2825, %v2895
  %v2897 = vpop.f32.mrf.mxu0
  %v2898 = vadd.f32 %v2827, %v2897
  %2899 = vdwg.mxu0
  %2900 = vmatprep.subr.mxu0 %v1189
  %2901 = vmatpush1.msra.mxu0 %v1188
  %2902 = vmatprep.subr.mxu0 %v1181
  %2903 = vmatpush1.msra.mxu0 %v1180
  %2904 = vmatprep.subr.mxu0 %v1173
  %2905 = vmatpush1.msra.mxu0 %v1172
  %2906 = vmatprep.subr.mxu0 %v1165
  %2907 = vmatpush1.msra.mxu0 %v1164
  %2908 = vmatprep.subr.mxu0 %v1157
  %2909 = vmatpush1.msra.mxu0 %v1156
  %2910 = vmatprep.subr.mxu0 %v1149
  %2911 = vmatpush1.msra.mxu0 %v1148
  %2912 = vmatprep.subr.mxu0 %v1141
  %2913 = vmatpush1.msra.mxu0 %v1140
  %2914 = vmatprep.subr.mxu0 %v1133
  %2915 = vmatpush1.msra.mxu0 %v1132
  %2916 = vmatprep.subr.mxu0 %v1125
  %2917 = vmatpush1.msra.mxu0 %v1124
  %2918 = vmatprep.subr.mxu0 %v1117
  %2919 = vmatpush1.msra.mxu0 %v1116
  %2920 = vmatprep.subr.mxu0 %v1109
  %2921 = vmatpush1.msra.mxu0 %v1108
  %2922 = vmatprep.subr.mxu0 %v1101
  %2923 = vmatpush1.msra.mxu0 %v1100
  %2924 = vmatprep.subr.mxu0 %v1093
  %2925 = vmatpush1.msra.mxu0 %v1092
  %2926 = vmatprep.subr.mxu0 %v1085
  %2927 = vmatpush1.msra.mxu0 %v1084
  %2928 = vmatprep.subr.mxu0 %v1077
  %2929 = vmatpush1.msra.mxu0 %v1076
  %2930 = vmatprep.subr.mxu0 %v1069
  %2931 = vmatpush1.msra.mxu0 %v1068
  %2932 = vmatprep.subr.mxu0 %v1317
  %2933 = vmatpush2.msra.mxu0 %v1316
  %2934 = vmatprep.subr.mxu0 %v1309
  %2935 = vmatpush2.msra.mxu0 %v1308
  %2936 = vmatprep.subr.mxu0 %v1301
  %2937 = vmatpush2.msra.mxu0 %v1300
  %2938 = vmatprep.subr.mxu0 %v1293
  %2939 = vmatpush2.msra.mxu0 %v1292
  %2940 = vmatprep.subr.mxu0 %v1285
  %2941 = vmatpush2.msra.mxu0 %v1284
  %2942 = vmatprep.subr.mxu0 %v1277
  %2943 = vmatpush2.msra.mxu0 %v1276
  %2944 = vmatprep.subr.mxu0 %v1269
  %2945 = vmatpush2.msra.mxu0 %v1268
  %2946 = vmatprep.subr.mxu0 %v1261
  %2947 = vmatpush2.msra.mxu0 %v1260
  %2948 = vmatprep.subr.mxu0 %v1253
  %2949 = vmatpush2.msra.mxu0 %v1252
  %2950 = vmatprep.subr.mxu0 %v1245
  %2951 = vmatpush2.msra.mxu0 %v1244
  %2952 = vmatprep.subr.mxu0 %v1237
  %2953 = vmatpush2.msra.mxu0 %v1236
  %2954 = vmatprep.subr.mxu0 %v1229
  %2955 = vmatpush2.msra.mxu0 %v1228
  %2956 = vmatprep.subr.mxu0 %v1221
  %2957 = vmatpush2.msra.mxu0 %v1220
  %2958 = vmatprep.subr.mxu0 %v1213
  %2959 = vmatpush2.msra.mxu0 %v1212
  %2960 = vmatprep.subr.mxu0 %v1205
  %2961 = vmatpush2.msra.mxu0 %v1204
  %2962 = vmatprep.subr.mxu0 %v1197
  %2963 = vmatpush2.msra.mxu0 %v1196
  %2964 = vmatprep.mubr.f32.mxu0 %v35
  %2965 = vmatmul.mubr.f32.gmra.mxu0 %v34
  %v2966 = vpop.f32.mrf.mxu0
  %v2967 = vadd.f32 %v2896, %v2966
  %v2968 = vpop.f32.mrf.mxu0
  %v2969 = vadd.f32 %v2898, %v2968
  %2970 = vdwg.mxu0
  %2971 = vmatprep.subr.mxu0 %v1445
  %2972 = vmatpush1.msra.mxu0 %v1444
  %2973 = vmatprep.subr.mxu0 %v1437
  %2974 = vmatpush1.msra.mxu0 %v1436
  %2975 = vmatprep.subr.mxu0 %v1429
  %2976 = vmatpush1.msra.mxu0 %v1428
  %2977 = vmatprep.subr.mxu0 %v1421
  %2978 = vmatpush1.msra.mxu0 %v1420
  %2979 = vmatprep.subr.mxu0 %v1413
  %2980 = vmatpush1.msra.mxu0 %v1412
  %2981 = vmatprep.subr.mxu0 %v1405
  %2982 = vmatpush1.msra.mxu0 %v1404
  %2983 = vmatprep.subr.mxu0 %v1397
  %2984 = vmatpush1.msra.mxu0 %v1396
  %2985 = vmatprep.subr.mxu0 %v1389
  %2986 = vmatpush1.msra.mxu0 %v1388
  %2987 = vmatprep.subr.mxu0 %v1381
  %2988 = vmatpush1.msra.mxu0 %v1380
  %2989 = vmatprep.subr.mxu0 %v1373
  %2990 = vmatpush1.msra.mxu0 %v1372
  %2991 = vmatprep.subr.mxu0 %v1365
  %2992 = vmatpush1.msra.mxu0 %v1364
  %2993 = vmatprep.subr.mxu0 %v1357
  %2994 = vmatpush1.msra.mxu0 %v1356
  %2995 = vmatprep.subr.mxu0 %v1349
  %2996 = vmatpush1.msra.mxu0 %v1348
  %2997 = vmatprep.subr.mxu0 %v1341
  %2998 = vmatpush1.msra.mxu0 %v1340
  %2999 = vmatprep.subr.mxu0 %v1333
  %3000 = vmatpush1.msra.mxu0 %v1332
  %3001 = vmatprep.subr.mxu0 %v1325
  %3002 = vmatpush1.msra.mxu0 %v1324
  %3003 = vmatprep.subr.mxu0 %v1573
  %3004 = vmatpush2.msra.mxu0 %v1572
  %3005 = vmatprep.subr.mxu0 %v1565
  %3006 = vmatpush2.msra.mxu0 %v1564
  %3007 = vmatprep.subr.mxu0 %v1557
  %3008 = vmatpush2.msra.mxu0 %v1556
  %3009 = vmatprep.subr.mxu0 %v1549
  %3010 = vmatpush2.msra.mxu0 %v1548
  %3011 = vmatprep.subr.mxu0 %v1541
  %3012 = vmatpush2.msra.mxu0 %v1540
  %3013 = vmatprep.subr.mxu0 %v1533
  %3014 = vmatpush2.msra.mxu0 %v1532
  %3015 = vmatprep.subr.mxu0 %v1525
  %3016 = vmatpush2.msra.mxu0 %v1524
  %3017 = vmatprep.subr.mxu0 %v1517
  %3018 = vmatpush2.msra.mxu0 %v1516
  %3019 = vmatprep.subr.mxu0 %v1509
  %3020 = vmatpush2.msra.mxu0 %v1508
  %3021 = vmatprep.subr.mxu0 %v1501
  %3022 = vmatpush2.msra.mxu0 %v1500
  %3023 = vmatprep.subr.mxu0 %v1493
  %3024 = vmatpush2.msra.mxu0 %v1492
  %3025 = vmatprep.subr.mxu0 %v1485
  %3026 = vmatpush2.msra.mxu0 %v1484
  %3027 = vmatprep.subr.mxu0 %v1477
  %3028 = vmatpush2.msra.mxu0 %v1476
  %3029 = vmatprep.subr.mxu0 %v1469
  %3030 = vmatpush2.msra.mxu0 %v1468
  %3031 = vmatprep.subr.mxu0 %v1461
  %3032 = vmatpush2.msra.mxu0 %v1460
  %3033 = vmatprep.subr.mxu0 %v1453
  %3034 = vmatpush2.msra.mxu0 %v1452
  %3035 = vmatprep.mubr.f32.mxu0 %v37
  %3036 = vmatmul.mubr.f32.gmra.mxu0 %v36
  %v3037 = vpop.f32.mrf.mxu0
  %v3038 = vadd.f32 %v2967, %v3037
  %v3039 = vpop.f32.mrf.mxu0
  %v3040 = vadd.f32 %v2969, %v3039
  %3041 = vdwg.mxu0
  %3042 = vmatprep.subr.mxu0 %v1701
  %3043 = vmatpush1.msra.mxu0 %v1700
  %3044 = vmatprep.subr.mxu0 %v1693
  %3045 = vmatpush1.msra.mxu0 %v1692
  %3046 = vmatprep.subr.mxu0 %v1685
  %3047 = vmatpush1.msra.mxu0 %v1684
  %3048 = vmatprep.subr.mxu0 %v1677
  %3049 = vmatpush1.msra.mxu0 %v1676
  %3050 = vmatprep.subr.mxu0 %v1669
  %3051 = vmatpush1.msra.mxu0 %v1668
  %3052 = vmatprep.subr.mxu0 %v1661
  %3053 = vmatpush1.msra.mxu0 %v1660
  %3054 = vmatprep.subr.mxu0 %v1653
  %3055 = vmatpush1.msra.mxu0 %v1652
  %3056 = vmatprep.subr.mxu0 %v1645
  %3057 = vmatpush1.msra.mxu0 %v1644
  %3058 = vmatprep.subr.mxu0 %v1637
  %3059 = vmatpush1.msra.mxu0 %v1636
  %3060 = vmatprep.subr.mxu0 %v1629
  %3061 = vmatpush1.msra.mxu0 %v1628
  %3062 = vmatprep.subr.mxu0 %v1621
  %3063 = vmatpush1.msra.mxu0 %v1620
  %3064 = vmatprep.subr.mxu0 %v1613
  %3065 = vmatpush1.msra.mxu0 %v1612
  %3066 = vmatprep.subr.mxu0 %v1605
  %3067 = vmatpush1.msra.mxu0 %v1604
  %3068 = vmatprep.subr.mxu0 %v1597
  %3069 = vmatpush1.msra.mxu0 %v1596
  %3070 = vmatprep.subr.mxu0 %v1589
  %3071 = vmatpush1.msra.mxu0 %v1588
  %3072 = vmatprep.subr.mxu0 %v1581
  %3073 = vmatpush1.msra.mxu0 %v1580
  %3074 = vmatprep.subr.mxu0 %v1829
  %3075 = vmatpush2.msra.mxu0 %v1828
  %3076 = vmatprep.subr.mxu0 %v1821
  %3077 = vmatpush2.msra.mxu0 %v1820
  %3078 = vmatprep.subr.mxu0 %v1813
  %3079 = vmatpush2.msra.mxu0 %v1812
  %3080 = vmatprep.subr.mxu0 %v1805
  %3081 = vmatpush2.msra.mxu0 %v1804
  %3082 = vmatprep.subr.mxu0 %v1797
  %3083 = vmatpush2.msra.mxu0 %v1796
  %3084 = vmatprep.subr.mxu0 %v1789
  %3085 = vmatpush2.msra.mxu0 %v1788
  %3086 = vmatprep.subr.mxu0 %v1781
  %3087 = vmatpush2.msra.mxu0 %v1780
  %3088 = vmatprep.subr.mxu0 %v1773
  %3089 = vmatpush2.msra.mxu0 %v1772
  %3090 = vmatprep.subr.mxu0 %v1765
  %3091 = vmatpush2.msra.mxu0 %v1764
  %3092 = vmatprep.subr.mxu0 %v1757
  %3093 = vmatpush2.msra.mxu0 %v1756
  %3094 = vmatprep.subr.mxu0 %v1749
  %3095 = vmatpush2.msra.mxu0 %v1748
  %3096 = vmatprep.subr.mxu0 %v1741
  %3097 = vmatpush2.msra.mxu0 %v1740
  %3098 = vmatprep.subr.mxu0 %v1733
  %3099 = vmatpush2.msra.mxu0 %v1732
  %3100 = vmatprep.subr.mxu0 %v1725
  %3101 = vmatpush2.msra.mxu0 %v1724
  %3102 = vmatprep.subr.mxu0 %v1717
  %3103 = vmatpush2.msra.mxu0 %v1716
  %3104 = vmatprep.subr.mxu0 %v1709
  %3105 = vmatpush2.msra.mxu0 %v1708
  %3106 = vmatprep.mubr.f32.mxu0 %v39
  %3107 = vmatmul.mubr.f32.gmra.mxu0 %v38
  %v3108 = vpop.f32.mrf.mxu0
  %v3109 = vadd.f32 %v3038, %v3108
  %v3110 = vpop.f32.mrf.mxu0
  %v3111 = vadd.f32 %v3040, %v3110
  %3112 = vdwg.mxu0
  %3113 = vmatprep.subr.mxu0 %v1957
  %3114 = vmatpush1.msra.mxu0 %v1956
  %3115 = vmatprep.subr.mxu0 %v1949
  %3116 = vmatpush1.msra.mxu0 %v1948
  %3117 = vmatprep.subr.mxu0 %v1941
  %3118 = vmatpush1.msra.mxu0 %v1940
  %3119 = vmatprep.subr.mxu0 %v1933
  %3120 = vmatpush1.msra.mxu0 %v1932
  %3121 = vmatprep.subr.mxu0 %v1925
  %3122 = vmatpush1.msra.mxu0 %v1924
  %3123 = vmatprep.subr.mxu0 %v1917
  %3124 = vmatpush1.msra.mxu0 %v1916
  %3125 = vmatprep.subr.mxu0 %v1909
  %3126 = vmatpush1.msra.mxu0 %v1908
  %3127 = vmatprep.subr.mxu0 %v1901
  %3128 = vmatpush1.msra.mxu0 %v1900
  %3129 = vmatprep.subr.mxu0 %v1893
  %3130 = vmatpush1.msra.mxu0 %v1892
  %3131 = vmatprep.subr.mxu0 %v1885
  %3132 = vmatpush1.msra.mxu0 %v1884
  %3133 = vmatprep.subr.mxu0 %v1877
  %3134 = vmatpush1.msra.mxu0 %v1876
  %3135 = vmatprep.subr.mxu0 %v1869
  %3136 = vmatpush1.msra.mxu0 %v1868
  %3137 = vmatprep.subr.mxu0 %v1861
  %3138 = vmatpush1.msra.mxu0 %v1860
  %3139 = vmatprep.subr.mxu0 %v1853
  %3140 = vmatpush1.msra.mxu0 %v1852
  %3141 = vmatprep.subr.mxu0 %v1845
  %3142 = vmatpush1.msra.mxu0 %v1844
  %3143 = vmatprep.subr.mxu0 %v1837
  %3144 = vmatpush1.msra.mxu0 %v1836
  %3145 = vmatprep.subr.mxu0 0.0
  %3146 = vmatpush2.msra.mxu0 0.0
  %3147 = vmatprep.subr.mxu0 0.0
  %3148 = vmatpush2.msra.mxu0 0.0
  %3149 = vmatprep.subr.mxu0 0.0
  %3150 = vmatpush2.msra.mxu0 0.0
  %3151 = vmatprep.subr.mxu0 0.0
  %3152 = vmatpush2.msra.mxu0 0.0
  %3153 = vmatprep.subr.mxu0 0.0
  %3154 = vmatpush2.msra.mxu0 0.0
  %3155 = vmatprep.subr.mxu0 0.0
  %3156 = vmatpush2.msra.mxu0 0.0
  %3157 = vmatprep.subr.mxu0 0.0
  %3158 = vmatpush2.msra.mxu0 0.0
  %3159 = vmatprep.subr.mxu0 0.0
  %3160 = vmatpush2.msra.mxu0 0.0
  %3161 = vmatprep.subr.mxu0 0.0
  %3162 = vmatpush2.msra.mxu0 0.0
  %3163 = vmatprep.subr.mxu0 0.0
  %3164 = vmatpush2.msra.mxu0 0.0
  %3165 = vmatprep.subr.mxu0 0.0
  %3166 = vmatpush2.msra.mxu0 0.0
  %3167 = vmatprep.subr.mxu0 %v1997
  %3168 = vmatpush2.msra.mxu0 %v1996
  %3169 = vmatprep.subr.mxu0 %v1989
  %3170 = vmatpush2.msra.mxu0 %v1988
  %3171 = vmatprep.subr.mxu0 %v1981
  %3172 = vmatpush2.msra.mxu0 %v1980
  %3173 = vmatprep.subr.mxu0 %v1973
  %3174 = vmatpush2.msra.mxu0 %v1972
  %3175 = vmatprep.subr.mxu0 %v1965
  %3176 = vmatpush2.msra.mxu0 %v1964
  %3177 = vmatprep.mubr.f32.mxu0 %v2046
  %3178 = vmatmul.mubr.f32.gmra.mxu0 %v40
  %v3179 = vpop.f32.mrf.mxu0
  %v3180 = vadd.f32 %v3109, %v3179
  %v3181 = vpop.f32.mrf.mxu0
  %v3182 = vadd.f32 %v3111, %v3181
  %3183 = vdwg.mxu0
  %3184 = vmatprep.subr.mxu0 %v167
  %3185 = vmatpush1.msra.mxu0 %v166
  %3186 = vmatprep.subr.mxu0 %v159
  %3187 = vmatpush1.msra.mxu0 %v158
  %3188 = vmatprep.subr.mxu0 %v151
  %3189 = vmatpush1.msra.mxu0 %v150
  %3190 = vmatprep.subr.mxu0 %v143
  %3191 = vmatpush1.msra.mxu0 %v142
  %3192 = vmatprep.subr.mxu0 %v135
  %3193 = vmatpush1.msra.mxu0 %v134
  %3194 = vmatprep.subr.mxu0 %v127
  %3195 = vmatpush1.msra.mxu0 %v126
  %3196 = vmatprep.subr.mxu0 %v119
  %3197 = vmatpush1.msra.mxu0 %v118
  %3198 = vmatprep.subr.mxu0 %v111
  %3199 = vmatpush1.msra.mxu0 %v110
  %3200 = vmatprep.subr.mxu0 %v103
  %3201 = vmatpush1.msra.mxu0 %v102
  %3202 = vmatprep.subr.mxu0 %v95
  %3203 = vmatpush1.msra.mxu0 %v94
  %3204 = vmatprep.subr.mxu0 %v87
  %3205 = vmatpush1.msra.mxu0 %v86
  %3206 = vmatprep.subr.mxu0 %v79
  %3207 = vmatpush1.msra.mxu0 %v78
  %3208 = vmatprep.subr.mxu0 %v71
  %3209 = vmatpush1.msra.mxu0 %v70
  %3210 = vmatprep.subr.mxu0 %v63
  %3211 = vmatpush1.msra.mxu0 %v62
  %3212 = vmatprep.subr.mxu0 %v55
  %3213 = vmatpush1.msra.mxu0 %v54
  %3214 = vmatprep.subr.mxu0 %v47
  %3215 = vmatpush1.msra.mxu0 %v46
  %3216 = vmatprep.subr.mxu0 %v295
  %3217 = vmatpush2.msra.mxu0 %v294
  %3218 = vmatprep.subr.mxu0 %v287
  %3219 = vmatpush2.msra.mxu0 %v286
  %3220 = vmatprep.subr.mxu0 %v279
  %3221 = vmatpush2.msra.mxu0 %v278
  %3222 = vmatprep.subr.mxu0 %v271
  %3223 = vmatpush2.msra.mxu0 %v270
  %3224 = vmatprep.subr.mxu0 %v263
  %3225 = vmatpush2.msra.mxu0 %v262
  %3226 = vmatprep.subr.mxu0 %v255
  %3227 = vmatpush2.msra.mxu0 %v254
  %3228 = vmatprep.subr.mxu0 %v247
  %3229 = vmatpush2.msra.mxu0 %v246
  %3230 = vmatprep.subr.mxu0 %v239
  %3231 = vmatpush2.msra.mxu0 %v238
  %3232 = vmatprep.subr.mxu0 %v231
  %3233 = vmatpush2.msra.mxu0 %v230
  %3234 = vmatprep.subr.mxu0 %v223
  %3235 = vmatpush2.msra.mxu0 %v222
  %3236 = vmatprep.subr.mxu0 %v215
  %3237 = vmatpush2.msra.mxu0 %v214
  %3238 = vmatprep.subr.mxu0 %v207
  %3239 = vmatpush2.msra.mxu0 %v206
  %3240 = vmatprep.subr.mxu0 %v199
  %3241 = vmatpush2.msra.mxu0 %v198
  %3242 = vmatprep.subr.mxu0 %v191
  %3243 = vmatpush2.msra.mxu0 %v190
  %3244 = vmatprep.subr.mxu0 %v183
  %3245 = vmatpush2.msra.mxu0 %v182
  %3246 = vmatprep.subr.mxu0 %v175
  %3247 = vmatpush2.msra.mxu0 %v174
  %3248 = vmatprep.mubr.f32.mxu0 %v27
  %3249 = vmatmul.mubr.f32.gmra.mxu0 %v26
  %v3250 = vpop.f32.mrf.mxu0
  %v3251 = vadd.f32 %v2023, %v3250
  %v3252 = vpop.f32.mrf.mxu0
  %v3253 = vadd.f32 %v2027, %v3252
  %3254 = vdwg.mxu0
  %3255 = vmatprep.subr.mxu0 %v423
  %3256 = vmatpush1.msra.mxu0 %v422
  %3257 = vmatprep.subr.mxu0 %v415
  %3258 = vmatpush1.msra.mxu0 %v414
  %3259 = vmatprep.subr.mxu0 %v407
  %3260 = vmatpush1.msra.mxu0 %v406
  %3261 = vmatprep.subr.mxu0 %v399
  %3262 = vmatpush1.msra.mxu0 %v398
  %3263 = vmatprep.subr.mxu0 %v391
  %3264 = vmatpush1.msra.mxu0 %v390
  %3265 = vmatprep.subr.mxu0 %v383
  %3266 = vmatpush1.msra.mxu0 %v382
  %3267 = vmatprep.subr.mxu0 %v375
  %3268 = vmatpush1.msra.mxu0 %v374
  %3269 = vmatprep.subr.mxu0 %v367
  %3270 = vmatpush1.msra.mxu0 %v366
  %3271 = vmatprep.subr.mxu0 %v359
  %3272 = vmatpush1.msra.mxu0 %v358
  %3273 = vmatprep.subr.mxu0 %v351
  %3274 = vmatpush1.msra.mxu0 %v350
  %3275 = vmatprep.subr.mxu0 %v343
  %3276 = vmatpush1.msra.mxu0 %v342
  %3277 = vmatprep.subr.mxu0 %v335
  %3278 = vmatpush1.msra.mxu0 %v334
  %3279 = vmatprep.subr.mxu0 %v327
  %3280 = vmatpush1.msra.mxu0 %v326
  %3281 = vmatprep.subr.mxu0 %v319
  %3282 = vmatpush1.msra.mxu0 %v318
  %3283 = vmatprep.subr.mxu0 %v311
  %3284 = vmatpush1.msra.mxu0 %v310
  %3285 = vmatprep.subr.mxu0 %v303
  %3286 = vmatpush1.msra.mxu0 %v302
  %3287 = vmatprep.subr.mxu0 %v551
  %3288 = vmatpush2.msra.mxu0 %v550
  %3289 = vmatprep.subr.mxu0 %v543
  %3290 = vmatpush2.msra.mxu0 %v542
  %3291 = vmatprep.subr.mxu0 %v535
  %3292 = vmatpush2.msra.mxu0 %v534
  %3293 = vmatprep.subr.mxu0 %v527
  %3294 = vmatpush2.msra.mxu0 %v526
  %3295 = vmatprep.subr.mxu0 %v519
  %3296 = vmatpush2.msra.mxu0 %v518
  %3297 = vmatprep.subr.mxu0 %v511
  %3298 = vmatpush2.msra.mxu0 %v510
  %3299 = vmatprep.subr.mxu0 %v503
  %3300 = vmatpush2.msra.mxu0 %v502
  %3301 = vmatprep.subr.mxu0 %v495
  %3302 = vmatpush2.msra.mxu0 %v494
  %3303 = vmatprep.subr.mxu0 %v487
  %3304 = vmatpush2.msra.mxu0 %v486
  %3305 = vmatprep.subr.mxu0 %v479
  %3306 = vmatpush2.msra.mxu0 %v478
  %3307 = vmatprep.subr.mxu0 %v471
  %3308 = vmatpush2.msra.mxu0 %v470
  %3309 = vmatprep.subr.mxu0 %v463
  %3310 = vmatpush2.msra.mxu0 %v462
  %3311 = vmatprep.subr.mxu0 %v455
  %3312 = vmatpush2.msra.mxu0 %v454
  %3313 = vmatprep.subr.mxu0 %v447
  %3314 = vmatpush2.msra.mxu0 %v446
  %3315 = vmatprep.subr.mxu0 %v439
  %3316 = vmatpush2.msra.mxu0 %v438
  %3317 = vmatprep.subr.mxu0 %v431
  %3318 = vmatpush2.msra.mxu0 %v430
  %3319 = vmatprep.mubr.f32.mxu0 %v29
  %3320 = vmatmul.mubr.f32.gmra.mxu0 %v28
  %v3321 = vpop.f32.mrf.mxu0
  %v3322 = vadd.f32 %v3251, %v3321
  %v3323 = vpop.f32.mrf.mxu0
  %v3324 = vadd.f32 %v3253, %v3323
  %3325 = vdwg.mxu0
  %3326 = vmatprep.subr.mxu0 %v679
  %3327 = vmatpush1.msra.mxu0 %v678
  %3328 = vmatprep.subr.mxu0 %v671
  %3329 = vmatpush1.msra.mxu0 %v670
  %3330 = vmatprep.subr.mxu0 %v663
  %3331 = vmatpush1.msra.mxu0 %v662
  %3332 = vmatprep.subr.mxu0 %v655
  %3333 = vmatpush1.msra.mxu0 %v654
  %3334 = vmatprep.subr.mxu0 %v647
  %3335 = vmatpush1.msra.mxu0 %v646
  %3336 = vmatprep.subr.mxu0 %v639
  %3337 = vmatpush1.msra.mxu0 %v638
  %3338 = vmatprep.subr.mxu0 %v631
  %3339 = vmatpush1.msra.mxu0 %v630
  %3340 = vmatprep.subr.mxu0 %v623
  %3341 = vmatpush1.msra.mxu0 %v622
  %3342 = vmatprep.subr.mxu0 %v615
  %3343 = vmatpush1.msra.mxu0 %v614
  %3344 = vmatprep.subr.mxu0 %v607
  %3345 = vmatpush1.msra.mxu0 %v606
  %3346 = vmatprep.subr.mxu0 %v599
  %3347 = vmatpush1.msra.mxu0 %v598
  %3348 = vmatprep.subr.mxu0 %v591
  %3349 = vmatpush1.msra.mxu0 %v590
  %3350 = vmatprep.subr.mxu0 %v583
  %3351 = vmatpush1.msra.mxu0 %v582
  %3352 = vmatprep.subr.mxu0 %v575
  %3353 = vmatpush1.msra.mxu0 %v574
  %3354 = vmatprep.subr.mxu0 %v567
  %3355 = vmatpush1.msra.mxu0 %v566
  %3356 = vmatprep.subr.mxu0 %v559
  %3357 = vmatpush1.msra.mxu0 %v558
  %3358 = vmatprep.subr.mxu0 %v807
  %3359 = vmatpush2.msra.mxu0 %v806
  %3360 = vmatprep.subr.mxu0 %v799
  %3361 = vmatpush2.msra.mxu0 %v798
  %3362 = vmatprep.subr.mxu0 %v791
  %3363 = vmatpush2.msra.mxu0 %v790
  %3364 = vmatprep.subr.mxu0 %v783
  %3365 = vmatpush2.msra.mxu0 %v782
  %3366 = vmatprep.subr.mxu0 %v775
  %3367 = vmatpush2.msra.mxu0 %v774
  %3368 = vmatprep.subr.mxu0 %v767
  %3369 = vmatpush2.msra.mxu0 %v766
  %3370 = vmatprep.subr.mxu0 %v759
  %3371 = vmatpush2.msra.mxu0 %v758
  %3372 = vmatprep.subr.mxu0 %v751
  %3373 = vmatpush2.msra.mxu0 %v750
  %3374 = vmatprep.subr.mxu0 %v743
  %3375 = vmatpush2.msra.mxu0 %v742
  %3376 = vmatprep.subr.mxu0 %v735
  %3377 = vmatpush2.msra.mxu0 %v734
  %3378 = vmatprep.subr.mxu0 %v727
  %3379 = vmatpush2.msra.mxu0 %v726
  %3380 = vmatprep.subr.mxu0 %v719
  %3381 = vmatpush2.msra.mxu0 %v718
  %3382 = vmatprep.subr.mxu0 %v711
  %3383 = vmatpush2.msra.mxu0 %v710
  %3384 = vmatprep.subr.mxu0 %v703
  %3385 = vmatpush2.msra.mxu0 %v702
  %3386 = vmatprep.subr.mxu0 %v695
  %3387 = vmatpush2.msra.mxu0 %v694
  %3388 = vmatprep.subr.mxu0 %v687
  %3389 = vmatpush2.msra.mxu0 %v686
  %3390 = vmatprep.mubr.f32.mxu0 %v31
  %3391 = vmatmul.mubr.f32.gmra.mxu0 %v30
  %v3392 = vpop.f32.mrf.mxu0
  %v3393 = vadd.f32 %v3322, %v3392
  %v3394 = vpop.f32.mrf.mxu0
  %v3395 = vadd.f32 %v3324, %v3394
  %3396 = vdwg.mxu0
  %3397 = vmatprep.subr.mxu0 %v935
  %3398 = vmatpush1.msra.mxu0 %v934
  %3399 = vmatprep.subr.mxu0 %v927
  %3400 = vmatpush1.msra.mxu0 %v926
  %3401 = vmatprep.subr.mxu0 %v919
  %3402 = vmatpush1.msra.mxu0 %v918
  %3403 = vmatprep.subr.mxu0 %v911
  %3404 = vmatpush1.msra.mxu0 %v910
  %3405 = vmatprep.subr.mxu0 %v903
  %3406 = vmatpush1.msra.mxu0 %v902
  %3407 = vmatprep.subr.mxu0 %v895
  %3408 = vmatpush1.msra.mxu0 %v894
  %3409 = vmatprep.subr.mxu0 %v887
  %3410 = vmatpush1.msra.mxu0 %v886
  %3411 = vmatprep.subr.mxu0 %v879
  %3412 = vmatpush1.msra.mxu0 %v878
  %3413 = vmatprep.subr.mxu0 %v871
  %3414 = vmatpush1.msra.mxu0 %v870
  %3415 = vmatprep.subr.mxu0 %v863
  %3416 = vmatpush1.msra.mxu0 %v862
  %3417 = vmatprep.subr.mxu0 %v855
  %3418 = vmatpush1.msra.mxu0 %v854
  %3419 = vmatprep.subr.mxu0 %v847
  %3420 = vmatpush1.msra.mxu0 %v846
  %3421 = vmatprep.subr.mxu0 %v839
  %3422 = vmatpush1.msra.mxu0 %v838
  %3423 = vmatprep.subr.mxu0 %v831
  %3424 = vmatpush1.msra.mxu0 %v830
  %3425 = vmatprep.subr.mxu0 %v823
  %3426 = vmatpush1.msra.mxu0 %v822
  %3427 = vmatprep.subr.mxu0 %v815
  %3428 = vmatpush1.msra.mxu0 %v814
  %3429 = vmatprep.subr.mxu0 %v1063
  %3430 = vmatpush2.msra.mxu0 %v1062
  %3431 = vmatprep.subr.mxu0 %v1055
  %3432 = vmatpush2.msra.mxu0 %v1054
  %3433 = vmatprep.subr.mxu0 %v1047
  %3434 = vmatpush2.msra.mxu0 %v1046
  %3435 = vmatprep.subr.mxu0 %v1039
  %3436 = vmatpush2.msra.mxu0 %v1038
  %3437 = vmatprep.subr.mxu0 %v1031
  %3438 = vmatpush2.msra.mxu0 %v1030
  %3439 = vmatprep.subr.mxu0 %v1023
  %3440 = vmatpush2.msra.mxu0 %v1022
  %3441 = vmatprep.subr.mxu0 %v1015
  %3442 = vmatpush2.msra.mxu0 %v1014
  %3443 = vmatprep.subr.mxu0 %v1007
  %3444 = vmatpush2.msra.mxu0 %v1006
  %3445 = vmatprep.subr.mxu0 %v999
  %3446 = vmatpush2.msra.mxu0 %v998
  %3447 = vmatprep.subr.mxu0 %v991
  %3448 = vmatpush2.msra.mxu0 %v990
  %3449 = vmatprep.subr.mxu0 %v983
  %3450 = vmatpush2.msra.mxu0 %v982
  %3451 = vmatprep.subr.mxu0 %v975
  %3452 = vmatpush2.msra.mxu0 %v974
  %3453 = vmatprep.subr.mxu0 %v967
  %3454 = vmatpush2.msra.mxu0 %v966
  %3455 = vmatprep.subr.mxu0 %v959
  %3456 = vmatpush2.msra.mxu0 %v958
  %3457 = vmatprep.subr.mxu0 %v951
  %3458 = vmatpush2.msra.mxu0 %v950
  %3459 = vmatprep.subr.mxu0 %v943
  %3460 = vmatpush2.msra.mxu0 %v942
  %3461 = vmatprep.mubr.f32.mxu0 %v33
  %3462 = vmatmul.mubr.f32.gmra.mxu0 %v32
  %v3463 = vpop.f32.mrf.mxu0
  %v3464 = vadd.f32 %v3393, %v3463
  %v3465 = vpop.f32.mrf.mxu0
  %v3466 = vadd.f32 %v3395, %v3465
  %3467 = vdwg.mxu0
  %3468 = vmatprep.subr.mxu0 %v1191
  %3469 = vmatpush1.msra.mxu0 %v1190
  %3470 = vmatprep.subr.mxu0 %v1183
  %3471 = vmatpush1.msra.mxu0 %v1182
  %3472 = vmatprep.subr.mxu0 %v1175
  %3473 = vmatpush1.msra.mxu0 %v1174
  %3474 = vmatprep.subr.mxu0 %v1167
  %3475 = vmatpush1.msra.mxu0 %v1166
  %3476 = vmatprep.subr.mxu0 %v1159
  %3477 = vmatpush1.msra.mxu0 %v1158
  %3478 = vmatprep.subr.mxu0 %v1151
  %3479 = vmatpush1.msra.mxu0 %v1150
  %3480 = vmatprep.subr.mxu0 %v1143
  %3481 = vmatpush1.msra.mxu0 %v1142
  %3482 = vmatprep.subr.mxu0 %v1135
  %3483 = vmatpush1.msra.mxu0 %v1134
  %3484 = vmatprep.subr.mxu0 %v1127
  %3485 = vmatpush1.msra.mxu0 %v1126
  %3486 = vmatprep.subr.mxu0 %v1119
  %3487 = vmatpush1.msra.mxu0 %v1118
  %3488 = vmatprep.subr.mxu0 %v1111
  %3489 = vmatpush1.msra.mxu0 %v1110
  %3490 = vmatprep.subr.mxu0 %v1103
  %3491 = vmatpush1.msra.mxu0 %v1102
  %3492 = vmatprep.subr.mxu0 %v1095
  %3493 = vmatpush1.msra.mxu0 %v1094
  %3494 = vmatprep.subr.mxu0 %v1087
  %3495 = vmatpush1.msra.mxu0 %v1086
  %3496 = vmatprep.subr.mxu0 %v1079
  %3497 = vmatpush1.msra.mxu0 %v1078
  %3498 = vmatprep.subr.mxu0 %v1071
  %3499 = vmatpush1.msra.mxu0 %v1070
  %3500 = vmatprep.subr.mxu0 %v1319
  %3501 = vmatpush2.msra.mxu0 %v1318
  %3502 = vmatprep.subr.mxu0 %v1311
  %3503 = vmatpush2.msra.mxu0 %v1310
  %3504 = vmatprep.subr.mxu0 %v1303
  %3505 = vmatpush2.msra.mxu0 %v1302
  %3506 = vmatprep.subr.mxu0 %v1295
  %3507 = vmatpush2.msra.mxu0 %v1294
  %3508 = vmatprep.subr.mxu0 %v1287
  %3509 = vmatpush2.msra.mxu0 %v1286
  %3510 = vmatprep.subr.mxu0 %v1279
  %3511 = vmatpush2.msra.mxu0 %v1278
  %3512 = vmatprep.subr.mxu0 %v1271
  %3513 = vmatpush2.msra.mxu0 %v1270
  %3514 = vmatprep.subr.mxu0 %v1263
  %3515 = vmatpush2.msra.mxu0 %v1262
  %3516 = vmatprep.subr.mxu0 %v1255
  %3517 = vmatpush2.msra.mxu0 %v1254
  %3518 = vmatprep.subr.mxu0 %v1247
  %3519 = vmatpush2.msra.mxu0 %v1246
  %3520 = vmatprep.subr.mxu0 %v1239
  %3521 = vmatpush2.msra.mxu0 %v1238
  %3522 = vmatprep.subr.mxu0 %v1231
  %3523 = vmatpush2.msra.mxu0 %v1230
  %3524 = vmatprep.subr.mxu0 %v1223
  %3525 = vmatpush2.msra.mxu0 %v1222
  %3526 = vmatprep.subr.mxu0 %v1215
  %3527 = vmatpush2.msra.mxu0 %v1214
  %3528 = vmatprep.subr.mxu0 %v1207
  %3529 = vmatpush2.msra.mxu0 %v1206
  %3530 = vmatprep.subr.mxu0 %v1199
  %3531 = vmatpush2.msra.mxu0 %v1198
  %3532 = vmatprep.mubr.f32.mxu0 %v35
  %3533 = vmatmul.mubr.f32.gmra.mxu0 %v34
  %v3534 = vpop.f32.mrf.mxu0
  %v3535 = vadd.f32 %v3464, %v3534
  %v3536 = vpop.f32.mrf.mxu0
  %v3537 = vadd.f32 %v3466, %v3536
  %3538 = vdwg.mxu0
  %3539 = vmatprep.subr.mxu0 %v1447
  %3540 = vmatpush1.msra.mxu0 %v1446
  %3541 = vmatprep.subr.mxu0 %v1439
  %3542 = vmatpush1.msra.mxu0 %v1438
  %3543 = vmatprep.subr.mxu0 %v1431
  %3544 = vmatpush1.msra.mxu0 %v1430
  %3545 = vmatprep.subr.mxu0 %v1423
  %3546 = vmatpush1.msra.mxu0 %v1422
  %3547 = vmatprep.subr.mxu0 %v1415
  %3548 = vmatpush1.msra.mxu0 %v1414
  %3549 = vmatprep.subr.mxu0 %v1407
  %3550 = vmatpush1.msra.mxu0 %v1406
  %3551 = vmatprep.subr.mxu0 %v1399
  %3552 = vmatpush1.msra.mxu0 %v1398
  %3553 = vmatprep.subr.mxu0 %v1391
  %3554 = vmatpush1.msra.mxu0 %v1390
  %3555 = vmatprep.subr.mxu0 %v1383
  %3556 = vmatpush1.msra.mxu0 %v1382
  %3557 = vmatprep.subr.mxu0 %v1375
  %3558 = vmatpush1.msra.mxu0 %v1374
  %3559 = vmatprep.subr.mxu0 %v1367
  %3560 = vmatpush1.msra.mxu0 %v1366
  %3561 = vmatprep.subr.mxu0 %v1359
  %3562 = vmatpush1.msra.mxu0 %v1358
  %3563 = vmatprep.subr.mxu0 %v1351
  %3564 = vmatpush1.msra.mxu0 %v1350
  %3565 = vmatprep.subr.mxu0 %v1343
  %3566 = vmatpush1.msra.mxu0 %v1342
  %3567 = vmatprep.subr.mxu0 %v1335
  %3568 = vmatpush1.msra.mxu0 %v1334
  %3569 = vmatprep.subr.mxu0 %v1327
  %3570 = vmatpush1.msra.mxu0 %v1326
  %3571 = vmatprep.subr.mxu0 %v1575
  %3572 = vmatpush2.msra.mxu0 %v1574
  %3573 = vmatprep.subr.mxu0 %v1567
  %3574 = vmatpush2.msra.mxu0 %v1566
  %3575 = vmatprep.subr.mxu0 %v1559
  %3576 = vmatpush2.msra.mxu0 %v1558
  %3577 = vmatprep.subr.mxu0 %v1551
  %3578 = vmatpush2.msra.mxu0 %v1550
  %3579 = vmatprep.subr.mxu0 %v1543
  %3580 = vmatpush2.msra.mxu0 %v1542
  %3581 = vmatprep.subr.mxu0 %v1535
  %3582 = vmatpush2.msra.mxu0 %v1534
  %3583 = vmatprep.subr.mxu0 %v1527
  %3584 = vmatpush2.msra.mxu0 %v1526
  %3585 = vmatprep.subr.mxu0 %v1519
  %3586 = vmatpush2.msra.mxu0 %v1518
  %3587 = vmatprep.subr.mxu0 %v1511
  %3588 = vmatpush2.msra.mxu0 %v1510
  %3589 = vmatprep.subr.mxu0 %v1503
  %3590 = vmatpush2.msra.mxu0 %v1502
  %3591 = vmatprep.subr.mxu0 %v1495
  %3592 = vmatpush2.msra.mxu0 %v1494
  %3593 = vmatprep.subr.mxu0 %v1487
  %3594 = vmatpush2.msra.mxu0 %v1486
  %3595 = vmatprep.subr.mxu0 %v1479
  %3596 = vmatpush2.msra.mxu0 %v1478
  %3597 = vmatprep.subr.mxu0 %v1471
  %3598 = vmatpush2.msra.mxu0 %v1470
  %3599 = vmatprep.subr.mxu0 %v1463
  %3600 = vmatpush2.msra.mxu0 %v1462
  %3601 = vmatprep.subr.mxu0 %v1455
  %3602 = vmatpush2.msra.mxu0 %v1454
  %3603 = vmatprep.mubr.f32.mxu0 %v37
  %3604 = vmatmul.mubr.f32.gmra.mxu0 %v36
  %v3605 = vpop.f32.mrf.mxu0
  %v3606 = vadd.f32 %v3535, %v3605
  %v3607 = vpop.f32.mrf.mxu0
  %v3608 = vadd.f32 %v3537, %v3607
  %3609 = vdwg.mxu0
  %3610 = vmatprep.subr.mxu0 %v1703
  %3611 = vmatpush1.msra.mxu0 %v1702
  %3612 = vmatprep.subr.mxu0 %v1695
  %3613 = vmatpush1.msra.mxu0 %v1694
  %3614 = vmatprep.subr.mxu0 %v1687
  %3615 = vmatpush1.msra.mxu0 %v1686
  %3616 = vmatprep.subr.mxu0 %v1679
  %3617 = vmatpush1.msra.mxu0 %v1678
  %3618 = vmatprep.subr.mxu0 %v1671
  %3619 = vmatpush1.msra.mxu0 %v1670
  %3620 = vmatprep.subr.mxu0 %v1663
  %3621 = vmatpush1.msra.mxu0 %v1662
  %3622 = vmatprep.subr.mxu0 %v1655
  %3623 = vmatpush1.msra.mxu0 %v1654
  %3624 = vmatprep.subr.mxu0 %v1647
  %3625 = vmatpush1.msra.mxu0 %v1646
  %3626 = vmatprep.subr.mxu0 %v1639
  %3627 = vmatpush1.msra.mxu0 %v1638
  %3628 = vmatprep.subr.mxu0 %v1631
  %3629 = vmatpush1.msra.mxu0 %v1630
  %3630 = vmatprep.subr.mxu0 %v1623
  %3631 = vmatpush1.msra.mxu0 %v1622
  %3632 = vmatprep.subr.mxu0 %v1615
  %3633 = vmatpush1.msra.mxu0 %v1614
  %3634 = vmatprep.subr.mxu0 %v1607
  %3635 = vmatpush1.msra.mxu0 %v1606
  %3636 = vmatprep.subr.mxu0 %v1599
  %3637 = vmatpush1.msra.mxu0 %v1598
  %3638 = vmatprep.subr.mxu0 %v1591
  %3639 = vmatpush1.msra.mxu0 %v1590
  %3640 = vmatprep.subr.mxu0 %v1583
  %3641 = vmatpush1.msra.mxu0 %v1582
  %3642 = vmatprep.subr.mxu0 %v1831
  %3643 = vmatpush2.msra.mxu0 %v1830
  %3644 = vmatprep.subr.mxu0 %v1823
  %3645 = vmatpush2.msra.mxu0 %v1822
  %3646 = vmatprep.subr.mxu0 %v1815
  %3647 = vmatpush2.msra.mxu0 %v1814
  %3648 = vmatprep.subr.mxu0 %v1807
  %3649 = vmatpush2.msra.mxu0 %v1806
  %3650 = vmatprep.subr.mxu0 %v1799
  %3651 = vmatpush2.msra.mxu0 %v1798
  %3652 = vmatprep.subr.mxu0 %v1791
  %3653 = vmatpush2.msra.mxu0 %v1790
  %3654 = vmatprep.subr.mxu0 %v1783
  %3655 = vmatpush2.msra.mxu0 %v1782
  %3656 = vmatprep.subr.mxu0 %v1775
  %3657 = vmatpush2.msra.mxu0 %v1774
  %3658 = vmatprep.subr.mxu0 %v1767
  %3659 = vmatpush2.msra.mxu0 %v1766
  %3660 = vmatprep.subr.mxu0 %v1759
  %3661 = vmatpush2.msra.mxu0 %v1758
  %3662 = vmatprep.subr.mxu0 %v1751
  %3663 = vmatpush2.msra.mxu0 %v1750
  %3664 = vmatprep.subr.mxu0 %v1743
  %3665 = vmatpush2.msra.mxu0 %v1742
  %3666 = vmatprep.subr.mxu0 %v1735
  %3667 = vmatpush2.msra.mxu0 %v1734
  %3668 = vmatprep.subr.mxu0 %v1727
  %3669 = vmatpush2.msra.mxu0 %v1726
  %3670 = vmatprep.subr.mxu0 %v1719
  %3671 = vmatpush2.msra.mxu0 %v1718
  %3672 = vmatprep.subr.mxu0 %v1711
  %3673 = vmatpush2.msra.mxu0 %v1710
  %3674 = vmatprep.mubr.f32.mxu0 %v39
  %3675 = vmatmul.mubr.f32.gmra.mxu0 %v38
  %v3676 = vpop.f32.mrf.mxu0
  %v3677 = vadd.f32 %v3606, %v3676
  %v3678 = vpop.f32.mrf.mxu0
  %v3679 = vadd.f32 %v3608, %v3678
  %3680 = vdwg.mxu0
  %3681 = vmatprep.subr.mxu0 %v1959
  %3682 = vmatpush1.msra.mxu0 %v1958
  %3683 = vmatprep.subr.mxu0 %v1951
  %3684 = vmatpush1.msra.mxu0 %v1950
  %3685 = vmatprep.subr.mxu0 %v1943
  %3686 = vmatpush1.msra.mxu0 %v1942
  %3687 = vmatprep.subr.mxu0 %v1935
  %3688 = vmatpush1.msra.mxu0 %v1934
  %3689 = vmatprep.subr.mxu0 %v1927
  %3690 = vmatpush1.msra.mxu0 %v1926
  %3691 = vmatprep.subr.mxu0 %v1919
  %3692 = vmatpush1.msra.mxu0 %v1918
  %3693 = vmatprep.subr.mxu0 %v1911
  %3694 = vmatpush1.msra.mxu0 %v1910
  %3695 = vmatprep.subr.mxu0 %v1903
  %3696 = vmatpush1.msra.mxu0 %v1902
  %3697 = vmatprep.subr.mxu0 %v1895
  %3698 = vmatpush1.msra.mxu0 %v1894
  %3699 = vmatprep.subr.mxu0 %v1887
  %3700 = vmatpush1.msra.mxu0 %v1886
  %3701 = vmatprep.subr.mxu0 %v1879
  %3702 = vmatpush1.msra.mxu0 %v1878
  %3703 = vmatprep.subr.mxu0 %v1871
  %3704 = vmatpush1.msra.mxu0 %v1870
  %3705 = vmatprep.subr.mxu0 %v1863
  %3706 = vmatpush1.msra.mxu0 %v1862
  %3707 = vmatprep.subr.mxu0 %v1855
  %3708 = vmatpush1.msra.mxu0 %v1854
  %3709 = vmatprep.subr.mxu0 %v1847
  %3710 = vmatpush1.msra.mxu0 %v1846
  %3711 = vmatprep.subr.mxu0 %v1839
  %3712 = vmatpush1.msra.mxu0 %v1838
  %3713 = vmatprep.subr.mxu0 0.0
  %3714 = vmatpush2.msra.mxu0 0.0
  %3715 = vmatprep.subr.mxu0 0.0
  %3716 = vmatpush2.msra.mxu0 0.0
  %3717 = vmatprep.subr.mxu0 0.0
  %3718 = vmatpush2.msra.mxu0 0.0
  %3719 = vmatprep.subr.mxu0 0.0
  %3720 = vmatpush2.msra.mxu0 0.0
  %3721 = vmatprep.subr.mxu0 0.0
  %3722 = vmatpush2.msra.mxu0 0.0
  %3723 = vmatprep.subr.mxu0 0.0
  %3724 = vmatpush2.msra.mxu0 0.0
  %3725 = vmatprep.subr.mxu0 0.0
  %3726 = vmatpush2.msra.mxu0 0.0
  %3727 = vmatprep.subr.mxu0 0.0
  %3728 = vmatpush2.msra.mxu0 0.0
  %3729 = vmatprep.subr.mxu0 0.0
  %3730 = vmatpush2.msra.mxu0 0.0
  %3731 = vmatprep.subr.mxu0 0.0
  %3732 = vmatpush2.msra.mxu0 0.0
  %3733 = vmatprep.subr.mxu0 0.0
  %3734 = vmatpush2.msra.mxu0 0.0
  %3735 = vmatprep.subr.mxu0 %v1999
  %3736 = vmatpush2.msra.mxu0 %v1998
  %3737 = vmatprep.subr.mxu0 %v1991
  %3738 = vmatpush2.msra.mxu0 %v1990
  %3739 = vmatprep.subr.mxu0 %v1983
  %3740 = vmatpush2.msra.mxu0 %v1982
  %3741 = vmatprep.subr.mxu0 %v1975
  %3742 = vmatpush2.msra.mxu0 %v1974
  %3743 = vmatprep.subr.mxu0 %v1967
  %3744 = vmatpush2.msra.mxu0 %v1966
  %3745 = vmatprep.mubr.f32.mxu0 %v2046
  %3746 = vmatmul.mubr.f32.gmra.mxu0 %v40
  %v3747 = vpop.f32.mrf.mxu0
  %v3748 = vadd.f32 %v3677, %v3747
  %v3749 = vpop.f32.mrf.mxu0
  %v3750 = vadd.f32 %v3679, %v3749
  %3751 = vdwg.mxu0
  %3752 = vmatprep.subr.mxu0 %v169
  %3753 = vmatpush1.msra.mxu0 %v168
  %3754 = vmatprep.subr.mxu0 %v161
  %3755 = vmatpush1.msra.mxu0 %v160
  %3756 = vmatprep.subr.mxu0 %v153
  %3757 = vmatpush1.msra.mxu0 %v152
  %3758 = vmatprep.subr.mxu0 %v145
  %3759 = vmatpush1.msra.mxu0 %v144
  %3760 = vmatprep.subr.mxu0 %v137
  %3761 = vmatpush1.msra.mxu0 %v136
  %3762 = vmatprep.subr.mxu0 %v129
  %3763 = vmatpush1.msra.mxu0 %v128
  %3764 = vmatprep.subr.mxu0 %v121
  %3765 = vmatpush1.msra.mxu0 %v120
  %3766 = vmatprep.subr.mxu0 %v113
  %3767 = vmatpush1.msra.mxu0 %v112
  %3768 = vmatprep.subr.mxu0 %v105
  %3769 = vmatpush1.msra.mxu0 %v104
  %3770 = vmatprep.subr.mxu0 %v97
  %3771 = vmatpush1.msra.mxu0 %v96
  %3772 = vmatprep.subr.mxu0 %v89
  %3773 = vmatpush1.msra.mxu0 %v88
  %3774 = vmatprep.subr.mxu0 %v81
  %3775 = vmatpush1.msra.mxu0 %v80
  %3776 = vmatprep.subr.mxu0 %v73
  %3777 = vmatpush1.msra.mxu0 %v72
  %3778 = vmatprep.subr.mxu0 %v65
  %3779 = vmatpush1.msra.mxu0 %v64
  %3780 = vmatprep.subr.mxu0 %v57
  %3781 = vmatpush1.msra.mxu0 %v56
  %3782 = vmatprep.subr.mxu0 %v49
  %3783 = vmatpush1.msra.mxu0 %v48
  %3784 = vmatprep.subr.mxu0 %v297
  %3785 = vmatpush2.msra.mxu0 %v296
  %3786 = vmatprep.subr.mxu0 %v289
  %3787 = vmatpush2.msra.mxu0 %v288
  %3788 = vmatprep.subr.mxu0 %v281
  %3789 = vmatpush2.msra.mxu0 %v280
  %3790 = vmatprep.subr.mxu0 %v273
  %3791 = vmatpush2.msra.mxu0 %v272
  %3792 = vmatprep.subr.mxu0 %v265
  %3793 = vmatpush2.msra.mxu0 %v264
  %3794 = vmatprep.subr.mxu0 %v257
  %3795 = vmatpush2.msra.mxu0 %v256
  %3796 = vmatprep.subr.mxu0 %v249
  %3797 = vmatpush2.msra.mxu0 %v248
  %3798 = vmatprep.subr.mxu0 %v241
  %3799 = vmatpush2.msra.mxu0 %v240
  %3800 = vmatprep.subr.mxu0 %v233
  %3801 = vmatpush2.msra.mxu0 %v232
  %3802 = vmatprep.subr.mxu0 %v225
  %3803 = vmatpush2.msra.mxu0 %v224
  %3804 = vmatprep.subr.mxu0 %v217
  %3805 = vmatpush2.msra.mxu0 %v216
  %3806 = vmatprep.subr.mxu0 %v209
  %3807 = vmatpush2.msra.mxu0 %v208
  %3808 = vmatprep.subr.mxu0 %v201
  %3809 = vmatpush2.msra.mxu0 %v200
  %3810 = vmatprep.subr.mxu0 %v193
  %3811 = vmatpush2.msra.mxu0 %v192
  %3812 = vmatprep.subr.mxu0 %v185
  %3813 = vmatpush2.msra.mxu0 %v184
  %3814 = vmatprep.subr.mxu0 %v177
  %3815 = vmatpush2.msra.mxu0 %v176
  %3816 = vmatprep.mubr.f32.mxu0 %v27
  %3817 = vmatmul.mubr.f32.gmra.mxu0 %v26
  %v3818 = vpop.f32.mrf.mxu0
  %v3819 = vadd.f32 %v2031, %v3818
  %v3820 = vpop.f32.mrf.mxu0
  %v3821 = vadd.f32 %v2035, %v3820
  %3822 = vdwg.mxu0
  %3823 = vmatprep.subr.mxu0 %v425
  %3824 = vmatpush1.msra.mxu0 %v424
  %3825 = vmatprep.subr.mxu0 %v417
  %3826 = vmatpush1.msra.mxu0 %v416
  %3827 = vmatprep.subr.mxu0 %v409
  %3828 = vmatpush1.msra.mxu0 %v408
  %3829 = vmatprep.subr.mxu0 %v401
  %3830 = vmatpush1.msra.mxu0 %v400
  %3831 = vmatprep.subr.mxu0 %v393
  %3832 = vmatpush1.msra.mxu0 %v392
  %3833 = vmatprep.subr.mxu0 %v385
  %3834 = vmatpush1.msra.mxu0 %v384
  %3835 = vmatprep.subr.mxu0 %v377
  %3836 = vmatpush1.msra.mxu0 %v376
  %3837 = vmatprep.subr.mxu0 %v369
  %3838 = vmatpush1.msra.mxu0 %v368
  %3839 = vmatprep.subr.mxu0 %v361
  %3840 = vmatpush1.msra.mxu0 %v360
  %3841 = vmatprep.subr.mxu0 %v353
  %3842 = vmatpush1.msra.mxu0 %v352
  %3843 = vmatprep.subr.mxu0 %v345
  %3844 = vmatpush1.msra.mxu0 %v344
  %3845 = vmatprep.subr.mxu0 %v337
  %3846 = vmatpush1.msra.mxu0 %v336
  %3847 = vmatprep.subr.mxu0 %v329
  %3848 = vmatpush1.msra.mxu0 %v328
  %3849 = vmatprep.subr.mxu0 %v321
  %3850 = vmatpush1.msra.mxu0 %v320
  %3851 = vmatprep.subr.mxu0 %v313
  %3852 = vmatpush1.msra.mxu0 %v312
  %3853 = vmatprep.subr.mxu0 %v305
  %3854 = vmatpush1.msra.mxu0 %v304
  %3855 = vmatprep.subr.mxu0 %v553
  %3856 = vmatpush2.msra.mxu0 %v552
  %3857 = vmatprep.subr.mxu0 %v545
  %3858 = vmatpush2.msra.mxu0 %v544
  %3859 = vmatprep.subr.mxu0 %v537
  %3860 = vmatpush2.msra.mxu0 %v536
  %3861 = vmatprep.subr.mxu0 %v529
  %3862 = vmatpush2.msra.mxu0 %v528
  %3863 = vmatprep.subr.mxu0 %v521
  %3864 = vmatpush2.msra.mxu0 %v520
  %3865 = vmatprep.subr.mxu0 %v513
  %3866 = vmatpush2.msra.mxu0 %v512
  %3867 = vmatprep.subr.mxu0 %v505
  %3868 = vmatpush2.msra.mxu0 %v504
  %3869 = vmatprep.subr.mxu0 %v497
  %3870 = vmatpush2.msra.mxu0 %v496
  %3871 = vmatprep.subr.mxu0 %v489
  %3872 = vmatpush2.msra.mxu0 %v488
  %3873 = vmatprep.subr.mxu0 %v481
  %3874 = vmatpush2.msra.mxu0 %v480
  %3875 = vmatprep.subr.mxu0 %v473
  %3876 = vmatpush2.msra.mxu0 %v472
  %3877 = vmatprep.subr.mxu0 %v465
  %3878 = vmatpush2.msra.mxu0 %v464
  %3879 = vmatprep.subr.mxu0 %v457
  %3880 = vmatpush2.msra.mxu0 %v456
  %3881 = vmatprep.subr.mxu0 %v449
  %3882 = vmatpush2.msra.mxu0 %v448
  %3883 = vmatprep.subr.mxu0 %v441
  %3884 = vmatpush2.msra.mxu0 %v440
  %3885 = vmatprep.subr.mxu0 %v433
  %3886 = vmatpush2.msra.mxu0 %v432
  %3887 = vmatprep.mubr.f32.mxu0 %v29
  %3888 = vmatmul.mubr.f32.gmra.mxu0 %v28
  %v3889 = vpop.f32.mrf.mxu0
  %v3890 = vadd.f32 %v3819, %v3889
  %v3891 = vpop.f32.mrf.mxu0
  %v3892 = vadd.f32 %v3821, %v3891
  %3893 = vdwg.mxu0
  %3894 = vmatprep.subr.mxu0 %v681
  %3895 = vmatpush1.msra.mxu0 %v680
  %3896 = vmatprep.subr.mxu0 %v673
  %3897 = vmatpush1.msra.mxu0 %v672
  %3898 = vmatprep.subr.mxu0 %v665
  %3899 = vmatpush1.msra.mxu0 %v664
  %3900 = vmatprep.subr.mxu0 %v657
  %3901 = vmatpush1.msra.mxu0 %v656
  %3902 = vmatprep.subr.mxu0 %v649
  %3903 = vmatpush1.msra.mxu0 %v648
  %3904 = vmatprep.subr.mxu0 %v641
  %3905 = vmatpush1.msra.mxu0 %v640
  %3906 = vmatprep.subr.mxu0 %v633
  %3907 = vmatpush1.msra.mxu0 %v632
  %3908 = vmatprep.subr.mxu0 %v625
  %3909 = vmatpush1.msra.mxu0 %v624
  %3910 = vmatprep.subr.mxu0 %v617
  %3911 = vmatpush1.msra.mxu0 %v616
  %3912 = vmatprep.subr.mxu0 %v609
  %3913 = vmatpush1.msra.mxu0 %v608
  %3914 = vmatprep.subr.mxu0 %v601
  %3915 = vmatpush1.msra.mxu0 %v600
  %3916 = vmatprep.subr.mxu0 %v593
  %3917 = vmatpush1.msra.mxu0 %v592
  %3918 = vmatprep.subr.mxu0 %v585
  %3919 = vmatpush1.msra.mxu0 %v584
  %3920 = vmatprep.subr.mxu0 %v577
  %3921 = vmatpush1.msra.mxu0 %v576
  %3922 = vmatprep.subr.mxu0 %v569
  %3923 = vmatpush1.msra.mxu0 %v568
  %3924 = vmatprep.subr.mxu0 %v561
  %3925 = vmatpush1.msra.mxu0 %v560
  %3926 = vmatprep.subr.mxu0 %v809
  %3927 = vmatpush2.msra.mxu0 %v808
  %3928 = vmatprep.subr.mxu0 %v801
  %3929 = vmatpush2.msra.mxu0 %v800
  %3930 = vmatprep.subr.mxu0 %v793
  %3931 = vmatpush2.msra.mxu0 %v792
  %3932 = vmatprep.subr.mxu0 %v785
  %3933 = vmatpush2.msra.mxu0 %v784
  %3934 = vmatprep.subr.mxu0 %v777
  %3935 = vmatpush2.msra.mxu0 %v776
  %3936 = vmatprep.subr.mxu0 %v769
  %3937 = vmatpush2.msra.mxu0 %v768
  %3938 = vmatprep.subr.mxu0 %v761
  %3939 = vmatpush2.msra.mxu0 %v760
  %3940 = vmatprep.subr.mxu0 %v753
  %3941 = vmatpush2.msra.mxu0 %v752
  %3942 = vmatprep.subr.mxu0 %v745
  %3943 = vmatpush2.msra.mxu0 %v744
  %3944 = vmatprep.subr.mxu0 %v737
  %3945 = vmatpush2.msra.mxu0 %v736
  %3946 = vmatprep.subr.mxu0 %v729
  %3947 = vmatpush2.msra.mxu0 %v728
  %3948 = vmatprep.subr.mxu0 %v721
  %3949 = vmatpush2.msra.mxu0 %v720
  %3950 = vmatprep.subr.mxu0 %v713
  %3951 = vmatpush2.msra.mxu0 %v712
  %3952 = vmatprep.subr.mxu0 %v705
  %3953 = vmatpush2.msra.mxu0 %v704
  %3954 = vmatprep.subr.mxu0 %v697
  %3955 = vmatpush2.msra.mxu0 %v696
  %3956 = vmatprep.subr.mxu0 %v689
  %3957 = vmatpush2.msra.mxu0 %v688
  %3958 = vmatprep.mubr.f32.mxu0 %v31
  %3959 = vmatmul.mubr.f32.gmra.mxu0 %v30
  %v3960 = vpop.f32.mrf.mxu0
  %v3961 = vadd.f32 %v3890, %v3960
  %v3962 = vpop.f32.mrf.mxu0
  %v3963 = vadd.f32 %v3892, %v3962
  %3964 = vdwg.mxu0
  %3965 = vmatprep.subr.mxu0 %v937
  %3966 = vmatpush1.msra.mxu0 %v936
  %3967 = vmatprep.subr.mxu0 %v929
  %3968 = vmatpush1.msra.mxu0 %v928
  %3969 = vmatprep.subr.mxu0 %v921
  %3970 = vmatpush1.msra.mxu0 %v920
  %3971 = vmatprep.subr.mxu0 %v913
  %3972 = vmatpush1.msra.mxu0 %v912
  %3973 = vmatprep.subr.mxu0 %v905
  %3974 = vmatpush1.msra.mxu0 %v904
  %3975 = vmatprep.subr.mxu0 %v897
  %3976 = vmatpush1.msra.mxu0 %v896
  %3977 = vmatprep.subr.mxu0 %v889
  %3978 = vmatpush1.msra.mxu0 %v888
  %3979 = vmatprep.subr.mxu0 %v881
  %3980 = vmatpush1.msra.mxu0 %v880
  %3981 = vmatprep.subr.mxu0 %v873
  %3982 = vmatpush1.msra.mxu0 %v872
  %3983 = vmatprep.subr.mxu0 %v865
  %3984 = vmatpush1.msra.mxu0 %v864
  %3985 = vmatprep.subr.mxu0 %v857
  %3986 = vmatpush1.msra.mxu0 %v856
  %3987 = vmatprep.subr.mxu0 %v849
  %3988 = vmatpush1.msra.mxu0 %v848
  %3989 = vmatprep.subr.mxu0 %v841
  %3990 = vmatpush1.msra.mxu0 %v840
  %3991 = vmatprep.subr.mxu0 %v833
  %3992 = vmatpush1.msra.mxu0 %v832
  %3993 = vmatprep.subr.mxu0 %v825
  %3994 = vmatpush1.msra.mxu0 %v824
  %3995 = vmatprep.subr.mxu0 %v817
  %3996 = vmatpush1.msra.mxu0 %v816
  %3997 = vmatprep.subr.mxu0 %v1065
  %3998 = vmatpush2.msra.mxu0 %v1064
  %3999 = vmatprep.subr.mxu0 %v1057
  %4000 = vmatpush2.msra.mxu0 %v1056
  %4001 = vmatprep.subr.mxu0 %v1049
  %4002 = vmatpush2.msra.mxu0 %v1048
  %4003 = vmatprep.subr.mxu0 %v1041
  %4004 = vmatpush2.msra.mxu0 %v1040
  %4005 = vmatprep.subr.mxu0 %v1033
  %4006 = vmatpush2.msra.mxu0 %v1032
  %4007 = vmatprep.subr.mxu0 %v1025
  %4008 = vmatpush2.msra.mxu0 %v1024
  %4009 = vmatprep.subr.mxu0 %v1017
  %4010 = vmatpush2.msra.mxu0 %v1016
  %4011 = vmatprep.subr.mxu0 %v1009
  %4012 = vmatpush2.msra.mxu0 %v1008
  %4013 = vmatprep.subr.mxu0 %v1001
  %4014 = vmatpush2.msra.mxu0 %v1000
  %4015 = vmatprep.subr.mxu0 %v993
  %4016 = vmatpush2.msra.mxu0 %v992
  %4017 = vmatprep.subr.mxu0 %v985
  %4018 = vmatpush2.msra.mxu0 %v984
  %4019 = vmatprep.subr.mxu0 %v977
  %4020 = vmatpush2.msra.mxu0 %v976
  %4021 = vmatprep.subr.mxu0 %v969
  %4022 = vmatpush2.msra.mxu0 %v968
  %4023 = vmatprep.subr.mxu0 %v961
  %4024 = vmatpush2.msra.mxu0 %v960
  %4025 = vmatprep.subr.mxu0 %v953
  %4026 = vmatpush2.msra.mxu0 %v952
  %4027 = vmatprep.subr.mxu0 %v945
  %4028 = vmatpush2.msra.mxu0 %v944
  %4029 = vmatprep.mubr.f32.mxu0 %v33
  %4030 = vmatmul.mubr.f32.gmra.mxu0 %v32
  %v4031 = vpop.f32.mrf.mxu0
  %v4032 = vadd.f32 %v3961, %v4031
  %v4033 = vpop.f32.mrf.mxu0
  %v4034 = vadd.f32 %v3963, %v4033
  %4035 = vdwg.mxu0
  %4036 = vmatprep.subr.mxu0 %v1193
  %4037 = vmatpush1.msra.mxu0 %v1192
  %4038 = vmatprep.subr.mxu0 %v1185
  %4039 = vmatpush1.msra.mxu0 %v1184
  %4040 = vmatprep.subr.mxu0 %v1177
  %4041 = vmatpush1.msra.mxu0 %v1176
  %4042 = vmatprep.subr.mxu0 %v1169
  %4043 = vmatpush1.msra.mxu0 %v1168
  %4044 = vmatprep.subr.mxu0 %v1161
  %4045 = vmatpush1.msra.mxu0 %v1160
  %4046 = vmatprep.subr.mxu0 %v1153
  %4047 = vmatpush1.msra.mxu0 %v1152
  %4048 = vmatprep.subr.mxu0 %v1145
  %4049 = vmatpush1.msra.mxu0 %v1144
  %4050 = vmatprep.subr.mxu0 %v1137
  %4051 = vmatpush1.msra.mxu0 %v1136
  %4052 = vmatprep.subr.mxu0 %v1129
  %4053 = vmatpush1.msra.mxu0 %v1128
  %4054 = vmatprep.subr.mxu0 %v1121
  %4055 = vmatpush1.msra.mxu0 %v1120
  %4056 = vmatprep.subr.mxu0 %v1113
  %4057 = vmatpush1.msra.mxu0 %v1112
  %4058 = vmatprep.subr.mxu0 %v1105
  %4059 = vmatpush1.msra.mxu0 %v1104
  %4060 = vmatprep.subr.mxu0 %v1097
  %4061 = vmatpush1.msra.mxu0 %v1096
  %4062 = vmatprep.subr.mxu0 %v1089
  %4063 = vmatpush1.msra.mxu0 %v1088
  %4064 = vmatprep.subr.mxu0 %v1081
  %4065 = vmatpush1.msra.mxu0 %v1080
  %4066 = vmatprep.subr.mxu0 %v1073
  %4067 = vmatpush1.msra.mxu0 %v1072
  %4068 = vmatprep.subr.mxu0 %v1321
  %4069 = vmatpush2.msra.mxu0 %v1320
  %4070 = vmatprep.subr.mxu0 %v1313
  %4071 = vmatpush2.msra.mxu0 %v1312
  %4072 = vmatprep.subr.mxu0 %v1305
  %4073 = vmatpush2.msra.mxu0 %v1304
  %4074 = vmatprep.subr.mxu0 %v1297
  %4075 = vmatpush2.msra.mxu0 %v1296
  %4076 = vmatprep.subr.mxu0 %v1289
  %4077 = vmatpush2.msra.mxu0 %v1288
  %4078 = vmatprep.subr.mxu0 %v1281
  %4079 = vmatpush2.msra.mxu0 %v1280
  %4080 = vmatprep.subr.mxu0 %v1273
  %4081 = vmatpush2.msra.mxu0 %v1272
  %4082 = vmatprep.subr.mxu0 %v1265
  %4083 = vmatpush2.msra.mxu0 %v1264
  %4084 = vmatprep.subr.mxu0 %v1257
  %4085 = vmatpush2.msra.mxu0 %v1256
  %4086 = vmatprep.subr.mxu0 %v1249
  %4087 = vmatpush2.msra.mxu0 %v1248
  %4088 = vmatprep.subr.mxu0 %v1241
  %4089 = vmatpush2.msra.mxu0 %v1240
  %4090 = vmatprep.subr.mxu0 %v1233
  %4091 = vmatpush2.msra.mxu0 %v1232
  %4092 = vmatprep.subr.mxu0 %v1225
  %4093 = vmatpush2.msra.mxu0 %v1224
  %4094 = vmatprep.subr.mxu0 %v1217
  %4095 = vmatpush2.msra.mxu0 %v1216
  %4096 = vmatprep.subr.mxu0 %v1209
  %4097 = vmatpush2.msra.mxu0 %v1208
  %4098 = vmatprep.subr.mxu0 %v1201
  %4099 = vmatpush2.msra.mxu0 %v1200
  %4100 = vmatprep.mubr.f32.mxu0 %v35
  %4101 = vmatmul.mubr.f32.gmra.mxu0 %v34
  %v4102 = vpop.f32.mrf.mxu0
  %v4103 = vadd.f32 %v4032, %v4102
  %v4104 = vpop.f32.mrf.mxu0
  %v4105 = vadd.f32 %v4034, %v4104
  %4106 = vdwg.mxu0
  %4107 = vmatprep.subr.mxu0 %v1449
  %4108 = vmatpush1.msra.mxu0 %v1448
  %4109 = vmatprep.subr.mxu0 %v1441
  %4110 = vmatpush1.msra.mxu0 %v1440
  %4111 = vmatprep.subr.mxu0 %v1433
  %4112 = vmatpush1.msra.mxu0 %v1432
  %4113 = vmatprep.subr.mxu0 %v1425
  %4114 = vmatpush1.msra.mxu0 %v1424
  %4115 = vmatprep.subr.mxu0 %v1417
  %4116 = vmatpush1.msra.mxu0 %v1416
  %4117 = vmatprep.subr.mxu0 %v1409
  %4118 = vmatpush1.msra.mxu0 %v1408
  %4119 = vmatprep.subr.mxu0 %v1401
  %4120 = vmatpush1.msra.mxu0 %v1400
  %4121 = vmatprep.subr.mxu0 %v1393
  %4122 = vmatpush1.msra.mxu0 %v1392
  %4123 = vmatprep.subr.mxu0 %v1385
  %4124 = vmatpush1.msra.mxu0 %v1384
  %4125 = vmatprep.subr.mxu0 %v1377
  %4126 = vmatpush1.msra.mxu0 %v1376
  %4127 = vmatprep.subr.mxu0 %v1369
  %4128 = vmatpush1.msra.mxu0 %v1368
  %4129 = vmatprep.subr.mxu0 %v1361
  %4130 = vmatpush1.msra.mxu0 %v1360
  %4131 = vmatprep.subr.mxu0 %v1353
  %4132 = vmatpush1.msra.mxu0 %v1352
  %4133 = vmatprep.subr.mxu0 %v1345
  %4134 = vmatpush1.msra.mxu0 %v1344
  %4135 = vmatprep.subr.mxu0 %v1337
  %4136 = vmatpush1.msra.mxu0 %v1336
  %4137 = vmatprep.subr.mxu0 %v1329
  %4138 = vmatpush1.msra.mxu0 %v1328
  %4139 = vmatprep.subr.mxu0 %v1577
  %4140 = vmatpush2.msra.mxu0 %v1576
  %4141 = vmatprep.subr.mxu0 %v1569
  %4142 = vmatpush2.msra.mxu0 %v1568
  %4143 = vmatprep.subr.mxu0 %v1561
  %4144 = vmatpush2.msra.mxu0 %v1560
  %4145 = vmatprep.subr.mxu0 %v1553
  %4146 = vmatpush2.msra.mxu0 %v1552
  %4147 = vmatprep.subr.mxu0 %v1545
  %4148 = vmatpush2.msra.mxu0 %v1544
  %4149 = vmatprep.subr.mxu0 %v1537
  %4150 = vmatpush2.msra.mxu0 %v1536
  %4151 = vmatprep.subr.mxu0 %v1529
  %4152 = vmatpush2.msra.mxu0 %v1528
  %4153 = vmatprep.subr.mxu0 %v1521
  %4154 = vmatpush2.msra.mxu0 %v1520
  %4155 = vmatprep.subr.mxu0 %v1513
  %4156 = vmatpush2.msra.mxu0 %v1512
  %4157 = vmatprep.subr.mxu0 %v1505
  %4158 = vmatpush2.msra.mxu0 %v1504
  %4159 = vmatprep.subr.mxu0 %v1497
  %4160 = vmatpush2.msra.mxu0 %v1496
  %4161 = vmatprep.subr.mxu0 %v1489
  %4162 = vmatpush2.msra.mxu0 %v1488
  %4163 = vmatprep.subr.mxu0 %v1481
  %4164 = vmatpush2.msra.mxu0 %v1480
  %4165 = vmatprep.subr.mxu0 %v1473
  %4166 = vmatpush2.msra.mxu0 %v1472
  %4167 = vmatprep.subr.mxu0 %v1465
  %4168 = vmatpush2.msra.mxu0 %v1464
  %4169 = vmatprep.subr.mxu0 %v1457
  %4170 = vmatpush2.msra.mxu0 %v1456
  %4171 = vmatprep.mubr.f32.mxu0 %v37
  %4172 = vmatmul.mubr.f32.gmra.mxu0 %v36
  %v4173 = vpop.f32.mrf.mxu0
  %v4174 = vadd.f32 %v4103, %v4173
  %v4175 = vpop.f32.mrf.mxu0
  %v4176 = vadd.f32 %v4105, %v4175
  %4177 = vdwg.mxu0
  %4178 = vmatprep.subr.mxu0 %v1705
  %4179 = vmatpush1.msra.mxu0 %v1704
  %4180 = vmatprep.subr.mxu0 %v1697
  %4181 = vmatpush1.msra.mxu0 %v1696
  %4182 = vmatprep.subr.mxu0 %v1689
  %4183 = vmatpush1.msra.mxu0 %v1688
  %4184 = vmatprep.subr.mxu0 %v1681
  %4185 = vmatpush1.msra.mxu0 %v1680
  %4186 = vmatprep.subr.mxu0 %v1673
  %4187 = vmatpush1.msra.mxu0 %v1672
  %4188 = vmatprep.subr.mxu0 %v1665
  %4189 = vmatpush1.msra.mxu0 %v1664
  %4190 = vmatprep.subr.mxu0 %v1657
  %4191 = vmatpush1.msra.mxu0 %v1656
  %4192 = vmatprep.subr.mxu0 %v1649
  %4193 = vmatpush1.msra.mxu0 %v1648
  %4194 = vmatprep.subr.mxu0 %v1641
  %4195 = vmatpush1.msra.mxu0 %v1640
  %4196 = vmatprep.subr.mxu0 %v1633
  %4197 = vmatpush1.msra.mxu0 %v1632
  %4198 = vmatprep.subr.mxu0 %v1625
  %4199 = vmatpush1.msra.mxu0 %v1624
  %4200 = vmatprep.subr.mxu0 %v1617
  %4201 = vmatpush1.msra.mxu0 %v1616
  %4202 = vmatprep.subr.mxu0 %v1609
  %4203 = vmatpush1.msra.mxu0 %v1608
  %4204 = vmatprep.subr.mxu0 %v1601
  %4205 = vmatpush1.msra.mxu0 %v1600
  %4206 = vmatprep.subr.mxu0 %v1593
  %4207 = vmatpush1.msra.mxu0 %v1592
  %4208 = vmatprep.subr.mxu0 %v1585
  %4209 = vmatpush1.msra.mxu0 %v1584
  %4210 = vmatprep.subr.mxu0 %v1833
  %4211 = vmatpush2.msra.mxu0 %v1832
  %4212 = vmatprep.subr.mxu0 %v1825
  %4213 = vmatpush2.msra.mxu0 %v1824
  %4214 = vmatprep.subr.mxu0 %v1817
  %4215 = vmatpush2.msra.mxu0 %v1816
  %4216 = vmatprep.subr.mxu0 %v1809
  %4217 = vmatpush2.msra.mxu0 %v1808
  %4218 = vmatprep.subr.mxu0 %v1801
  %4219 = vmatpush2.msra.mxu0 %v1800
  %4220 = vmatprep.subr.mxu0 %v1793
  %4221 = vmatpush2.msra.mxu0 %v1792
  %4222 = vmatprep.subr.mxu0 %v1785
  %4223 = vmatpush2.msra.mxu0 %v1784
  %4224 = vmatprep.subr.mxu0 %v1777
  %4225 = vmatpush2.msra.mxu0 %v1776
  %4226 = vmatprep.subr.mxu0 %v1769
  %4227 = vmatpush2.msra.mxu0 %v1768
  %4228 = vmatprep.subr.mxu0 %v1761
  %4229 = vmatpush2.msra.mxu0 %v1760
  %4230 = vmatprep.subr.mxu0 %v1753
  %4231 = vmatpush2.msra.mxu0 %v1752
  %4232 = vmatprep.subr.mxu0 %v1745
  %4233 = vmatpush2.msra.mxu0 %v1744
  %4234 = vmatprep.subr.mxu0 %v1737
  %4235 = vmatpush2.msra.mxu0 %v1736
  %4236 = vmatprep.subr.mxu0 %v1729
  %4237 = vmatpush2.msra.mxu0 %v1728
  %4238 = vmatprep.subr.mxu0 %v1721
  %4239 = vmatpush2.msra.mxu0 %v1720
  %4240 = vmatprep.subr.mxu0 %v1713
  %4241 = vmatpush2.msra.mxu0 %v1712
  %4242 = vmatprep.mubr.f32.mxu0 %v39
  %4243 = vmatmul.mubr.f32.gmra.mxu0 %v38
  %v4244 = vpop.f32.mrf.mxu0
  %v4245 = vadd.f32 %v4174, %v4244
  %v4246 = vpop.f32.mrf.mxu0
  %v4247 = vadd.f32 %v4176, %v4246
  %4248 = vdwg.mxu0
  %4249 = vmatprep.subr.mxu0 %v1961
  %4250 = vmatpush1.msra.mxu0 %v1960
  %4251 = vmatprep.subr.mxu0 %v1953
  %4252 = vmatpush1.msra.mxu0 %v1952
  %4253 = vmatprep.subr.mxu0 %v1945
  %4254 = vmatpush1.msra.mxu0 %v1944
  %4255 = vmatprep.subr.mxu0 %v1937
  %4256 = vmatpush1.msra.mxu0 %v1936
  %4257 = vmatprep.subr.mxu0 %v1929
  %4258 = vmatpush1.msra.mxu0 %v1928
  %4259 = vmatprep.subr.mxu0 %v1921
  %4260 = vmatpush1.msra.mxu0 %v1920
  %4261 = vmatprep.subr.mxu0 %v1913
  %4262 = vmatpush1.msra.mxu0 %v1912
  %4263 = vmatprep.subr.mxu0 %v1905
  %4264 = vmatpush1.msra.mxu0 %v1904
  %4265 = vmatprep.subr.mxu0 %v1897
  %4266 = vmatpush1.msra.mxu0 %v1896
  %4267 = vmatprep.subr.mxu0 %v1889
  %4268 = vmatpush1.msra.mxu0 %v1888
  %4269 = vmatprep.subr.mxu0 %v1881
  %4270 = vmatpush1.msra.mxu0 %v1880
  %4271 = vmatprep.subr.mxu0 %v1873
  %4272 = vmatpush1.msra.mxu0 %v1872
  %4273 = vmatprep.subr.mxu0 %v1865
  %4274 = vmatpush1.msra.mxu0 %v1864
  %4275 = vmatprep.subr.mxu0 %v1857
  %4276 = vmatpush1.msra.mxu0 %v1856
  %4277 = vmatprep.subr.mxu0 %v1849
  %4278 = vmatpush1.msra.mxu0 %v1848
  %4279 = vmatprep.subr.mxu0 %v1841
  %4280 = vmatpush1.msra.mxu0 %v1840
  %4281 = vmatprep.subr.mxu0 0.0
  %4282 = vmatpush2.msra.mxu0 0.0
  %4283 = vmatprep.subr.mxu0 0.0
  %4284 = vmatpush2.msra.mxu0 0.0
  %4285 = vmatprep.subr.mxu0 0.0
  %4286 = vmatpush2.msra.mxu0 0.0
  %4287 = vmatprep.subr.mxu0 0.0
  %4288 = vmatpush2.msra.mxu0 0.0
  %4289 = vmatprep.subr.mxu0 0.0
  %4290 = vmatpush2.msra.mxu0 0.0
  %4291 = vmatprep.subr.mxu0 0.0
  %4292 = vmatpush2.msra.mxu0 0.0
  %4293 = vmatprep.subr.mxu0 0.0
  %4294 = vmatpush2.msra.mxu0 0.0
  %4295 = vmatprep.subr.mxu0 0.0
  %4296 = vmatpush2.msra.mxu0 0.0
  %4297 = vmatprep.subr.mxu0 0.0
  %4298 = vmatpush2.msra.mxu0 0.0
  %4299 = vmatprep.subr.mxu0 0.0
  %4300 = vmatpush2.msra.mxu0 0.0
  %4301 = vmatprep.subr.mxu0 0.0
  %4302 = vmatpush2.msra.mxu0 0.0
  %4303 = vmatprep.subr.mxu0 %v2001
  %4304 = vmatpush2.msra.mxu0 %v2000
  %4305 = vmatprep.subr.mxu0 %v1993
  %4306 = vmatpush2.msra.mxu0 %v1992
  %4307 = vmatprep.subr.mxu0 %v1985
  %4308 = vmatpush2.msra.mxu0 %v1984
  %4309 = vmatprep.subr.mxu0 %v1977
  %4310 = vmatpush2.msra.mxu0 %v1976
  %4311 = vmatprep.subr.mxu0 %v1969
  %4312 = vmatpush2.msra.mxu0 %v1968
  %4313 = vmatprep.mubr.f32.mxu0 %v2046
  %4314 = vmatmul.mubr.f32.gmra.mxu0 %v40
  %v4315 = vpop.f32.mrf.mxu0
  %v4316 = vadd.f32 %v4245, %v4315
  %v4317 = vpop.f32.mrf.mxu0
  %v4318 = vadd.f32 %v4247, %v4317
  %4319 = vdwg.mxu0
  %v4320 = vmax.f32 %v2612, 0.0
  %v4321 = vmax.f32 %v2614, 0.0
  %v4322 = vmax.f32 %v3180, 0.0
  %v4323 = vmax.f32 %v3182, 0.0
  %v4324 = vmax.f32 %v3748, 0.0
  %v4325 = vmax.f32 %v3750, 0.0
  %v4326 = vmax.f32 %v4316, 0.0
  %v4327 = vmax.f32 %v4318, 0.0
  %v4328 = vld [vmem:[%s3] sm:$0xff]
  %v4329 = vld [vmem:[%s3 + $0x8] sm:$0xff]
  %v4330 = vld [vmem:[%s3 + $0x10] sm:$0xff]
  %v4331 = vld [vmem:[%s3 + $0x18] sm:$0xff]
  %v4332 = vld [vmem:[%s3 + $0x20] sm:$0xff]
  %v4333 = vld [vmem:[%s3 + $0x28] sm:$0xff]
  %v4334 = vld [vmem:[%s3 + $0x30] sm:$0xff]
  %v4335 = vld [vmem:[%s3 + $0x38] sm:$0xff]
  %v4336 = vld [vmem:[%s3 + $0x40] sm:$0xff]
  %v4337 = vld [vmem:[%s3 + $0x48] sm:$0xff]
  %v4338 = vld [vmem:[%s3 + $0x50] sm:$0xff]
  %v4339 = vld [vmem:[%s3 + $0x58] sm:$0xff]
  %v4340 = vld [vmem:[%s3 + $0x60] sm:$0xff]
  %v4341 = vld [vmem:[%s3 + $0x68] sm:$0xff]
  %v4342 = vld [vmem:[%s3 + $0x70] sm:$0xff]
  %v4343 = vld [vmem:[%s3 + $0x78] sm:$0xff]
  %v4344 = vld [vmem:[%s3 + $0x80] sm:$0xff]
  %v4345 = vld [vmem:[%s3 + $0x88] sm:$0xff]
  %v4346 = vld [vmem:[%s3 + $0x90] sm:$0xff]
  %v4347 = vld [vmem:[%s3 + $0x98] sm:$0xff]
  %v4348 = vld [vmem:[%s3 + $0xa0] sm:$0xff]
  %v4349 = vld [vmem:[%s3 + $0xa8] sm:$0xff]
  %v4350 = vld [vmem:[%s3 + $0xb0] sm:$0xff]
  %v4351 = vld [vmem:[%s3 + $0xb8] sm:$0xff]
  %v4352 = vld [vmem:[%s3 + $0xc0] sm:$0xff]
  %v4353 = vld [vmem:[%s3 + $0xc8] sm:$0xff]
  %v4354 = vld [vmem:[%s3 + $0xd0] sm:$0xff]
  %v4355 = vld [vmem:[%s3 + $0xd8] sm:$0xff]
  %v4356 = vld [vmem:[%s3 + $0xe0] sm:$0xff]
  %v4357 = vld [vmem:[%s3 + $0xe8] sm:$0xff]
  %v4358 = vld [vmem:[%s3 + $0xf0] sm:$0xff]
  %v4359 = vld [vmem:[%s3 + $0xf8] sm:$0xff]
  %v4360 = vld [vmem:[%s3 + $0x100] sm:$0xff]
  %v4361 = vld [vmem:[%s3 + $0x108] sm:$0xff]
  %v4362 = vld [vmem:[%s3 + $0x110] sm:$0xff]
  %v4363 = vld [vmem:[%s3 + $0x118] sm:$0xff]
  %v4364 = vld [vmem:[%s3 + $0x120] sm:$0xff]
  %v4365 = vld [vmem:[%s3 + $0x128] sm:$0xff]
  %v4366 = vld [vmem:[%s3 + $0x130] sm:$0xff]
  %v4367 = vld [vmem:[%s3 + $0x138] sm:$0xff]
  %v4368 = vld [vmem:[%s3 + $0x140] sm:$0xff]
  %v4369 = vld [vmem:[%s3 + $0x148] sm:$0xff]
  %v4370 = vld [vmem:[%s3 + $0x150] sm:$0xff]
  %v4371 = vld [vmem:[%s3 + $0x158] sm:$0xff]
  %v4372 = vld [vmem:[%s3 + $0x160] sm:$0xff]
  %v4373 = vld [vmem:[%s3 + $0x168] sm:$0xff]
  %v4374 = vld [vmem:[%s3 + $0x170] sm:$0xff]
  %v4375 = vld [vmem:[%s3 + $0x178] sm:$0xff]
  %v4376 = vld [vmem:[%s3 + $0x180] sm:$0xff]
  %v4377 = vld [vmem:[%s3 + $0x188] sm:$0xff]
  %v4378 = vld [vmem:[%s3 + $0x190] sm:$0xff]
  %v4379 = vld [vmem:[%s3 + $0x198] sm:$0xff]
  %v4380 = vld [vmem:[%s3 + $0x1a0] sm:$0xff]
  %v4381 = vld [vmem:[%s3 + $0x1a8] sm:$0xff]
  %v4382 = vld [vmem:[%s3 + $0x1b0] sm:$0xff]
  %v4383 = vld [vmem:[%s3 + $0x1b8] sm:$0xff]
  %v4384 = vld [vmem:[%s3 + $0x1c0] sm:$0xff]
  %v4385 = vld [vmem:[%s3 + $0x1c8] sm:$0xff]
  %v4386 = vld [vmem:[%s3 + $0x1d0] sm:$0xff]
  %v4387 = vld [vmem:[%s3 + $0x1d8] sm:$0xff]
  %v4388 = vld [vmem:[%s3 + $0x1e0] sm:$0xff]
  %v4389 = vld [vmem:[%s3 + $0x1e8] sm:$0xff]
  %v4390 = vld [vmem:[%s3 + $0x1f0] sm:$0xff]
  %v4391 = vld [vmem:[%s3 + $0x1f8] sm:$0xff]
  %v4392 = vld [vmem:[%s3 + $0x200] sm:$0xff]
  %v4393 = vld [vmem:[%s3 + $0x208] sm:$0xff]
  %v4394 = vld [vmem:[%s3 + $0x210] sm:$0xff]
  %v4395 = vld [vmem:[%s3 + $0x218] sm:$0xff]
  %v4396 = vld [vmem:[%s3 + $0x220] sm:$0xff]
  %v4397 = vld [vmem:[%s3 + $0x228] sm:$0xff]
  %v4398 = vld [vmem:[%s3 + $0x230] sm:$0xff]
  %v4399 = vld [vmem:[%s3 + $0x238] sm:$0xff]
  %v4400 = vld [vmem:[%s3 + $0x240] sm:$0xff]
  %v4401 = vld [vmem:[%s3 + $0x248] sm:$0xff]
  %v4402 = vld [vmem:[%s3 + $0x250] sm:$0xff]
  %v4403 = vld [vmem:[%s3 + $0x258] sm:$0xff]
  %v4404 = vld [vmem:[%s3 + $0x260] sm:$0xff]
  %v4405 = vld [vmem:[%s3 + $0x268] sm:$0xff]
  %v4406 = vld [vmem:[%s3 + $0x270] sm:$0xff]
  %v4407 = vld [vmem:[%s3 + $0x278] sm:$0xff]
  %v4408 = vld [vmem:[%s3 + $0x280] sm:$0xff]
  %v4409 = vld [vmem:[%s3 + $0x288] sm:$0xff]
  %v4410 = vld [vmem:[%s3 + $0x290] sm:$0xff]
  %v4411 = vld [vmem:[%s3 + $0x298] sm:$0xff]
  %v4412 = vld [vmem:[%s3 + $0x2a0] sm:$0xff]
  %v4413 = vld [vmem:[%s3 + $0x2a8] sm:$0xff]
  %v4414 = vld [vmem:[%s3 + $0x2b0] sm:$0xff]
  %v4415 = vld [vmem:[%s3 + $0x2b8] sm:$0xff]
  %v4416 = vld [vmem:[%s3 + $0x2c0] sm:$0xff]
  %v4417 = vld [vmem:[%s3 + $0x2c8] sm:$0xff]
  %v4418 = vld [vmem:[%s3 + $0x2d0] sm:$0xff]
  %v4419 = vld [vmem:[%s3 + $0x2d8] sm:$0xff]
  %v4420 = vld [vmem:[%s3 + $0x2e0] sm:$0xff]
  %v4421 = vld [vmem:[%s3 + $0x2e8] sm:$0xff]
  %v4422 = vld [vmem:[%s3 + $0x2f0] sm:$0xff]
  %v4423 = vld [vmem:[%s3 + $0x2f8] sm:$0xff]
  %v4424 = vld [vmem:[%s3 + $0x300] sm:$0xff]
  %v4425 = vld [vmem:[%s3 + $0x308] sm:$0xff]
  %v4426 = vld [vmem:[%s3 + $0x310] sm:$0xff]
  %v4427 = vld [vmem:[%s3 + $0x318] sm:$0xff]
  %v4428 = vld [vmem:[%s3 + $0x320] sm:$0xff]
  %v4429 = vld [vmem:[%s3 + $0x328] sm:$0xff]
  %v4430 = vld [vmem:[%s3 + $0x330] sm:$0xff]
  %v4431 = vld [vmem:[%s3 + $0x338] sm:$0xff]
  %v4432 = vld [vmem:[%s3 + $0x340] sm:$0xff]
  %v4433 = vld [vmem:[%s3 + $0x348] sm:$0xff]
  %v4434 = vld [vmem:[%s3 + $0x350] sm:$0xff]
  %v4435 = vld [vmem:[%s3 + $0x358] sm:$0xff]
  %v4436 = vld [vmem:[%s3 + $0x360] sm:$0xff]
  %v4437 = vld [vmem:[%s3 + $0x368] sm:$0xff]
  %v4438 = vld [vmem:[%s3 + $0x370] sm:$0xff]
  %v4439 = vld [vmem:[%s3 + $0x378] sm:$0xff]
  %v4440 = vld [vmem:[%s3 + $0x380] sm:$0xff]
  %v4441 = vld [vmem:[%s3 + $0x388] sm:$0xff]
  %v4442 = vld [vmem:[%s3 + $0x390] sm:$0xff]
  %v4443 = vld [vmem:[%s3 + $0x398] sm:$0xff]
  %v4444 = vld [vmem:[%s3 + $0x3a0] sm:$0xff]
  %v4445 = vld [vmem:[%s3 + $0x3a8] sm:$0xff]
  %v4446 = vld [vmem:[%s3 + $0x3b0] sm:$0xff]
  %v4447 = vld [vmem:[%s3 + $0x3b8] sm:$0xff]
  %v4448 = vld [vmem:[%s3 + $0x3c0] sm:$0xff]
  %v4449 = vld [vmem:[%s3 + $0x3c8] sm:$0xff]
  %v4450 = vld [vmem:[%s3 + $0x3d0] sm:$0xff]
  %v4451 = vld [vmem:[%s3 + $0x3d8] sm:$0xff]
  %v4452 = vld [vmem:[%s3 + $0x3e0] sm:$0xff]
  %v4453 = vld [vmem:[%s3 + $0x3e8] sm:$0xff]
  %v4454 = vld [vmem:[%s3 + $0x3f0] sm:$0xff]
  %v4455 = vld [vmem:[%s3 + $0x3f8] sm:$0xff]
  %v4456 = vld [vmem:[%s3 + $0x400] sm:$0xff]
  %v4457 = vld [vmem:[%s3 + $0x408] sm:$0xff]
  %v4458 = vld [vmem:[%s3 + $0x410] sm:$0xff]
  %v4459 = vld [vmem:[%s3 + $0x418] sm:$0xff]
  %v4460 = vld [vmem:[%s3 + $0x420] sm:$0xff]
  %v4461 = vld [vmem:[%s3 + $0x428] sm:$0xff]
  %v4462 = vld [vmem:[%s3 + $0x430] sm:$0xff]
  %v4463 = vld [vmem:[%s3 + $0x438] sm:$0xff]
  %v4464 = vld [vmem:[%s3 + $0x440] sm:$0xff]
  %v4465 = vld [vmem:[%s3 + $0x448] sm:$0xff]
  %v4466 = vld [vmem:[%s3 + $0x450] sm:$0xff]
  %v4467 = vld [vmem:[%s3 + $0x458] sm:$0xff]
  %v4468 = vld [vmem:[%s3 + $0x460] sm:$0xff]
  %v4469 = vld [vmem:[%s3 + $0x468] sm:$0xff]
  %v4470 = vld [vmem:[%s3 + $0x470] sm:$0xff]
  %v4471 = vld [vmem:[%s3 + $0x478] sm:$0xff]
  %v4472 = vld [vmem:[%s3 + $0x480] sm:$0xff]
  %v4473 = vld [vmem:[%s3 + $0x488] sm:$0xff]
  %v4474 = vld [vmem:[%s3 + $0x490] sm:$0xff]
  %v4475 = vld [vmem:[%s3 + $0x498] sm:$0xff]
  %v4476 = vld [vmem:[%s3 + $0x4a0] sm:$0xff]
  %v4477 = vld [vmem:[%s3 + $0x4a8] sm:$0xff]
  %v4478 = vld [vmem:[%s3 + $0x4b0] sm:$0xff]
  %v4479 = vld [vmem:[%s3 + $0x4b8] sm:$0xff]
  %v4480 = vld [vmem:[%s3 + $0x4c0] sm:$0xff]
  %v4481 = vld [vmem:[%s3 + $0x4c8] sm:$0xff]
  %v4482 = vld [vmem:[%s3 + $0x4d0] sm:$0xff]
  %v4483 = vld [vmem:[%s3 + $0x4d8] sm:$0xff]
  %v4484 = vld [vmem:[%s3 + $0x4e0] sm:$0xff]
  %v4485 = vld [vmem:[%s3 + $0x4e8] sm:$0xff]
  %v4486 = vld [vmem:[%s3 + $0x4f0] sm:$0xff]
  %v4487 = vld [vmem:[%s3 + $0x4f8] sm:$0xff]
  %v4488 = vld [vmem:[%s3 + $0x500] sm:$0xff]
  %v4489 = vld [vmem:[%s3 + $0x508] sm:$0xff]
  %v4490 = vld [vmem:[%s3 + $0x510] sm:$0xff]
  %v4491 = vld [vmem:[%s3 + $0x518] sm:$0xff]
  %v4492 = vld [vmem:[%s3 + $0x520] sm:$0xff]
  %v4493 = vld [vmem:[%s3 + $0x528] sm:$0xff]
  %v4494 = vld [vmem:[%s3 + $0x530] sm:$0xff]
  %v4495 = vld [vmem:[%s3 + $0x538] sm:$0xff]
  %v4496 = vld [vmem:[%s3 + $0x540] sm:$0xff]
  %v4497 = vld [vmem:[%s3 + $0x548] sm:$0xff]
  %v4498 = vld [vmem:[%s3 + $0x550] sm:$0xff]
  %v4499 = vld [vmem:[%s3 + $0x558] sm:$0xff]
  %v4500 = vld [vmem:[%s3 + $0x560] sm:$0xff]
  %v4501 = vld [vmem:[%s3 + $0x568] sm:$0xff]
  %v4502 = vld [vmem:[%s3 + $0x570] sm:$0xff]
  %v4503 = vld [vmem:[%s3 + $0x578] sm:$0xff]
  %v4504 = vld [vmem:[%s3 + $0x580] sm:$0xff]
  %v4505 = vld [vmem:[%s3 + $0x588] sm:$0xff]
  %v4506 = vld [vmem:[%s3 + $0x590] sm:$0xff]
  %v4507 = vld [vmem:[%s3 + $0x598] sm:$0xff]
  %v4508 = vld [vmem:[%s3 + $0x5a0] sm:$0xff]
  %v4509 = vld [vmem:[%s3 + $0x5a8] sm:$0xff]
  %v4510 = vld [vmem:[%s3 + $0x5b0] sm:$0xff]
  %v4511 = vld [vmem:[%s3 + $0x5b8] sm:$0xff]
  %v4512 = vld [vmem:[%s3 + $0x5c0] sm:$0xff]
  %v4513 = vld [vmem:[%s3 + $0x5c8] sm:$0xff]
  %v4514 = vld [vmem:[%s3 + $0x5d0] sm:$0xff]
  %v4515 = vld [vmem:[%s3 + $0x5d8] sm:$0xff]
  %v4516 = vld [vmem:[%s3 + $0x5e0] sm:$0xff]
  %v4517 = vld [vmem:[%s3 + $0x5e8] sm:$0xff]
  %v4518 = vld [vmem:[%s3 + $0x5f0] sm:$0xff]
  %v4519 = vld [vmem:[%s3 + $0x5f8] sm:$0xff]
  %v4520 = vld [vmem:[%s3 + $0x600] sm:$0xff]
  %v4521 = vld [vmem:[%s3 + $0x608] sm:$0xff]
  %v4522 = vld [vmem:[%s3 + $0x610] sm:$0xff]
  %v4523 = vld [vmem:[%s3 + $0x618] sm:$0xff]
  %v4524 = vld [vmem:[%s3 + $0x620] sm:$0xff]
  %v4525 = vld [vmem:[%s3 + $0x628] sm:$0xff]
  %v4526 = vld [vmem:[%s3 + $0x630] sm:$0xff]
  %v4527 = vld [vmem:[%s3 + $0x638] sm:$0xff]
  %v4528 = vld [vmem:[%s3 + $0x640] sm:$0xff]
  %v4529 = vld [vmem:[%s3 + $0x648] sm:$0xff]
  %v4530 = vld [vmem:[%s3 + $0x650] sm:$0xff]
  %v4531 = vld [vmem:[%s3 + $0x658] sm:$0xff]
  %v4532 = vld [vmem:[%s3 + $0x660] sm:$0xff]
  %v4533 = vld [vmem:[%s3 + $0x668] sm:$0xff]
  %v4534 = vld [vmem:[%s3 + $0x670] sm:$0xff]
  %v4535 = vld [vmem:[%s3 + $0x678] sm:$0xff]
  %v4536 = vld [vmem:[%s3 + $0x680] sm:$0xff]
  %v4537 = vld [vmem:[%s3 + $0x688] sm:$0xff]
  %v4538 = vld [vmem:[%s3 + $0x690] sm:$0xff]
  %v4539 = vld [vmem:[%s3 + $0x698] sm:$0xff]
  %v4540 = vld [vmem:[%s3 + $0x6a0] sm:$0xff]
  %v4541 = vld [vmem:[%s3 + $0x6a8] sm:$0xff]
  %v4542 = vld [vmem:[%s3 + $0x6b0] sm:$0xff]
  %v4543 = vld [vmem:[%s3 + $0x6b8] sm:$0xff]
  %v4544 = vld [vmem:[%s3 + $0x6c0] sm:$0xff]
  %v4545 = vld [vmem:[%s3 + $0x6c8] sm:$0xff]
  %v4546 = vld [vmem:[%s3 + $0x6d0] sm:$0xff]
  %v4547 = vld [vmem:[%s3 + $0x6d8] sm:$0xff]
  %v4548 = vld [vmem:[%s3 + $0x6e0] sm:$0xff]
  %v4549 = vld [vmem:[%s3 + $0x6e8] sm:$0xff]
  %v4550 = vld [vmem:[%s3 + $0x6f0] sm:$0xff]
  %v4551 = vld [vmem:[%s3 + $0x6f8] sm:$0xff]
  %v4552 = vld [vmem:[%s3 + $0x700] sm:$0xff]
  %v4553 = vld [vmem:[%s3 + $0x708] sm:$0xff]
  %v4554 = vld [vmem:[%s3 + $0x710] sm:$0xff]
  %v4555 = vld [vmem:[%s3 + $0x718] sm:$0xff]
  %v4556 = vld [vmem:[%s3 + $0x720] sm:$0xff]
  %v4557 = vld [vmem:[%s3 + $0x728] sm:$0xff]
  %v4558 = vld [vmem:[%s3 + $0x730] sm:$0xff]
  %v4559 = vld [vmem:[%s3 + $0x738] sm:$0xff]
  %v4560 = vld [vmem:[%s3 + $0x740] sm:$0xff]
  %v4561 = vld [vmem:[%s3 + $0x748] sm:$0xff]
  %v4562 = vld [vmem:[%s3 + $0x750] sm:$0xff]
  %v4563 = vld [vmem:[%s3 + $0x758] sm:$0xff]
  %v4564 = vld [vmem:[%s3 + $0x760] sm:$0xff]
  %v4565 = vld [vmem:[%s3 + $0x768] sm:$0xff]
  %v4566 = vld [vmem:[%s3 + $0x770] sm:$0xff]
  %v4567 = vld [vmem:[%s3 + $0x778] sm:$0xff]
  %v4568 = vld [vmem:[%s3 + $0x780] sm:$0xff]
  %v4569 = vld [vmem:[%s3 + $0x788] sm:$0xff]
  %v4570 = vld [vmem:[%s3 + $0x790] sm:$0xff]
  %v4571 = vld [vmem:[%s3 + $0x798] sm:$0xff]
  %v4572 = vld [vmem:[%s3 + $0x7a0] sm:$0xff]
  %v4573 = vld [vmem:[%s3 + $0x7a8] sm:$0xff]
  %v4574 = vld [vmem:[%s3 + $0x7b0] sm:$0xff]
  %v4575 = vld [vmem:[%s3 + $0x7b8] sm:$0xff]
  %v4576 = vld [vmem:[%s3 + $0x7c0] sm:$0xff]
  %v4577 = vld [vmem:[%s3 + $0x7c8] sm:$0xff]
  %v4578 = vld [vmem:[%s3 + $0x7d0] sm:$0xff]
  %v4579 = vld [vmem:[%s3 + $0x7d8] sm:$0xff]
  %v4580 = vld [vmem:[%s3 + $0x7e0] sm:$0xff]
  %v4581 = vld [vmem:[%s3 + $0x7e8] sm:$0xff]
  %v4582 = vld [vmem:[%s3 + $0x7f0] sm:$0xff]
  %v4583 = vld [vmem:[%s3 + $0x7f8] sm:$0xff]
  %v4584 = vld [vmem:[%s3 + $0x800] sm:$0xff]
  %v4585 = vld [vmem:[%s3 + $0x808] sm:$0xff]
  %v4586 = vld [vmem:[%s3 + $0x810] sm:$0xff]
  %v4587 = vld [vmem:[%s3 + $0x818] sm:$0xff]
  %v4588 = vld [vmem:[%s3 + $0x820] sm:$0xff]
  %v4589 = vld [vmem:[%s3 + $0x828] sm:$0xff]
  %v4590 = vld [vmem:[%s3 + $0x830] sm:$0xff]
  %v4591 = vld [vmem:[%s3 + $0x838] sm:$0xff]
  %v4592 = vld [vmem:[%s3 + $0x840] sm:$0xff]
  %v4593 = vld [vmem:[%s3 + $0x848] sm:$0xff]
  %v4594 = vld [vmem:[%s3 + $0x850] sm:$0xff]
  %v4595 = vld [vmem:[%s3 + $0x858] sm:$0xff]
  %v4596 = vld [vmem:[%s3 + $0x860] sm:$0xff]
  %v4597 = vld [vmem:[%s3 + $0x868] sm:$0xff]
  %v4598 = vld [vmem:[%s3 + $0x870] sm:$0xff]
  %v4599 = vld [vmem:[%s3 + $0x878] sm:$0xff]
  %v4600 = vld [vmem:[%s3 + $0x880] sm:$0xff]
  %v4601 = vld [vmem:[%s3 + $0x888] sm:$0xff]
  %v4602 = vld [vmem:[%s3 + $0x890] sm:$0xff]
  %v4603 = vld [vmem:[%s3 + $0x898] sm:$0xff]
  %v4604 = vld [vmem:[%s3 + $0x8a0] sm:$0xff]
  %v4605 = vld [vmem:[%s3 + $0x8a8] sm:$0xff]
  %v4606 = vld [vmem:[%s3 + $0x8b0] sm:$0xff]
  %v4607 = vld [vmem:[%s3 + $0x8b8] sm:$0xff]
  %v4608 = vld [vmem:[%s3 + $0x8c0] sm:$0xff]
  %v4609 = vld [vmem:[%s3 + $0x8c8] sm:$0xff]
  %v4610 = vld [vmem:[%s3 + $0x8d0] sm:$0xff]
  %v4611 = vld [vmem:[%s3 + $0x8d8] sm:$0xff]
  %v4612 = vld [vmem:[%s3 + $0x8e0] sm:$0xff]
  %v4613 = vld [vmem:[%s3 + $0x8e8] sm:$0xff]
  %v4614 = vld [vmem:[%s3 + $0x8f0] sm:$0xff]
  %v4615 = vld [vmem:[%s3 + $0x8f8] sm:$0xff]
  %v4616 = vld [vmem:[%s3 + $0x900] sm:$0xff]
  %v4617 = vld [vmem:[%s3 + $0x908] sm:$0xff]
  %v4618 = vld [vmem:[%s3 + $0x910] sm:$0xff]
  %v4619 = vld [vmem:[%s3 + $0x918] sm:$0xff]
  %v4620 = vld [vmem:[%s3 + $0x920] sm:$0xff]
  %v4621 = vld [vmem:[%s3 + $0x928] sm:$0xff]
  %v4622 = vld [vmem:[%s3 + $0x930] sm:$0xff]
  %v4623 = vld [vmem:[%s3 + $0x938] sm:$0xff]
  %v4624 = vld [vmem:[%s3 + $0x940] sm:$0xff]
  %v4625 = vld [vmem:[%s3 + $0x948] sm:$0xff]
  %v4626 = vld [vmem:[%s3 + $0x950] sm:$0xff]
  %v4627 = vld [vmem:[%s3 + $0x958] sm:$0xff]
  %v4628 = vld [vmem:[%s3 + $0x960] sm:$0xff]
  %v4629 = vld [vmem:[%s3 + $0x968] sm:$0xff]
  %v4630 = vld [vmem:[%s3 + $0x970] sm:$0xff]
  %v4631 = vld [vmem:[%s3 + $0x978] sm:$0xff]
  %v4632 = vld [vmem:[%s3 + $0x980] sm:$0xff]
  %v4633 = vld [vmem:[%s3 + $0x988] sm:$0xff]
  %v4634 = vld [vmem:[%s3 + $0x990] sm:$0xff]
  %v4635 = vld [vmem:[%s3 + $0x998] sm:$0xff]
  %v4636 = vld [vmem:[%s3 + $0x9a0] sm:$0xff]
  %v4637 = vld [vmem:[%s3 + $0x9a8] sm:$0xff]
  %v4638 = vld [vmem:[%s3 + $0x9b0] sm:$0xff]
  %v4639 = vld [vmem:[%s3 + $0x9b8] sm:$0xff]
  %v4640 = vld [vmem:[%s3 + $0x9c0] sm:$0xff]
  %v4641 = vld [vmem:[%s3 + $0x9c8] sm:$0xff]
  %v4642 = vld [vmem:[%s3 + $0x9d0] sm:$0xff]
  %v4643 = vld [vmem:[%s3 + $0x9d8] sm:$0xff]
  %v4644 = vld [vmem:[%s3 + $0x9e0] sm:$0xff]
  %v4645 = vld [vmem:[%s3 + $0x9e8] sm:$0xff]
  %v4646 = vld [vmem:[%s3 + $0x9f0] sm:$0xff]
  %v4647 = vld [vmem:[%s3 + $0x9f8] sm:$0xff]
  %v4648 = vld [vmem:[%s3 + $0xa00] sm:$0xff]
  %v4649 = vld [vmem:[%s3 + $0xa08] sm:$0xff]
  %v4650 = vld [vmem:[%s3 + $0xa10] sm:$0xff]
  %v4651 = vld [vmem:[%s3 + $0xa18] sm:$0xff]
  %v4652 = vld [vmem:[%s3 + $0xa20] sm:$0xff]
  %v4653 = vld [vmem:[%s3 + $0xa28] sm:$0xff]
  %v4654 = vld [vmem:[%s3 + $0xa30] sm:$0xff]
  %v4655 = vld [vmem:[%s3 + $0xa38] sm:$0xff]
  %v4656 = vld [vmem:[%s3 + $0xa40] sm:$0xff]
  %v4657 = vld [vmem:[%s3 + $0xa48] sm:$0xff]
  %v4658 = vld [vmem:[%s3 + $0xa50] sm:$0xff]
  %v4659 = vld [vmem:[%s3 + $0xa58] sm:$0xff]
  %v4660 = vld [vmem:[%s3 + $0xa60] sm:$0xff]
  %v4661 = vld [vmem:[%s3 + $0xa68] sm:$0xff]
  %v4662 = vld [vmem:[%s3 + $0xa70] sm:$0xff]
  %v4663 = vld [vmem:[%s3 + $0xa78] sm:$0xff]
  %v4664 = vld [vmem:[%s3 + $0xa80] sm:$0xff]
  %v4665 = vld [vmem:[%s3 + $0xa88] sm:$0xff]
  %v4666 = vld [vmem:[%s3 + $0xa90] sm:$0xff]
  %v4667 = vld [vmem:[%s3 + $0xa98] sm:$0xff]
  %v4668 = vld [vmem:[%s3 + $0xaa0] sm:$0xff]
  %v4669 = vld [vmem:[%s3 + $0xaa8] sm:$0xff]
  %v4670 = vld [vmem:[%s3 + $0xab0] sm:$0xff]
  %v4671 = vld [vmem:[%s3 + $0xab8] sm:$0xff]
  %v4672 = vld [vmem:[%s3 + $0xac0] sm:$0xff]
  %v4673 = vld [vmem:[%s3 + $0xac8] sm:$0xff]
  %v4674 = vld [vmem:[%s3 + $0xad0] sm:$0xff]
  %v4675 = vld [vmem:[%s3 + $0xad8] sm:$0xff]
  %v4676 = vld [vmem:[%s3 + $0xae0] sm:$0xff]
  %v4677 = vld [vmem:[%s3 + $0xae8] sm:$0xff]
  %v4678 = vld [vmem:[%s3 + $0xaf0] sm:$0xff]
  %v4679 = vld [vmem:[%s3 + $0xaf8] sm:$0xff]
  %v4680 = vld [vmem:[%s3 + $0xb00] sm:$0xff]
  %v4681 = vld [vmem:[%s3 + $0xb08] sm:$0xff]
  %v4682 = vld [vmem:[%s3 + $0xb10] sm:$0xff]
  %v4683 = vld [vmem:[%s3 + $0xb18] sm:$0xff]
  %v4684 = vld [vmem:[%s3 + $0xb20] sm:$0xff]
  %v4685 = vld [vmem:[%s3 + $0xb28] sm:$0xff]
  %v4686 = vld [vmem:[%s3 + $0xb30] sm:$0xff]
  %v4687 = vld [vmem:[%s3 + $0xb38] sm:$0xff]
  %v4688 = vld [vmem:[%s3 + $0xb40] sm:$0xff]
  %v4689 = vld [vmem:[%s3 + $0xb48] sm:$0xff]
  %v4690 = vld [vmem:[%s3 + $0xb50] sm:$0xff]
  %v4691 = vld [vmem:[%s3 + $0xb58] sm:$0xff]
  %v4692 = vld [vmem:[%s3 + $0xb60] sm:$0xff]
  %v4693 = vld [vmem:[%s3 + $0xb68] sm:$0xff]
  %v4694 = vld [vmem:[%s3 + $0xb70] sm:$0xff]
  %v4695 = vld [vmem:[%s3 + $0xb78] sm:$0xff]
  %v4696 = vld [vmem:[%s3 + $0xb80] sm:$0xff]
  %v4697 = vld [vmem:[%s3 + $0xb88] sm:$0xff]
  %v4698 = vld [vmem:[%s3 + $0xb90] sm:$0xff]
  %v4699 = vld [vmem:[%s3 + $0xb98] sm:$0xff]
  %v4700 = vld [vmem:[%s3 + $0xba0] sm:$0xff]
  %v4701 = vld [vmem:[%s3 + $0xba8] sm:$0xff]
  %v4702 = vld [vmem:[%s3 + $0xbb0] sm:$0xff]
  %v4703 = vld [vmem:[%s3 + $0xbb8] sm:$0xff]
  %v4704 = vld [vmem:[%s3 + $0xbc0] sm:$0xff]
  %v4705 = vld [vmem:[%s3 + $0xbc8] sm:$0xff]
  %v4706 = vld [vmem:[%s3 + $0xbd0] sm:$0xff]
  %v4707 = vld [vmem:[%s3 + $0xbd8] sm:$0xff]
  %v4708 = vld [vmem:[%s3 + $0xbe0] sm:$0xff]
  %v4709 = vld [vmem:[%s3 + $0xbe8] sm:$0xff]
  %v4710 = vld [vmem:[%s3 + $0xbf0] sm:$0xff]
  %v4711 = vld [vmem:[%s3 + $0xbf8] sm:$0xff]
  %v4712 = vld [vmem:[%s3 + $0xc00] sm:$0xff]
  %v4713 = vld [vmem:[%s3 + $0xc08] sm:$0xff]
  %v4714 = vld [vmem:[%s3 + $0xc10] sm:$0xff]
  %v4715 = vld [vmem:[%s3 + $0xc18] sm:$0xff]
  %v4716 = vld [vmem:[%s3 + $0xc20] sm:$0xff]
  %v4717 = vld [vmem:[%s3 + $0xc28] sm:$0xff]
  %v4718 = vld [vmem:[%s3 + $0xc30] sm:$0xff]
  %v4719 = vld [vmem:[%s3 + $0xc38] sm:$0xff]
  %v4720 = vld [vmem:[%s3 + $0xc40] sm:$0xff]
  %v4721 = vld [vmem:[%s3 + $0xc48] sm:$0xff]
  %v4722 = vld [vmem:[%s3 + $0xc50] sm:$0xff]
  %v4723 = vld [vmem:[%s3 + $0xc58] sm:$0xff]
  %v4724 = vld [vmem:[%s3 + $0xc60] sm:$0xff]
  %v4725 = vld [vmem:[%s3 + $0xc68] sm:$0xff]
  %v4726 = vld [vmem:[%s3 + $0xc70] sm:$0xff]
  %v4727 = vld [vmem:[%s3 + $0xc78] sm:$0xff]
  %v4728 = vld [vmem:[%s3 + $0xc80] sm:$0xff]
  %v4729 = vld [vmem:[%s3 + $0xc88] sm:$0xff]
  %v4730 = vld [vmem:[%s3 + $0xc90] sm:$0xff]
  %v4731 = vld [vmem:[%s3 + $0xc98] sm:$0xff]
  %v4732 = vld [vmem:[%s3 + $0xca0] sm:$0xff]
  %v4733 = vld [vmem:[%s3 + $0xca8] sm:$0xff]
  %v4734 = vld [vmem:[%s3 + $0xcb0] sm:$0xff]
  %v4735 = vld [vmem:[%s3 + $0xcb8] sm:$0xff]
  %v4736 = vld [vmem:[%s3 + $0xcc0] sm:$0xff]
  %v4737 = vld [vmem:[%s3 + $0xcc8] sm:$0xff]
  %v4738 = vld [vmem:[%s3 + $0xcd0] sm:$0xff]
  %v4739 = vld [vmem:[%s3 + $0xcd8] sm:$0xff]
  %v4740 = vld [vmem:[%s3 + $0xce0] sm:$0xff]
  %v4741 = vld [vmem:[%s3 + $0xce8] sm:$0xff]
  %v4742 = vld [vmem:[%s3 + $0xcf0] sm:$0xff]
  %v4743 = vld [vmem:[%s3 + $0xcf8] sm:$0xff]
  %v4744 = vld [vmem:[%s3 + $0xd00] sm:$0xff]
  %v4745 = vld [vmem:[%s3 + $0xd08] sm:$0xff]
  %v4746 = vld [vmem:[%s3 + $0xd10] sm:$0xff]
  %v4747 = vld [vmem:[%s3 + $0xd18] sm:$0xff]
  %v4748 = vld [vmem:[%s3 + $0xd20] sm:$0xff]
  %v4749 = vld [vmem:[%s3 + $0xd28] sm:$0xff]
  %v4750 = vld [vmem:[%s3 + $0xd30] sm:$0xff]
  %v4751 = vld [vmem:[%s3 + $0xd38] sm:$0xff]
  %v4752 = vld [vmem:[%s3 + $0xd40] sm:$0xff]
  %v4753 = vld [vmem:[%s3 + $0xd48] sm:$0xff]
  %v4754 = vld [vmem:[%s3 + $0xd50] sm:$0xff]
  %v4755 = vld [vmem:[%s3 + $0xd58] sm:$0xff]
  %v4756 = vld [vmem:[%s3 + $0xd60] sm:$0xff]
  %v4757 = vld [vmem:[%s3 + $0xd68] sm:$0xff]
  %v4758 = vld [vmem:[%s3 + $0xd70] sm:$0xff]
  %v4759 = vld [vmem:[%s3 + $0xd78] sm:$0xff]
  %v4760 = vld [vmem:[%s3 + $0xd80] sm:$0xff]
  %v4761 = vld [vmem:[%s3 + $0xd88] sm:$0xff]
  %v4762 = vld [vmem:[%s3 + $0xd90] sm:$0xff]
  %v4763 = vld [vmem:[%s3 + $0xd98] sm:$0xff]
  %v4764 = vld [vmem:[%s3 + $0xda0] sm:$0xff]
  %v4765 = vld [vmem:[%s3 + $0xda8] sm:$0xff]
  %v4766 = vld [vmem:[%s3 + $0xdb0] sm:$0xff]
  %v4767 = vld [vmem:[%s3 + $0xdb8] sm:$0xff]
  %v4768 = vld [vmem:[%s3 + $0xdc0] sm:$0xff]
  %v4769 = vld [vmem:[%s3 + $0xdc8] sm:$0xff]
  %v4770 = vld [vmem:[%s3 + $0xdd0] sm:$0xff]
  %v4771 = vld [vmem:[%s3 + $0xdd8] sm:$0xff]
  %v4772 = vld [vmem:[%s3 + $0xde0] sm:$0xff]
  %v4773 = vld [vmem:[%s3 + $0xde8] sm:$0xff]
  %v4774 = vld [vmem:[%s3 + $0xdf0] sm:$0xff]
  %v4775 = vld [vmem:[%s3 + $0xdf8] sm:$0xff]
  %v4776 = vld [vmem:[%s3 + $0xe00] sm:$0xff]
  %v4777 = vld [vmem:[%s3 + $0xe08] sm:$0xff]
  %v4778 = vld [vmem:[%s3 + $0xe10] sm:$0xff]
  %v4779 = vld [vmem:[%s3 + $0xe18] sm:$0xff]
  %v4780 = vld [vmem:[%s3 + $0xe20] sm:$0xff]
  %v4781 = vld [vmem:[%s3 + $0xe28] sm:$0xff]
  %v4782 = vld [vmem:[%s3 + $0xe30] sm:$0xff]
  %v4783 = vld [vmem:[%s3 + $0xe38] sm:$0xff]
  %v4784 = vld [vmem:[%s3 + $0xe40] sm:$0xff]
  %v4785 = vld [vmem:[%s3 + $0xe48] sm:$0xff]
  %v4786 = vld [vmem:[%s3 + $0xe50] sm:$0xff]
  %v4787 = vld [vmem:[%s3 + $0xe58] sm:$0xff]
  %v4788 = vld [vmem:[%s3 + $0xe60] sm:$0xff]
  %v4789 = vld [vmem:[%s3 + $0xe68] sm:$0xff]
  %v4790 = vld [vmem:[%s3 + $0xe70] sm:$0xff]
  %v4791 = vld [vmem:[%s3 + $0xe78] sm:$0xff]
  %v4792 = vld [vmem:[%s3 + $0xe80] sm:$0xff]
  %v4793 = vld [vmem:[%s3 + $0xe88] sm:$0xff]
  %v4794 = vld [vmem:[%s3 + $0xe90] sm:$0xff]
  %v4795 = vld [vmem:[%s3 + $0xe98] sm:$0xff]
  %v4796 = vld [vmem:[%s3 + $0xea0] sm:$0xff]
  %v4797 = vld [vmem:[%s3 + $0xea8] sm:$0xff]
  %v4798 = vld [vmem:[%s3 + $0xeb0] sm:$0xff]
  %v4799 = vld [vmem:[%s3 + $0xeb8] sm:$0xff]
  %v4800 = vld [vmem:[%s3 + $0xec0] sm:$0xff]
  %v4801 = vld [vmem:[%s3 + $0xec8] sm:$0xff]
  %v4802 = vld [vmem:[%s3 + $0xed0] sm:$0xff]
  %v4803 = vld [vmem:[%s3 + $0xed8] sm:$0xff]
  %v4804 = vld [vmem:[%s3 + $0xee0] sm:$0xff]
  %v4805 = vld [vmem:[%s3 + $0xee8] sm:$0xff]
  %v4806 = vld [vmem:[%s3 + $0xef0] sm:$0xff]
  %v4807 = vld [vmem:[%s3 + $0xef8] sm:$0xff]
  %v4808 = vld [vmem:[%s3 + $0xf00] sm:$0xff]
  %v4809 = vld [vmem:[%s3 + $0xf08] sm:$0xff]
  %v4810 = vld [vmem:[%s3 + $0xf10] sm:$0xff]
  %v4811 = vld [vmem:[%s3 + $0xf18] sm:$0xff]
  %v4812 = vld [vmem:[%s3 + $0xf20] sm:$0xff]
  %v4813 = vld [vmem:[%s3 + $0xf28] sm:$0xff]
  %v4814 = vld [vmem:[%s3 + $0xf30] sm:$0xff]
  %v4815 = vld [vmem:[%s3 + $0xf38] sm:$0xff]
  %v4816 = vld [vmem:[%s3 + $0xf40] sm:$0xff]
  %v4817 = vld [vmem:[%s3 + $0xf48] sm:$0xff]
  %v4818 = vld [vmem:[%s3 + $0xf50] sm:$0xff]
  %v4819 = vld [vmem:[%s3 + $0xf58] sm:$0xff]
  %v4820 = vld [vmem:[%s3 + $0xf60] sm:$0xff]
  %v4821 = vld [vmem:[%s3 + $0xf68] sm:$0xff]
  %v4822 = vld [vmem:[%s3 + $0xf70] sm:$0xff]
  %v4823 = vld [vmem:[%s3 + $0xf78] sm:$0xff]
  %v4824 = vld [vmem:[%s3 + $0xf80] sm:$0xff]
  %v4825 = vld [vmem:[%s3 + $0xf88] sm:$0xff]
  %v4826 = vld [vmem:[%s3 + $0xf90] sm:$0xff]
  %v4827 = vld [vmem:[%s3 + $0xf98] sm:$0xff]
  %v4828 = vld [vmem:[%s3 + $0xfa0] sm:$0xff]
  %v4829 = vld [vmem:[%s3 + $0xfa8] sm:$0xff]
  %v4830 = vld [vmem:[%s3 + $0xfb0] sm:$0xff]
  %v4831 = vld [vmem:[%s3 + $0xfb8] sm:$0xff]
  %v4832 = vld [vmem:[%s3 + $0xfc0] sm:$0xff]
  %v4833 = vld [vmem:[%s3 + $0xfc8] sm:$0xff]
  %v4834 = vld [vmem:[%s3 + $0xfd0] sm:$0xff]
  %v4835 = vld [vmem:[%s3 + $0xfd8] sm:$0xff]
  %v4836 = vld [vmem:[%s3 + $0xfe0] sm:$0xff]
  %v4837 = vld [vmem:[%s3 + $0xfe8] sm:$0xff]
  %v4838 = vld [vmem:[%s3 + $0xff0] sm:$0xff]
  %v4839 = vld [vmem:[%s3 + $0xff8] sm:$0xff]
  %v4840 = vld [vmem:[%s3 + $0x1000] sm:$0xff]
  %v4841 = vld [vmem:[%s3 + $0x1008] sm:$0xff]
  %v4842 = vld [vmem:[%s3 + $0x1010] sm:$0xff]
  %v4843 = vld [vmem:[%s3 + $0x1018] sm:$0xff]
  %v4844 = vld [vmem:[%s3 + $0x1020] sm:$0xff]
  %v4845 = vld [vmem:[%s3 + $0x1028] sm:$0xff]
  %v4846 = vld [vmem:[%s3 + $0x1030] sm:$0xff]
  %v4847 = vld [vmem:[%s3 + $0x1038] sm:$0xff]
  %v4848 = vld [vmem:[%s3 + $0x1040] sm:$0xff]
  %v4849 = vld [vmem:[%s3 + $0x1048] sm:$0xff]
  %v4850 = vld [vmem:[%s3 + $0x1050] sm:$0xff]
  %v4851 = vld [vmem:[%s3 + $0x1058] sm:$0xff]
  %v4852 = vld [vmem:[%s3 + $0x1060] sm:$0xff]
  %v4853 = vld [vmem:[%s3 + $0x1068] sm:$0xff]
  %v4854 = vld [vmem:[%s3 + $0x1070] sm:$0xff]
  %v4855 = vld [vmem:[%s3 + $0x1078] sm:$0xff]
  %v4856 = vld [vmem:[%s3 + $0x1080] sm:$0xff]
  %v4857 = vld [vmem:[%s3 + $0x1088] sm:$0xff]
  %v4858 = vld [vmem:[%s3 + $0x1090] sm:$0xff]
  %v4859 = vld [vmem:[%s3 + $0x1098] sm:$0xff]
  %v4860 = vld [vmem:[%s3 + $0x10a0] sm:$0xff]
  %v4861 = vld [vmem:[%s3 + $0x10a8] sm:$0xff]
  %v4862 = vld [vmem:[%s3 + $0x10b0] sm:$0xff]
  %v4863 = vld [vmem:[%s3 + $0x10b8] sm:$0xff]
  %v4864 = vld [vmem:[%s3 + $0x10c0] sm:$0xff]
  %v4865 = vld [vmem:[%s3 + $0x10c8] sm:$0xff]
  %v4866 = vld [vmem:[%s3 + $0x10d0] sm:$0xff]
  %v4867 = vld [vmem:[%s3 + $0x10d8] sm:$0xff]
  %v4868 = vld [vmem:[%s3 + $0x10e0] sm:$0xff]
  %v4869 = vld [vmem:[%s3 + $0x10e8] sm:$0xff]
  %v4870 = vld [vmem:[%s3 + $0x10f0] sm:$0xff]
  %v4871 = vld [vmem:[%s3 + $0x10f8] sm:$0xff]
  %v4872 = vld [vmem:[%s3 + $0x1100] sm:$0xff]
  %v4873 = vld [vmem:[%s3 + $0x1108] sm:$0xff]
  %v4874 = vld [vmem:[%s3 + $0x1110] sm:$0xff]
  %v4875 = vld [vmem:[%s3 + $0x1118] sm:$0xff]
  %v4876 = vld [vmem:[%s3 + $0x1120] sm:$0xff]
  %v4877 = vld [vmem:[%s3 + $0x1128] sm:$0xff]
  %v4878 = vld [vmem:[%s3 + $0x1130] sm:$0xff]
  %v4879 = vld [vmem:[%s3 + $0x1138] sm:$0xff]
  %v4880 = vld [vmem:[%s3 + $0x1140] sm:$0xff]
  %v4881 = vld [vmem:[%s3 + $0x1148] sm:$0xff]
  %v4882 = vld [vmem:[%s3 + $0x1150] sm:$0xff]
  %v4883 = vld [vmem:[%s3 + $0x1158] sm:$0xff]
  %v4884 = vld [vmem:[%s3 + $0x1160] sm:$0xff]
  %v4885 = vld [vmem:[%s3 + $0x1168] sm:$0xff]
  %v4886 = vld [vmem:[%s3 + $0x1170] sm:$0xff]
  %v4887 = vld [vmem:[%s3 + $0x1178] sm:$0xff]
  %v4888 = vld [vmem:[%s3 + $0x1180] sm:$0xff]
  %v4889 = vld [vmem:[%s3 + $0x1188] sm:$0xff]
  %v4890 = vld [vmem:[%s3 + $0x1190] sm:$0xff]
  %v4891 = vld [vmem:[%s3 + $0x1198] sm:$0xff]
  %v4892 = vld [vmem:[%s3 + $0x11a0] sm:$0xff]
  %v4893 = vld [vmem:[%s3 + $0x11a8] sm:$0xff]
  %v4894 = vld [vmem:[%s3 + $0x11b0] sm:$0xff]
  %v4895 = vld [vmem:[%s3 + $0x11b8] sm:$0xff]
  %v4896 = vld [vmem:[%s3 + $0x11c0] sm:$0xff]
  %v4897 = vld [vmem:[%s3 + $0x11c8] sm:$0xff]
  %v4898 = vld [vmem:[%s3 + $0x11d0] sm:$0xff]
  %v4899 = vld [vmem:[%s3 + $0x11d8] sm:$0xff]
  %v4900 = vld [vmem:[%s3 + $0x11e0] sm:$0xff]
  %v4901 = vld [vmem:[%s3 + $0x11e8] sm:$0xff]
  %v4902 = vld [vmem:[%s3 + $0x11f0] sm:$0xff]
  %v4903 = vld [vmem:[%s3 + $0x11f8] sm:$0xff]
  %v4904 = vld [vmem:[%s3 + $0x1200] sm:$0xff]
  %v4905 = vld [vmem:[%s3 + $0x1208] sm:$0xff]
  %v4906 = vld [vmem:[%s3 + $0x1210] sm:$0xff]
  %v4907 = vld [vmem:[%s3 + $0x1218] sm:$0xff]
  %v4908 = vld [vmem:[%s3 + $0x1220] sm:$0xff]
  %v4909 = vld [vmem:[%s3 + $0x1228] sm:$0xff]
  %v4910 = vld [vmem:[%s3 + $0x1230] sm:$0xff]
  %v4911 = vld [vmem:[%s3 + $0x1238] sm:$0xff]
  %v4912 = vld [vmem:[%s3 + $0x1240] sm:$0xff]
  %v4913 = vld [vmem:[%s3 + $0x1248] sm:$0xff]
  %v4914 = vld [vmem:[%s3 + $0x1250] sm:$0xff]
  %v4915 = vld [vmem:[%s3 + $0x1258] sm:$0xff]
  %v4916 = vld [vmem:[%s3 + $0x1260] sm:$0xff]
  %v4917 = vld [vmem:[%s3 + $0x1268] sm:$0xff]
  %v4918 = vld [vmem:[%s3 + $0x1270] sm:$0xff]
  %v4919 = vld [vmem:[%s3 + $0x1278] sm:$0xff]
  %v4920 = vld [vmem:[%s3 + $0x1280] sm:$0xff]
  %v4921 = vld [vmem:[%s3 + $0x1288] sm:$0xff]
  %v4922 = vld [vmem:[%s3 + $0x1290] sm:$0xff]
  %v4923 = vld [vmem:[%s3 + $0x1298] sm:$0xff]
  %v4924 = vld [vmem:[%s3 + $0x12a0] sm:$0xff]
  %v4925 = vld [vmem:[%s3 + $0x12a8] sm:$0xff]
  %v4926 = vld [vmem:[%s3 + $0x12b0] sm:$0xff]
  %v4927 = vld [vmem:[%s3 + $0x12b8] sm:$0xff]
  %v4928 = vld [vmem:[%s3 + $0x12c0] sm:$0xff]
  %v4929 = vld [vmem:[%s3 + $0x12c8] sm:$0xff]
  %v4930 = vld [vmem:[%s3 + $0x12d0] sm:$0xff]
  %v4931 = vld [vmem:[%s3 + $0x12d8] sm:$0xff]
  %v4932 = vld [vmem:[%s3 + $0x12e0] sm:$0xff]
  %v4933 = vld [vmem:[%s3 + $0x12e8] sm:$0xff]
  %v4934 = vld [vmem:[%s3 + $0x12f0] sm:$0xff]
  %v4935 = vld [vmem:[%s3 + $0x12f8] sm:$0xff]
  %v4936 = vld [vmem:[%s3 + $0x1300] sm:$0xff]
  %v4937 = vld [vmem:[%s3 + $0x1308] sm:$0xff]
  %v4938 = vld [vmem:[%s3 + $0x1310] sm:$0xff]
  %v4939 = vld [vmem:[%s3 + $0x1318] sm:$0xff]
  %v4940 = vld [vmem:[%s3 + $0x1320] sm:$0xff]
  %v4941 = vld [vmem:[%s3 + $0x1328] sm:$0xff]
  %v4942 = vld [vmem:[%s3 + $0x1330] sm:$0xff]
  %v4943 = vld [vmem:[%s3 + $0x1338] sm:$0xff]
  %v4944 = vld [vmem:[%s3 + $0x1340] sm:$0xff]
  %v4945 = vld [vmem:[%s3 + $0x1348] sm:$0xff]
  %v4946 = vld [vmem:[%s3 + $0x1350] sm:$0xff]
  %v4947 = vld [vmem:[%s3 + $0x1358] sm:$0xff]
  %v4948 = vld [vmem:[%s3 + $0x1360] sm:$0xff]
  %v4949 = vld [vmem:[%s3 + $0x1368] sm:$0xff]
  %v4950 = vld [vmem:[%s3 + $0x1370] sm:$0xff]
  %v4951 = vld [vmem:[%s3 + $0x1378] sm:$0xff]
  %v4952 = vld [vmem:[%s3 + $0x1380] sm:$0xff]
  %v4953 = vld [vmem:[%s3 + $0x1388] sm:$0xff]
  %v4954 = vld [vmem:[%s3 + $0x1390] sm:$0xff]
  %v4955 = vld [vmem:[%s3 + $0x1398] sm:$0xff]
  %v4956 = vld [vmem:[%s3 + $0x13a0] sm:$0xff]
  %v4957 = vld [vmem:[%s3 + $0x13a8] sm:$0xff]
  %v4958 = vld [vmem:[%s3 + $0x13b0] sm:$0xff]
  %v4959 = vld [vmem:[%s3 + $0x13b8] sm:$0xff]
  %v4960 = vld [vmem:[%s3 + $0x13c0] sm:$0xff]
  %v4961 = vld [vmem:[%s3 + $0x13c8] sm:$0xff]
  %v4962 = vld [vmem:[%s3 + $0x13d0] sm:$0xff]
  %v4963 = vld [vmem:[%s3 + $0x13d8] sm:$0xff]
  %v4964 = vld [vmem:[%s3 + $0x13e0] sm:$0xff]
  %v4965 = vld [vmem:[%s3 + $0x13e8] sm:$0xff]
  %v4966 = vld [vmem:[%s3 + $0x13f0] sm:$0xff]
  %v4967 = vld [vmem:[%s3 + $0x13f8] sm:$0xff]
  %v4968 = vld [vmem:[%s3 + $0x1400] sm:$0xff]
  %v4969 = vld [vmem:[%s3 + $0x1408] sm:$0xff]
  %v4970 = vld [vmem:[%s3 + $0x1410] sm:$0xff]
  %v4971 = vld [vmem:[%s3 + $0x1418] sm:$0xff]
  %v4972 = vld [vmem:[%s3 + $0x1420] sm:$0xff]
  %v4973 = vld [vmem:[%s3 + $0x1428] sm:$0xff]
  %v4974 = vld [vmem:[%s3 + $0x1430] sm:$0xff]
  %v4975 = vld [vmem:[%s3 + $0x1438] sm:$0xff]
  %v4976 = vld [vmem:[%s3 + $0x1440] sm:$0xff]
  %v4977 = vld [vmem:[%s3 + $0x1448] sm:$0xff]
  %v4978 = vld [vmem:[%s3 + $0x1450] sm:$0xff]
  %v4979 = vld [vmem:[%s3 + $0x1458] sm:$0xff]
  %v4980 = vld [vmem:[%s3 + $0x1460] sm:$0xff]
  %v4981 = vld [vmem:[%s3 + $0x1468] sm:$0xff]
  %v4982 = vld [vmem:[%s3 + $0x1470] sm:$0xff]
  %v4983 = vld [vmem:[%s3 + $0x1478] sm:$0xff]
  %v4984 = vld [vmem:[%s3 + $0x1480] sm:$0xff]
  %v4985 = vld [vmem:[%s3 + $0x1488] sm:$0xff]
  %v4986 = vld [vmem:[%s3 + $0x1490] sm:$0xff]
  %v4987 = vld [vmem:[%s3 + $0x1498] sm:$0xff]
  %v4988 = vld [vmem:[%s3 + $0x14a0] sm:$0xff]
  %v4989 = vld [vmem:[%s3 + $0x14a8] sm:$0xff]
  %v4990 = vld [vmem:[%s3 + $0x14b0] sm:$0xff]
  %v4991 = vld [vmem:[%s3 + $0x14b8] sm:$0xff]
  %v4992 = vld [vmem:[%s3 + $0x14c0] sm:$0xff]
  %v4993 = vld [vmem:[%s3 + $0x14c8] sm:$0xff]
  %v4994 = vld [vmem:[%s3 + $0x14d0] sm:$0xff]
  %v4995 = vld [vmem:[%s3 + $0x14d8] sm:$0xff]
  %v4996 = vld [vmem:[%s3 + $0x14e0] sm:$0xff]
  %v4997 = vld [vmem:[%s3 + $0x14e8] sm:$0xff]
  %v4998 = vld [vmem:[%s3 + $0x14f0] sm:$0xff]
  %v4999 = vld [vmem:[%s3 + $0x14f8] sm:$0xff]
  %v5000 = vld [vmem:[%s3 + $0x1500] sm:$0xff]
  %v5001 = vld [vmem:[%s3 + $0x1508] sm:$0xff]
  %v5002 = vld [vmem:[%s3 + $0x1510] sm:$0xff]
  %v5003 = vld [vmem:[%s3 + $0x1518] sm:$0xff]
  %v5004 = vld [vmem:[%s3 + $0x1520] sm:$0xff]
  %v5005 = vld [vmem:[%s3 + $0x1528] sm:$0xff]
  %v5006 = vld [vmem:[%s3 + $0x1530] sm:$0xff]
  %v5007 = vld [vmem:[%s3 + $0x1538] sm:$0xff]
  %v5008 = vld [vmem:[%s3 + $0x1540] sm:$0xff]
  %v5009 = vld [vmem:[%s3 + $0x1548] sm:$0xff]
  %v5010 = vld [vmem:[%s3 + $0x1550] sm:$0xff]
  %v5011 = vld [vmem:[%s3 + $0x1558] sm:$0xff]
  %v5012 = vld [vmem:[%s3 + $0x1560] sm:$0xff]
  %v5013 = vld [vmem:[%s3 + $0x1568] sm:$0xff]
  %v5014 = vld [vmem:[%s3 + $0x1570] sm:$0xff]
  %v5015 = vld [vmem:[%s3 + $0x1578] sm:$0xff]
  %v5016 = vld [vmem:[%s3 + $0x1580] sm:$0xff]
  %v5017 = vld [vmem:[%s3 + $0x1588] sm:$0xff]
  %v5018 = vld [vmem:[%s3 + $0x1590] sm:$0xff]
  %v5019 = vld [vmem:[%s3 + $0x1598] sm:$0xff]
  %v5020 = vld [vmem:[%s3 + $0x15a0] sm:$0xff]
  %v5021 = vld [vmem:[%s3 + $0x15a8] sm:$0xff]
  %v5022 = vld [vmem:[%s3 + $0x15b0] sm:$0xff]
  %v5023 = vld [vmem:[%s3 + $0x15b8] sm:$0xff]
  %v5024 = vld [vmem:[%s3 + $0x15c0] sm:$0xff]
  %v5025 = vld [vmem:[%s3 + $0x15c8] sm:$0xff]
  %v5026 = vld [vmem:[%s3 + $0x15d0] sm:$0xff]
  %v5027 = vld [vmem:[%s3 + $0x15d8] sm:$0xff]
  %v5028 = vld [vmem:[%s3 + $0x15e0] sm:$0xff]
  %v5029 = vld [vmem:[%s3 + $0x15e8] sm:$0xff]
  %v5030 = vld [vmem:[%s3 + $0x15f0] sm:$0xff]
  %v5031 = vld [vmem:[%s3 + $0x15f8] sm:$0xff]
  %v5032 = vld [vmem:[%s3 + $0x1600] sm:$0xff]
  %v5033 = vld [vmem:[%s3 + $0x1608] sm:$0xff]
  %v5034 = vld [vmem:[%s3 + $0x1610] sm:$0xff]
  %v5035 = vld [vmem:[%s3 + $0x1618] sm:$0xff]
  %v5036 = vld [vmem:[%s3 + $0x1620] sm:$0xff]
  %v5037 = vld [vmem:[%s3 + $0x1628] sm:$0xff]
  %v5038 = vld [vmem:[%s3 + $0x1630] sm:$0xff]
  %v5039 = vld [vmem:[%s3 + $0x1638] sm:$0xff]
  %v5040 = vld [vmem:[%s3 + $0x1640] sm:$0xff]
  %v5041 = vld [vmem:[%s3 + $0x1648] sm:$0xff]
  %v5042 = vld [vmem:[%s3 + $0x1650] sm:$0xff]
  %v5043 = vld [vmem:[%s3 + $0x1658] sm:$0xff]
  %v5044 = vld [vmem:[%s3 + $0x1660] sm:$0xff]
  %v5045 = vld [vmem:[%s3 + $0x1668] sm:$0xff]
  %v5046 = vld [vmem:[%s3 + $0x1670] sm:$0xff]
  %v5047 = vld [vmem:[%s3 + $0x1678] sm:$0xff]
  %v5048 = vld [vmem:[%s3 + $0x1680] sm:$0xff]
  %v5049 = vld [vmem:[%s3 + $0x1688] sm:$0xff]
  %v5050 = vld [vmem:[%s3 + $0x1690] sm:$0xff]
  %v5051 = vld [vmem:[%s3 + $0x1698] sm:$0xff]
  %v5052 = vld [vmem:[%s3 + $0x16a0] sm:$0xff]
  %v5053 = vld [vmem:[%s3 + $0x16a8] sm:$0xff]
  %v5054 = vld [vmem:[%s3 + $0x16b0] sm:$0xff]
  %v5055 = vld [vmem:[%s3 + $0x16b8] sm:$0xff]
  %v5056 = vld [vmem:[%s3 + $0x16c0] sm:$0xff]
  %v5057 = vld [vmem:[%s3 + $0x16c8] sm:$0xff]
  %v5058 = vld [vmem:[%s3 + $0x16d0] sm:$0xff]
  %v5059 = vld [vmem:[%s3 + $0x16d8] sm:$0xff]
  %v5060 = vld [vmem:[%s3 + $0x16e0] sm:$0xff]
  %v5061 = vld [vmem:[%s3 + $0x16e8] sm:$0xff]
  %v5062 = vld [vmem:[%s3 + $0x16f0] sm:$0xff]
  %v5063 = vld [vmem:[%s3 + $0x16f8] sm:$0xff]
  %v5064 = vld [vmem:[%s3 + $0x1700] sm:$0xff]
  %v5065 = vld [vmem:[%s3 + $0x1708] sm:$0xff]
  %v5066 = vld [vmem:[%s3 + $0x1710] sm:$0xff]
  %v5067 = vld [vmem:[%s3 + $0x1718] sm:$0xff]
  %v5068 = vld [vmem:[%s3 + $0x1720] sm:$0xff]
  %v5069 = vld [vmem:[%s3 + $0x1728] sm:$0xff]
  %v5070 = vld [vmem:[%s3 + $0x1730] sm:$0xff]
  %v5071 = vld [vmem:[%s3 + $0x1738] sm:$0xff]
  %v5072 = vld [vmem:[%s3 + $0x1740] sm:$0xff]
  %v5073 = vld [vmem:[%s3 + $0x1748] sm:$0xff]
  %v5074 = vld [vmem:[%s3 + $0x1750] sm:$0xff]
  %v5075 = vld [vmem:[%s3 + $0x1758] sm:$0xff]
  %v5076 = vld [vmem:[%s3 + $0x1760] sm:$0xff]
  %v5077 = vld [vmem:[%s3 + $0x1768] sm:$0xff]
  %v5078 = vld [vmem:[%s3 + $0x1770] sm:$0xff]
  %v5079 = vld [vmem:[%s3 + $0x1778] sm:$0xff]
  %v5080 = vld [vmem:[%s3 + $0x1780] sm:$0xff]
  %v5081 = vld [vmem:[%s3 + $0x1788] sm:$0xff]
  %v5082 = vld [vmem:[%s3 + $0x1790] sm:$0xff]
  %v5083 = vld [vmem:[%s3 + $0x1798] sm:$0xff]
  %v5084 = vld [vmem:[%s3 + $0x17a0] sm:$0xff]
  %v5085 = vld [vmem:[%s3 + $0x17a8] sm:$0xff]
  %v5086 = vld [vmem:[%s3 + $0x17b0] sm:$0xff]
  %v5087 = vld [vmem:[%s3 + $0x17b8] sm:$0xff]
  %v5088 = vld [vmem:[%s3 + $0x17c0] sm:$0xff]
  %v5089 = vld [vmem:[%s3 + $0x17c8] sm:$0xff]
  %v5090 = vld [vmem:[%s3 + $0x17d0] sm:$0xff]
  %v5091 = vld [vmem:[%s3 + $0x17d8] sm:$0xff]
  %v5092 = vld [vmem:[%s3 + $0x17e0] sm:$0xff]
  %v5093 = vld [vmem:[%s3 + $0x17e8] sm:$0xff]
  %v5094 = vld [vmem:[%s3 + $0x17f0] sm:$0xff]
  %v5095 = vld [vmem:[%s3 + $0x17f8] sm:$0xff]
  %v5096 = vld [vmem:[%s3 + $0x1800] sm:$0xff]
  %v5097 = vld [vmem:[%s3 + $0x1808] sm:$0xff]
  %v5098 = vld [vmem:[%s3 + $0x1810] sm:$0xff]
  %v5099 = vld [vmem:[%s3 + $0x1818] sm:$0xff]
  %v5100 = vld [vmem:[%s3 + $0x1820] sm:$0xff]
  %v5101 = vld [vmem:[%s3 + $0x1828] sm:$0xff]
  %v5102 = vld [vmem:[%s3 + $0x1830] sm:$0xff]
  %v5103 = vld [vmem:[%s3 + $0x1838] sm:$0xff]
  %v5104 = vld [vmem:[%s3 + $0x1840] sm:$0xff]
  %v5105 = vld [vmem:[%s3 + $0x1848] sm:$0xff]
  %v5106 = vld [vmem:[%s3 + $0x1850] sm:$0xff]
  %v5107 = vld [vmem:[%s3 + $0x1858] sm:$0xff]
  %v5108 = vld [vmem:[%s3 + $0x1860] sm:$0xff]
  %v5109 = vld [vmem:[%s3 + $0x1868] sm:$0xff]
  %v5110 = vld [vmem:[%s3 + $0x1870] sm:$0xff]
  %v5111 = vld [vmem:[%s3 + $0x1878] sm:$0xff]
  %v5112 = vld [vmem:[%s3 + $0x1880] sm:$0xff]
  %v5113 = vld [vmem:[%s3 + $0x1888] sm:$0xff]
  %v5114 = vld [vmem:[%s3 + $0x1890] sm:$0xff]
  %v5115 = vld [vmem:[%s3 + $0x1898] sm:$0xff]
  %v5116 = vld [vmem:[%s3 + $0x18a0] sm:$0xff]
  %v5117 = vld [vmem:[%s3 + $0x18a8] sm:$0xff]
  %v5118 = vld [vmem:[%s3 + $0x18b0] sm:$0xff]
  %v5119 = vld [vmem:[%s3 + $0x18b8] sm:$0xff]
  %v5120 = vld [vmem:[%s3 + $0x18c0] sm:$0xff]
  %v5121 = vld [vmem:[%s3 + $0x18c8] sm:$0xff]
  %v5122 = vld [vmem:[%s3 + $0x18d0] sm:$0xff]
  %v5123 = vld [vmem:[%s3 + $0x18d8] sm:$0xff]
  %v5124 = vld [vmem:[%s3 + $0x18e0] sm:$0xff]
  %v5125 = vld [vmem:[%s3 + $0x18e8] sm:$0xff]
  %v5126 = vld [vmem:[%s3 + $0x18f0] sm:$0xff]
  %v5127 = vld [vmem:[%s3 + $0x18f8] sm:$0xff]
  %v5128 = vld [vmem:[%s3 + $0x1900] sm:$0xff]
  %v5129 = vld [vmem:[%s3 + $0x1908] sm:$0xff]
  %v5130 = vld [vmem:[%s3 + $0x1910] sm:$0xff]
  %v5131 = vld [vmem:[%s3 + $0x1918] sm:$0xff]
  %v5132 = vld [vmem:[%s3 + $0x1920] sm:$0xff]
  %v5133 = vld [vmem:[%s3 + $0x1928] sm:$0xff]
  %v5134 = vld [vmem:[%s3 + $0x1930] sm:$0xff]
  %v5135 = vld [vmem:[%s3 + $0x1938] sm:$0xff]
  %v5136 = vld [vmem:[%s3 + $0x1940] sm:$0xff]
  %v5137 = vld [vmem:[%s3 + $0x1948] sm:$0xff]
  %v5138 = vld [vmem:[%s3 + $0x1950] sm:$0xff]
  %v5139 = vld [vmem:[%s3 + $0x1958] sm:$0xff]
  %v5140 = vld [vmem:[%s3 + $0x1960] sm:$0xff]
  %v5141 = vld [vmem:[%s3 + $0x1968] sm:$0xff]
  %v5142 = vld [vmem:[%s3 + $0x1970] sm:$0xff]
  %v5143 = vld [vmem:[%s3 + $0x1978] sm:$0xff]
  %v5144 = vld [vmem:[%s3 + $0x1980] sm:$0xff]
  %v5145 = vld [vmem:[%s3 + $0x1988] sm:$0xff]
  %v5146 = vld [vmem:[%s3 + $0x1990] sm:$0xff]
  %v5147 = vld [vmem:[%s3 + $0x1998] sm:$0xff]
  %v5148 = vld [vmem:[%s3 + $0x19a0] sm:$0xff]
  %v5149 = vld [vmem:[%s3 + $0x19a8] sm:$0xff]
  %v5150 = vld [vmem:[%s3 + $0x19b0] sm:$0xff]
  %v5151 = vld [vmem:[%s3 + $0x19b8] sm:$0xff]
  %v5152 = vld [vmem:[%s3 + $0x19c0] sm:$0xff]
  %v5153 = vld [vmem:[%s3 + $0x19c8] sm:$0xff]
  %v5154 = vld [vmem:[%s3 + $0x19d0] sm:$0xff]
  %v5155 = vld [vmem:[%s3 + $0x19d8] sm:$0xff]
  %v5156 = vld [vmem:[%s3 + $0x19e0] sm:$0xff]
  %v5157 = vld [vmem:[%s3 + $0x19e8] sm:$0xff]
  %v5158 = vld [vmem:[%s3 + $0x19f0] sm:$0xff]
  %v5159 = vld [vmem:[%s3 + $0x19f8] sm:$0xff]
  %v5160 = vld [vmem:[%s3 + $0x1a00] sm:$0xff]
  %v5161 = vld [vmem:[%s3 + $0x1a08] sm:$0xff]
  %v5162 = vld [vmem:[%s3 + $0x1a10] sm:$0xff]
  %v5163 = vld [vmem:[%s3 + $0x1a18] sm:$0xff]
  %v5164 = vld [vmem:[%s3 + $0x1a20] sm:$0xff]
  %v5165 = vld [vmem:[%s3 + $0x1a28] sm:$0xff]
  %v5166 = vld [vmem:[%s3 + $0x1a30] sm:$0xff]
  %v5167 = vld [vmem:[%s3 + $0x1a38] sm:$0xff]
  %v5168 = vld [vmem:[%s3 + $0x1a40] sm:$0xff]
  %v5169 = vld [vmem:[%s3 + $0x1a48] sm:$0xff]
  %v5170 = vld [vmem:[%s3 + $0x1a50] sm:$0xff]
  %v5171 = vld [vmem:[%s3 + $0x1a58] sm:$0xff]
  %v5172 = vld [vmem:[%s3 + $0x1a60] sm:$0xff]
  %v5173 = vld [vmem:[%s3 + $0x1a68] sm:$0xff]
  %v5174 = vld [vmem:[%s3 + $0x1a70] sm:$0xff]
  %v5175 = vld [vmem:[%s3 + $0x1a78] sm:$0xff]
  %v5176 = vld [vmem:[%s3 + $0x1a80] sm:$0xff]
  %v5177 = vld [vmem:[%s3 + $0x1a88] sm:$0xff]
  %v5178 = vld [vmem:[%s3 + $0x1a90] sm:$0xff]
  %v5179 = vld [vmem:[%s3 + $0x1a98] sm:$0xff]
  %v5180 = vld [vmem:[%s3 + $0x1aa0] sm:$0xff]
  %v5181 = vld [vmem:[%s3 + $0x1aa8] sm:$0xff]
  %v5182 = vld [vmem:[%s3 + $0x1ab0] sm:$0xff]
  %v5183 = vld [vmem:[%s3 + $0x1ab8] sm:$0xff]
  %v5184 = vld [vmem:[%s3 + $0x1ac0] sm:$0xff]
  %v5185 = vld [vmem:[%s3 + $0x1ac8] sm:$0xff]
  %v5186 = vld [vmem:[%s3 + $0x1ad0] sm:$0xff]
  %v5187 = vld [vmem:[%s3 + $0x1ad8] sm:$0xff]
  %v5188 = vld [vmem:[%s3 + $0x1ae0] sm:$0xff]
  %v5189 = vld [vmem:[%s3 + $0x1ae8] sm:$0xff]
  %v5190 = vld [vmem:[%s3 + $0x1af0] sm:$0xff]
  %v5191 = vld [vmem:[%s3 + $0x1af8] sm:$0xff]
  %v5192 = vld [vmem:[%s3 + $0x1b00] sm:$0xff]
  %v5193 = vld [vmem:[%s3 + $0x1b08] sm:$0xff]
  %v5194 = vld [vmem:[%s3 + $0x1b10] sm:$0xff]
  %v5195 = vld [vmem:[%s3 + $0x1b18] sm:$0xff]
  %v5196 = vld [vmem:[%s3 + $0x1b20] sm:$0xff]
  %v5197 = vld [vmem:[%s3 + $0x1b28] sm:$0xff]
  %v5198 = vld [vmem:[%s3 + $0x1b30] sm:$0xff]
  %v5199 = vld [vmem:[%s3 + $0x1b38] sm:$0xff]
  %v5200 = vld [vmem:[%s3 + $0x1b40] sm:$0xff]
  %v5201 = vld [vmem:[%s3 + $0x1b48] sm:$0xff]
  %v5202 = vld [vmem:[%s3 + $0x1b50] sm:$0xff]
  %v5203 = vld [vmem:[%s3 + $0x1b58] sm:$0xff]
  %v5204 = vld [vmem:[%s3 + $0x1b60] sm:$0xff]
  %v5205 = vld [vmem:[%s3 + $0x1b68] sm:$0xff]
  %v5206 = vld [vmem:[%s3 + $0x1b70] sm:$0xff]
  %v5207 = vld [vmem:[%s3 + $0x1b78] sm:$0xff]
  %v5208 = vld [vmem:[%s3 + $0x1b80] sm:$0xff]
  %v5209 = vld [vmem:[%s3 + $0x1b88] sm:$0xff]
  %v5210 = vld [vmem:[%s3 + $0x1b90] sm:$0xff]
  %v5211 = vld [vmem:[%s3 + $0x1b98] sm:$0xff]
  %v5212 = vld [vmem:[%s3 + $0x1ba0] sm:$0xff]
  %v5213 = vld [vmem:[%s3 + $0x1ba8] sm:$0xff]
  %v5214 = vld [vmem:[%s3 + $0x1bb0] sm:$0xff]
  %v5215 = vld [vmem:[%s3 + $0x1bb8] sm:$0xff]
  %v5216 = vld [vmem:[%s3 + $0x1bc0] sm:$0xff]
  %v5217 = vld [vmem:[%s3 + $0x1bc8] sm:$0xff]
  %v5218 = vld [vmem:[%s3 + $0x1bd0] sm:$0xff]
  %v5219 = vld [vmem:[%s3 + $0x1bd8] sm:$0xff]
  %v5220 = vld [vmem:[%s3 + $0x1be0] sm:$0xff]
  %v5221 = vld [vmem:[%s3 + $0x1be8] sm:$0xff]
  %v5222 = vld [vmem:[%s3 + $0x1bf0] sm:$0xff]
  %v5223 = vld [vmem:[%s3 + $0x1bf8] sm:$0xff]
  %v5224 = vld [vmem:[%s3 + $0x1c00] sm:$0xff]
  %v5225 = vld [vmem:[%s3 + $0x1c08] sm:$0xff]
  %v5226 = vld [vmem:[%s3 + $0x1c10] sm:$0xff]
  %v5227 = vld [vmem:[%s3 + $0x1c18] sm:$0xff]
  %v5228 = vld [vmem:[%s3 + $0x1c20] sm:$0xff]
  %v5229 = vld [vmem:[%s3 + $0x1c28] sm:$0xff]
  %v5230 = vld [vmem:[%s3 + $0x1c30] sm:$0xff]
  %v5231 = vld [vmem:[%s3 + $0x1c38] sm:$0xff]
  %v5232 = vld [vmem:[%s3 + $0x1c40] sm:$0xff]
  %v5233 = vld [vmem:[%s3 + $0x1c48] sm:$0xff]
  %v5234 = vld [vmem:[%s3 + $0x1c50] sm:$0xff]
  %v5235 = vld [vmem:[%s3 + $0x1c58] sm:$0xff]
  %v5236 = vld [vmem:[%s3 + $0x1c60] sm:$0xff]
  %v5237 = vld [vmem:[%s3 + $0x1c68] sm:$0xff]
  %v5238 = vld [vmem:[%s3 + $0x1c70] sm:$0xff]
  %v5239 = vld [vmem:[%s3 + $0x1c78] sm:$0xff]
  %v5240 = vld [vmem:[%s3 + $0x1c80] sm:$0xff]
  %v5241 = vld [vmem:[%s3 + $0x1c88] sm:$0xff]
  %v5242 = vld [vmem:[%s3 + $0x1c90] sm:$0xff]
  %v5243 = vld [vmem:[%s3 + $0x1c98] sm:$0xff]
  %v5244 = vld [vmem:[%s3 + $0x1ca0] sm:$0xff]
  %v5245 = vld [vmem:[%s3 + $0x1ca8] sm:$0xff]
  %v5246 = vld [vmem:[%s3 + $0x1cb0] sm:$0xff]
  %v5247 = vld [vmem:[%s3 + $0x1cb8] sm:$0xff]
  %v5248 = vld [vmem:[%s3 + $0x1cc0] sm:$0xff]
  %v5249 = vld [vmem:[%s3 + $0x1cc8] sm:$0xff]
  %v5250 = vld [vmem:[%s3 + $0x1cd0] sm:$0xff]
  %v5251 = vld [vmem:[%s3 + $0x1cd8] sm:$0xff]
  %v5252 = vld [vmem:[%s3 + $0x1ce0] sm:$0xff]
  %v5253 = vld [vmem:[%s3 + $0x1ce8] sm:$0xff]
  %v5254 = vld [vmem:[%s3 + $0x1cf0] sm:$0xff]
  %v5255 = vld [vmem:[%s3 + $0x1cf8] sm:$0xff]
  %v5256 = vld [vmem:[%s3 + $0x1d00] sm:$0xff]
  %v5257 = vld [vmem:[%s3 + $0x1d08] sm:$0xff]
  %v5258 = vld [vmem:[%s3 + $0x1d10] sm:$0xff]
  %v5259 = vld [vmem:[%s3 + $0x1d18] sm:$0xff]
  %v5260 = vld [vmem:[%s3 + $0x1d20] sm:$0xff]
  %v5261 = vld [vmem:[%s3 + $0x1d28] sm:$0xff]
  %v5262 = vld [vmem:[%s3 + $0x1d30] sm:$0xff]
  %v5263 = vld [vmem:[%s3 + $0x1d38] sm:$0xff]
  %v5264 = vld [vmem:[%s3 + $0x1d40] sm:$0xff]
  %v5265 = vld [vmem:[%s3 + $0x1d48] sm:$0xff]
  %v5266 = vld [vmem:[%s3 + $0x1d50] sm:$0xff]
  %v5267 = vld [vmem:[%s3 + $0x1d58] sm:$0xff]
  %v5268 = vld [vmem:[%s3 + $0x1d60] sm:$0xff]
  %v5269 = vld [vmem:[%s3 + $0x1d68] sm:$0xff]
  %v5270 = vld [vmem:[%s3 + $0x1d70] sm:$0xff]
  %v5271 = vld [vmem:[%s3 + $0x1d78] sm:$0xff]
  %v5272 = vld [vmem:[%s3 + $0x1d80] sm:$0xff]
  %v5273 = vld [vmem:[%s3 + $0x1d88] sm:$0xff]
  %v5274 = vld [vmem:[%s3 + $0x1d90] sm:$0xff]
  %v5275 = vld [vmem:[%s3 + $0x1d98] sm:$0xff]
  %v5276 = vld [vmem:[%s3 + $0x1da0] sm:$0xff]
  %v5277 = vld [vmem:[%s3 + $0x1da8] sm:$0xff]
  %v5278 = vld [vmem:[%s3 + $0x1db0] sm:$0xff]
  %v5279 = vld [vmem:[%s3 + $0x1db8] sm:$0xff]
  %v5280 = vld [vmem:[%s3 + $0x1dc0] sm:$0xff]
  %v5281 = vld [vmem:[%s3 + $0x1dc8] sm:$0xff]
  %v5282 = vld [vmem:[%s3 + $0x1dd0] sm:$0xff]
  %v5283 = vld [vmem:[%s3 + $0x1dd8] sm:$0xff]
  %v5284 = vld [vmem:[%s3 + $0x1de0] sm:$0xff]
  %v5285 = vld [vmem:[%s3 + $0x1de8] sm:$0xff]
  %v5286 = vld [vmem:[%s3 + $0x1df0] sm:$0xff]
  %v5287 = vld [vmem:[%s3 + $0x1df8] sm:$0xff]
  %v5288 = vld [vmem:[%s3 + $0x1e00] sm:$0xff]
  %v5289 = vld [vmem:[%s3 + $0x1e08] sm:$0xff]
  %v5290 = vld [vmem:[%s3 + $0x1e10] sm:$0xff]
  %v5291 = vld [vmem:[%s3 + $0x1e18] sm:$0xff]
  %v5292 = vld [vmem:[%s3 + $0x1e20] sm:$0xff]
  %v5293 = vld [vmem:[%s3 + $0x1e28] sm:$0xff]
  %v5294 = vld [vmem:[%s3 + $0x1e30] sm:$0xff]
  %v5295 = vld [vmem:[%s3 + $0x1e38] sm:$0xff]
  %v5296 = vld [vmem:[%s3 + $0x1e40] sm:$0xff]
  %v5297 = vld [vmem:[%s3 + $0x1e48] sm:$0xff]
  %v5298 = vld [vmem:[%s3 + $0x1e50] sm:$0xff]
  %v5299 = vld [vmem:[%s3 + $0x1e58] sm:$0xff]
  %v5300 = vld [vmem:[%s3 + $0x1e60] sm:$0xff]
  %v5301 = vld [vmem:[%s3 + $0x1e68] sm:$0xff]
  %v5302 = vld [vmem:[%s3 + $0x1e70] sm:$0xff]
  %v5303 = vld [vmem:[%s3 + $0x1e78] sm:$0xff]
  %v5304 = vld [vmem:[%s3 + $0x1e80] sm:$0xff]
  %v5305 = vld [vmem:[%s3 + $0x1e88] sm:$0xff]
  %v5306 = vld [vmem:[%s3 + $0x1e90] sm:$0xff]
  %v5307 = vld [vmem:[%s3 + $0x1e98] sm:$0xff]
  %v5308 = vld [vmem:[%s3 + $0x1ea0] sm:$0xff]
  %v5309 = vld [vmem:[%s3 + $0x1ea8] sm:$0xff]
  %v5310 = vld [vmem:[%s3 + $0x1eb0] sm:$0xff]
  %v5311 = vld [vmem:[%s3 + $0x1eb8] sm:$0xff]
  %v5312 = vld [vmem:[%s3 + $0x1ec0] sm:$0xff]
  %v5313 = vld [vmem:[%s3 + $0x1ec8] sm:$0xff]
  %v5314 = vld [vmem:[%s3 + $0x1ed0] sm:$0xff]
  %v5315 = vld [vmem:[%s3 + $0x1ed8] sm:$0xff]
  %v5316 = vld [vmem:[%s3 + $0x1ee0] sm:$0xff]
  %v5317 = vld [vmem:[%s3 + $0x1ee8] sm:$0xff]
  %v5318 = vld [vmem:[%s3 + $0x1ef0] sm:$0xff]
  %v5319 = vld [vmem:[%s3 + $0x1ef8] sm:$0xff]
  %v5320 = vld [vmem:[%s3 + $0x1f00] sm:$0xff]
  %v5321 = vld [vmem:[%s3 + $0x1f08] sm:$0xff]
  %v5322 = vld [vmem:[%s3 + $0x1f10] sm:$0xff]
  %v5323 = vld [vmem:[%s3 + $0x1f18] sm:$0xff]
  %v5324 = vld [vmem:[%s3 + $0x1f20] sm:$0xff]
  %v5325 = vld [vmem:[%s3 + $0x1f28] sm:$0xff]
  %v5326 = vld [vmem:[%s3 + $0x1f30] sm:$0xff]
  %v5327 = vld [vmem:[%s3 + $0x1f38] sm:$0xff]
  %v5328 = vld [vmem:[%s4] sm:$0xff]
  %v5330 = vlaneseq
  %v5331 = vshrl.u32 %v5330, 7
  %v5332 = vsub.s32 0, %v5331
  %v5333 = vrot.slane %v5328, %v5332
  %v5334 = vlaneseq
  %v5335 = vshrl.u32 %v5334, 7
  %v5336 = vsub.s32 1, %v5335
  %v5337 = vrot.slane %v5328, %v5336
  %v5338 = vlaneseq
  %v5339 = vshrl.u32 %v5338, 7
  %v5340 = vsub.s32 2, %v5339
  %v5341 = vrot.slane %v5328, %v5340
  %v5342 = vlaneseq
  %v5343 = vshrl.u32 %v5342, 7
  %v5344 = vsub.s32 3, %v5343
  %v5345 = vrot.slane %v5328, %v5344
  %v5346 = vlaneseq
  %v5347 = vshrl.u32 %v5346, 7
  %v5348 = vsub.s32 4, %v5347
  %v5349 = vrot.slane %v5328, %v5348
  %v5350 = vlaneseq
  %v5351 = vshrl.u32 %v5350, 7
  %v5352 = vsub.s32 5, %v5351
  %v5353 = vrot.slane %v5328, %v5352
  %v5354 = vlaneseq
  %v5355 = vshrl.u32 %v5354, 7
  %v5356 = vsub.s32 6, %v5355
  %v5357 = vrot.slane %v5328, %v5356
  %v5358 = vlaneseq
  %v5359 = vshrl.u32 %v5358, 7
  %v5360 = vsub.s32 7, %v5359
  %v5361 = vrot.slane %v5328, %v5360
  %vm5370 = vcmask 850944
  %v5372 = vsel %vm5370, %v4327, 0
  %5374 = vmatprep.subr.mxu0 %v4449
  %5375 = vmatpush1.msra.mxu0 %v4448
  %5376 = vmatprep.subr.mxu0 %v4441
  %5377 = vmatpush1.msra.mxu0 %v4440
  %5378 = vmatprep.subr.mxu0 %v4433
  %5379 = vmatpush1.msra.mxu0 %v4432
  %5380 = vmatprep.subr.mxu0 %v4425
  %5381 = vmatpush1.msra.mxu0 %v4424
  %5382 = vmatprep.subr.mxu0 %v4417
  %5383 = vmatpush1.msra.mxu0 %v4416
  %5384 = vmatprep.subr.mxu0 %v4409
  %5385 = vmatpush1.msra.mxu0 %v4408
  %5386 = vmatprep.subr.mxu0 %v4401
  %5387 = vmatpush1.msra.mxu0 %v4400
  %5388 = vmatprep.subr.mxu0 %v4393
  %5389 = vmatpush1.msra.mxu0 %v4392
  %5390 = vmatprep.subr.mxu0 %v4385
  %5391 = vmatpush1.msra.mxu0 %v4384
  %5392 = vmatprep.subr.mxu0 %v4377
  %5393 = vmatpush1.msra.mxu0 %v4376
  %5394 = vmatprep.subr.mxu0 %v4369
  %5395 = vmatpush1.msra.mxu0 %v4368
  %5396 = vmatprep.subr.mxu0 %v4361
  %5397 = vmatpush1.msra.mxu0 %v4360
  %5398 = vmatprep.subr.mxu0 %v4353
  %5399 = vmatpush1.msra.mxu0 %v4352
  %5400 = vmatprep.subr.mxu0 %v4345
  %5401 = vmatpush1.msra.mxu0 %v4344
  %5402 = vmatprep.subr.mxu0 %v4337
  %5403 = vmatpush1.msra.mxu0 %v4336
  %5404 = vmatprep.subr.mxu0 %v4329
  %5405 = vmatpush1.msra.mxu0 %v4328
  %5406 = vmatprep.subr.mxu0 %v4577
  %5407 = vmatpush2.msra.mxu0 %v4576
  %5408 = vmatprep.subr.mxu0 %v4569
  %5409 = vmatpush2.msra.mxu0 %v4568
  %5410 = vmatprep.subr.mxu0 %v4561
  %5411 = vmatpush2.msra.mxu0 %v4560
  %5412 = vmatprep.subr.mxu0 %v4553
  %5413 = vmatpush2.msra.mxu0 %v4552
  %5414 = vmatprep.subr.mxu0 %v4545
  %5415 = vmatpush2.msra.mxu0 %v4544
  %5416 = vmatprep.subr.mxu0 %v4537
  %5417 = vmatpush2.msra.mxu0 %v4536
  %5418 = vmatprep.subr.mxu0 %v4529
  %5419 = vmatpush2.msra.mxu0 %v4528
  %5420 = vmatprep.subr.mxu0 %v4521
  %5421 = vmatpush2.msra.mxu0 %v4520
  %5422 = vmatprep.subr.mxu0 %v4513
  %5423 = vmatpush2.msra.mxu0 %v4512
  %5424 = vmatprep.subr.mxu0 %v4505
  %5425 = vmatpush2.msra.mxu0 %v4504
  %5426 = vmatprep.subr.mxu0 %v4497
  %5427 = vmatpush2.msra.mxu0 %v4496
  %5428 = vmatprep.subr.mxu0 %v4489
  %5429 = vmatpush2.msra.mxu0 %v4488
  %5430 = vmatprep.subr.mxu0 %v4481
  %5431 = vmatpush2.msra.mxu0 %v4480
  %5432 = vmatprep.subr.mxu0 %v4473
  %5433 = vmatpush2.msra.mxu0 %v4472
  %5434 = vmatprep.subr.mxu0 %v4465
  %5435 = vmatpush2.msra.mxu0 %v4464
  %5436 = vmatprep.subr.mxu0 %v4457
  %5437 = vmatpush2.msra.mxu0 %v4456
  %5438 = vmatprep.mubr.f32.mxu0 %v4321
  %5439 = vmatmul.mubr.f32.gmra.mxu0 %v4320
  %v5440 = vpop.f32.mrf.mxu0
  %v5441 = vadd.f32 %v5333, %v5440
  %v5442 = vpop.f32.mrf.mxu0
  %v5443 = vadd.f32 %v5337, %v5442
  %5444 = vdwg.mxu0
  %5445 = vmatprep.subr.mxu0 %v4705
  %5446 = vmatpush1.msra.mxu0 %v4704
  %5447 = vmatprep.subr.mxu0 %v4697
  %5448 = vmatpush1.msra.mxu0 %v4696
  %5449 = vmatprep.subr.mxu0 %v4689
  %5450 = vmatpush1.msra.mxu0 %v4688
  %5451 = vmatprep.subr.mxu0 %v4681
  %5452 = vmatpush1.msra.mxu0 %v4680
  %5453 = vmatprep.subr.mxu0 %v4673
  %5454 = vmatpush1.msra.mxu0 %v4672
  %5455 = vmatprep.subr.mxu0 %v4665
  %5456 = vmatpush1.msra.mxu0 %v4664
  %5457 = vmatprep.subr.mxu0 %v4657
  %5458 = vmatpush1.msra.mxu0 %v4656
  %5459 = vmatprep.subr.mxu0 %v4649
  %5460 = vmatpush1.msra.mxu0 %v4648
  %5461 = vmatprep.subr.mxu0 %v4641
  %5462 = vmatpush1.msra.mxu0 %v4640
  %5463 = vmatprep.subr.mxu0 %v4633
  %5464 = vmatpush1.msra.mxu0 %v4632
  %5465 = vmatprep.subr.mxu0 %v4625
  %5466 = vmatpush1.msra.mxu0 %v4624
  %5467 = vmatprep.subr.mxu0 %v4617
  %5468 = vmatpush1.msra.mxu0 %v4616
  %5469 = vmatprep.subr.mxu0 %v4609
  %5470 = vmatpush1.msra.mxu0 %v4608
  %5471 = vmatprep.subr.mxu0 %v4601
  %5472 = vmatpush1.msra.mxu0 %v4600
  %5473 = vmatprep.subr.mxu0 %v4593
  %5474 = vmatpush1.msra.mxu0 %v4592
  %5475 = vmatprep.subr.mxu0 %v4585
  %5476 = vmatpush1.msra.mxu0 %v4584
  %5477 = vmatprep.subr.mxu0 %v4833
  %5478 = vmatpush2.msra.mxu0 %v4832
  %5479 = vmatprep.subr.mxu0 %v4825
  %5480 = vmatpush2.msra.mxu0 %v4824
  %5481 = vmatprep.subr.mxu0 %v4817
  %5482 = vmatpush2.msra.mxu0 %v4816
  %5483 = vmatprep.subr.mxu0 %v4809
  %5484 = vmatpush2.msra.mxu0 %v4808
  %5485 = vmatprep.subr.mxu0 %v4801
  %5486 = vmatpush2.msra.mxu0 %v4800
  %5487 = vmatprep.subr.mxu0 %v4793
  %5488 = vmatpush2.msra.mxu0 %v4792
  %5489 = vmatprep.subr.mxu0 %v4785
  %5490 = vmatpush2.msra.mxu0 %v4784
  %5491 = vmatprep.subr.mxu0 %v4777
  %5492 = vmatpush2.msra.mxu0 %v4776
  %5493 = vmatprep.subr.mxu0 %v4769
  %5494 = vmatpush2.msra.mxu0 %v4768
  %5495 = vmatprep.subr.mxu0 %v4761
  %5496 = vmatpush2.msra.mxu0 %v4760
  %5497 = vmatprep.subr.mxu0 %v4753
  %5498 = vmatpush2.msra.mxu0 %v4752
  %5499 = vmatprep.subr.mxu0 %v4745
  %5500 = vmatpush2.msra.mxu0 %v4744
  %5501 = vmatprep.subr.mxu0 %v4737
  %5502 = vmatpush2.msra.mxu0 %v4736
  %5503 = vmatprep.subr.mxu0 %v4729
  %5504 = vmatpush2.msra.mxu0 %v4728
  %5505 = vmatprep.subr.mxu0 %v4721
  %5506 = vmatpush2.msra.mxu0 %v4720
  %5507 = vmatprep.subr.mxu0 %v4713
  %5508 = vmatpush2.msra.mxu0 %v4712
  %5509 = vmatprep.mubr.f32.mxu0 %v4323
  %5510 = vmatmul.mubr.f32.gmra.mxu0 %v4322
  %v5511 = vpop.f32.mrf.mxu0
  %v5512 = vadd.f32 %v5441, %v5511
  %v5513 = vpop.f32.mrf.mxu0
  %v5514 = vadd.f32 %v5443, %v5513
  %5515 = vdwg.mxu0
  %5516 = vmatprep.subr.mxu0 %v4961
  %5517 = vmatpush1.msra.mxu0 %v4960
  %5518 = vmatprep.subr.mxu0 %v4953
  %5519 = vmatpush1.msra.mxu0 %v4952
  %5520 = vmatprep.subr.mxu0 %v4945
  %5521 = vmatpush1.msra.mxu0 %v4944
  %5522 = vmatprep.subr.mxu0 %v4937
  %5523 = vmatpush1.msra.mxu0 %v4936
  %5524 = vmatprep.subr.mxu0 %v4929
  %5525 = vmatpush1.msra.mxu0 %v4928
  %5526 = vmatprep.subr.mxu0 %v4921
  %5527 = vmatpush1.msra.mxu0 %v4920
  %5528 = vmatprep.subr.mxu0 %v4913
  %5529 = vmatpush1.msra.mxu0 %v4912
  %5530 = vmatprep.subr.mxu0 %v4905
  %5531 = vmatpush1.msra.mxu0 %v4904
  %5532 = vmatprep.subr.mxu0 %v4897
  %5533 = vmatpush1.msra.mxu0 %v4896
  %5534 = vmatprep.subr.mxu0 %v4889
  %5535 = vmatpush1.msra.mxu0 %v4888
  %5536 = vmatprep.subr.mxu0 %v4881
  %5537 = vmatpush1.msra.mxu0 %v4880
  %5538 = vmatprep.subr.mxu0 %v4873
  %5539 = vmatpush1.msra.mxu0 %v4872
  %5540 = vmatprep.subr.mxu0 %v4865
  %5541 = vmatpush1.msra.mxu0 %v4864
  %5542 = vmatprep.subr.mxu0 %v4857
  %5543 = vmatpush1.msra.mxu0 %v4856
  %5544 = vmatprep.subr.mxu0 %v4849
  %5545 = vmatpush1.msra.mxu0 %v4848
  %5546 = vmatprep.subr.mxu0 %v4841
  %5547 = vmatpush1.msra.mxu0 %v4840
  %5548 = vmatprep.subr.mxu0 %v5089
  %5549 = vmatpush2.msra.mxu0 %v5088
  %5550 = vmatprep.subr.mxu0 %v5081
  %5551 = vmatpush2.msra.mxu0 %v5080
  %5552 = vmatprep.subr.mxu0 %v5073
  %5553 = vmatpush2.msra.mxu0 %v5072
  %5554 = vmatprep.subr.mxu0 %v5065
  %5555 = vmatpush2.msra.mxu0 %v5064
  %5556 = vmatprep.subr.mxu0 %v5057
  %5557 = vmatpush2.msra.mxu0 %v5056
  %5558 = vmatprep.subr.mxu0 %v5049
  %5559 = vmatpush2.msra.mxu0 %v5048
  %5560 = vmatprep.subr.mxu0 %v5041
  %5561 = vmatpush2.msra.mxu0 %v5040
  %5562 = vmatprep.subr.mxu0 %v5033
  %5563 = vmatpush2.msra.mxu0 %v5032
  %5564 = vmatprep.subr.mxu0 %v5025
  %5565 = vmatpush2.msra.mxu0 %v5024
  %5566 = vmatprep.subr.mxu0 %v5017
  %5567 = vmatpush2.msra.mxu0 %v5016
  %5568 = vmatprep.subr.mxu0 %v5009
  %5569 = vmatpush2.msra.mxu0 %v5008
  %5570 = vmatprep.subr.mxu0 %v5001
  %5571 = vmatpush2.msra.mxu0 %v5000
  %5572 = vmatprep.subr.mxu0 %v4993
  %5573 = vmatpush2.msra.mxu0 %v4992
  %5574 = vmatprep.subr.mxu0 %v4985
  %5575 = vmatpush2.msra.mxu0 %v4984
  %5576 = vmatprep.subr.mxu0 %v4977
  %5577 = vmatpush2.msra.mxu0 %v4976
  %5578 = vmatprep.subr.mxu0 %v4969
  %5579 = vmatpush2.msra.mxu0 %v4968
  %5580 = vmatprep.mubr.f32.mxu0 %v4325
  %5581 = vmatmul.mubr.f32.gmra.mxu0 %v4324
  %v5582 = vpop.f32.mrf.mxu0
  %v5583 = vadd.f32 %v5512, %v5582
  %v5584 = vpop.f32.mrf.mxu0
  %v5585 = vadd.f32 %v5514, %v5584
  %5586 = vdwg.mxu0
  %5587 = vmatprep.subr.mxu0 %v5217
  %5588 = vmatpush1.msra.mxu0 %v5216
  %5589 = vmatprep.subr.mxu0 %v5209
  %5590 = vmatpush1.msra.mxu0 %v5208
  %5591 = vmatprep.subr.mxu0 %v5201
  %5592 = vmatpush1.msra.mxu0 %v5200
  %5593 = vmatprep.subr.mxu0 %v5193
  %5594 = vmatpush1.msra.mxu0 %v5192
  %5595 = vmatprep.subr.mxu0 %v5185
  %5596 = vmatpush1.msra.mxu0 %v5184
  %5597 = vmatprep.subr.mxu0 %v5177
  %5598 = vmatpush1.msra.mxu0 %v5176
  %5599 = vmatprep.subr.mxu0 %v5169
  %5600 = vmatpush1.msra.mxu0 %v5168
  %5601 = vmatprep.subr.mxu0 %v5161
  %5602 = vmatpush1.msra.mxu0 %v5160
  %5603 = vmatprep.subr.mxu0 %v5153
  %5604 = vmatpush1.msra.mxu0 %v5152
  %5605 = vmatprep.subr.mxu0 %v5145
  %5606 = vmatpush1.msra.mxu0 %v5144
  %5607 = vmatprep.subr.mxu0 %v5137
  %5608 = vmatpush1.msra.mxu0 %v5136
  %5609 = vmatprep.subr.mxu0 %v5129
  %5610 = vmatpush1.msra.mxu0 %v5128
  %5611 = vmatprep.subr.mxu0 %v5121
  %5612 = vmatpush1.msra.mxu0 %v5120
  %5613 = vmatprep.subr.mxu0 %v5113
  %5614 = vmatpush1.msra.mxu0 %v5112
  %5615 = vmatprep.subr.mxu0 %v5105
  %5616 = vmatpush1.msra.mxu0 %v5104
  %5617 = vmatprep.subr.mxu0 %v5097
  %5618 = vmatpush1.msra.mxu0 %v5096
  %5619 = vmatprep.subr.mxu0 0.0
  %5620 = vmatpush2.msra.mxu0 0.0
  %5621 = vmatprep.subr.mxu0 0.0
  %5622 = vmatpush2.msra.mxu0 0.0
  %5623 = vmatprep.subr.mxu0 0.0
  %5624 = vmatpush2.msra.mxu0 0.0
  %5625 = vmatprep.subr.mxu0 %v5321
  %5626 = vmatpush2.msra.mxu0 %v5320
  %5627 = vmatprep.subr.mxu0 %v5313
  %5628 = vmatpush2.msra.mxu0 %v5312
  %5629 = vmatprep.subr.mxu0 %v5305
  %5630 = vmatpush2.msra.mxu0 %v5304
  %5631 = vmatprep.subr.mxu0 %v5297
  %5632 = vmatpush2.msra.mxu0 %v5296
  %5633 = vmatprep.subr.mxu0 %v5289
  %5634 = vmatpush2.msra.mxu0 %v5288
  %5635 = vmatprep.subr.mxu0 %v5281
  %5636 = vmatpush2.msra.mxu0 %v5280
  %5637 = vmatprep.subr.mxu0 %v5273
  %5638 = vmatpush2.msra.mxu0 %v5272
  %5639 = vmatprep.subr.mxu0 %v5265
  %5640 = vmatpush2.msra.mxu0 %v5264
  %5641 = vmatprep.subr.mxu0 %v5257
  %5642 = vmatpush2.msra.mxu0 %v5256
  %5643 = vmatprep.subr.mxu0 %v5249
  %5644 = vmatpush2.msra.mxu0 %v5248
  %5645 = vmatprep.subr.mxu0 %v5241
  %5646 = vmatpush2.msra.mxu0 %v5240
  %5647 = vmatprep.subr.mxu0 %v5233
  %5648 = vmatpush2.msra.mxu0 %v5232
  %5649 = vmatprep.subr.mxu0 %v5225
  %5650 = vmatpush2.msra.mxu0 %v5224
  %5651 = vmatprep.mubr.f32.mxu0 %v5372
  %5652 = vmatmul.mubr.f32.gmra.mxu0 %v4326
  %v5653 = vpop.f32.mrf.mxu0
  %v5654 = vadd.f32 %v5583, %v5653
  %v5655 = vpop.f32.mrf.mxu0
  %v5656 = vadd.f32 %v5585, %v5655
  %5657 = vdwg.mxu0
  %5658 = vmatprep.subr.mxu0 %v4451
  %5659 = vmatpush1.msra.mxu0 %v4450
  %5660 = vmatprep.subr.mxu0 %v4443
  %5661 = vmatpush1.msra.mxu0 %v4442
  %5662 = vmatprep.subr.mxu0 %v4435
  %5663 = vmatpush1.msra.mxu0 %v4434
  %5664 = vmatprep.subr.mxu0 %v4427
  %5665 = vmatpush1.msra.mxu0 %v4426
  %5666 = vmatprep.subr.mxu0 %v4419
  %5667 = vmatpush1.msra.mxu0 %v4418
  %5668 = vmatprep.subr.mxu0 %v4411
  %5669 = vmatpush1.msra.mxu0 %v4410
  %5670 = vmatprep.subr.mxu0 %v4403
  %5671 = vmatpush1.msra.mxu0 %v4402
  %5672 = vmatprep.subr.mxu0 %v4395
  %5673 = vmatpush1.msra.mxu0 %v4394
  %5674 = vmatprep.subr.mxu0 %v4387
  %5675 = vmatpush1.msra.mxu0 %v4386
  %5676 = vmatprep.subr.mxu0 %v4379
  %5677 = vmatpush1.msra.mxu0 %v4378
  %5678 = vmatprep.subr.mxu0 %v4371
  %5679 = vmatpush1.msra.mxu0 %v4370
  %5680 = vmatprep.subr.mxu0 %v4363
  %5681 = vmatpush1.msra.mxu0 %v4362
  %5682 = vmatprep.subr.mxu0 %v4355
  %5683 = vmatpush1.msra.mxu0 %v4354
  %5684 = vmatprep.subr.mxu0 %v4347
  %5685 = vmatpush1.msra.mxu0 %v4346
  %5686 = vmatprep.subr.mxu0 %v4339
  %5687 = vmatpush1.msra.mxu0 %v4338
  %5688 = vmatprep.subr.mxu0 %v4331
  %5689 = vmatpush1.msra.mxu0 %v4330
  %5690 = vmatprep.subr.mxu0 %v4579
  %5691 = vmatpush2.msra.mxu0 %v4578
  %5692 = vmatprep.subr.mxu0 %v4571
  %5693 = vmatpush2.msra.mxu0 %v4570
  %5694 = vmatprep.subr.mxu0 %v4563
  %5695 = vmatpush2.msra.mxu0 %v4562
  %5696 = vmatprep.subr.mxu0 %v4555
  %5697 = vmatpush2.msra.mxu0 %v4554
  %5698 = vmatprep.subr.mxu0 %v4547
  %5699 = vmatpush2.msra.mxu0 %v4546
  %5700 = vmatprep.subr.mxu0 %v4539
  %5701 = vmatpush2.msra.mxu0 %v4538
  %5702 = vmatprep.subr.mxu0 %v4531
  %5703 = vmatpush2.msra.mxu0 %v4530
  %5704 = vmatprep.subr.mxu0 %v4523
  %5705 = vmatpush2.msra.mxu0 %v4522
  %5706 = vmatprep.subr.mxu0 %v4515
  %5707 = vmatpush2.msra.mxu0 %v4514
  %5708 = vmatprep.subr.mxu0 %v4507
  %5709 = vmatpush2.msra.mxu0 %v4506
  %5710 = vmatprep.subr.mxu0 %v4499
  %5711 = vmatpush2.msra.mxu0 %v4498
  %5712 = vmatprep.subr.mxu0 %v4491
  %5713 = vmatpush2.msra.mxu0 %v4490
  %5714 = vmatprep.subr.mxu0 %v4483
  %5715 = vmatpush2.msra.mxu0 %v4482
  %5716 = vmatprep.subr.mxu0 %v4475
  %5717 = vmatpush2.msra.mxu0 %v4474
  %5718 = vmatprep.subr.mxu0 %v4467
  %5719 = vmatpush2.msra.mxu0 %v4466
  %5720 = vmatprep.subr.mxu0 %v4459
  %5721 = vmatpush2.msra.mxu0 %v4458
  %5722 = vmatprep.mubr.f32.mxu0 %v4321
  %5723 = vmatmul.mubr.f32.gmra.mxu0 %v4320
  %v5724 = vpop.f32.mrf.mxu0
  %v5725 = vadd.f32 %v5341, %v5724
  %v5726 = vpop.f32.mrf.mxu0
  %v5727 = vadd.f32 %v5345, %v5726
  %5728 = vdwg.mxu0
  %5729 = vmatprep.subr.mxu0 %v4707
  %5730 = vmatpush1.msra.mxu0 %v4706
  %5731 = vmatprep.subr.mxu0 %v4699
  %5732 = vmatpush1.msra.mxu0 %v4698
  %5733 = vmatprep.subr.mxu0 %v4691
  %5734 = vmatpush1.msra.mxu0 %v4690
  %5735 = vmatprep.subr.mxu0 %v4683
  %5736 = vmatpush1.msra.mxu0 %v4682
  %5737 = vmatprep.subr.mxu0 %v4675
  %5738 = vmatpush1.msra.mxu0 %v4674
  %5739 = vmatprep.subr.mxu0 %v4667
  %5740 = vmatpush1.msra.mxu0 %v4666
  %5741 = vmatprep.subr.mxu0 %v4659
  %5742 = vmatpush1.msra.mxu0 %v4658
  %5743 = vmatprep.subr.mxu0 %v4651
  %5744 = vmatpush1.msra.mxu0 %v4650
  %5745 = vmatprep.subr.mxu0 %v4643
  %5746 = vmatpush1.msra.mxu0 %v4642
  %5747 = vmatprep.subr.mxu0 %v4635
  %5748 = vmatpush1.msra.mxu0 %v4634
  %5749 = vmatprep.subr.mxu0 %v4627
  %5750 = vmatpush1.msra.mxu0 %v4626
  %5751 = vmatprep.subr.mxu0 %v4619
  %5752 = vmatpush1.msra.mxu0 %v4618
  %5753 = vmatprep.subr.mxu0 %v4611
  %5754 = vmatpush1.msra.mxu0 %v4610
  %5755 = vmatprep.subr.mxu0 %v4603
  %5756 = vmatpush1.msra.mxu0 %v4602
  %5757 = vmatprep.subr.mxu0 %v4595
  %5758 = vmatpush1.msra.mxu0 %v4594
  %5759 = vmatprep.subr.mxu0 %v4587
  %5760 = vmatpush1.msra.mxu0 %v4586
  %5761 = vmatprep.subr.mxu0 %v4835
  %5762 = vmatpush2.msra.mxu0 %v4834
  %5763 = vmatprep.subr.mxu0 %v4827
  %5764 = vmatpush2.msra.mxu0 %v4826
  %5765 = vmatprep.subr.mxu0 %v4819
  %5766 = vmatpush2.msra.mxu0 %v4818
  %5767 = vmatprep.subr.mxu0 %v4811
  %5768 = vmatpush2.msra.mxu0 %v4810
  %5769 = vmatprep.subr.mxu0 %v4803
  %5770 = vmatpush2.msra.mxu0 %v4802
  %5771 = vmatprep.subr.mxu0 %v4795
  %5772 = vmatpush2.msra.mxu0 %v4794
  %5773 = vmatprep.subr.mxu0 %v4787
  %5774 = vmatpush2.msra.mxu0 %v4786
  %5775 = vmatprep.subr.mxu0 %v4779
  %5776 = vmatpush2.msra.mxu0 %v4778
  %5777 = vmatprep.subr.mxu0 %v4771
  %5778 = vmatpush2.msra.mxu0 %v4770
  %5779 = vmatprep.subr.mxu0 %v4763
  %5780 = vmatpush2.msra.mxu0 %v4762
  %5781 = vmatprep.subr.mxu0 %v4755
  %5782 = vmatpush2.msra.mxu0 %v4754
  %5783 = vmatprep.subr.mxu0 %v4747
  %5784 = vmatpush2.msra.mxu0 %v4746
  %5785 = vmatprep.subr.mxu0 %v4739
  %5786 = vmatpush2.msra.mxu0 %v4738
  %5787 = vmatprep.subr.mxu0 %v4731
  %5788 = vmatpush2.msra.mxu0 %v4730
  %5789 = vmatprep.subr.mxu0 %v4723
  %5790 = vmatpush2.msra.mxu0 %v4722
  %5791 = vmatprep.subr.mxu0 %v4715
  %5792 = vmatpush2.msra.mxu0 %v4714
  %5793 = vmatprep.mubr.f32.mxu0 %v4323
  %5794 = vmatmul.mubr.f32.gmra.mxu0 %v4322
  %v5795 = vpop.f32.mrf.mxu0
  %v5796 = vadd.f32 %v5725, %v5795
  %v5797 = vpop.f32.mrf.mxu0
  %v5798 = vadd.f32 %v5727, %v5797
  %5799 = vdwg.mxu0
  %5800 = vmatprep.subr.mxu0 %v4963
  %5801 = vmatpush1.msra.mxu0 %v4962
  %5802 = vmatprep.subr.mxu0 %v4955
  %5803 = vmatpush1.msra.mxu0 %v4954
  %5804 = vmatprep.subr.mxu0 %v4947
  %5805 = vmatpush1.msra.mxu0 %v4946
  %5806 = vmatprep.subr.mxu0 %v4939
  %5807 = vmatpush1.msra.mxu0 %v4938
  %5808 = vmatprep.subr.mxu0 %v4931
  %5809 = vmatpush1.msra.mxu0 %v4930
  %5810 = vmatprep.subr.mxu0 %v4923
  %5811 = vmatpush1.msra.mxu0 %v4922
  %5812 = vmatprep.subr.mxu0 %v4915
  %5813 = vmatpush1.msra.mxu0 %v4914
  %5814 = vmatprep.subr.mxu0 %v4907
  %5815 = vmatpush1.msra.mxu0 %v4906
  %5816 = vmatprep.subr.mxu0 %v4899
  %5817 = vmatpush1.msra.mxu0 %v4898
  %5818 = vmatprep.subr.mxu0 %v4891
  %5819 = vmatpush1.msra.mxu0 %v4890
  %5820 = vmatprep.subr.mxu0 %v4883
  %5821 = vmatpush1.msra.mxu0 %v4882
  %5822 = vmatprep.subr.mxu0 %v4875
  %5823 = vmatpush1.msra.mxu0 %v4874
  %5824 = vmatprep.subr.mxu0 %v4867
  %5825 = vmatpush1.msra.mxu0 %v4866
  %5826 = vmatprep.subr.mxu0 %v4859
  %5827 = vmatpush1.msra.mxu0 %v4858
  %5828 = vmatprep.subr.mxu0 %v4851
  %5829 = vmatpush1.msra.mxu0 %v4850
  %5830 = vmatprep.subr.mxu0 %v4843
  %5831 = vmatpush1.msra.mxu0 %v4842
  %5832 = vmatprep.subr.mxu0 %v5091
  %5833 = vmatpush2.msra.mxu0 %v5090
  %5834 = vmatprep.subr.mxu0 %v5083
  %5835 = vmatpush2.msra.mxu0 %v5082
  %5836 = vmatprep.subr.mxu0 %v5075
  %5837 = vmatpush2.msra.mxu0 %v5074
  %5838 = vmatprep.subr.mxu0 %v5067
  %5839 = vmatpush2.msra.mxu0 %v5066
  %5840 = vmatprep.subr.mxu0 %v5059
  %5841 = vmatpush2.msra.mxu0 %v5058
  %5842 = vmatprep.subr.mxu0 %v5051
  %5843 = vmatpush2.msra.mxu0 %v5050
  %5844 = vmatprep.subr.mxu0 %v5043
  %5845 = vmatpush2.msra.mxu0 %v5042
  %5846 = vmatprep.subr.mxu0 %v5035
  %5847 = vmatpush2.msra.mxu0 %v5034
  %5848 = vmatprep.subr.mxu0 %v5027
  %5849 = vmatpush2.msra.mxu0 %v5026
  %5850 = vmatprep.subr.mxu0 %v5019
  %5851 = vmatpush2.msra.mxu0 %v5018
  %5852 = vmatprep.subr.mxu0 %v5011
  %5853 = vmatpush2.msra.mxu0 %v5010
  %5854 = vmatprep.subr.mxu0 %v5003
  %5855 = vmatpush2.msra.mxu0 %v5002
  %5856 = vmatprep.subr.mxu0 %v4995
  %5857 = vmatpush2.msra.mxu0 %v4994
  %5858 = vmatprep.subr.mxu0 %v4987
  %5859 = vmatpush2.msra.mxu0 %v4986
  %5860 = vmatprep.subr.mxu0 %v4979
  %5861 = vmatpush2.msra.mxu0 %v4978
  %5862 = vmatprep.subr.mxu0 %v4971
  %5863 = vmatpush2.msra.mxu0 %v4970
  %5864 = vmatprep.mubr.f32.mxu0 %v4325
  %5865 = vmatmul.mubr.f32.gmra.mxu0 %v4324
  %v5866 = vpop.f32.mrf.mxu0
  %v5867 = vadd.f32 %v5796, %v5866
  %v5868 = vpop.f32.mrf.mxu0
  %v5869 = vadd.f32 %v5798, %v5868
  %5870 = vdwg.mxu0
  %5871 = vmatprep.subr.mxu0 %v5219
  %5872 = vmatpush1.msra.mxu0 %v5218
  %5873 = vmatprep.subr.mxu0 %v5211
  %5874 = vmatpush1.msra.mxu0 %v5210
  %5875 = vmatprep.subr.mxu0 %v5203
  %5876 = vmatpush1.msra.mxu0 %v5202
  %5877 = vmatprep.subr.mxu0 %v5195
  %5878 = vmatpush1.msra.mxu0 %v5194
  %5879 = vmatprep.subr.mxu0 %v5187
  %5880 = vmatpush1.msra.mxu0 %v5186
  %5881 = vmatprep.subr.mxu0 %v5179
  %5882 = vmatpush1.msra.mxu0 %v5178
  %5883 = vmatprep.subr.mxu0 %v5171
  %5884 = vmatpush1.msra.mxu0 %v5170
  %5885 = vmatprep.subr.mxu0 %v5163
  %5886 = vmatpush1.msra.mxu0 %v5162
  %5887 = vmatprep.subr.mxu0 %v5155
  %5888 = vmatpush1.msra.mxu0 %v5154
  %5889 = vmatprep.subr.mxu0 %v5147
  %5890 = vmatpush1.msra.mxu0 %v5146
  %5891 = vmatprep.subr.mxu0 %v5139
  %5892 = vmatpush1.msra.mxu0 %v5138
  %5893 = vmatprep.subr.mxu0 %v5131
  %5894 = vmatpush1.msra.mxu0 %v5130
  %5895 = vmatprep.subr.mxu0 %v5123
  %5896 = vmatpush1.msra.mxu0 %v5122
  %5897 = vmatprep.subr.mxu0 %v5115
  %5898 = vmatpush1.msra.mxu0 %v5114
  %5899 = vmatprep.subr.mxu0 %v5107
  %5900 = vmatpush1.msra.mxu0 %v5106
  %5901 = vmatprep.subr.mxu0 %v5099
  %5902 = vmatpush1.msra.mxu0 %v5098
  %5903 = vmatprep.subr.mxu0 0.0
  %5904 = vmatpush2.msra.mxu0 0.0
  %5905 = vmatprep.subr.mxu0 0.0
  %5906 = vmatpush2.msra.mxu0 0.0
  %5907 = vmatprep.subr.mxu0 0.0
  %5908 = vmatpush2.msra.mxu0 0.0
  %5909 = vmatprep.subr.mxu0 %v5323
  %5910 = vmatpush2.msra.mxu0 %v5322
  %5911 = vmatprep.subr.mxu0 %v5315
  %5912 = vmatpush2.msra.mxu0 %v5314
  %5913 = vmatprep.subr.mxu0 %v5307
  %5914 = vmatpush2.msra.mxu0 %v5306
  %5915 = vmatprep.subr.mxu0 %v5299
  %5916 = vmatpush2.msra.mxu0 %v5298
  %5917 = vmatprep.subr.mxu0 %v5291
  %5918 = vmatpush2.msra.mxu0 %v5290
  %5919 = vmatprep.subr.mxu0 %v5283
  %5920 = vmatpush2.msra.mxu0 %v5282
  %5921 = vmatprep.subr.mxu0 %v5275
  %5922 = vmatpush2.msra.mxu0 %v5274
  %5923 = vmatprep.subr.mxu0 %v5267
  %5924 = vmatpush2.msra.mxu0 %v5266
  %5925 = vmatprep.subr.mxu0 %v5259
  %5926 = vmatpush2.msra.mxu0 %v5258
  %5927 = vmatprep.subr.mxu0 %v5251
  %5928 = vmatpush2.msra.mxu0 %v5250
  %5929 = vmatprep.subr.mxu0 %v5243
  %5930 = vmatpush2.msra.mxu0 %v5242
  %5931 = vmatprep.subr.mxu0 %v5235
  %5932 = vmatpush2.msra.mxu0 %v5234
  %5933 = vmatprep.subr.mxu0 %v5227
  %5934 = vmatpush2.msra.mxu0 %v5226
  %5935 = vmatprep.mubr.f32.mxu0 %v5372
  %5936 = vmatmul.mubr.f32.gmra.mxu0 %v4326
  %v5937 = vpop.f32.mrf.mxu0
  %v5938 = vadd.f32 %v5867, %v5937
  %v5939 = vpop.f32.mrf.mxu0
  %v5940 = vadd.f32 %v5869, %v5939
  %5941 = vdwg.mxu0
  %5942 = vmatprep.subr.mxu0 %v4453
  %5943 = vmatpush1.msra.mxu0 %v4452
  %5944 = vmatprep.subr.mxu0 %v4445
  %5945 = vmatpush1.msra.mxu0 %v4444
  %5946 = vmatprep.subr.mxu0 %v4437
  %5947 = vmatpush1.msra.mxu0 %v4436
  %5948 = vmatprep.subr.mxu0 %v4429
  %5949 = vmatpush1.msra.mxu0 %v4428
  %5950 = vmatprep.subr.mxu0 %v4421
  %5951 = vmatpush1.msra.mxu0 %v4420
  %5952 = vmatprep.subr.mxu0 %v4413
  %5953 = vmatpush1.msra.mxu0 %v4412
  %5954 = vmatprep.subr.mxu0 %v4405
  %5955 = vmatpush1.msra.mxu0 %v4404
  %5956 = vmatprep.subr.mxu0 %v4397
  %5957 = vmatpush1.msra.mxu0 %v4396
  %5958 = vmatprep.subr.mxu0 %v4389
  %5959 = vmatpush1.msra.mxu0 %v4388
  %5960 = vmatprep.subr.mxu0 %v4381
  %5961 = vmatpush1.msra.mxu0 %v4380
  %5962 = vmatprep.subr.mxu0 %v4373
  %5963 = vmatpush1.msra.mxu0 %v4372
  %5964 = vmatprep.subr.mxu0 %v4365
  %5965 = vmatpush1.msra.mxu0 %v4364
  %5966 = vmatprep.subr.mxu0 %v4357
  %5967 = vmatpush1.msra.mxu0 %v4356
  %5968 = vmatprep.subr.mxu0 %v4349
  %5969 = vmatpush1.msra.mxu0 %v4348
  %5970 = vmatprep.subr.mxu0 %v4341
  %5971 = vmatpush1.msra.mxu0 %v4340
  %5972 = vmatprep.subr.mxu0 %v4333
  %5973 = vmatpush1.msra.mxu0 %v4332
  %5974 = vmatprep.subr.mxu0 %v4581
  %5975 = vmatpush2.msra.mxu0 %v4580
  %5976 = vmatprep.subr.mxu0 %v4573
  %5977 = vmatpush2.msra.mxu0 %v4572
  %5978 = vmatprep.subr.mxu0 %v4565
  %5979 = vmatpush2.msra.mxu0 %v4564
  %5980 = vmatprep.subr.mxu0 %v4557
  %5981 = vmatpush2.msra.mxu0 %v4556
  %5982 = vmatprep.subr.mxu0 %v4549
  %5983 = vmatpush2.msra.mxu0 %v4548
  %5984 = vmatprep.subr.mxu0 %v4541
  %5985 = vmatpush2.msra.mxu0 %v4540
  %5986 = vmatprep.subr.mxu0 %v4533
  %5987 = vmatpush2.msra.mxu0 %v4532
  %5988 = vmatprep.subr.mxu0 %v4525
  %5989 = vmatpush2.msra.mxu0 %v4524
  %5990 = vmatprep.subr.mxu0 %v4517
  %5991 = vmatpush2.msra.mxu0 %v4516
  %5992 = vmatprep.subr.mxu0 %v4509
  %5993 = vmatpush2.msra.mxu0 %v4508
  %5994 = vmatprep.subr.mxu0 %v4501
  %5995 = vmatpush2.msra.mxu0 %v4500
  %5996 = vmatprep.subr.mxu0 %v4493
  %5997 = vmatpush2.msra.mxu0 %v4492
  %5998 = vmatprep.subr.mxu0 %v4485
  %5999 = vmatpush2.msra.mxu0 %v4484
  %6000 = vmatprep.subr.mxu0 %v4477
  %6001 = vmatpush2.msra.mxu0 %v4476
  %6002 = vmatprep.subr.mxu0 %v4469
  %6003 = vmatpush2.msra.mxu0 %v4468
  %6004 = vmatprep.subr.mxu0 %v4461
  %6005 = vmatpush2.msra.mxu0 %v4460
  %6006 = vmatprep.mubr.f32.mxu0 %v4321
  %6007 = vmatmul.mubr.f32.gmra.mxu0 %v4320
  %v6008 = vpop.f32.mrf.mxu0
  %v6009 = vadd.f32 %v5349, %v6008
  %v6010 = vpop.f32.mrf.mxu0
  %v6011 = vadd.f32 %v5353, %v6010
  %6012 = vdwg.mxu0
  %6013 = vmatprep.subr.mxu0 %v4709
  %6014 = vmatpush1.msra.mxu0 %v4708
  %6015 = vmatprep.subr.mxu0 %v4701
  %6016 = vmatpush1.msra.mxu0 %v4700
  %6017 = vmatprep.subr.mxu0 %v4693
  %6018 = vmatpush1.msra.mxu0 %v4692
  %6019 = vmatprep.subr.mxu0 %v4685
  %6020 = vmatpush1.msra.mxu0 %v4684
  %6021 = vmatprep.subr.mxu0 %v4677
  %6022 = vmatpush1.msra.mxu0 %v4676
  %6023 = vmatprep.subr.mxu0 %v4669
  %6024 = vmatpush1.msra.mxu0 %v4668
  %6025 = vmatprep.subr.mxu0 %v4661
  %6026 = vmatpush1.msra.mxu0 %v4660
  %6027 = vmatprep.subr.mxu0 %v4653
  %6028 = vmatpush1.msra.mxu0 %v4652
  %6029 = vmatprep.subr.mxu0 %v4645
  %6030 = vmatpush1.msra.mxu0 %v4644
  %6031 = vmatprep.subr.mxu0 %v4637
  %6032 = vmatpush1.msra.mxu0 %v4636
  %6033 = vmatprep.subr.mxu0 %v4629
  %6034 = vmatpush1.msra.mxu0 %v4628
  %6035 = vmatprep.subr.mxu0 %v4621
  %6036 = vmatpush1.msra.mxu0 %v4620
  %6037 = vmatprep.subr.mxu0 %v4613
  %6038 = vmatpush1.msra.mxu0 %v4612
  %6039 = vmatprep.subr.mxu0 %v4605
  %6040 = vmatpush1.msra.mxu0 %v4604
  %6041 = vmatprep.subr.mxu0 %v4597
  %6042 = vmatpush1.msra.mxu0 %v4596
  %6043 = vmatprep.subr.mxu0 %v4589
  %6044 = vmatpush1.msra.mxu0 %v4588
  %6045 = vmatprep.subr.mxu0 %v4837
  %6046 = vmatpush2.msra.mxu0 %v4836
  %6047 = vmatprep.subr.mxu0 %v4829
  %6048 = vmatpush2.msra.mxu0 %v4828
  %6049 = vmatprep.subr.mxu0 %v4821
  %6050 = vmatpush2.msra.mxu0 %v4820
  %6051 = vmatprep.subr.mxu0 %v4813
  %6052 = vmatpush2.msra.mxu0 %v4812
  %6053 = vmatprep.subr.mxu0 %v4805
  %6054 = vmatpush2.msra.mxu0 %v4804
  %6055 = vmatprep.subr.mxu0 %v4797
  %6056 = vmatpush2.msra.mxu0 %v4796
  %6057 = vmatprep.subr.mxu0 %v4789
  %6058 = vmatpush2.msra.mxu0 %v4788
  %6059 = vmatprep.subr.mxu0 %v4781
  %6060 = vmatpush2.msra.mxu0 %v4780
  %6061 = vmatprep.subr.mxu0 %v4773
  %6062 = vmatpush2.msra.mxu0 %v4772
  %6063 = vmatprep.subr.mxu0 %v4765
  %6064 = vmatpush2.msra.mxu0 %v4764
  %6065 = vmatprep.subr.mxu0 %v4757
  %6066 = vmatpush2.msra.mxu0 %v4756
  %6067 = vmatprep.subr.mxu0 %v4749
  %6068 = vmatpush2.msra.mxu0 %v4748
  %6069 = vmatprep.subr.mxu0 %v4741
  %6070 = vmatpush2.msra.mxu0 %v4740
  %6071 = vmatprep.subr.mxu0 %v4733
  %6072 = vmatpush2.msra.mxu0 %v4732
  %6073 = vmatprep.subr.mxu0 %v4725
  %6074 = vmatpush2.msra.mxu0 %v4724
  %6075 = vmatprep.subr.mxu0 %v4717
  %6076 = vmatpush2.msra.mxu0 %v4716
  %6077 = vmatprep.mubr.f32.mxu0 %v4323
  %6078 = vmatmul.mubr.f32.gmra.mxu0 %v4322
  %v6079 = vpop.f32.mrf.mxu0
  %v6080 = vadd.f32 %v6009, %v6079
  %v6081 = vpop.f32.mrf.mxu0
  %v6082 = vadd.f32 %v6011, %v6081
  %6083 = vdwg.mxu0
  %6084 = vmatprep.subr.mxu0 %v4965
  %6085 = vmatpush1.msra.mxu0 %v4964
  %6086 = vmatprep.subr.mxu0 %v4957
  %6087 = vmatpush1.msra.mxu0 %v4956
  %6088 = vmatprep.subr.mxu0 %v4949
  %6089 = vmatpush1.msra.mxu0 %v4948
  %6090 = vmatprep.subr.mxu0 %v4941
  %6091 = vmatpush1.msra.mxu0 %v4940
  %6092 = vmatprep.subr.mxu0 %v4933
  %6093 = vmatpush1.msra.mxu0 %v4932
  %6094 = vmatprep.subr.mxu0 %v4925
  %6095 = vmatpush1.msra.mxu0 %v4924
  %6096 = vmatprep.subr.mxu0 %v4917
  %6097 = vmatpush1.msra.mxu0 %v4916
  %6098 = vmatprep.subr.mxu0 %v4909
  %6099 = vmatpush1.msra.mxu0 %v4908
  %6100 = vmatprep.subr.mxu0 %v4901
  %6101 = vmatpush1.msra.mxu0 %v4900
  %6102 = vmatprep.subr.mxu0 %v4893
  %6103 = vmatpush1.msra.mxu0 %v4892
  %6104 = vmatprep.subr.mxu0 %v4885
  %6105 = vmatpush1.msra.mxu0 %v4884
  %6106 = vmatprep.subr.mxu0 %v4877
  %6107 = vmatpush1.msra.mxu0 %v4876
  %6108 = vmatprep.subr.mxu0 %v4869
  %6109 = vmatpush1.msra.mxu0 %v4868
  %6110 = vmatprep.subr.mxu0 %v4861
  %6111 = vmatpush1.msra.mxu0 %v4860
  %6112 = vmatprep.subr.mxu0 %v4853
  %6113 = vmatpush1.msra.mxu0 %v4852
  %6114 = vmatprep.subr.mxu0 %v4845
  %6115 = vmatpush1.msra.mxu0 %v4844
  %6116 = vmatprep.subr.mxu0 %v5093
  %6117 = vmatpush2.msra.mxu0 %v5092
  %6118 = vmatprep.subr.mxu0 %v5085
  %6119 = vmatpush2.msra.mxu0 %v5084
  %6120 = vmatprep.subr.mxu0 %v5077
  %6121 = vmatpush2.msra.mxu0 %v5076
  %6122 = vmatprep.subr.mxu0 %v5069
  %6123 = vmatpush2.msra.mxu0 %v5068
  %6124 = vmatprep.subr.mxu0 %v5061
  %6125 = vmatpush2.msra.mxu0 %v5060
  %6126 = vmatprep.subr.mxu0 %v5053
  %6127 = vmatpush2.msra.mxu0 %v5052
  %6128 = vmatprep.subr.mxu0 %v5045
  %6129 = vmatpush2.msra.mxu0 %v5044
  %6130 = vmatprep.subr.mxu0 %v5037
  %6131 = vmatpush2.msra.mxu0 %v5036
  %6132 = vmatprep.subr.mxu0 %v5029
  %6133 = vmatpush2.msra.mxu0 %v5028
  %6134 = vmatprep.subr.mxu0 %v5021
  %6135 = vmatpush2.msra.mxu0 %v5020
  %6136 = vmatprep.subr.mxu0 %v5013
  %6137 = vmatpush2.msra.mxu0 %v5012
  %6138 = vmatprep.subr.mxu0 %v5005
  %6139 = vmatpush2.msra.mxu0 %v5004
  %6140 = vmatprep.subr.mxu0 %v4997
  %6141 = vmatpush2.msra.mxu0 %v4996
  %6142 = vmatprep.subr.mxu0 %v4989
  %6143 = vmatpush2.msra.mxu0 %v4988
  %6144 = vmatprep.subr.mxu0 %v4981
  %6145 = vmatpush2.msra.mxu0 %v4980
  %6146 = vmatprep.subr.mxu0 %v4973
  %6147 = vmatpush2.msra.mxu0 %v4972
  %6148 = vmatprep.mubr.f32.mxu0 %v4325
  %6149 = vmatmul.mubr.f32.gmra.mxu0 %v4324
  %v6150 = vpop.f32.mrf.mxu0
  %v6151 = vadd.f32 %v6080, %v6150
  %v6152 = vpop.f32.mrf.mxu0
  %v6153 = vadd.f32 %v6082, %v6152
  %6154 = vdwg.mxu0
  %6155 = vmatprep.subr.mxu0 %v5221
  %6156 = vmatpush1.msra.mxu0 %v5220
  %6157 = vmatprep.subr.mxu0 %v5213
  %6158 = vmatpush1.msra.mxu0 %v5212
  %6159 = vmatprep.subr.mxu0 %v5205
  %6160 = vmatpush1.msra.mxu0 %v5204
  %6161 = vmatprep.subr.mxu0 %v5197
  %6162 = vmatpush1.msra.mxu0 %v5196
  %6163 = vmatprep.subr.mxu0 %v5189
  %6164 = vmatpush1.msra.mxu0 %v5188
  %6165 = vmatprep.subr.mxu0 %v5181
  %6166 = vmatpush1.msra.mxu0 %v5180
  %6167 = vmatprep.subr.mxu0 %v5173
  %6168 = vmatpush1.msra.mxu0 %v5172
  %6169 = vmatprep.subr.mxu0 %v5165
  %6170 = vmatpush1.msra.mxu0 %v5164
  %6171 = vmatprep.subr.mxu0 %v5157
  %6172 = vmatpush1.msra.mxu0 %v5156
  %6173 = vmatprep.subr.mxu0 %v5149
  %6174 = vmatpush1.msra.mxu0 %v5148
  %6175 = vmatprep.subr.mxu0 %v5141
  %6176 = vmatpush1.msra.mxu0 %v5140
  %6177 = vmatprep.subr.mxu0 %v5133
  %6178 = vmatpush1.msra.mxu0 %v5132
  %6179 = vmatprep.subr.mxu0 %v5125
  %6180 = vmatpush1.msra.mxu0 %v5124
  %6181 = vmatprep.subr.mxu0 %v5117
  %6182 = vmatpush1.msra.mxu0 %v5116
  %6183 = vmatprep.subr.mxu0 %v5109
  %6184 = vmatpush1.msra.mxu0 %v5108
  %6185 = vmatprep.subr.mxu0 %v5101
  %6186 = vmatpush1.msra.mxu0 %v5100
  %6187 = vmatprep.subr.mxu0 0.0
  %6188 = vmatpush2.msra.mxu0 0.0
  %6189 = vmatprep.subr.mxu0 0.0
  %6190 = vmatpush2.msra.mxu0 0.0
  %6191 = vmatprep.subr.mxu0 0.0
  %6192 = vmatpush2.msra.mxu0 0.0
  %6193 = vmatprep.subr.mxu0 %v5325
  %6194 = vmatpush2.msra.mxu0 %v5324
  %6195 = vmatprep.subr.mxu0 %v5317
  %6196 = vmatpush2.msra.mxu0 %v5316
  %6197 = vmatprep.subr.mxu0 %v5309
  %6198 = vmatpush2.msra.mxu0 %v5308
  %6199 = vmatprep.subr.mxu0 %v5301
  %6200 = vmatpush2.msra.mxu0 %v5300
  %6201 = vmatprep.subr.mxu0 %v5293
  %6202 = vmatpush2.msra.mxu0 %v5292
  %6203 = vmatprep.subr.mxu0 %v5285
  %6204 = vmatpush2.msra.mxu0 %v5284
  %6205 = vmatprep.subr.mxu0 %v5277
  %6206 = vmatpush2.msra.mxu0 %v5276
  %6207 = vmatprep.subr.mxu0 %v5269
  %6208 = vmatpush2.msra.mxu0 %v5268
  %6209 = vmatprep.subr.mxu0 %v5261
  %6210 = vmatpush2.msra.mxu0 %v5260
  %6211 = vmatprep.subr.mxu0 %v5253
  %6212 = vmatpush2.msra.mxu0 %v5252
  %6213 = vmatprep.subr.mxu0 %v5245
  %6214 = vmatpush2.msra.mxu0 %v5244
  %6215 = vmatprep.subr.mxu0 %v5237
  %6216 = vmatpush2.msra.mxu0 %v5236
  %6217 = vmatprep.subr.mxu0 %v5229
  %6218 = vmatpush2.msra.mxu0 %v5228
  %6219 = vmatprep.mubr.f32.mxu0 %v5372
  %6220 = vmatmul.mubr.f32.gmra.mxu0 %v4326
  %v6221 = vpop.f32.mrf.mxu0
  %v6222 = vadd.f32 %v6151, %v6221
  %v6223 = vpop.f32.mrf.mxu0
  %v6224 = vadd.f32 %v6153, %v6223
  %6225 = vdwg.mxu0
  %6226 = vmatprep.subr.mxu0 %v4455
  %6227 = vmatpush1.msra.mxu0 %v4454
  %6228 = vmatprep.subr.mxu0 %v4447
  %6229 = vmatpush1.msra.mxu0 %v4446
  %6230 = vmatprep.subr.mxu0 %v4439
  %6231 = vmatpush1.msra.mxu0 %v4438
  %6232 = vmatprep.subr.mxu0 %v4431
  %6233 = vmatpush1.msra.mxu0 %v4430
  %6234 = vmatprep.subr.mxu0 %v4423
  %6235 = vmatpush1.msra.mxu0 %v4422
  %6236 = vmatprep.subr.mxu0 %v4415
  %6237 = vmatpush1.msra.mxu0 %v4414
  %6238 = vmatprep.subr.mxu0 %v4407
  %6239 = vmatpush1.msra.mxu0 %v4406
  %6240 = vmatprep.subr.mxu0 %v4399
  %6241 = vmatpush1.msra.mxu0 %v4398
  %6242 = vmatprep.subr.mxu0 %v4391
  %6243 = vmatpush1.msra.mxu0 %v4390
  %6244 = vmatprep.subr.mxu0 %v4383
  %6245 = vmatpush1.msra.mxu0 %v4382
  %6246 = vmatprep.subr.mxu0 %v4375
  %6247 = vmatpush1.msra.mxu0 %v4374
  %6248 = vmatprep.subr.mxu0 %v4367
  %6249 = vmatpush1.msra.mxu0 %v4366
  %6250 = vmatprep.subr.mxu0 %v4359
  %6251 = vmatpush1.msra.mxu0 %v4358
  %6252 = vmatprep.subr.mxu0 %v4351
  %6253 = vmatpush1.msra.mxu0 %v4350
  %6254 = vmatprep.subr.mxu0 %v4343
  %6255 = vmatpush1.msra.mxu0 %v4342
  %6256 = vmatprep.subr.mxu0 %v4335
  %6257 = vmatpush1.msra.mxu0 %v4334
  %6258 = vmatprep.subr.mxu0 %v4583
  %6259 = vmatpush2.msra.mxu0 %v4582
  %6260 = vmatprep.subr.mxu0 %v4575
  %6261 = vmatpush2.msra.mxu0 %v4574
  %6262 = vmatprep.subr.mxu0 %v4567
  %6263 = vmatpush2.msra.mxu0 %v4566
  %6264 = vmatprep.subr.mxu0 %v4559
  %6265 = vmatpush2.msra.mxu0 %v4558
  %6266 = vmatprep.subr.mxu0 %v4551
  %6267 = vmatpush2.msra.mxu0 %v4550
  %6268 = vmatprep.subr.mxu0 %v4543
  %6269 = vmatpush2.msra.mxu0 %v4542
  %6270 = vmatprep.subr.mxu0 %v4535
  %6271 = vmatpush2.msra.mxu0 %v4534
  %6272 = vmatprep.subr.mxu0 %v4527
  %6273 = vmatpush2.msra.mxu0 %v4526
  %6274 = vmatprep.subr.mxu0 %v4519
  %6275 = vmatpush2.msra.mxu0 %v4518
  %6276 = vmatprep.subr.mxu0 %v4511
  %6277 = vmatpush2.msra.mxu0 %v4510
  %6278 = vmatprep.subr.mxu0 %v4503
  %6279 = vmatpush2.msra.mxu0 %v4502
  %6280 = vmatprep.subr.mxu0 %v4495
  %6281 = vmatpush2.msra.mxu0 %v4494
  %6282 = vmatprep.subr.mxu0 %v4487
  %6283 = vmatpush2.msra.mxu0 %v4486
  %6284 = vmatprep.subr.mxu0 %v4479
  %6285 = vmatpush2.msra.mxu0 %v4478
  %6286 = vmatprep.subr.mxu0 %v4471
  %6287 = vmatpush2.msra.mxu0 %v4470
  %6288 = vmatprep.subr.mxu0 %v4463
  %6289 = vmatpush2.msra.mxu0 %v4462
  %6290 = vmatprep.mubr.f32.mxu0 %v4321
  %6291 = vmatmul.mubr.f32.gmra.mxu0 %v4320
  %v6292 = vpop.f32.mrf.mxu0
  %v6293 = vadd.f32 %v5357, %v6292
  %v6294 = vpop.f32.mrf.mxu0
  %v6295 = vadd.f32 %v5361, %v6294
  %6296 = vdwg.mxu0
  %6297 = vmatprep.subr.mxu0 %v4711
  %6298 = vmatpush1.msra.mxu0 %v4710
  %6299 = vmatprep.subr.mxu0 %v4703
  %6300 = vmatpush1.msra.mxu0 %v4702
  %6301 = vmatprep.subr.mxu0 %v4695
  %6302 = vmatpush1.msra.mxu0 %v4694
  %6303 = vmatprep.subr.mxu0 %v4687
  %6304 = vmatpush1.msra.mxu0 %v4686
  %6305 = vmatprep.subr.mxu0 %v4679
  %6306 = vmatpush1.msra.mxu0 %v4678
  %6307 = vmatprep.subr.mxu0 %v4671
  %6308 = vmatpush1.msra.mxu0 %v4670
  %6309 = vmatprep.subr.mxu0 %v4663
  %6310 = vmatpush1.msra.mxu0 %v4662
  %6311 = vmatprep.subr.mxu0 %v4655
  %6312 = vmatpush1.msra.mxu0 %v4654
  %6313 = vmatprep.subr.mxu0 %v4647
  %6314 = vmatpush1.msra.mxu0 %v4646
  %6315 = vmatprep.subr.mxu0 %v4639
  %6316 = vmatpush1.msra.mxu0 %v4638
  %6317 = vmatprep.subr.mxu0 %v4631
  %6318 = vmatpush1.msra.mxu0 %v4630
  %6319 = vmatprep.subr.mxu0 %v4623
  %6320 = vmatpush1.msra.mxu0 %v4622
  %6321 = vmatprep.subr.mxu0 %v4615
  %6322 = vmatpush1.msra.mxu0 %v4614
  %6323 = vmatprep.subr.mxu0 %v4607
  %6324 = vmatpush1.msra.mxu0 %v4606
  %6325 = vmatprep.subr.mxu0 %v4599
  %6326 = vmatpush1.msra.mxu0 %v4598
  %6327 = vmatprep.subr.mxu0 %v4591
  %6328 = vmatpush1.msra.mxu0 %v4590
  %6329 = vmatprep.subr.mxu0 %v4839
  %6330 = vmatpush2.msra.mxu0 %v4838
  %6331 = vmatprep.subr.mxu0 %v4831
  %6332 = vmatpush2.msra.mxu0 %v4830
  %6333 = vmatprep.subr.mxu0 %v4823
  %6334 = vmatpush2.msra.mxu0 %v4822
  %6335 = vmatprep.subr.mxu0 %v4815
  %6336 = vmatpush2.msra.mxu0 %v4814
  %6337 = vmatprep.subr.mxu0 %v4807
  %6338 = vmatpush2.msra.mxu0 %v4806
  %6339 = vmatprep.subr.mxu0 %v4799
  %6340 = vmatpush2.msra.mxu0 %v4798
  %6341 = vmatprep.subr.mxu0 %v4791
  %6342 = vmatpush2.msra.mxu0 %v4790
  %6343 = vmatprep.subr.mxu0 %v4783
  %6344 = vmatpush2.msra.mxu0 %v4782
  %6345 = vmatprep.subr.mxu0 %v4775
  %6346 = vmatpush2.msra.mxu0 %v4774
  %6347 = vmatprep.subr.mxu0 %v4767
  %6348 = vmatpush2.msra.mxu0 %v4766
  %6349 = vmatprep.subr.mxu0 %v4759
  %6350 = vmatpush2.msra.mxu0 %v4758
  %6351 = vmatprep.subr.mxu0 %v4751
  %6352 = vmatpush2.msra.mxu0 %v4750
  %6353 = vmatprep.subr.mxu0 %v4743
  %6354 = vmatpush2.msra.mxu0 %v4742
  %6355 = vmatprep.subr.mxu0 %v4735
  %6356 = vmatpush2.msra.mxu0 %v4734
  %6357 = vmatprep.subr.mxu0 %v4727
  %6358 = vmatpush2.msra.mxu0 %v4726
  %6359 = vmatprep.subr.mxu0 %v4719
  %6360 = vmatpush2.msra.mxu0 %v4718
  %6361 = vmatprep.mubr.f32.mxu0 %v4323
  %6362 = vmatmul.mubr.f32.gmra.mxu0 %v4322
  %v6363 = vpop.f32.mrf.mxu0
  %v6364 = vadd.f32 %v6293, %v6363
  %v6365 = vpop.f32.mrf.mxu0
  %v6366 = vadd.f32 %v6295, %v6365
  %6367 = vdwg.mxu0
  %6368 = vmatprep.subr.mxu0 %v4967
  %6369 = vmatpush1.msra.mxu0 %v4966
  %6370 = vmatprep.subr.mxu0 %v4959
  %6371 = vmatpush1.msra.mxu0 %v4958
  %6372 = vmatprep.subr.mxu0 %v4951
  %6373 = vmatpush1.msra.mxu0 %v4950
  %6374 = vmatprep.subr.mxu0 %v4943
  %6375 = vmatpush1.msra.mxu0 %v4942
  %6376 = vmatprep.subr.mxu0 %v4935
  %6377 = vmatpush1.msra.mxu0 %v4934
  %6378 = vmatprep.subr.mxu0 %v4927
  %6379 = vmatpush1.msra.mxu0 %v4926
  %6380 = vmatprep.subr.mxu0 %v4919
  %6381 = vmatpush1.msra.mxu0 %v4918
  %6382 = vmatprep.subr.mxu0 %v4911
  %6383 = vmatpush1.msra.mxu0 %v4910
  %6384 = vmatprep.subr.mxu0 %v4903
  %6385 = vmatpush1.msra.mxu0 %v4902
  %6386 = vmatprep.subr.mxu0 %v4895
  %6387 = vmatpush1.msra.mxu0 %v4894
  %6388 = vmatprep.subr.mxu0 %v4887
  %6389 = vmatpush1.msra.mxu0 %v4886
  %6390 = vmatprep.subr.mxu0 %v4879
  %6391 = vmatpush1.msra.mxu0 %v4878
  %6392 = vmatprep.subr.mxu0 %v4871
  %6393 = vmatpush1.msra.mxu0 %v4870
  %6394 = vmatprep.subr.mxu0 %v4863
  %6395 = vmatpush1.msra.mxu0 %v4862
  %6396 = vmatprep.subr.mxu0 %v4855
  %6397 = vmatpush1.msra.mxu0 %v4854
  %6398 = vmatprep.subr.mxu0 %v4847
  %6399 = vmatpush1.msra.mxu0 %v4846
  %6400 = vmatprep.subr.mxu0 %v5095
  %6401 = vmatpush2.msra.mxu0 %v5094
  %6402 = vmatprep.subr.mxu0 %v5087
  %6403 = vmatpush2.msra.mxu0 %v5086
  %6404 = vmatprep.subr.mxu0 %v5079
  %6405 = vmatpush2.msra.mxu0 %v5078
  %6406 = vmatprep.subr.mxu0 %v5071
  %6407 = vmatpush2.msra.mxu0 %v5070
  %6408 = vmatprep.subr.mxu0 %v5063
  %6409 = vmatpush2.msra.mxu0 %v5062
  %6410 = vmatprep.subr.mxu0 %v5055
  %6411 = vmatpush2.msra.mxu0 %v5054
  %6412 = vmatprep.subr.mxu0 %v5047
  %6413 = vmatpush2.msra.mxu0 %v5046
  %6414 = vmatprep.subr.mxu0 %v5039
  %6415 = vmatpush2.msra.mxu0 %v5038
  %6416 = vmatprep.subr.mxu0 %v5031
  %6417 = vmatpush2.msra.mxu0 %v5030
  %6418 = vmatprep.subr.mxu0 %v5023
  %6419 = vmatpush2.msra.mxu0 %v5022
  %6420 = vmatprep.subr.mxu0 %v5015
  %6421 = vmatpush2.msra.mxu0 %v5014
  %6422 = vmatprep.subr.mxu0 %v5007
  %6423 = vmatpush2.msra.mxu0 %v5006
  %6424 = vmatprep.subr.mxu0 %v4999
  %6425 = vmatpush2.msra.mxu0 %v4998
  %6426 = vmatprep.subr.mxu0 %v4991
  %6427 = vmatpush2.msra.mxu0 %v4990
  %6428 = vmatprep.subr.mxu0 %v4983
  %6429 = vmatpush2.msra.mxu0 %v4982
  %6430 = vmatprep.subr.mxu0 %v4975
  %6431 = vmatpush2.msra.mxu0 %v4974
  %6432 = vmatprep.mubr.f32.mxu0 %v4325
  %6433 = vmatmul.mubr.f32.gmra.mxu0 %v4324
  %v6434 = vpop.f32.mrf.mxu0
  %v6435 = vadd.f32 %v6364, %v6434
  %v6436 = vpop.f32.mrf.mxu0
  %v6437 = vadd.f32 %v6366, %v6436
  %6438 = vdwg.mxu0
  %6439 = vmatprep.subr.mxu0 %v5223
  %6440 = vmatpush1.msra.mxu0 %v5222
  %6441 = vmatprep.subr.mxu0 %v5215
  %6442 = vmatpush1.msra.mxu0 %v5214
  %6443 = vmatprep.subr.mxu0 %v5207
  %6444 = vmatpush1.msra.mxu0 %v5206
  %6445 = vmatprep.subr.mxu0 %v5199
  %6446 = vmatpush1.msra.mxu0 %v5198
  %6447 = vmatprep.subr.mxu0 %v5191
  %6448 = vmatpush1.msra.mxu0 %v5190
  %6449 = vmatprep.subr.mxu0 %v5183
  %6450 = vmatpush1.msra.mxu0 %v5182
  %6451 = vmatprep.subr.mxu0 %v5175
  %6452 = vmatpush1.msra.mxu0 %v5174
  %6453 = vmatprep.subr.mxu0 %v5167
  %6454 = vmatpush1.msra.mxu0 %v5166
  %6455 = vmatprep.subr.mxu0 %v5159
  %6456 = vmatpush1.msra.mxu0 %v5158
  %6457 = vmatprep.subr.mxu0 %v5151
  %6458 = vmatpush1.msra.mxu0 %v5150
  %6459 = vmatprep.subr.mxu0 %v5143
  %6460 = vmatpush1.msra.mxu0 %v5142
  %6461 = vmatprep.subr.mxu0 %v5135
  %6462 = vmatpush1.msra.mxu0 %v5134
  %6463 = vmatprep.subr.mxu0 %v5127
  %6464 = vmatpush1.msra.mxu0 %v5126
  %6465 = vmatprep.subr.mxu0 %v5119
  %6466 = vmatpush1.msra.mxu0 %v5118
  %6467 = vmatprep.subr.mxu0 %v5111
  %6468 = vmatpush1.msra.mxu0 %v5110
  %6469 = vmatprep.subr.mxu0 %v5103
  %6470 = vmatpush1.msra.mxu0 %v5102
  %6471 = vmatprep.subr.mxu0 0.0
  %6472 = vmatpush2.msra.mxu0 0.0
  %6473 = vmatprep.subr.mxu0 0.0
  %6474 = vmatpush2.msra.mxu0 0.0
  %6475 = vmatprep.subr.mxu0 0.0
  %6476 = vmatpush2.msra.mxu0 0.0
  %6477 = vmatprep.subr.mxu0 %v5327
  %6478 = vmatpush2.msra.mxu0 %v5326
  %6479 = vmatprep.subr.mxu0 %v5319
  %6480 = vmatpush2.msra.mxu0 %v5318
  %6481 = vmatprep.subr.mxu0 %v5311
  %6482 = vmatpush2.msra.mxu0 %v5310
  %6483 = vmatprep.subr.mxu0 %v5303
  %6484 = vmatpush2.msra.mxu0 %v5302
  %6485 = vmatprep.subr.mxu0 %v5295
  %6486 = vmatpush2.msra.mxu0 %v5294
  %6487 = vmatprep.subr.mxu0 %v5287
  %6488 = vmatpush2.msra.mxu0 %v5286
  %6489 = vmatprep.subr.mxu0 %v5279
  %6490 = vmatpush2.msra.mxu0 %v5278
  %6491 = vmatprep.subr.mxu0 %v5271
  %6492 = vmatpush2.msra.mxu0 %v5270
  %6493 = vmatprep.subr.mxu0 %v5263
  %6494 = vmatpush2.msra.mxu0 %v5262
  %6495 = vmatprep.subr.mxu0 %v5255
  %6496 = vmatpush2.msra.mxu0 %v5254
  %6497 = vmatprep.subr.mxu0 %v5247
  %6498 = vmatpush2.msra.mxu0 %v5246
  %6499 = vmatprep.subr.mxu0 %v5239
  %6500 = vmatpush2.msra.mxu0 %v5238
  %6501 = vmatprep.subr.mxu0 %v5231
  %6502 = vmatpush2.msra.mxu0 %v5230
  %6503 = vmatprep.mubr.f32.mxu0 %v5372
  %6504 = vmatmul.mubr.f32.gmra.mxu0 %v4326
  %v6505 = vpop.f32.mrf.mxu0
  %v6506 = vadd.f32 %v6435, %v6505
  %v6507 = vpop.f32.mrf.mxu0
  %v6508 = vadd.f32 %v6437, %v6507
  %6509 = vdwg.mxu0
  %v6510 = vmax.f32 %v5654, 0.0
  %v6511 = vmax.f32 %v5656, 0.0
  %v6512 = vmax.f32 %v5938, 0.0
  %v6513 = vmax.f32 %v5940, 0.0
  %v6514 = vmax.f32 %v6222, 0.0
  %v6515 = vmax.f32 %v6224, 0.0
  %v6516 = vmax.f32 %v6506, 0.0
  %v6517 = vmax.f32 %v6508, 0.0
  %v6518 = vld [vmem:[%s5] sm:$0xff]
  %v6519 = vld [vmem:[%s5 + $0x8] sm:$0xff]
  %v6520 = vld [vmem:[%s5 + $0x10] sm:$0xff]
  %v6521 = vld [vmem:[%s5 + $0x18] sm:$0xff]
  %v6522 = vld [vmem:[%s5 + $0x20] sm:$0xff]
  %v6523 = vld [vmem:[%s5 + $0x28] sm:$0xff]
  %v6524 = vld [vmem:[%s5 + $0x30] sm:$0xff]
  %v6525 = vld [vmem:[%s5 + $0x38] sm:$0xff]
  %v6526 = vld [vmem:[%s5 + $0x40] sm:$0xff]
  %v6527 = vld [vmem:[%s5 + $0x48] sm:$0xff]
  %v6528 = vld [vmem:[%s5 + $0x50] sm:$0xff]
  %v6529 = vld [vmem:[%s5 + $0x58] sm:$0xff]
  %v6530 = vld [vmem:[%s5 + $0x60] sm:$0xff]
  %v6531 = vld [vmem:[%s5 + $0x68] sm:$0xff]
  %v6532 = vld [vmem:[%s5 + $0x70] sm:$0xff]
  %v6533 = vld [vmem:[%s5 + $0x78] sm:$0xff]
  %v6534 = vld [vmem:[%s5 + $0x80] sm:$0xff]
  %v6535 = vld [vmem:[%s5 + $0x88] sm:$0xff]
  %v6536 = vld [vmem:[%s5 + $0x90] sm:$0xff]
  %v6537 = vld [vmem:[%s5 + $0x98] sm:$0xff]
  %v6538 = vld [vmem:[%s5 + $0xa0] sm:$0xff]
  %v6539 = vld [vmem:[%s5 + $0xa8] sm:$0xff]
  %v6540 = vld [vmem:[%s5 + $0xb0] sm:$0xff]
  %v6541 = vld [vmem:[%s5 + $0xb8] sm:$0xff]
  %v6542 = vld [vmem:[%s5 + $0xc0] sm:$0xff]
  %v6543 = vld [vmem:[%s5 + $0xc8] sm:$0xff]
  %v6544 = vld [vmem:[%s5 + $0xd0] sm:$0xff]
  %v6545 = vld [vmem:[%s5 + $0xd8] sm:$0xff]
  %v6546 = vld [vmem:[%s5 + $0xe0] sm:$0xff]
  %v6547 = vld [vmem:[%s5 + $0xe8] sm:$0xff]
  %v6548 = vld [vmem:[%s5 + $0xf0] sm:$0xff]
  %v6549 = vld [vmem:[%s5 + $0xf8] sm:$0xff]
  %v6550 = vld [vmem:[%s5 + $0x100] sm:$0xff]
  %v6551 = vld [vmem:[%s5 + $0x108] sm:$0xff]
  %v6552 = vld [vmem:[%s5 + $0x110] sm:$0xff]
  %v6553 = vld [vmem:[%s5 + $0x118] sm:$0xff]
  %v6554 = vld [vmem:[%s5 + $0x120] sm:$0xff]
  %v6555 = vld [vmem:[%s5 + $0x128] sm:$0xff]
  %v6556 = vld [vmem:[%s5 + $0x130] sm:$0xff]
  %v6557 = vld [vmem:[%s5 + $0x138] sm:$0xff]
  %v6558 = vld [vmem:[%s5 + $0x140] sm:$0xff]
  %v6559 = vld [vmem:[%s5 + $0x148] sm:$0xff]
  %v6560 = vld [vmem:[%s5 + $0x150] sm:$0xff]
  %v6561 = vld [vmem:[%s5 + $0x158] sm:$0xff]
  %v6562 = vld [vmem:[%s5 + $0x160] sm:$0xff]
  %v6563 = vld [vmem:[%s5 + $0x168] sm:$0xff]
  %v6564 = vld [vmem:[%s5 + $0x170] sm:$0xff]
  %v6565 = vld [vmem:[%s5 + $0x178] sm:$0xff]
  %v6566 = vld [vmem:[%s5 + $0x180] sm:$0xff]
  %v6567 = vld [vmem:[%s5 + $0x188] sm:$0xff]
  %v6568 = vld [vmem:[%s5 + $0x190] sm:$0xff]
  %v6569 = vld [vmem:[%s5 + $0x198] sm:$0xff]
  %v6570 = vld [vmem:[%s5 + $0x1a0] sm:$0xff]
  %v6571 = vld [vmem:[%s5 + $0x1a8] sm:$0xff]
  %v6572 = vld [vmem:[%s5 + $0x1b0] sm:$0xff]
  %v6573 = vld [vmem:[%s5 + $0x1b8] sm:$0xff]
  %v6574 = vld [vmem:[%s5 + $0x1c0] sm:$0xff]
  %v6575 = vld [vmem:[%s5 + $0x1c8] sm:$0xff]
  %v6576 = vld [vmem:[%s5 + $0x1d0] sm:$0xff]
  %v6577 = vld [vmem:[%s5 + $0x1d8] sm:$0xff]
  %v6578 = vld [vmem:[%s5 + $0x1e0] sm:$0xff]
  %v6579 = vld [vmem:[%s5 + $0x1e8] sm:$0xff]
  %v6580 = vld [vmem:[%s5 + $0x1f0] sm:$0xff]
  %v6581 = vld [vmem:[%s5 + $0x1f8] sm:$0xff]
  %v6582 = vld [vmem:[%s5 + $0x200] sm:$0xff]
  %v6583 = vld [vmem:[%s5 + $0x208] sm:$0xff]
  %v6584 = vld [vmem:[%s5 + $0x210] sm:$0xff]
  %v6585 = vld [vmem:[%s5 + $0x218] sm:$0xff]
  %v6586 = vld [vmem:[%s5 + $0x220] sm:$0xff]
  %v6587 = vld [vmem:[%s5 + $0x228] sm:$0xff]
  %v6588 = vld [vmem:[%s5 + $0x230] sm:$0xff]
  %v6589 = vld [vmem:[%s5 + $0x238] sm:$0xff]
  %v6590 = vld [vmem:[%s5 + $0x240] sm:$0xff]
  %v6591 = vld [vmem:[%s5 + $0x248] sm:$0xff]
  %v6592 = vld [vmem:[%s5 + $0x250] sm:$0xff]
  %v6593 = vld [vmem:[%s5 + $0x258] sm:$0xff]
  %v6594 = vld [vmem:[%s5 + $0x260] sm:$0xff]
  %v6595 = vld [vmem:[%s5 + $0x268] sm:$0xff]
  %v6596 = vld [vmem:[%s5 + $0x270] sm:$0xff]
  %v6597 = vld [vmem:[%s5 + $0x278] sm:$0xff]
  %v6598 = vld [vmem:[%s5 + $0x280] sm:$0xff]
  %v6599 = vld [vmem:[%s5 + $0x288] sm:$0xff]
  %v6600 = vld [vmem:[%s5 + $0x290] sm:$0xff]
  %v6601 = vld [vmem:[%s5 + $0x298] sm:$0xff]
  %v6602 = vld [vmem:[%s5 + $0x2a0] sm:$0xff]
  %v6603 = vld [vmem:[%s5 + $0x2a8] sm:$0xff]
  %v6604 = vld [vmem:[%s5 + $0x2b0] sm:$0xff]
  %v6605 = vld [vmem:[%s5 + $0x2b8] sm:$0xff]
  %v6606 = vld [vmem:[%s5 + $0x2c0] sm:$0xff]
  %v6607 = vld [vmem:[%s5 + $0x2c8] sm:$0xff]
  %v6608 = vld [vmem:[%s5 + $0x2d0] sm:$0xff]
  %v6609 = vld [vmem:[%s5 + $0x2d8] sm:$0xff]
  %v6610 = vld [vmem:[%s5 + $0x2e0] sm:$0xff]
  %v6611 = vld [vmem:[%s5 + $0x2e8] sm:$0xff]
  %v6612 = vld [vmem:[%s5 + $0x2f0] sm:$0xff]
  %v6613 = vld [vmem:[%s5 + $0x2f8] sm:$0xff]
  %v6614 = vld [vmem:[%s5 + $0x300] sm:$0xff]
  %v6615 = vld [vmem:[%s5 + $0x308] sm:$0xff]
  %v6616 = vld [vmem:[%s5 + $0x310] sm:$0xff]
  %v6617 = vld [vmem:[%s5 + $0x318] sm:$0xff]
  %v6618 = vld [vmem:[%s5 + $0x320] sm:$0xff]
  %v6619 = vld [vmem:[%s5 + $0x328] sm:$0xff]
  %v6620 = vld [vmem:[%s5 + $0x330] sm:$0xff]
  %v6621 = vld [vmem:[%s5 + $0x338] sm:$0xff]
  %v6622 = vld [vmem:[%s5 + $0x340] sm:$0xff]
  %v6623 = vld [vmem:[%s5 + $0x348] sm:$0xff]
  %v6624 = vld [vmem:[%s5 + $0x350] sm:$0xff]
  %v6625 = vld [vmem:[%s5 + $0x358] sm:$0xff]
  %v6626 = vld [vmem:[%s5 + $0x360] sm:$0xff]
  %v6627 = vld [vmem:[%s5 + $0x368] sm:$0xff]
  %v6628 = vld [vmem:[%s5 + $0x370] sm:$0xff]
  %v6629 = vld [vmem:[%s5 + $0x378] sm:$0xff]
  %v6630 = vld [vmem:[%s5 + $0x380] sm:$0xff]
  %v6631 = vld [vmem:[%s5 + $0x388] sm:$0xff]
  %v6632 = vld [vmem:[%s5 + $0x390] sm:$0xff]
  %v6633 = vld [vmem:[%s5 + $0x398] sm:$0xff]
  %v6634 = vld [vmem:[%s5 + $0x3a0] sm:$0xff]
  %v6635 = vld [vmem:[%s5 + $0x3a8] sm:$0xff]
  %v6636 = vld [vmem:[%s5 + $0x3b0] sm:$0xff]
  %v6637 = vld [vmem:[%s5 + $0x3b8] sm:$0xff]
  %v6638 = vld [vmem:[%s5 + $0x3c0] sm:$0xff]
  %v6639 = vld [vmem:[%s5 + $0x3c8] sm:$0xff]
  %v6640 = vld [vmem:[%s5 + $0x3d0] sm:$0xff]
  %v6641 = vld [vmem:[%s5 + $0x3d8] sm:$0xff]
  %v6642 = vld [vmem:[%s5 + $0x3e0] sm:$0xff]
  %v6643 = vld [vmem:[%s6] sm:$0x1]
  %v6645 = vlaneseq
  %v6646 = vshrl.u32 %v6645, 7
  %v6647 = vsub.s32 0, %v6646
  %v6648 = vrot.slane %v6643, %v6647
  %v6651 = vsel %vm5370, %v6517, 0
  %6653 = vmatprep.subr.mxu0 0.0
  %6654 = vmatpush1.msra.mxu0 %v6533
  %6655 = vmatprep.subr.mxu0 0.0
  %6656 = vmatpush1.msra.mxu0 %v6532
  %6657 = vmatprep.subr.mxu0 0.0
  %6658 = vmatpush1.msra.mxu0 %v6531
  %6659 = vmatprep.subr.mxu0 0.0
  %6660 = vmatpush1.msra.mxu0 %v6530
  %6661 = vmatprep.subr.mxu0 0.0
  %6662 = vmatpush1.msra.mxu0 %v6529
  %6663 = vmatprep.subr.mxu0 0.0
  %6664 = vmatpush1.msra.mxu0 %v6528
  %6665 = vmatprep.subr.mxu0 0.0
  %6666 = vmatpush1.msra.mxu0 %v6527
  %6667 = vmatprep.subr.mxu0 0.0
  %6668 = vmatpush1.msra.mxu0 %v6526
  %6669 = vmatprep.subr.mxu0 0.0
  %6670 = vmatpush1.msra.mxu0 %v6525
  %6671 = vmatprep.subr.mxu0 0.0
  %6672 = vmatpush1.msra.mxu0 %v6524
  %6673 = vmatprep.subr.mxu0 0.0
  %6674 = vmatpush1.msra.mxu0 %v6523
  %6675 = vmatprep.subr.mxu0 0.0
  %6676 = vmatpush1.msra.mxu0 %v6522
  %6677 = vmatprep.subr.mxu0 0.0
  %6678 = vmatpush1.msra.mxu0 %v6521
  %6679 = vmatprep.subr.mxu0 0.0
  %6680 = vmatpush1.msra.mxu0 %v6520
  %6681 = vmatprep.subr.mxu0 0.0
  %6682 = vmatpush1.msra.mxu0 %v6519
  %6683 = vmatprep.subr.mxu0 0.0
  %6684 = vmatpush1.msra.mxu0 %v6518
  %6685 = vmatprep.subr.mxu0 0.0
  %6686 = vmatpush2.msra.mxu0 %v6549
  %6687 = vmatprep.subr.mxu0 0.0
  %6688 = vmatpush2.msra.mxu0 %v6548
  %6689 = vmatprep.subr.mxu0 0.0
  %6690 = vmatpush2.msra.mxu0 %v6547
  %6691 = vmatprep.subr.mxu0 0.0
  %6692 = vmatpush2.msra.mxu0 %v6546
  %6693 = vmatprep.subr.mxu0 0.0
  %6694 = vmatpush2.msra.mxu0 %v6545
  %6695 = vmatprep.subr.mxu0 0.0
  %6696 = vmatpush2.msra.mxu0 %v6544
  %6697 = vmatprep.subr.mxu0 0.0
  %6698 = vmatpush2.msra.mxu0 %v6543
  %6699 = vmatprep.subr.mxu0 0.0
  %6700 = vmatpush2.msra.mxu0 %v6542
  %6701 = vmatprep.subr.mxu0 0.0
  %6702 = vmatpush2.msra.mxu0 %v6541
  %6703 = vmatprep.subr.mxu0 0.0
  %6704 = vmatpush2.msra.mxu0 %v6540
  %6705 = vmatprep.subr.mxu0 0.0
  %6706 = vmatpush2.msra.mxu0 %v6539
  %6707 = vmatprep.subr.mxu0 0.0
  %6708 = vmatpush2.msra.mxu0 %v6538
  %6709 = vmatprep.subr.mxu0 0.0
  %6710 = vmatpush2.msra.mxu0 %v6537
  %6711 = vmatprep.subr.mxu0 0.0
  %6712 = vmatpush2.msra.mxu0 %v6536
  %6713 = vmatprep.subr.mxu0 0.0
  %6714 = vmatpush2.msra.mxu0 %v6535
  %6715 = vmatprep.subr.mxu0 0.0
  %6716 = vmatpush2.msra.mxu0 %v6534
  %6717 = vmatprep.mubr.f32.mxu0 %v6511
  %6718 = vmatmul.mubr.f32.gmra.mxu0 %v6510
  %v6719 = vpop.f32.mrf.mxu0
  %v6720 = vadd.f32 %v6648, %v6719
  %v6721 = vpop.f32.mrf.mxu0
  %6722 = vdwg.mxu0
  %6723 = vmatprep.subr.mxu0 0.0
  %6724 = vmatpush1.msra.mxu0 %v6565
  %6725 = vmatprep.subr.mxu0 0.0
  %6726 = vmatpush1.msra.mxu0 %v6564
  %6727 = vmatprep.subr.mxu0 0.0
  %6728 = vmatpush1.msra.mxu0 %v6563
  %6729 = vmatprep.subr.mxu0 0.0
  %6730 = vmatpush1.msra.mxu0 %v6562
  %6731 = vmatprep.subr.mxu0 0.0
  %6732 = vmatpush1.msra.mxu0 %v6561
  %6733 = vmatprep.subr.mxu0 0.0
  %6734 = vmatpush1.msra.mxu0 %v6560
  %6735 = vmatprep.subr.mxu0 0.0
  %6736 = vmatpush1.msra.mxu0 %v6559
  %6737 = vmatprep.subr.mxu0 0.0
  %6738 = vmatpush1.msra.mxu0 %v6558
  %6739 = vmatprep.subr.mxu0 0.0
  %6740 = vmatpush1.msra.mxu0 %v6557
  %6741 = vmatprep.subr.mxu0 0.0
  %6742 = vmatpush1.msra.mxu0 %v6556
  %6743 = vmatprep.subr.mxu0 0.0
  %6744 = vmatpush1.msra.mxu0 %v6555
  %6745 = vmatprep.subr.mxu0 0.0
  %6746 = vmatpush1.msra.mxu0 %v6554
  %6747 = vmatprep.subr.mxu0 0.0
  %6748 = vmatpush1.msra.mxu0 %v6553
  %6749 = vmatprep.subr.mxu0 0.0
  %6750 = vmatpush1.msra.mxu0 %v6552
  %6751 = vmatprep.subr.mxu0 0.0
  %6752 = vmatpush1.msra.mxu0 %v6551
  %6753 = vmatprep.subr.mxu0 0.0
  %6754 = vmatpush1.msra.mxu0 %v6550
  %6755 = vmatprep.subr.mxu0 0.0
  %6756 = vmatpush2.msra.mxu0 %v6581
  %6757 = vmatprep.subr.mxu0 0.0
  %6758 = vmatpush2.msra.mxu0 %v6580
  %6759 = vmatprep.subr.mxu0 0.0
  %6760 = vmatpush2.msra.mxu0 %v6579
  %6761 = vmatprep.subr.mxu0 0.0
  %6762 = vmatpush2.msra.mxu0 %v6578
  %6763 = vmatprep.subr.mxu0 0.0
  %6764 = vmatpush2.msra.mxu0 %v6577
  %6765 = vmatprep.subr.mxu0 0.0
  %6766 = vmatpush2.msra.mxu0 %v6576
  %6767 = vmatprep.subr.mxu0 0.0
  %6768 = vmatpush2.msra.mxu0 %v6575
  %6769 = vmatprep.subr.mxu0 0.0
  %6770 = vmatpush2.msra.mxu0 %v6574
  %6771 = vmatprep.subr.mxu0 0.0
  %6772 = vmatpush2.msra.mxu0 %v6573
  %6773 = vmatprep.subr.mxu0 0.0
  %6774 = vmatpush2.msra.mxu0 %v6572
  %6775 = vmatprep.subr.mxu0 0.0
  %6776 = vmatpush2.msra.mxu0 %v6571
  %6777 = vmatprep.subr.mxu0 0.0
  %6778 = vmatpush2.msra.mxu0 %v6570
  %6779 = vmatprep.subr.mxu0 0.0
  %6780 = vmatpush2.msra.mxu0 %v6569
  %6781 = vmatprep.subr.mxu0 0.0
  %6782 = vmatpush2.msra.mxu0 %v6568
  %6783 = vmatprep.subr.mxu0 0.0
  %6784 = vmatpush2.msra.mxu0 %v6567
  %6785 = vmatprep.subr.mxu0 0.0
  %6786 = vmatpush2.msra.mxu0 %v6566
  %6787 = vmatprep.mubr.f32.mxu0 %v6513
  %6788 = vmatmul.mubr.f32.gmra.mxu0 %v6512
  %v6789 = vpop.f32.mrf.mxu0
  %v6790 = vadd.f32 %v6720, %v6789
  %v6791 = vpop.f32.mrf.mxu0
  %6792 = vdwg.mxu0
  %6793 = vmatprep.subr.mxu0 0.0
  %6794 = vmatpush1.msra.mxu0 %v6597
  %6795 = vmatprep.subr.mxu0 0.0
  %6796 = vmatpush1.msra.mxu0 %v6596
  %6797 = vmatprep.subr.mxu0 0.0
  %6798 = vmatpush1.msra.mxu0 %v6595
  %6799 = vmatprep.subr.mxu0 0.0
  %6800 = vmatpush1.msra.mxu0 %v6594
  %6801 = vmatprep.subr.mxu0 0.0
  %6802 = vmatpush1.msra.mxu0 %v6593
  %6803 = vmatprep.subr.mxu0 0.0
  %6804 = vmatpush1.msra.mxu0 %v6592
  %6805 = vmatprep.subr.mxu0 0.0
  %6806 = vmatpush1.msra.mxu0 %v6591
  %6807 = vmatprep.subr.mxu0 0.0
  %6808 = vmatpush1.msra.mxu0 %v6590
  %6809 = vmatprep.subr.mxu0 0.0
  %6810 = vmatpush1.msra.mxu0 %v6589
  %6811 = vmatprep.subr.mxu0 0.0
  %6812 = vmatpush1.msra.mxu0 %v6588
  %6813 = vmatprep.subr.mxu0 0.0
  %6814 = vmatpush1.msra.mxu0 %v6587
  %6815 = vmatprep.subr.mxu0 0.0
  %6816 = vmatpush1.msra.mxu0 %v6586
  %6817 = vmatprep.subr.mxu0 0.0
  %6818 = vmatpush1.msra.mxu0 %v6585
  %6819 = vmatprep.subr.mxu0 0.0
  %6820 = vmatpush1.msra.mxu0 %v6584
  %6821 = vmatprep.subr.mxu0 0.0
  %6822 = vmatpush1.msra.mxu0 %v6583
  %6823 = vmatprep.subr.mxu0 0.0
  %6824 = vmatpush1.msra.mxu0 %v6582
  %6825 = vmatprep.subr.mxu0 0.0
  %6826 = vmatpush2.msra.mxu0 %v6613
  %6827 = vmatprep.subr.mxu0 0.0
  %6828 = vmatpush2.msra.mxu0 %v6612
  %6829 = vmatprep.subr.mxu0 0.0
  %6830 = vmatpush2.msra.mxu0 %v6611
  %6831 = vmatprep.subr.mxu0 0.0
  %6832 = vmatpush2.msra.mxu0 %v6610
  %6833 = vmatprep.subr.mxu0 0.0
  %6834 = vmatpush2.msra.mxu0 %v6609
  %6835 = vmatprep.subr.mxu0 0.0
  %6836 = vmatpush2.msra.mxu0 %v6608
  %6837 = vmatprep.subr.mxu0 0.0
  %6838 = vmatpush2.msra.mxu0 %v6607
  %6839 = vmatprep.subr.mxu0 0.0
  %6840 = vmatpush2.msra.mxu0 %v6606
  %6841 = vmatprep.subr.mxu0 0.0
  %6842 = vmatpush2.msra.mxu0 %v6605
  %6843 = vmatprep.subr.mxu0 0.0
  %6844 = vmatpush2.msra.mxu0 %v6604
  %6845 = vmatprep.subr.mxu0 0.0
  %6846 = vmatpush2.msra.mxu0 %v6603
  %6847 = vmatprep.subr.mxu0 0.0
  %6848 = vmatpush2.msra.mxu0 %v6602
  %6849 = vmatprep.subr.mxu0 0.0
  %6850 = vmatpush2.msra.mxu0 %v6601
  %6851 = vmatprep.subr.mxu0 0.0
  %6852 = vmatpush2.msra.mxu0 %v6600
  %6853 = vmatprep.subr.mxu0 0.0
  %6854 = vmatpush2.msra.mxu0 %v6599
  %6855 = vmatprep.subr.mxu0 0.0
  %6856 = vmatpush2.msra.mxu0 %v6598
  %6857 = vmatprep.mubr.f32.mxu0 %v6515
  %6858 = vmatmul.mubr.f32.gmra.mxu0 %v6514
  %v6859 = vpop.f32.mrf.mxu0
  %v6860 = vadd.f32 %v6790, %v6859
  %v6861 = vpop.f32.mrf.mxu0
  %6862 = vdwg.mxu0
  %6863 = vmatprep.subr.mxu0 0.0
  %6864 = vmatpush1.msra.mxu0 %v6629
  %6865 = vmatprep.subr.mxu0 0.0
  %6866 = vmatpush1.msra.mxu0 %v6628
  %6867 = vmatprep.subr.mxu0 0.0
  %6868 = vmatpush1.msra.mxu0 %v6627
  %6869 = vmatprep.subr.mxu0 0.0
  %6870 = vmatpush1.msra.mxu0 %v6626
  %6871 = vmatprep.subr.mxu0 0.0
  %6872 = vmatpush1.msra.mxu0 %v6625
  %6873 = vmatprep.subr.mxu0 0.0
  %6874 = vmatpush1.msra.mxu0 %v6624
  %6875 = vmatprep.subr.mxu0 0.0
  %6876 = vmatpush1.msra.mxu0 %v6623
  %6877 = vmatprep.subr.mxu0 0.0
  %6878 = vmatpush1.msra.mxu0 %v6622
  %6879 = vmatprep.subr.mxu0 0.0
  %6880 = vmatpush1.msra.mxu0 %v6621
  %6881 = vmatprep.subr.mxu0 0.0
  %6882 = vmatpush1.msra.mxu0 %v6620
  %6883 = vmatprep.subr.mxu0 0.0
  %6884 = vmatpush1.msra.mxu0 %v6619
  %6885 = vmatprep.subr.mxu0 0.0
  %6886 = vmatpush1.msra.mxu0 %v6618
  %6887 = vmatprep.subr.mxu0 0.0
  %6888 = vmatpush1.msra.mxu0 %v6617
  %6889 = vmatprep.subr.mxu0 0.0
  %6890 = vmatpush1.msra.mxu0 %v6616
  %6891 = vmatprep.subr.mxu0 0.0
  %6892 = vmatpush1.msra.mxu0 %v6615
  %6893 = vmatprep.subr.mxu0 0.0
  %6894 = vmatpush1.msra.mxu0 %v6614
  %6895 = vmatprep.subr.mxu0 0.0
  %6896 = vmatpush2.msra.mxu0 0.0
  %6897 = vmatprep.subr.mxu0 0.0
  %6898 = vmatpush2.msra.mxu0 0.0
  %6899 = vmatprep.subr.mxu0 0.0
  %6900 = vmatpush2.msra.mxu0 0.0
  %6901 = vmatprep.subr.mxu0 0.0
  %6902 = vmatpush2.msra.mxu0 %v6642
  %6903 = vmatprep.subr.mxu0 0.0
  %6904 = vmatpush2.msra.mxu0 %v6641
  %6905 = vmatprep.subr.mxu0 0.0
  %6906 = vmatpush2.msra.mxu0 %v6640
  %6907 = vmatprep.subr.mxu0 0.0
  %6908 = vmatpush2.msra.mxu0 %v6639
  %6909 = vmatprep.subr.mxu0 0.0
  %6910 = vmatpush2.msra.mxu0 %v6638
  %6911 = vmatprep.subr.mxu0 0.0
  %6912 = vmatpush2.msra.mxu0 %v6637
  %6913 = vmatprep.subr.mxu0 0.0
  %6914 = vmatpush2.msra.mxu0 %v6636
  %6915 = vmatprep.subr.mxu0 0.0
  %6916 = vmatpush2.msra.mxu0 %v6635
  %6917 = vmatprep.subr.mxu0 0.0
  %6918 = vmatpush2.msra.mxu0 %v6634
  %6919 = vmatprep.subr.mxu0 0.0
  %6920 = vmatpush2.msra.mxu0 %v6633
  %6921 = vmatprep.subr.mxu0 0.0
  %6922 = vmatpush2.msra.mxu0 %v6632
  %6923 = vmatprep.subr.mxu0 0.0
  %6924 = vmatpush2.msra.mxu0 %v6631
  %6925 = vmatprep.subr.mxu0 0.0
  %6926 = vmatpush2.msra.mxu0 %v6630
  %6927 = vmatprep.mubr.f32.mxu0 %v6651
  %6928 = vmatmul.mubr.f32.gmra.mxu0 %v6516
  %v6929 = vpop.f32.mrf.mxu0
  %v6930 = vadd.f32 %v6860, %v6929
  %v6931 = vpop.f32.mrf.mxu0
  %6932 = vdwg.mxu0
  %vm6933 = vcmask 15360
  %v6934 = vsel %vm6933, %v6930, -inf
  %6935 = vmax.xlane.f32.xlu0 %v6934
  %v6936 = vpop.xlane.xlu0 %6935
  %v6937 = vsub.f32 %v6930, %v6936
  %v6938 = vmul.f32 %v6937, 1.442695
  %v6939 = vpow.pop %v6938
  %v6940 = vsel %vm6933, %v6939, 0.0
  %6941 = vadd.xlane.f32.xlu0 %v6940
  %v6942 = vpop.xlane.xlu0 %6941
  %v6943 = vlog2.pop %v6942
  %v6944 = vmul.f32 %v6943, 0.6931472
  %v6945 = vsub.f32 %v6937, %v6944
  %6946 = vst.msk [vmem:[%s7] sm:$0xff] %vm6933, %v6945
  // Predicated region
  $region30: #{network_phi_forward.7} parent=0 // pred_check
    _
  $region31: #{network_phi_forward.7} parent=0 // pred_check_branch
    %6948 = sbr.rel (0) target = $region33
  $region32: #{network_phi_forward.7} parent=0 // pred_region
    _
  $region33: #{network_phi_forward.7} parent=0 // pred_fallthru
    _
  // Predicated region
  $region34: #{network_phi_forward.7} parent=0 // pred_check
    _
  $region35: #{network_phi_forward.7} parent=0 // pred_check_branch
    %6950 = sbr.rel (0) target = $region37
  $region36: #{network_phi_forward.7} parent=0 // pred_region
    _
  $region37: #{network_phi_forward.7} parent=0 // pred_fallthru
    _

</llo_original>
